<compile_context>
chip_gen: v7x
topology: tpu7x:2x2x1
jax: 0.10.0
libtpu: 0.0.40
codegen_flags: <defaults>
</compile_context>

<pallas_src>
import functools

import jax
import jax.numpy as jnp
import numpy as np
from jax.experimental import pallas as pl
from jax.experimental.pallas import tpu as pltpu

EPS = 1e-5
LANE = 128
VMEM_LIMIT = 64 * 1024 * 1024


def _round_up(x, m):
    return (x + m - 1) // m * m


# --------------------------- Pallas kernels ---------------------------------

def _dconv_kernel(*refs, res_mode):
    """Fused BasicBlock conv: BN+ReLU -> 3x3 stride-1 'same' conv -> +residual.

    Ref layout by res_mode:
      'none' : xpad, scale, shift, w, out
      'ident': xpad, scale, shift, w, res, out               (identity shortcut)
      'short': xpad, scale, shift, w, xs, sc1, sh1, ws, out  (fused 1x1 shortcut)
    xpad is the raw input pre-padded spatially by 1 (zeros); BN+ReLU is applied
    in-kernel and the pad ring is re-zeroed so padding behaves as if applied
    AFTER the activation (PyTorch conv-padding semantics).
    """
    if res_mode == "short":
        x_ref, sc_ref, sh_ref, w_ref, xs_ref, sc1_ref, sh1_ref, ws_ref, o_ref = refs
    elif res_mode == "ident":
        x_ref, sc_ref, sh_ref, w_ref, r_ref, o_ref = refs
    else:
        x_ref, sc_ref, sh_ref, w_ref, o_ref = refs

    _, hp, wp, cin = x_ref.shape
    ho, wo = hp - 2, wp - 2
    tn = w_ref.shape[-1]

    # fused BN + ReLU (f32 VPU math), then zero the spatial padding ring.
    x = x_ref[0]                                             # (hp, wp, cin)
    sc = sc_ref[...].reshape(1, 1, cin)
    sh = sh_ref[...].reshape(1, 1, cin)
    act = jnp.maximum(x * sc + sh, 0.0)
    ih = jax.lax.broadcasted_iota(jnp.int32, (hp, wp, 1), 0)
    iw = jax.lax.broadcasted_iota(jnp.int32, (hp, wp, 1), 1)
    interior = (ih >= 1) & (ih <= hp - 2) & (iw >= 1) & (iw <= wp - 2)
    act = jnp.where(interior, act, 0.0)
    # cast to bf16 ONCE; the 9 tap slices below reuse the cast result.
    act = act.astype(jnp.bfloat16)

    # 3x3 conv = sum over 9 shifted slices; each is a (Ho*Wo, Cin)x(Cin, tn)
    # bf16 MXU dot accumulated in f32 — activations never round-trip HBM.
    acc = jnp.zeros((ho * wo, tn), jnp.float32)
    for dy in range(3):
        for dx in range(3):
            patch = act[dy:dy + ho, dx:dx + wo, :].reshape(ho * wo, cin)
            acc = acc + jnp.dot(patch, w_ref[dy, dx],
                                preferred_element_type=jnp.float32)

    if res_mode == "ident":
        acc = acc + r_ref[0].reshape(ho * wo, tn)
    elif res_mode == "short":
        cin_s = xs_ref.shape[-1]
        sc1 = sc1_ref[...].reshape(1, 1, cin_s)
        sh1 = sh1_ref[...].reshape(1, 1, cin_s)
        act_s = jnp.maximum(xs_ref[0] * sc1 + sh1, 0.0)      # relu(bn1(x[::s]))
        act_s = act_s.reshape(ho * wo, cin_s).astype(jnp.bfloat16)
        acc = acc + jnp.dot(act_s, ws_ref[...],
                            preferred_element_type=jnp.float32)

    o_ref[0] = acc.reshape(ho, wo, tn).astype(o_ref.dtype)


def _mm_kernel(a_ref, w_ref, o_ref, acc_ref):
    # (M,N,K)-tiled matmul, K is the last grid axis ("arbitrary"); bf16 inputs,
    # f32 VMEM accumulator, init / writeback gated by pl.when.
    @pl.when(pl.program_id(2) == 0)
    def _():
        acc_ref[...] = jnp.zeros_like(acc_ref)

    acc_ref[...] += jnp.dot(a_ref[...], w_ref[...],
                            preferred_element_type=jnp.float32)

    @pl.when(pl.program_id(2) == pl.num_programs(2) - 1)
    def _():
        o_ref[...] = acc_ref[...]


# --------------------------- Pallas wrappers ---------------------------------

def conv3x3_s1_fused(xpad, scale, shift, w, residual=None, shortcut=None):
    """Fused BN+ReLU + 3x3 stride-1 conv (+ residual / fused 1x1 shortcut).

    xpad : (N, H+2, W+2, Cp_in)  raw input, spatially pre-padded, channels padded.
    w    : (3, 3, Cp_in, Cp_out) bf16.
    """
    n, hp, wp, cin = xpad.shape
    ho, wo = hp - 2, wp - 2
    cout = w.shape[-1]
    tn = min(LANE, cout)                       # cout is a multiple of 128

    args = [xpad, scale.reshape(1, cin), shift.reshape(1, cin), w]
    in_specs = [
        pl.BlockSpec((1, hp, wp, cin), lambda b, j: (b, 0, 0, 0)),
        pl.BlockSpec((1, cin), lambda b, j: (0, 0)),
        pl.BlockSpec((1, cin), lambda b, j: (0, 0)),
        pl.BlockSpec((3, 3, cin, tn), lambda b, j: (0, 0, 0, j)),
    ]
    if residual is not None:
        mode = "ident"
        args.append(residual)
        in_specs.append(pl.BlockSpec((1, ho, wo, tn), lambda b, j: (b, 0, 0, j)))
    elif shortcut is not None:
        mode = "short"
        xs, sc1, sh1, ws = shortcut
        cin_s = xs.shape[-1]
        args += [xs, sc1.reshape(1, cin_s), sh1.reshape(1, cin_s), ws]
        in_specs += [
            pl.BlockSpec((1, ho, wo, cin_s), lambda b, j: (b, 0, 0, 0)),
            pl.BlockSpec((1, cin_s), lambda b, j: (0, 0)),
            pl.BlockSpec((1, cin_s), lambda b, j: (0, 0)),
            pl.BlockSpec((cin_s, tn), lambda b, j: (0, j)),
        ]
    else:
        mode = "none"

    return pl.pallas_call(
        functools.partial(_dconv_kernel, res_mode=mode),
        out_shape=jax.ShapeDtypeStruct((n, ho, wo, cout), jnp.float32),
        grid=(n, cout // tn),
        in_specs=in_specs,
        out_specs=pl.BlockSpec((1, ho, wo, tn), lambda b, j: (b, 0, 0, j)),
        compiler_params=pltpu.CompilerParams(
            dimension_semantics=("parallel", "parallel"),
            vmem_limit_bytes=VMEM_LIMIT),
    )(*args)


def matmul_tiled(a, w, tk):
    """a: (M, K) bf16, w: (K, N) bf16 (K % tk == 0, N % 128 == 0) -> (M, N) f32."""
    m, k = a.shape
    n = w.shape[1]
    tn = min(2 * LANE, n) if n % (2 * LANE) == 0 else LANE
    tm = min(512, _round_up(m, LANE))
    mp = _round_up(m, tm)                      # pad M instead of whole-array tiles
    if mp != m:
        a = jnp.pad(a, ((0, mp - m), (0, 0)))

    out = pl.pallas_call(
        _mm_kernel,
        out_shape=jax.ShapeDtypeStruct((mp, n), jnp.float32),
        grid=(mp // tm, n // tn, k // tk),
        in_specs=[pl.BlockSpec((tm, tk), lambda i, j, kk: (i, kk)),
                  pl.BlockSpec((tk, tn), lambda i, j, kk: (kk, j))],
        out_specs=pl.BlockSpec((tm, tn), lambda i, j, kk: (i, j)),
        scratch_shapes=[pltpu.VMEM((tm, tn), jnp.float32)],
        compiler_params=pltpu.CompilerParams(
            dimension_semantics=("parallel", "parallel", "arbitrary"),
            vmem_limit_bytes=VMEM_LIMIT),
    )(a, w)
    return out[:m] if mp != m else out


# --------------------------- plain-JAX glue ----------------------------------

def im2col(x, k, stride, pad):
    """x: (N,H,W,C) NHWC -> (N*Ho*Wo, k*k*C), tap-major then channel."""
    n, h, w, c = x.shape
    xp = jnp.pad(x, ((0, 0), (pad, pad), (pad, pad), (0, 0)))
    ho = (h + 2 * pad - k) // stride + 1
    wo = (w + 2 * pad - k) // stride + 1
    cols = []
    for dy in range(k):
        for dx in range(k):
            cols.append(xp[:, dy:dy + stride * ho:stride,
                           dx:dx + stride * wo:stride, :])
    patches = jnp.concatenate(cols, axis=-1)
    return patches.reshape(n * ho * wo, k * k * c), ho, wo


def basic_block_forward(x, p, stride):
    """One BasicBlock in channel-padded NHWC space (C % 128 == 0)."""
    n, h, w, cpi = x.shape
    cpo = p['w1p'].shape[-1]

    if stride == 1:
        # conv1: BN1+ReLU + 3x3 conv fused in one Pallas kernel (no im2col).
        xpad = jnp.pad(x, ((0, 0), (1, 1), (1, 1), (0, 0)))
        y1 = conv3x3_s1_fused(xpad, p['bn1_scale_p'], p['bn1_shift_p'], p['w1p'])
        ho, wo = h, w
    else:
        # strided conv1: BN1+ReLU in plain JAX (XLA fuses it into the im2col
        # producer), then a tiled bf16 Pallas matmul over the patches.
        act = jnp.maximum(x * p['bn1_scale_p'] + p['bn1_shift_p'], 0.0)
        patches, ho, wo = im2col(act, 3, stride, 1)
        y1 = matmul_tiled(patches.astype(jnp.bfloat16), p['w1p_2d'], tk=cpi)
        y1 = y1.reshape(n, ho, wo, cpo)

    # TODO(synk): F.dropout between conv1 and conv2 for dropRate > 0 in
    # training mode is not implemented (dropRate defaults to 0.0, eval mode).

    # conv2: BN2+ReLU + 3x3 conv + residual (identity, or the 1x1 shortcut on
    # relu(bn1(x)) fused into the same kernel).
    y1pad = jnp.pad(y1, ((0, 0), (1, 1), (1, 1), (0, 0)))
    if p['equal']:
        out = conv3x3_s1_fused(y1pad, p['bn2_scale_p'], p['bn2_shift_p'],
                               p['w2p'], residual=x)
    else:
        xs = x[:, ::stride, ::stride, :]
        out = conv3x3_s1_fused(y1pad, p['bn2_scale_p'], p['bn2_shift_p'],
                               p['w2p'],
                               shortcut=(xs, p['bn1_scale_p'],
                                         p['bn1_shift_p'], p['wsp']))
    return out


def network_block_forward(x_nchw, params, strides):
    x = jnp.transpose(x_nchw, (0, 2, 3, 1)).astype(jnp.float32)   # NCHW -> NHWC
    cin = x.shape[-1]
    cpi = _round_up(cin, LANE)
    x = jnp.pad(x, ((0, 0), (0, 0), (0, 0), (0, cpi - cin)))      # lane-dense
    for p, s in zip(params, strides):
        x = basic_block_forward(x, p, s)
    x = x[..., :params[-1]['cout']]                               # drop channel pad
    return jnp.transpose(x, (0, 3, 1, 2))                         # back to NCHW


# --------------------------- parameter init ----------------------------------

def _fold_bn(g, b, m, v):
    scale = g / jnp.sqrt(v + EPS)
    return scale, b - m * scale


def init_basic_block(key, cin, cout):
    ks = jax.random.split(key, 11)
    equal = (cin == cout)
    p = {'equal': equal, 'cin': cin, 'cout': cout}
    p['w1'] = jax.random.normal(ks[0], (3, 3, cin, cout), jnp.float32) * np.sqrt(2.0 / (9 * cout))
    p['w2'] = jax.random.normal(ks[1], (3, 3, cout, cout), jnp.float32) * np.sqrt(2.0 / (9 * cout))
    if not equal:
        p['ws'] = jax.random.normal(ks[2], (cin, cout), jnp.float32) * np.sqrt(2.0 / cout)
    g1 = 1.0 + 0.1 * jax.random.normal(ks[3], (cin,), jnp.float32)
    b1 = 0.1 * jax.random.normal(ks[4], (cin,), jnp.float32)
    m1 = 0.1 * jax.random.normal(ks[5], (cin,), jnp.float32)
    v1 = jax.random.uniform(ks[6], (cin,), jnp.float32, 0.5, 1.5)
    g2 = 1.0 + 0.1 * jax.random.normal(ks[7], (cout,), jnp.float32)
    b2 = 0.1 * jax.random.normal(ks[8], (cout,), jnp.float32)
    m2 = 0.1 * jax.random.normal(ks[9], (cout,), jnp.float32)
    v2 = jax.random.uniform(ks[10], (cout,), jnp.float32, 0.5, 1.5)
    p['bn1_raw'], p['bn2_raw'] = (g1, b1, m1, v1), (g2, b2, m2, v2)
    return p


def prep_basic_block(p):
    """Fold BN, pad channels to multiples of 128, pre-cast weights to bf16."""
    cin, cout = p['cin'], p['cout']
    cpi, cpo = _round_up(cin, LANE), _round_up(cout, LANE)

    s1, h1 = _fold_bn(*p['bn1_raw'])
    s2, h2 = _fold_bn(*p['bn2_raw'])
    p['bn1_scale_p'] = jnp.pad(s1, (0, cpi - cin))
    p['bn1_shift_p'] = jnp.pad(h1, (0, cpi - cin))
    p['bn2_scale_p'] = jnp.pad(s2, (0, cpo - cout))
    p['bn2_shift_p'] = jnp.pad(h2, (0, cpo - cout))

    w1p = jnp.pad(p['w1'], ((0, 0), (0, 0), (0, cpi - cin), (0, cpo - cout)))
    w2p = jnp.pad(p['w2'], ((0, 0), (0, 0), (0, cpo - cout), (0, cpo - cout)))
    p['w1p'] = w1p.astype(jnp.bfloat16)
    p['w2p'] = w2p.astype(jnp.bfloat16)
    p['w1p_2d'] = w1p.reshape(9 * cpi, cpo).astype(jnp.bfloat16)
    if not p['equal']:
        wsp = jnp.pad(p['ws'], ((0, cpi - cin), (0, cpo - cout)))
        p['wsp'] = wsp.astype(jnp.bfloat16)
    return p


# --------------------------- pure-JAX reference -------------------------------

def _conv_ref(x, w, stride, pad):
    return jax.lax.conv_general_dilated(
        x, w, (stride, stride), ((pad, pad), (pad, pad)),
        dimension_numbers=('NHWC', 'HWIO', 'NHWC'))


def _bn_relu_ref(x, raw):
    g, b, m, v = raw
    return jnp.maximum((x - m) / jnp.sqrt(v + EPS) * g + b, 0.0)


def basic_block_ref(x, p, stride):
    act = _bn_relu_ref(x, p['bn1_raw'])
    out = _conv_ref(act, p['w1'], stride, 1)
    out = _bn_relu_ref(out, p['bn2_raw'])
    out = _conv_ref(out, p['w2'], 1, 1)
    if p['equal']:
        res = x
    else:
        res = _conv_ref(act, p['ws'].reshape(1, 1, *p['ws'].shape), stride, 0)
    return res + out


# --------------------------------- main --------------------------------------

if __name__ == "__main__":
    key = jax.random.PRNGKey(0)
    kx, k0, k1 = jax.random.split(key, 3)

    # NetworkBlock(nb_layers=2, in_planes=4, out_planes=8, block=BasicBlock,
    #              stride=2, dropRate=0.0), eval mode.
    x_nchw = jax.random.normal(kx, (2, 4, 16, 16), jnp.float32)
    params = [prep_basic_block(init_basic_block(k0, 4, 8)),
              prep_basic_block(init_basic_block(k1, 8, 8))]
    strides = [2, 1]

    fwd = jax.jit(lambda xx: network_block_forward(xx, params, strides))
    y = jax.block_until_ready(fwd(x_nchw))
    assert y.shape == (2, 8, 8, 8), y.shape

    # correctness check vs pure-f32 pure-JAX reference (bf16 MXU inputs => ~%-level tol)
    xr = jnp.transpose(x_nchw, (0, 2, 3, 1))
    for p, s in zip(params, strides):
        xr = basic_block_ref(xr, p, s)
    y_ref = jnp.transpose(xr, (0, 3, 1, 2))
    np.testing.assert_allclose(np.asarray(y), np.asarray(y_ref),
                               rtol=5e-2, atol=5e-2)

    print("KERNEL_OK")
</pallas_src>

<mosaic_0001>
module attributes {stable_mosaic.version = 11 : i64} {
  func.func @_mm_kernel(%arg0: i32, %arg1: i32, %arg2: i32, %arg3: memref<128x128xbf16, #tpu.memory_space<vmem>>, %arg4: memref<128x128xbf16, #tpu.memory_space<vmem>>, %arg5: memref<128x128xf32, #tpu.memory_space<vmem>>, %arg6: memref<128x128xf32, #tpu.memory_space<vmem>>) attributes {dimension_semantics = [#tpu.dimension_semantics<parallel>, #tpu.dimension_semantics<parallel>, #tpu.dimension_semantics<arbitrary>], iteration_bounds = array<i64: 1, 1, 9>, scalar_prefetch = 0 : i64, scratch_operands = 1 : i64, tpu.core_type = #tpu.core_type<tc>, window_params = [{transform_indices = @transform_0, window_bounds = array<i64: 128, 128>}, {transform_indices = @transform_1, window_bounds = array<i64: 128, 128>}, {transform_indices = @transform_2, window_bounds = array<i64: 128, 128>}]} {
    %c0_i32 = arith.constant 0 : i32
    %0 = arith.cmpi eq, %arg2, %c0_i32 : i32
    %1 = arith.extui %0 : i1 to i32
    %c0_i32_0 = arith.constant 0 : i32
    %2 = arith.cmpi ne, %1, %c0_i32_0 : i32
    scf.if %2 {
      %cst_9 = arith.constant 0.000000e+00 : f32
      %12 = vector.broadcast %cst_9 : f32 to vector<128x128xf32>
      %c0_10 = arith.constant 0 : index
      %c0_11 = arith.constant 0 : index
      %13 = vector.load %arg6[%c0_10, %c0_11] : memref<128x128xf32, #tpu.memory_space<vmem>>, vector<128x128xf32>
      tpu.vector_store %arg6[%c0_10, %c0_11], %12 {strides = array<i32>} : memref<128x128xf32, #tpu.memory_space<vmem>>, vector<128x128xf32>,
    } else {
    }
    %c0 = arith.constant 0 : index
    %c0_1 = arith.constant 0 : index
    %3 = vector.load %arg6[%c0, %c0_1] : memref<128x128xf32, #tpu.memory_space<vmem>>, vector<128x128xf32>
    %c0_2 = arith.constant 0 : index
    %c0_3 = arith.constant 0 : index
    %4 = vector.load %arg3[%c0_2, %c0_3] : memref<128x128xbf16, #tpu.memory_space<vmem>>, vector<128x128xbf16>
    %c0_4 = arith.constant 0 : index
    %c0_5 = arith.constant 0 : index
    %5 = vector.load %arg4[%c0_4, %c0_5] : memref<128x128xbf16, #tpu.memory_space<vmem>>, vector<128x128xbf16>
    %cst = arith.constant dense<0.000000e+00> : vector<128x128xf32>
    %6 = tpu.matmul %4, %5, %cst {dimension_numbers = #tpu.dot_dimension_numbers<[1], [0], [0], [1], [0, 0, 1, 1], [], []>} : vector<128x128xbf16>, vector<128x128xbf16>, vector<128x128xf32> -> vector<128x128xf32>
    %7 = arith.addf %3, %6 : vector<128x128xf32>
    %c0_6 = arith.constant 0 : index
    %c0_7 = arith.constant 0 : index
    %8 = vector.load %arg6[%c0_6, %c0_7] : memref<128x128xf32, #tpu.memory_space<vmem>>, vector<128x128xf32>
    tpu.vector_store %arg6[%c0_6, %c0_7], %7 {strides = array<i32>} : memref<128x128xf32, #tpu.memory_space<vmem>>, vector<128x128xf32>,
    %c8_i32 = arith.constant 8 : i32
    %9 = arith.cmpi eq, %arg2, %c8_i32 : i32
    %10 = arith.extui %9 : i1 to i32
    %c0_i32_8 = arith.constant 0 : i32
    %11 = arith.cmpi ne, %10, %c0_i32_8 : i32
    scf.if %11 {
      %c0_9 = arith.constant 0 : index
      %c0_10 = arith.constant 0 : index
      %12 = vector.load %arg6[%c0_9, %c0_10] : memref<128x128xf32, #tpu.memory_space<vmem>>, vector<128x128xf32>
      %c0_11 = arith.constant 0 : index
      %c0_12 = arith.constant 0 : index
      %13 = vector.load %arg5[%c0_11, %c0_12] : memref<128x128xf32, #tpu.memory_space<vmem>>, vector<128x128xf32>
      tpu.vector_store %arg5[%c0_11, %c0_12], %12 {strides = array<i32>} : memref<128x128xf32, #tpu.memory_space<vmem>>, vector<128x128xf32>,
    } else {
    }
    return
  }
  func.func @transform_0(%arg0: i32, %arg1: i32, %arg2: i32) -> (i32, i32) {
    %c0_i32 = arith.constant 0 : i32
    return %arg0, %arg2 : i32, i32
  }
  func.func @transform_1(%arg0: i32, %arg1: i32, %arg2: i32) -> (i32, i32) {
    %c0_i32 = arith.constant 0 : i32
    return %arg2, %arg1 : i32, i32
  }
  func.func @transform_2(%arg0: i32, %arg1: i32, %arg2: i32) -> (i32, i32) {
    %c0_i32 = arith.constant 0 : i32
    return %arg0, %arg1 : i32, i32
  }
}

module attributes {stable_mosaic.version = 11 : i64} {
  func.func @_dconv_kernel(%arg0: i32, %arg1: i32, %arg2: memref<1x10x10x128xf32, #tpu.memory_space<vmem>>, %arg3: memref<1x128xf32, #tpu.memory_space<vmem>>, %arg4: memref<1x128xf32, #tpu.memory_space<vmem>>, %arg5: memref<3x3x128x128xbf16, #tpu.memory_space<vmem>>, %arg6: memref<1x8x8x128xf32, #tpu.memory_space<vmem>>) attributes {dimension_semantics = [#tpu.dimension_semantics<parallel>, #tpu.dimension_semantics<parallel>], iteration_bounds = array<i64: 2, 1>, scalar_prefetch = 0 : i64, scratch_operands = 0 : i64, tpu.core_type = #tpu.core_type<tc>, window_params = [{transform_indices = @transform_0, window_bounds = array<i64: 1, 10, 10, 128>}, {pipeline_mode = #tpu.pipeline_mode<synchronous>, transform_indices = @transform_1, window_bounds = array<i64: 1, 128>}, {pipeline_mode = #tpu.pipeline_mode<synchronous>, transform_indices = @transform_2, window_bounds = array<i64: 1, 128>}, {transform_indices = @transform_3, window_bounds = array<i64: 3, 3, 128, 128>}, {transform_indices = @transform_4, window_bounds = array<i64: 1, 8, 8, 128>}]} {
    %c0 = arith.constant 0 : index
    %c0_0 = arith.constant 0 : index
    %c0_1 = arith.constant 0 : index
    %c0_2 = arith.constant 0 : index
    %0 = vector.load %arg2[%c0, %c0_0, %c0_1, %c0_2] : memref<1x10x10x128xf32, #tpu.memory_space<vmem>>, vector<1x10x10x128xf32>
    %1 = vector.shape_cast %0 : vector<1x10x10x128xf32> to vector<10x10x128xf32>
    %c0_3 = arith.constant 0 : index
    %c0_4 = arith.constant 0 : index
    %2 = vector.load %arg3[%c0_3, %c0_4] : memref<1x128xf32, #tpu.memory_space<vmem>>, vector<1x128xf32>
    %3 = vector.shape_cast %2 : vector<1x128xf32> to vector<1x1x128xf32>
    %c0_5 = arith.constant 0 : index
    %c0_6 = arith.constant 0 : index
    %4 = vector.load %arg4[%c0_5, %c0_6] : memref<1x128xf32, #tpu.memory_space<vmem>>, vector<1x128xf32>
    %5 = vector.shape_cast %4 : vector<1x128xf32> to vector<1x1x128xf32>
    %6 = vector.broadcast %3 : vector<1x1x128xf32> to vector<10x10x128xf32>
    %7 = arith.mulf %1, %6 : vector<10x10x128xf32>
    %8 = vector.broadcast %5 : vector<1x1x128xf32> to vector<10x10x128xf32>
    %9 = arith.addf %7, %8 : vector<10x10x128xf32>
    %cst = arith.constant 0.000000e+00 : f32
    %10 = vector.broadcast %cst : f32 to vector<10x10x128xf32>
    %11 = arith.maximumf %9, %10 : vector<10x10x128xf32>
    %12 = tpu.iota {dimensions = array<i32: 0>} : vector<10x10x1xi32>
    %13 = tpu.iota {dimensions = array<i32: 1>} : vector<10x10x1xi32>
    %c1_i32 = arith.constant 1 : i32
    %14 = vector.broadcast %c1_i32 : i32 to vector<10x10x1xi32>
    %15 = arith.cmpi sge, %12, %14 : vector<10x10x1xi32>
    %c8_i32 = arith.constant 8 : i32
    %16 = vector.broadcast %c8_i32 : i32 to vector<10x10x1xi32>
    %17 = arith.cmpi sle, %12, %16 : vector<10x10x1xi32>
    %18 = arith.andi %15, %17 : vector<10x10x1xi1>
    %c1_i32_7 = arith.constant 1 : i32
    %19 = vector.broadcast %c1_i32_7 : i32 to vector<10x10x1xi32>
    %20 = arith.cmpi sge, %13, %19 : vector<10x10x1xi32>
    %21 = arith.andi %18, %20 : vector<10x10x1xi1>
    %c8_i32_8 = arith.constant 8 : i32
    %22 = vector.broadcast %c8_i32_8 : i32 to vector<10x10x1xi32>
    %23 = arith.cmpi sle, %13, %22 : vector<10x10x1xi32>
    %24 = arith.andi %21, %23 : vector<10x10x1xi1>
    %cst_9 = arith.constant 0.000000e+00 : f32
    %25 = vector.shape_cast %24 : vector<10x10x1xi1> to vector<10x10x1xi1>
    %26 = vector.broadcast %25 : vector<10x10x1xi1> to vector<10x10x128xi1>
    %27 = vector.broadcast %cst_9 : f32 to vector<10x10x128xf32>
    %28 = arith.select %26, %11, %27 : vector<10x10x128xi1>, vector<10x10x128xf32>
    %29 = arith.truncf %28 : vector<10x10x128xf32> to vector<10x10x128xbf16>
    %cst_10 = arith.constant 0.000000e+00 : f32
    %30 = vector.broadcast %cst_10 : f32 to vector<64x128xf32>
    %31 = vector.extract_strided_slice %29 {offsets = [0, 0, 0], sizes = [8, 8, 128], strides = [1, 1, 1]} : vector<10x10x128xbf16> to vector<8x8x128xbf16>
    %32 = vector.shape_cast %31 : vector<8x8x128xbf16> to vector<64x128xbf16>
    %c0_11 = arith.constant 0 : index
    %c0_12 = arith.constant 0 : index
    %c0_13 = arith.constant 0 : index
    %c0_14 = arith.constant 0 : index
    %33 = vector.load %arg5[%c0_11, %c0_12, %c0_13, %c0_14] : memref<3x3x128x128xbf16, #tpu.memory_space<vmem>>, vector<1x1x128x128xbf16>
    %34 = vector.shape_cast %33 : vector<1x1x128x128xbf16> to vector<128x128xbf16>
    %cst_15 = arith.constant dense<0.000000e+00> : vector<64x128xf32>
    %35 = tpu.matmul %32, %34, %cst_15 {dimension_numbers = #tpu.dot_dimension_numbers<[1], [0], [0], [1], [0, 0, 1, 1], [], []>} : vector<64x128xbf16>, vector<128x128xbf16>, vector<64x128xf32> -> vector<64x128xf32>
    %36 = arith.addf %30, %35 : vector<64x128xf32>
    %37 = vector.extract_strided_slice %29 {offsets = [0, 1, 0], sizes = [8, 8, 128], strides = [1, 1, 1]} : vector<10x10x128xbf16> to vector<8x8x128xbf16>
    %38 = vector.shape_cast %37 : vector<8x8x128xbf16> to vector<64x128xbf16>
    %c0_16 = arith.constant 0 : index
    %c1 = arith.constant 1 : index
    %c0_17 = arith.constant 0 : index
    %c0_18 = arith.constant 0 : index
    %39 = vector.load %arg5[%c0_16, %c1, %c0_17, %c0_18] : memref<3x3x128x128xbf16, #tpu.memory_space<vmem>>, vector<1x1x128x128xbf16>
    %40 = vector.shape_cast %39 : vector<1x1x128x128xbf16> to vector<128x128xbf16>
    %cst_19 = arith.constant dense<0.000000e+00> : vector<64x128xf32>
    %41 = tpu.matmul %38, %40, %cst_19 {dimension_numbers = #tpu.dot_dimension_numbers<[1], [0], [0], [1], [0, 0, 1, 1], [], []>} : vector<64x128xbf16>, vector<128x128xbf16>, vector<64x128xf32> -> vector<64x128xf32>
    %42 = arith.addf %36, %41 : vector<64x128xf32>
    %43 = vector.extract_strided_slice %29 {offsets = [0, 2, 0], sizes = [8, 8, 128], strides = [1, 1, 1]} : vector<10x10x128xbf16> to vector<8x8x128xbf16>
    %44 = vector.shape_cast %43 : vector<8x8x128xbf16> to vector<64x128xbf16>
    %c0_20 = arith.constant 0 : index
    %c2 = arith.constant 2 : index
    %c0_21 = arith.constant 0 : index
    %c0_22 = arith.constant 0 : index
    %45 = vector.load %arg5[%c0_20, %c2, %c0_21, %c0_22] : memref<3x3x128x128xbf16, #tpu.memory_space<vmem>>, vector<1x1x128x128xbf16>
    %46 = vector.shape_cast %45 : vector<1x1x128x128xbf16> to vector<128x128xbf16>
    %cst_23 = arith.constant dense<0.000000e+00> : vector<64x128xf32>
    %47 = tpu.matmul %44, %46, %cst_23 {dimension_numbers = #tpu.dot_dimension_numbers<[1], [0], [0], [1], [0, 0, 1, 1], [], []>} : vector<64x128xbf16>, vector<128x128xbf16>, vector<64x128xf32> -> vector<64x128xf32>
    %48 = arith.addf %42, %47 : vector<64x128xf32>
    %49 = vector.extract_strided_slice %29 {offsets = [1, 0, 0], sizes = [8, 8, 128], strides = [1, 1, 1]} : vector<10x10x128xbf16> to vector<8x8x128xbf16>
    %50 = vector.shape_cast %49 : vector<8x8x128xbf16> to vector<64x128xbf16>
    %c1_24 = arith.constant 1 : index
    %c0_25 = arith.constant 0 : index
    %c0_26 = arith.constant 0 : index
    %c0_27 = arith.constant 0 : index
    %51 = vector.load %arg5[%c1_24, %c0_25, %c0_26, %c0_27] : memref<3x3x128x128xbf16, #tpu.memory_space<vmem>>, vector<1x1x128x128xbf16>
    %52 = vector.shape_cast %51 : vector<1x1x128x128xbf16> to vector<128x128xbf16>
    %cst_28 = arith.constant dense<0.000000e+00> : vector<64x128xf32>
    %53 = tpu.matmul %50, %52, %cst_28 {dimension_numbers = #tpu.dot_dimension_numbers<[1], [0], [0], [1], [0, 0, 1, 1], [], []>} : vector<64x128xbf16>, vector<128x128xbf16>, vector<64x128xf32> -> vector<64x128xf32>
    %54 = arith.addf %48, %53 : vector<64x128xf32>
    %55 = vector.extract_strided_slice %29 {offsets = [1, 1, 0], sizes = [8, 8, 128], strides = [1, 1, 1]} : vector<10x10x128xbf16> to vector<8x8x128xbf16>
    %56 = vector.shape_cast %55 : vector<8x8x128xbf16> to vector<64x128xbf16>
    %c1_29 = arith.constant 1 : index
    %c1_30 = arith.constant 1 : index
    %c0_31 = arith.constant 0 : index
    %c0_32 = arith.constant 0 : index
    %57 = vector.load %arg5[%c1_29, %c1_30, %c0_31, %c0_32] : memref<3x3x128x128xbf16, #tpu.memory_space<vmem>>, vector<1x1x128x128xbf16>
    %58 = vector.shape_cast %57 : vector<1x1x128x128xbf16> to vector<128x128xbf16>
    %cst_33 = arith.constant dense<0.000000e+00> : vector<64x128xf32>
    %59 = tpu.matmul %56, %58, %cst_33 {dimension_numbers = #tpu.dot_dimension_numbers<[1], [0], [0], [1], [0, 0, 1, 1], [], []>} : vector<64x128xbf16>, vector<128x128xbf16>, vector<64x128xf32> -> vector<64x128xf32>
    %60 = arith.addf %54, %59 : vector<64x128xf32>
    %61 = vector.extract_strided_slice %29 {offsets = [1, 2, 0], sizes = [8, 8, 128], strides = [1, 1, 1]} : vector<10x10x128xbf16> to vector<8x8x128xbf16>
    %62 = vector.shape_cast %61 : vector<8x8x128xbf16> to vector<64x128xbf16>
    %c1_34 = arith.constant 1 : index
    %c2_35 = arith.constant 2 : index
    %c0_36 = arith.constant 0 : index
    %c0_37 = arith.constant 0 : index
    %63 = vector.load %arg5[%c1_34, %c2_35, %c0_36, %c0_37] : memref<3x3x128x128xbf16, #tpu.memory_space<vmem>>, vector<1x1x128x128xbf16>
    %64 = vector.shape_cast %63 : vector<1x1x128x128xbf16> to vector<128x128xbf16>
    %cst_38 = arith.constant dense<0.000000e+00> : vector<64x128xf32>
    %65 = tpu.matmul %62, %64, %cst_38 {dimension_numbers = #tpu.dot_dimension_numbers<[1], [0], [0], [1], [0, 0, 1, 1], [], []>} : vector<64x128xbf16>, vector<128x128xbf16>, vector<64x128xf32> -> vector<64x128xf32>
    %66 = arith.addf %60, %65 : vector<64x128xf32>
    %67 = vector.extract_strided_slice %29 {offsets = [2, 0, 0], sizes = [8, 8, 128], strides = [1, 1, 1]} : vector<10x10x128xbf16> to vector<8x8x128xbf16>
    %68 = vector.shape_cast %67 : vector<8x8x128xbf16> to vector<64x128xbf16>
    %c2_39 = arith.constant 2 : index
    %c0_40 = arith.constant 0 : index
    %c0_41 = arith.constant 0 : index
    %c0_42 = arith.constant 0 : index
    %69 = vector.load %arg5[%c2_39, %c0_40, %c0_41, %c0_42] : memref<3x3x128x128xbf16, #tpu.memory_space<vmem>>, vector<1x1x128x128xbf16>
    %70 = vector.shape_cast %69 : vector<1x1x128x128xbf16> to vector<128x128xbf16>
    %cst_43 = arith.constant dense<0.000000e+00> : vector<64x128xf32>
    %71 = tpu.matmul %68, %70, %cst_43 {dimension_numbers = #tpu.dot_dimension_numbers<[1], [0], [0], [1], [0, 0, 1, 1], [], []>} : vector<64x128xbf16>, vector<128x128xbf16>, vector<64x128xf32> -> vector<64x128xf32>
    %72 = arith.addf %66, %71 : vector<64x128xf32>
    %73 = vector.extract_strided_slice %29 {offsets = [2, 1, 0], sizes = [8, 8, 128], strides = [1, 1, 1]} : vector<10x10x128xbf16> to vector<8x8x128xbf16>
    %74 = vector.shape_cast %73 : vector<8x8x128xbf16> to vector<64x128xbf16>
    %c2_44 = arith.constant 2 : index
    %c1_45 = arith.constant 1 : index
    %c0_46 = arith.constant 0 : index
    %c0_47 = arith.constant 0 : index
    %75 = vector.load %arg5[%c2_44, %c1_45, %c0_46, %c0_47] : memref<3x3x128x128xbf16, #tpu.memory_space<vmem>>, vector<1x1x128x128xbf16>
    %76 = vector.shape_cast %75 : vector<1x1x128x128xbf16> to vector<128x128xbf16>
    %cst_48 = arith.constant dense<0.000000e+00> : vector<64x128xf32>
    %77 = tpu.matmul %74, %76, %cst_48 {dimension_numbers = #tpu.dot_dimension_numbers<[1], [0], [0], [1], [0, 0, 1, 1], [], []>} : vector<64x128xbf16>, vector<128x128xbf16>, vector<64x128xf32> -> vector<64x128xf32>
    %78 = arith.addf %72, %77 : vector<64x128xf32>
    %79 = vector.extract_strided_slice %29 {offsets = [2, 2, 0], sizes = [8, 8, 128], strides = [1, 1, 1]} : vector<10x10x128xbf16> to vector<8x8x128xbf16>
    %80 = vector.shape_cast %79 : vector<8x8x128xbf16> to vector<64x128xbf16>
    %c2_49 = arith.constant 2 : index
    %c2_50 = arith.constant 2 : index
    %c0_51 = arith.constant 0 : index
    %c0_52 = arith.constant 0 : index
    %81 = vector.load %arg5[%c2_49, %c2_50, %c0_51, %c0_52] : memref<3x3x128x128xbf16, #tpu.memory_space<vmem>>, vector<1x1x128x128xbf16>
    %82 = vector.shape_cast %81 : vector<1x1x128x128xbf16> to vector<128x128xbf16>
    %cst_53 = arith.constant dense<0.000000e+00> : vector<64x128xf32>
    %83 = tpu.matmul %80, %82, %cst_53 {dimension_numbers = #tpu.dot_dimension_numbers<[1], [0], [0], [1], [0, 0, 1, 1], [], []>} : vector<64x128xbf16>, vector<128x128xbf16>, vector<64x128xf32> -> vector<64x128xf32>
    %84 = arith.addf %78, %83 : vector<64x128xf32>
    %85 = vector.shape_cast %84 : vector<64x128xf32> to vector<8x8x128xf32>
    %c0_54 = arith.constant 0 : index
    %c0_55 = arith.constant 0 : index
    %c0_56 = arith.constant 0 : index
    %c0_57 = arith.constant 0 : index
    %86 = vector.load %arg6[%c0_54, %c0_55, %c0_56, %c0_57] : memref<1x8x8x128xf32, #tpu.memory_space<vmem>>, vector<1x8x8x128xf32>
    %87 = vector.shape_cast %86 : vector<1x8x8x128xf32> to vector<8x8x128xf32>
    %88 = vector.shape_cast %85 : vector<8x8x128xf32> to vector<1x8x8x128xf32>
    tpu.vector_store %arg6[%c0_54, %c0_55, %c0_56, %c0_57], %88 {strides = array<i32>} : memref<1x8x8x128xf32, #tpu.memory_space<vmem>>, vector<1x8x8x128xf32>,
    return
  }
  func.func @transform_0(%arg0: i32, %arg1: i32) -> (i32, i32, i32, i32) {
    %c0_i32 = arith.constant 0 : i32
    %c0_i32_0 = arith.constant 0 : i32
    %c0_i32_1 = arith.constant 0 : i32
    %c0_i32_2 = arith.constant 0 : i32
    return %arg0, %c0_i32, %c0_i32_0, %c0_i32_1 : i32, i32, i32, i32
  }
  func.func @transform_1(%arg0: i32, %arg1: i32) -> (i32, i32) {
    %c0_i32 = arith.constant 0 : i32
    %c0_i32_0 = arith.constant 0 : i32
    %c0_i32_1 = arith.constant 0 : i32
    return %c0_i32, %c0_i32_0 : i32, i32
  }
  func.func @transform_2(%arg0: i32, %arg1: i32) -> (i32, i32) {
    %c0_i32 = arith.constant 0 : i32
    %c0_i32_0 = arith.constant 0 : i32
    %c0_i32_1 = arith.constant 0 : i32
    return %c0_i32, %c0_i32_0 : i32, i32
  }
  func.func @transform_3(%arg0: i32, %arg1: i32) -> (i32, i32, i32, i32) {
    %c0_i32 = arith.constant 0 : i32
    %c0_i32_0 = arith.constant 0 : i32
    %c0_i32_1 = arith.constant 0 : i32
    %c0_i32_2 = arith.constant 0 : i32
    return %c0_i32, %c0_i32_0, %c0_i32_1, %arg1 : i32, i32, i32, i32
  }
  func.func @transform_4(%arg0: i32, %arg1: i32) -> (i32, i32, i32, i32) {
    %c0_i32 = arith.constant 0 : i32
    %c0_i32_0 = arith.constant 0 : i32
    %c0_i32_1 = arith.constant 0 : i32
    return %arg0, %c0_i32, %c0_i32_0, %arg1 : i32, i32, i32, i32
  }
}

module attributes {stable_mosaic.version = 11 : i64} {
  func.func @_dconv_kernel(%arg0: i32, %arg1: i32, %arg2: memref<1x10x10x128xf32, #tpu.memory_space<vmem>>, %arg3: memref<1x128xf32, #tpu.memory_space<vmem>>, %arg4: memref<1x128xf32, #tpu.memory_space<vmem>>, %arg5: memref<3x3x128x128xbf16, #tpu.memory_space<vmem>>, %arg6: memref<1x8x8x128xf32, #tpu.memory_space<vmem>>, %arg7: memref<1x128xf32, #tpu.memory_space<vmem>>, %arg8: memref<1x128xf32, #tpu.memory_space<vmem>>, %arg9: memref<128x128xbf16, #tpu.memory_space<vmem>>, %arg10: memref<1x8x8x128xf32, #tpu.memory_space<vmem>>) attributes {dimension_semantics = [#tpu.dimension_semantics<parallel>, #tpu.dimension_semantics<parallel>], iteration_bounds = array<i64: 2, 1>, scalar_prefetch = 0 : i64, scratch_operands = 0 : i64, tpu.core_type = #tpu.core_type<tc>, window_params = [{transform_indices = @transform_0, window_bounds = array<i64: 1, 10, 10, 128>}, {pipeline_mode = #tpu.pipeline_mode<synchronous>, transform_indices = @transform_1, window_bounds = array<i64: 1, 128>}, {pipeline_mode = #tpu.pipeline_mode<synchronous>, transform_indices = @transform_2, window_bounds = array<i64: 1, 128>}, {transform_indices = @transform_3, window_bounds = array<i64: 3, 3, 128, 128>}, {transform_indices = @transform_4, window_bounds = array<i64: 1, 8, 8, 128>}, {pipeline_mode = #tpu.pipeline_mode<synchronous>, transform_indices = @transform_5, window_bounds = array<i64: 1, 128>}, {pipeline_mode = #tpu.pipeline_mode<synchronous>, transform_indices = @transform_6, window_bounds = array<i64: 1, 128>}, {transform_indices = @transform_7, window_bounds = array<i64: 128, 128>}, {transform_indices = @transform_8, window_bounds = array<i64: 1, 8, 8, 128>}]} {
    %c0 = arith.constant 0 : index
    %c0_0 = arith.constant 0 : index
    %c0_1 = arith.constant 0 : index
    %c0_2 = arith.constant 0 : index
    %0 = vector.load %arg2[%c0, %c0_0, %c0_1, %c0_2] : memref<1x10x10x128xf32, #tpu.memory_space<vmem>>, vector<1x10x10x128xf32>
    %1 = vector.shape_cast %0 : vector<1x10x10x128xf32> to vector<10x10x128xf32>
    %c0_3 = arith.constant 0 : index
    %c0_4 = arith.constant 0 : index
    %2 = vector.load %arg3[%c0_3, %c0_4] : memref<1x128xf32, #tpu.memory_space<vmem>>, vector<1x128xf32>
    %3 = vector.shape_cast %2 : vector<1x128xf32> to vector<1x1x128xf32>
    %c0_5 = arith.constant 0 : index
    %c0_6 = arith.constant 0 : index
    %4 = vector.load %arg4[%c0_5, %c0_6] : memref<1x128xf32, #tpu.memory_space<vmem>>, vector<1x128xf32>
    %5 = vector.shape_cast %4 : vector<1x128xf32> to vector<1x1x128xf32>
    %6 = vector.broadcast %3 : vector<1x1x128xf32> to vector<10x10x128xf32>
    %7 = arith.mulf %1, %6 : vector<10x10x128xf32>
    %8 = vector.broadcast %5 : vector<1x1x128xf32> to vector<10x10x128xf32>
    %9 = arith.addf %7, %8 : vector<10x10x128xf32>
    %cst = arith.constant 0.000000e+00 : f32
    %10 = vector.broadcast %cst : f32 to vector<10x10x128xf32>
    %11 = arith.maximumf %9, %10 : vector<10x10x128xf32>
    %12 = tpu.iota {dimensions = array<i32: 0>} : vector<10x10x1xi32>
    %13 = tpu.iota {dimensions = array<i32: 1>} : vector<10x10x1xi32>
    %c1_i32 = arith.constant 1 : i32
    %14 = vector.broadcast %c1_i32 : i32 to vector<10x10x1xi32>
    %15 = arith.cmpi sge, %12, %14 : vector<10x10x1xi32>
    %c8_i32 = arith.constant 8 : i32
    %16 = vector.broadcast %c8_i32 : i32 to vector<10x10x1xi32>
    %17 = arith.cmpi sle, %12, %16 : vector<10x10x1xi32>
    %18 = arith.andi %15, %17 : vector<10x10x1xi1>
    %c1_i32_7 = arith.constant 1 : i32
    %19 = vector.broadcast %c1_i32_7 : i32 to vector<10x10x1xi32>
    %20 = arith.cmpi sge, %13, %19 : vector<10x10x1xi32>
    %21 = arith.andi %18, %20 : vector<10x10x1xi1>
    %c8_i32_8 = arith.constant 8 : i32
    %22 = vector.broadcast %c8_i32_8 : i32 to vector<10x10x1xi32>
    %23 = arith.cmpi sle, %13, %22 : vector<10x10x1xi32>
    %24 = arith.andi %21, %23 : vector<10x10x1xi1>
    %cst_9 = arith.constant 0.000000e+00 : f32
    %25 = vector.shape_cast %24 : vector<10x10x1xi1> to vector<10x10x1xi1>
    %26 = vector.broadcast %25 : vector<10x10x1xi1> to vector<10x10x128xi1>
    %27 = vector.broadcast %cst_9 : f32 to vector<10x10x128xf32>
    %28 = arith.select %26, %11, %27 : vector<10x10x128xi1>, vector<10x10x128xf32>
    %29 = arith.truncf %28 : vector<10x10x128xf32> to vector<10x10x128xbf16>
    %cst_10 = arith.constant 0.000000e+00 : f32
    %30 = vector.broadcast %cst_10 : f32 to vector<64x128xf32>
    %31 = vector.extract_strided_slice %29 {offsets = [0, 0, 0], sizes = [8, 8, 128], strides = [1, 1, 1]} : vector<10x10x128xbf16> to vector<8x8x128xbf16>
    %32 = vector.shape_cast %31 : vector<8x8x128xbf16> to vector<64x128xbf16>
    %c0_11 = arith.constant 0 : index
    %c0_12 = arith.constant 0 : index
    %c0_13 = arith.constant 0 : index
    %c0_14 = arith.constant 0 : index
    %33 = vector.load %arg5[%c0_11, %c0_12, %c0_13, %c0_14] : memref<3x3x128x128xbf16, #tpu.memory_space<vmem>>, vector<1x1x128x128xbf16>
    %34 = vector.shape_cast %33 : vector<1x1x128x128xbf16> to vector<128x128xbf16>
    %cst_15 = arith.constant dense<0.000000e+00> : vector<64x128xf32>
    %35 = tpu.matmul %32, %34, %cst_15 {dimension_numbers = #tpu.dot_dimension_numbers<[1], [0], [0], [1], [0, 0, 1, 1], [], []>} : vector<64x128xbf16>, vector<128x128xbf16>, vector<64x128xf32> -> vector<64x128xf32>
    %36 = arith.addf %30, %35 : vector<64x128xf32>
    %37 = vector.extract_strided_slice %29 {offsets = [0, 1, 0], sizes = [8, 8, 128], strides = [1, 1, 1]} : vector<10x10x128xbf16> to vector<8x8x128xbf16>
    %38 = vector.shape_cast %37 : vector<8x8x128xbf16> to vector<64x128xbf16>
    %c0_16 = arith.constant 0 : index
    %c1 = arith.constant 1 : index
    %c0_17 = arith.constant 0 : index
    %c0_18 = arith.constant 0 : index
    %39 = vector.load %arg5[%c0_16, %c1, %c0_17, %c0_18] : memref<3x3x128x128xbf16, #tpu.memory_space<vmem>>, vector<1x1x128x128xbf16>
    %40 = vector.shape_cast %39 : vector<1x1x128x128xbf16> to vector<128x128xbf16>
    %cst_19 = arith.constant dense<0.000000e+00> : vector<64x128xf32>
    %41 = tpu.matmul %38, %40, %cst_19 {dimension_numbers = #tpu.dot_dimension_numbers<[1], [0], [0], [1], [0, 0, 1, 1], [], []>} : vector<64x128xbf16>, vector<128x128xbf16>, vector<64x128xf32> -> vector<64x128xf32>
    %42 = arith.addf %36, %41 : vector<64x128xf32>
    %43 = vector.extract_strided_slice %29 {offsets = [0, 2, 0], sizes = [8, 8, 128], strides = [1, 1, 1]} : vector<10x10x128xbf16> to vector<8x8x128xbf16>
    %44 = vector.shape_cast %43 : vector<8x8x128xbf16> to vector<64x128xbf16>
    %c0_20 = arith.constant 0 : index
    %c2 = arith.constant 2 : index
    %c0_21 = arith.constant 0 : index
    %c0_22 = arith.constant 0 : index
    %45 = vector.load %arg5[%c0_20, %c2, %c0_21, %c0_22] : memref<3x3x128x128xbf16, #tpu.memory_space<vmem>>, vector<1x1x128x128xbf16>
    %46 = vector.shape_cast %45 : vector<1x1x128x128xbf16> to vector<128x128xbf16>
    %cst_23 = arith.constant dense<0.000000e+00> : vector<64x128xf32>
    %47 = tpu.matmul %44, %46, %cst_23 {dimension_numbers = #tpu.dot_dimension_numbers<[1], [0], [0], [1], [0, 0, 1, 1], [], []>} : vector<64x128xbf16>, vector<128x128xbf16>, vector<64x128xf32> -> vector<64x128xf32>
    %48 = arith.addf %42, %47 : vector<64x128xf32>
    %49 = vector.extract_strided_slice %29 {offsets = [1, 0, 0], sizes = [8, 8, 128], strides = [1, 1, 1]} : vector<10x10x128xbf16> to vector<8x8x128xbf16>
    %50 = vector.shape_cast %49 : vector<8x8x128xbf16> to vector<64x128xbf16>
    %c1_24 = arith.constant 1 : index
    %c0_25 = arith.constant 0 : index
    %c0_26 = arith.constant 0 : index
    %c0_27 = arith.constant 0 : index
    %51 = vector.load %arg5[%c1_24, %c0_25, %c0_26, %c0_27] : memref<3x3x128x128xbf16, #tpu.memory_space<vmem>>, vector<1x1x128x128xbf16>
    %52 = vector.shape_cast %51 : vector<1x1x128x128xbf16> to vector<128x128xbf16>
    %cst_28 = arith.constant dense<0.000000e+00> : vector<64x128xf32>
    %53 = tpu.matmul %50, %52, %cst_28 {dimension_numbers = #tpu.dot_dimension_numbers<[1], [0], [0], [1], [0, 0, 1, 1], [], []>} : vector<64x128xbf16>, vector<128x128xbf16>, vector<64x128xf32> -> vector<64x128xf32>
    %54 = arith.addf %48, %53 : vector<64x128xf32>
    %55 = vector.extract_strided_slice %29 {offsets = [1, 1, 0], sizes = [8, 8, 128], strides = [1, 1, 1]} : vector<10x10x128xbf16> to vector<8x8x128xbf16>
    %56 = vector.shape_cast %55 : vector<8x8x128xbf16> to vector<64x128xbf16>
    %c1_29 = arith.constant 1 : index
    %c1_30 = arith.constant 1 : index
    %c0_31 = arith.constant 0 : index
    %c0_32 = arith.constant 0 : index
    %57 = vector.load %arg5[%c1_29, %c1_30, %c0_31, %c0_32] : memref<3x3x128x128xbf16, #tpu.memory_space<vmem>>, vector<1x1x128x128xbf16>
    %58 = vector.shape_cast %57 : vector<1x1x128x128xbf16> to vector<128x128xbf16>
    %cst_33 = arith.constant dense<0.000000e+00> : vector<64x128xf32>
    %59 = tpu.matmul %56, %58, %cst_33 {dimension_numbers = #tpu.dot_dimension_numbers<[1], [0], [0], [1], [0, 0, 1, 1], [], []>} : vector<64x128xbf16>, vector<128x128xbf16>, vector<64x128xf32> -> vector<64x128xf32>
    %60 = arith.addf %54, %59 : vector<64x128xf32>
    %61 = vector.extract_strided_slice %29 {offsets = [1, 2, 0], sizes = [8, 8, 128], strides = [1, 1, 1]} : vector<10x10x128xbf16> to vector<8x8x128xbf16>
    %62 = vector.shape_cast %61 : vector<8x8x128xbf16> to vector<64x128xbf16>
    %c1_34 = arith.constant 1 : index
    %c2_35 = arith.constant 2 : index
    %c0_36 = arith.constant 0 : index
    %c0_37 = arith.constant 0 : index
    %63 = vector.load %arg5[%c1_34, %c2_35, %c0_36, %c0_37] : memref<3x3x128x128xbf16, #tpu.memory_space<vmem>>, vector<1x1x128x128xbf16>
    %64 = vector.shape_cast %63 : vector<1x1x128x128xbf16> to vector<128x128xbf16>
    %cst_38 = arith.constant dense<0.000000e+00> : vector<64x128xf32>
    %65 = tpu.matmul %62, %64, %cst_38 {dimension_numbers = #tpu.dot_dimension_numbers<[1], [0], [0], [1], [0, 0, 1, 1], [], []>} : vector<64x128xbf16>, vector<128x128xbf16>, vector<64x128xf32> -> vector<64x128xf32>
    %66 = arith.addf %60, %65 : vector<64x128xf32>
    %67 = vector.extract_strided_slice %29 {offsets = [2, 0, 0], sizes = [8, 8, 128], strides = [1, 1, 1]} : vector<10x10x128xbf16> to vector<8x8x128xbf16>
    %68 = vector.shape_cast %67 : vector<8x8x128xbf16> to vector<64x128xbf16>
    %c2_39 = arith.constant 2 : index
    %c0_40 = arith.constant 0 : index
    %c0_41 = arith.constant 0 : index
    %c0_42 = arith.constant 0 : index
    %69 = vector.load %arg5[%c2_39, %c0_40, %c0_41, %c0_42] : memref<3x3x128x128xbf16, #tpu.memory_space<vmem>>, vector<1x1x128x128xbf16>
    %70 = vector.shape_cast %69 : vector<1x1x128x128xbf16> to vector<128x128xbf16>
    %cst_43 = arith.constant dense<0.000000e+00> : vector<64x128xf32>
    %71 = tpu.matmul %68, %70, %cst_43 {dimension_numbers = #tpu.dot_dimension_numbers<[1], [0], [0], [1], [0, 0, 1, 1], [], []>} : vector<64x128xbf16>, vector<128x128xbf16>, vector<64x128xf32> -> vector<64x128xf32>
    %72 = arith.addf %66, %71 : vector<64x128xf32>
    %73 = vector.extract_strided_slice %29 {offsets = [2, 1, 0], sizes = [8, 8, 128], strides = [1, 1, 1]} : vector<10x10x128xbf16> to vector<8x8x128xbf16>
    %74 = vector.shape_cast %73 : vector<8x8x128xbf16> to vector<64x128xbf16>
    %c2_44 = arith.constant 2 : index
    %c1_45 = arith.constant 1 : index
    %c0_46 = arith.constant 0 : index
    %c0_47 = arith.constant 0 : index
    %75 = vector.load %arg5[%c2_44, %c1_45, %c0_46, %c0_47] : memref<3x3x128x128xbf16, #tpu.memory_space<vmem>>, vector<1x1x128x128xbf16>
    %76 = vector.shape_cast %75 : vector<1x1x128x128xbf16> to vector<128x128xbf16>
    %cst_48 = arith.constant dense<0.000000e+00> : vector<64x128xf32>
    %77 = tpu.matmul %74, %76, %cst_48 {dimension_numbers = #tpu.dot_dimension_numbers<[1], [0], [0], [1], [0, 0, 1, 1], [], []>} : vector<64x128xbf16>, vector<128x128xbf16>, vector<64x128xf32> -> vector<64x128xf32>
    %78 = arith.addf %72, %77 : vector<64x128xf32>
    %79 = vector.extract_strided_slice %29 {offsets = [2, 2, 0], sizes = [8, 8, 128], strides = [1, 1, 1]} : vector<10x10x128xbf16> to vector<8x8x128xbf16>
    %80 = vector.shape_cast %79 : vector<8x8x128xbf16> to vector<64x128xbf16>
    %c2_49 = arith.constant 2 : index
    %c2_50 = arith.constant 2 : index
    %c0_51 = arith.constant 0 : index
    %c0_52 = arith.constant 0 : index
    %81 = vector.load %arg5[%c2_49, %c2_50, %c0_51, %c0_52] : memref<3x3x128x128xbf16, #tpu.memory_space<vmem>>, vector<1x1x128x128xbf16>
    %82 = vector.shape_cast %81 : vector<1x1x128x128xbf16> to vector<128x128xbf16>
    %cst_53 = arith.constant dense<0.000000e+00> : vector<64x128xf32>
    %83 = tpu.matmul %80, %82, %cst_53 {dimension_numbers = #tpu.dot_dimension_numbers<[1], [0], [0], [1], [0, 0, 1, 1], [], []>} : vector<64x128xbf16>, vector<128x128xbf16>, vector<64x128xf32> -> vector<64x128xf32>
    %84 = arith.addf %78, %83 : vector<64x128xf32>
    %c0_54 = arith.constant 0 : index
    %c0_55 = arith.constant 0 : index
    %85 = vector.load %arg7[%c0_54, %c0_55] : memref<1x128xf32, #tpu.memory_space<vmem>>, vector<1x128xf32>
    %86 = vector.shape_cast %85 : vector<1x128xf32> to vector<1x1x128xf32>
    %c0_56 = arith.constant 0 : index
    %c0_57 = arith.constant 0 : index
    %87 = vector.load %arg8[%c0_56, %c0_57] : memref<1x128xf32, #tpu.memory_space<vmem>>, vector<1x128xf32>
    %88 = vector.shape_cast %87 : vector<1x128xf32> to vector<1x1x128xf32>
    %c0_58 = arith.constant 0 : index
    %c0_59 = arith.constant 0 : index
    %c0_60 = arith.constant 0 : index
    %c0_61 = arith.constant 0 : index
    %89 = vector.load %arg6[%c0_58, %c0_59, %c0_60, %c0_61] : memref<1x8x8x128xf32, #tpu.memory_space<vmem>>, vector<1x8x8x128xf32>
    %90 = vector.shape_cast %89 : vector<1x8x8x128xf32> to vector<8x8x128xf32>
    %91 = vector.broadcast %86 : vector<1x1x128xf32> to vector<8x8x128xf32>
    %92 = arith.mulf %90, %91 : vector<8x8x128xf32>
    %93 = vector.broadcast %88 : vector<1x1x128xf32> to vector<8x8x128xf32>
    %94 = arith.addf %92, %93 : vector<8x8x128xf32>
    %cst_62 = arith.constant 0.000000e+00 : f32
    %95 = vector.broadcast %cst_62 : f32 to vector<8x8x128xf32>
    %96 = arith.maximumf %94, %95 : vector<8x8x128xf32>
    %97 = vector.shape_cast %96 : vector<8x8x128xf32> to vector<64x128xf32>
    %98 = arith.truncf %97 : vector<64x128xf32> to vector<64x128xbf16>
    %c0_63 = arith.constant 0 : index
    %c0_64 = arith.constant 0 : index
    %99 = vector.load %arg9[%c0_63, %c0_64] : memref<128x128xbf16, #tpu.memory_space<vmem>>, vector<128x128xbf16>
    %cst_65 = arith.constant dense<0.000000e+00> : vector<64x128xf32>
    %100 = tpu.matmul %98, %99, %cst_65 {dimension_numbers = #tpu.dot_dimension_numbers<[1], [0], [0], [1], [0, 0, 1, 1], [], []>} : vector<64x128xbf16>, vector<128x128xbf16>, vector<64x128xf32> -> vector<64x128xf32>
    %101 = arith.addf %84, %100 : vector<64x128xf32>
    %102 = vector.shape_cast %101 : vector<64x128xf32> to vector<8x8x128xf32>
    %c0_66 = arith.constant 0 : index
    %c0_67 = arith.constant 0 : index
    %c0_68 = arith.constant 0 : index
    %c0_69 = arith.constant 0 : index
    %103 = vector.load %arg10[%c0_66, %c0_67, %c0_68, %c0_69] : memref<1x8x8x128xf32, #tpu.memory_space<vmem>>, vector<1x8x8x128xf32>
    %104 = vector.shape_cast %103 : vector<1x8x8x128xf32> to vector<8x8x128xf32>
    %105 = vector.shape_cast %102 : vector<8x8x128xf32> to vector<1x8x8x128xf32>
    tpu.vector_store %arg10[%c0_66, %c0_67, %c0_68, %c0_69], %105 {strides = array<i32>} : memref<1x8x8x128xf32, #tpu.memory_space<vmem>>, vector<1x8x8x128xf32>,
    return
  }
  func.func @transform_0(%arg0: i32, %arg1: i32) -> (i32, i32, i32, i32) {
    %c0_i32 = arith.constant 0 : i32
    %c0_i32_0 = arith.constant 0 : i32
    %c0_i32_1 = arith.constant 0 : i32
    %c0_i32_2 = arith.constant 0 : i32
    return %arg0, %c0_i32, %c0_i32_0, %c0_i32_1 : i32, i32, i32, i32
  }
  func.func @transform_1(%arg0: i32, %arg1: i32) -> (i32, i32) {
    %c0_i32 = arith.constant 0 : i32
    %c0_i32_0 = arith.constant 0 : i32
    %c0_i32_1 = arith.constant 0 : i32
    return %c0_i32, %c0_i32_0 : i32, i32
  }
  func.func @transform_2(%arg0: i32, %arg1: i32) -> (i32, i32) {
    %c0_i32 = arith.constant 0 : i32
    %c0_i32_0 = arith.constant 0 : i32
    %c0_i32_1 = arith.constant 0 : i32
    return %c0_i32, %c0_i32_0 : i32, i32
  }
  func.func @transform_3(%arg0: i32, %arg1: i32) -> (i32, i32, i32, i32) {
    %c0_i32 = arith.constant 0 : i32
    %c0_i32_0 = arith.constant 0 : i32
    %c0_i32_1 = arith.constant 0 : i32
    %c0_i32_2 = arith.constant 0 : i32
    return %c0_i32, %c0_i32_0, %c0_i32_1, %arg1 : i32, i32, i32, i32
  }
  func.func @transform_4(%arg0: i32, %arg1: i32) -> (i32, i32, i32, i32) {
    %c0_i32 = arith.constant 0 : i32
    %c0_i32_0 = arith.constant 0 : i32
    %c0_i32_1 = arith.constant 0 : i32
    %c0_i32_2 = arith.constant 0 : i32
    return %arg0, %c0_i32, %c0_i32_0, %c0_i32_1 : i32, i32, i32, i32
  }
  func.func @transform_5(%arg0: i32, %arg1: i32) -> (i32, i32) {
    %c0_i32 = arith.constant 0 : i32
    %c0_i32_0 = arith.constant 0 : i32
    %c0_i32_1 = arith.constant 0 : i32
    return %c0_i32, %c0_i32_0 : i32, i32
  }
  func.func @transform_6(%arg0: i32, %arg1: i32) -> (i32, i32) {
    %c0_i32 = arith.constant 0 : i32
    %c0_i32_0 = arith.constant 0 : i32
    %c0_i32_1 = arith.constant 0 : i32
    return %c0_i32, %c0_i32_0 : i32, i32
  }
  func.func @transform_7(%arg0: i32, %arg1: i32) -> (i32, i32) {
    %c0_i32 = arith.constant 0 : i32
    %c0_i32_0 = arith.constant 0 : i32
    return %c0_i32, %arg1 : i32, i32
  }
  func.func @transform_8(%arg0: i32, %arg1: i32) -> (i32, i32, i32, i32) {
    %c0_i32 = arith.constant 0 : i32
    %c0_i32_0 = arith.constant 0 : i32
    %c0_i32_1 = arith.constant 0 : i32
    return %arg0, %c0_i32, %c0_i32_0, %arg1 : i32, i32, i32, i32
  }
}

module attributes {stable_mosaic.version = 11 : i64} {
  func.func @_dconv_kernel(%arg0: i32, %arg1: i32, %arg2: memref<1x10x10x128xf32, #tpu.memory_space<vmem>>, %arg3: memref<1x128xf32, #tpu.memory_space<vmem>>, %arg4: memref<1x128xf32, #tpu.memory_space<vmem>>, %arg5: memref<3x3x128x128xbf16, #tpu.memory_space<vmem>>, %arg6: memref<1x8x8x128xf32, #tpu.memory_space<vmem>>, %arg7: memref<1x8x8x128xf32, #tpu.memory_space<vmem>>) attributes {dimension_semantics = [#tpu.dimension_semantics<parallel>, #tpu.dimension_semantics<parallel>], iteration_bounds = array<i64: 2, 1>, scalar_prefetch = 0 : i64, scratch_operands = 0 : i64, tpu.core_type = #tpu.core_type<tc>, window_params = [{transform_indices = @transform_0, window_bounds = array<i64: 1, 10, 10, 128>}, {pipeline_mode = #tpu.pipeline_mode<synchronous>, transform_indices = @transform_1, window_bounds = array<i64: 1, 128>}, {pipeline_mode = #tpu.pipeline_mode<synchronous>, transform_indices = @transform_2, window_bounds = array<i64: 1, 128>}, {transform_indices = @transform_3, window_bounds = array<i64: 3, 3, 128, 128>}, {transform_indices = @transform_4, window_bounds = array<i64: 1, 8, 8, 128>}, {transform_indices = @transform_5, window_bounds = array<i64: 1, 8, 8, 128>}]} {
    %c0 = arith.constant 0 : index
    %c0_0 = arith.constant 0 : index
    %c0_1 = arith.constant 0 : index
    %c0_2 = arith.constant 0 : index
    %0 = vector.load %arg2[%c0, %c0_0, %c0_1, %c0_2] : memref<1x10x10x128xf32, #tpu.memory_space<vmem>>, vector<1x10x10x128xf32>
    %1 = vector.shape_cast %0 : vector<1x10x10x128xf32> to vector<10x10x128xf32>
    %c0_3 = arith.constant 0 : index
    %c0_4 = arith.constant 0 : index
    %2 = vector.load %arg3[%c0_3, %c0_4] : memref<1x128xf32, #tpu.memory_space<vmem>>, vector<1x128xf32>
    %3 = vector.shape_cast %2 : vector<1x128xf32> to vector<1x1x128xf32>
    %c0_5 = arith.constant 0 : index
    %c0_6 = arith.constant 0 : index
    %4 = vector.load %arg4[%c0_5, %c0_6] : memref<1x128xf32, #tpu.memory_space<vmem>>, vector<1x128xf32>
    %5 = vector.shape_cast %4 : vector<1x128xf32> to vector<1x1x128xf32>
    %6 = vector.broadcast %3 : vector<1x1x128xf32> to vector<10x10x128xf32>
    %7 = arith.mulf %1, %6 : vector<10x10x128xf32>
    %8 = vector.broadcast %5 : vector<1x1x128xf32> to vector<10x10x128xf32>
    %9 = arith.addf %7, %8 : vector<10x10x128xf32>
    %cst = arith.constant 0.000000e+00 : f32
    %10 = vector.broadcast %cst : f32 to vector<10x10x128xf32>
    %11 = arith.maximumf %9, %10 : vector<10x10x128xf32>
    %12 = tpu.iota {dimensions = array<i32: 0>} : vector<10x10x1xi32>
    %13 = tpu.iota {dimensions = array<i32: 1>} : vector<10x10x1xi32>
    %c1_i32 = arith.constant 1 : i32
    %14 = vector.broadcast %c1_i32 : i32 to vector<10x10x1xi32>
    %15 = arith.cmpi sge, %12, %14 : vector<10x10x1xi32>
    %c8_i32 = arith.constant 8 : i32
    %16 = vector.broadcast %c8_i32 : i32 to vector<10x10x1xi32>
    %17 = arith.cmpi sle, %12, %16 : vector<10x10x1xi32>
    %18 = arith.andi %15, %17 : vector<10x10x1xi1>
    %c1_i32_7 = arith.constant 1 : i32
    %19 = vector.broadcast %c1_i32_7 : i32 to vector<10x10x1xi32>
    %20 = arith.cmpi sge, %13, %19 : vector<10x10x1xi32>
    %21 = arith.andi %18, %20 : vector<10x10x1xi1>
    %c8_i32_8 = arith.constant 8 : i32
    %22 = vector.broadcast %c8_i32_8 : i32 to vector<10x10x1xi32>
    %23 = arith.cmpi sle, %13, %22 : vector<10x10x1xi32>
    %24 = arith.andi %21, %23 : vector<10x10x1xi1>
    %cst_9 = arith.constant 0.000000e+00 : f32
    %25 = vector.shape_cast %24 : vector<10x10x1xi1> to vector<10x10x1xi1>
    %26 = vector.broadcast %25 : vector<10x10x1xi1> to vector<10x10x128xi1>
    %27 = vector.broadcast %cst_9 : f32 to vector<10x10x128xf32>
    %28 = arith.select %26, %11, %27 : vector<10x10x128xi1>, vector<10x10x128xf32>
    %29 = arith.truncf %28 : vector<10x10x128xf32> to vector<10x10x128xbf16>
    %cst_10 = arith.constant 0.000000e+00 : f32
    %30 = vector.broadcast %cst_10 : f32 to vector<64x128xf32>
    %31 = vector.extract_strided_slice %29 {offsets = [0, 0, 0], sizes = [8, 8, 128], strides = [1, 1, 1]} : vector<10x10x128xbf16> to vector<8x8x128xbf16>
    %32 = vector.shape_cast %31 : vector<8x8x128xbf16> to vector<64x128xbf16>
    %c0_11 = arith.constant 0 : index
    %c0_12 = arith.constant 0 : index
    %c0_13 = arith.constant 0 : index
    %c0_14 = arith.constant 0 : index
    %33 = vector.load %arg5[%c0_11, %c0_12, %c0_13, %c0_14] : memref<3x3x128x128xbf16, #tpu.memory_space<vmem>>, vector<1x1x128x128xbf16>
    %34 = vector.shape_cast %33 : vector<1x1x128x128xbf16> to vector<128x128xbf16>
    %cst_15 = arith.constant dense<0.000000e+00> : vector<64x128xf32>
    %35 = tpu.matmul %32, %34, %cst_15 {dimension_numbers = #tpu.dot_dimension_numbers<[1], [0], [0], [1], [0, 0, 1, 1], [], []>} : vector<64x128xbf16>, vector<128x128xbf16>, vector<64x128xf32> -> vector<64x128xf32>
    %36 = arith.addf %30, %35 : vector<64x128xf32>
    %37 = vector.extract_strided_slice %29 {offsets = [0, 1, 0], sizes = [8, 8, 128], strides = [1, 1, 1]} : vector<10x10x128xbf16> to vector<8x8x128xbf16>
    %38 = vector.shape_cast %37 : vector<8x8x128xbf16> to vector<64x128xbf16>
    %c0_16 = arith.constant 0 : index
    %c1 = arith.constant 1 : index
    %c0_17 = arith.constant 0 : index
    %c0_18 = arith.constant 0 : index
    %39 = vector.load %arg5[%c0_16, %c1, %c0_17, %c0_18] : memref<3x3x128x128xbf16, #tpu.memory_space<vmem>>, vector<1x1x128x128xbf16>
    %40 = vector.shape_cast %39 : vector<1x1x128x128xbf16> to vector<128x128xbf16>
    %cst_19 = arith.constant dense<0.000000e+00> : vector<64x128xf32>
    %41 = tpu.matmul %38, %40, %cst_19 {dimension_numbers = #tpu.dot_dimension_numbers<[1], [0], [0], [1], [0, 0, 1, 1], [], []>} : vector<64x128xbf16>, vector<128x128xbf16>, vector<64x128xf32> -> vector<64x128xf32>
    %42 = arith.addf %36, %41 : vector<64x128xf32>
    %43 = vector.extract_strided_slice %29 {offsets = [0, 2, 0], sizes = [8, 8, 128], strides = [1, 1, 1]} : vector<10x10x128xbf16> to vector<8x8x128xbf16>
    %44 = vector.shape_cast %43 : vector<8x8x128xbf16> to vector<64x128xbf16>
    %c0_20 = arith.constant 0 : index
    %c2 = arith.constant 2 : index
    %c0_21 = arith.constant 0 : index
    %c0_22 = arith.constant 0 : index
    %45 = vector.load %arg5[%c0_20, %c2, %c0_21, %c0_22] : memref<3x3x128x128xbf16, #tpu.memory_space<vmem>>, vector<1x1x128x128xbf16>
    %46 = vector.shape_cast %45 : vector<1x1x128x128xbf16> to vector<128x128xbf16>
    %cst_23 = arith.constant dense<0.000000e+00> : vector<64x128xf32>
    %47 = tpu.matmul %44, %46, %cst_23 {dimension_numbers = #tpu.dot_dimension_numbers<[1], [0], [0], [1], [0, 0, 1, 1], [], []>} : vector<64x128xbf16>, vector<128x128xbf16>, vector<64x128xf32> -> vector<64x128xf32>
    %48 = arith.addf %42, %47 : vector<64x128xf32>
    %49 = vector.extract_strided_slice %29 {offsets = [1, 0, 0], sizes = [8, 8, 128], strides = [1, 1, 1]} : vector<10x10x128xbf16> to vector<8x8x128xbf16>
    %50 = vector.shape_cast %49 : vector<8x8x128xbf16> to vector<64x128xbf16>
    %c1_24 = arith.constant 1 : index
    %c0_25 = arith.constant 0 : index
    %c0_26 = arith.constant 0 : index
    %c0_27 = arith.constant 0 : index
    %51 = vector.load %arg5[%c1_24, %c0_25, %c0_26, %c0_27] : memref<3x3x128x128xbf16, #tpu.memory_space<vmem>>, vector<1x1x128x128xbf16>
    %52 = vector.shape_cast %51 : vector<1x1x128x128xbf16> to vector<128x128xbf16>
    %cst_28 = arith.constant dense<0.000000e+00> : vector<64x128xf32>
    %53 = tpu.matmul %50, %52, %cst_28 {dimension_numbers = #tpu.dot_dimension_numbers<[1], [0], [0], [1], [0, 0, 1, 1], [], []>} : vector<64x128xbf16>, vector<128x128xbf16>, vector<64x128xf32> -> vector<64x128xf32>
    %54 = arith.addf %48, %53 : vector<64x128xf32>
    %55 = vector.extract_strided_slice %29 {offsets = [1, 1, 0], sizes = [8, 8, 128], strides = [1, 1, 1]} : vector<10x10x128xbf16> to vector<8x8x128xbf16>
    %56 = vector.shape_cast %55 : vector<8x8x128xbf16> to vector<64x128xbf16>
    %c1_29 = arith.constant 1 : index
    %c1_30 = arith.constant 1 : index
    %c0_31 = arith.constant 0 : index
    %c0_32 = arith.constant 0 : index
    %57 = vector.load %arg5[%c1_29, %c1_30, %c0_31, %c0_32] : memref<3x3x128x128xbf16, #tpu.memory_space<vmem>>, vector<1x1x128x128xbf16>
    %58 = vector.shape_cast %57 : vector<1x1x128x128xbf16> to vector<128x128xbf16>
    %cst_33 = arith.constant dense<0.000000e+00> : vector<64x128xf32>
    %59 = tpu.matmul %56, %58, %cst_33 {dimension_numbers = #tpu.dot_dimension_numbers<[1], [0], [0], [1], [0, 0, 1, 1], [], []>} : vector<64x128xbf16>, vector<128x128xbf16>, vector<64x128xf32> -> vector<64x128xf32>
    %60 = arith.addf %54, %59 : vector<64x128xf32>
    %61 = vector.extract_strided_slice %29 {offsets = [1, 2, 0], sizes = [8, 8, 128], strides = [1, 1, 1]} : vector<10x10x128xbf16> to vector<8x8x128xbf16>
    %62 = vector.shape_cast %61 : vector<8x8x128xbf16> to vector<64x128xbf16>
    %c1_34 = arith.constant 1 : index
    %c2_35 = arith.constant 2 : index
    %c0_36 = arith.constant 0 : index
    %c0_37 = arith.constant 0 : index
    %63 = vector.load %arg5[%c1_34, %c2_35, %c0_36, %c0_37] : memref<3x3x128x128xbf16, #tpu.memory_space<vmem>>, vector<1x1x128x128xbf16>
    %64 = vector.shape_cast %63 : vector<1x1x128x128xbf16> to vector<128x128xbf16>
    %cst_38 = arith.constant dense<0.000000e+00> : vector<64x128xf32>
    %65 = tpu.matmul %62, %64, %cst_38 {dimension_numbers = #tpu.dot_dimension_numbers<[1], [0], [0], [1], [0, 0, 1, 1], [], []>} : vector<64x128xbf16>, vector<128x128xbf16>, vector<64x128xf32> -> vector<64x128xf32>
    %66 = arith.addf %60, %65 : vector<64x128xf32>
    %67 = vector.extract_strided_slice %29 {offsets = [2, 0, 0], sizes = [8, 8, 128], strides = [1, 1, 1]} : vector<10x10x128xbf16> to vector<8x8x128xbf16>
    %68 = vector.shape_cast %67 : vector<8x8x128xbf16> to vector<64x128xbf16>
    %c2_39 = arith.constant 2 : index
    %c0_40 = arith.constant 0 : index
    %c0_41 = arith.constant 0 : index
    %c0_42 = arith.constant 0 : index
    %69 = vector.load %arg5[%c2_39, %c0_40, %c0_41, %c0_42] : memref<3x3x128x128xbf16, #tpu.memory_space<vmem>>, vector<1x1x128x128xbf16>
    %70 = vector.shape_cast %69 : vector<1x1x128x128xbf16> to vector<128x128xbf16>
    %cst_43 = arith.constant dense<0.000000e+00> : vector<64x128xf32>
    %71 = tpu.matmul %68, %70, %cst_43 {dimension_numbers = #tpu.dot_dimension_numbers<[1], [0], [0], [1], [0, 0, 1, 1], [], []>} : vector<64x128xbf16>, vector<128x128xbf16>, vector<64x128xf32> -> vector<64x128xf32>
    %72 = arith.addf %66, %71 : vector<64x128xf32>
    %73 = vector.extract_strided_slice %29 {offsets = [2, 1, 0], sizes = [8, 8, 128], strides = [1, 1, 1]} : vector<10x10x128xbf16> to vector<8x8x128xbf16>
    %74 = vector.shape_cast %73 : vector<8x8x128xbf16> to vector<64x128xbf16>
    %c2_44 = arith.constant 2 : index
    %c1_45 = arith.constant 1 : index
    %c0_46 = arith.constant 0 : index
    %c0_47 = arith.constant 0 : index
    %75 = vector.load %arg5[%c2_44, %c1_45, %c0_46, %c0_47] : memref<3x3x128x128xbf16, #tpu.memory_space<vmem>>, vector<1x1x128x128xbf16>
    %76 = vector.shape_cast %75 : vector<1x1x128x128xbf16> to vector<128x128xbf16>
    %cst_48 = arith.constant dense<0.000000e+00> : vector<64x128xf32>
    %77 = tpu.matmul %74, %76, %cst_48 {dimension_numbers = #tpu.dot_dimension_numbers<[1], [0], [0], [1], [0, 0, 1, 1], [], []>} : vector<64x128xbf16>, vector<128x128xbf16>, vector<64x128xf32> -> vector<64x128xf32>
    %78 = arith.addf %72, %77 : vector<64x128xf32>
    %79 = vector.extract_strided_slice %29 {offsets = [2, 2, 0], sizes = [8, 8, 128], strides = [1, 1, 1]} : vector<10x10x128xbf16> to vector<8x8x128xbf16>
    %80 = vector.shape_cast %79 : vector<8x8x128xbf16> to vector<64x128xbf16>
    %c2_49 = arith.constant 2 : index
    %c2_50 = arith.constant 2 : index
    %c0_51 = arith.constant 0 : index
    %c0_52 = arith.constant 0 : index
    %81 = vector.load %arg5[%c2_49, %c2_50, %c0_51, %c0_52] : memref<3x3x128x128xbf16, #tpu.memory_space<vmem>>, vector<1x1x128x128xbf16>
    %82 = vector.shape_cast %81 : vector<1x1x128x128xbf16> to vector<128x128xbf16>
    %cst_53 = arith.constant dense<0.000000e+00> : vector<64x128xf32>
    %83 = tpu.matmul %80, %82, %cst_53 {dimension_numbers = #tpu.dot_dimension_numbers<[1], [0], [0], [1], [0, 0, 1, 1], [], []>} : vector<64x128xbf16>, vector<128x128xbf16>, vector<64x128xf32> -> vector<64x128xf32>
    %84 = arith.addf %78, %83 : vector<64x128xf32>
    %c0_54 = arith.constant 0 : index
    %c0_55 = arith.constant 0 : index
    %c0_56 = arith.constant 0 : index
    %c0_57 = arith.constant 0 : index
    %85 = vector.load %arg6[%c0_54, %c0_55, %c0_56, %c0_57] : memref<1x8x8x128xf32, #tpu.memory_space<vmem>>, vector<1x8x8x128xf32>
    %86 = vector.shape_cast %85 : vector<1x8x8x128xf32> to vector<8x8x128xf32>
    %87 = vector.shape_cast %86 : vector<8x8x128xf32> to vector<64x128xf32>
    %88 = arith.addf %84, %87 : vector<64x128xf32>
    %89 = vector.shape_cast %88 : vector<64x128xf32> to vector<8x8x128xf32>
    %c0_58 = arith.constant 0 : index
    %c0_59 = arith.constant 0 : index
    %c0_60 = arith.constant 0 : index
    %c0_61 = arith.constant 0 : index
    %90 = vector.load %arg7[%c0_58, %c0_59, %c0_60, %c0_61] : memref<1x8x8x128xf32, #tpu.memory_space<vmem>>, vector<1x8x8x128xf32>
    %91 = vector.shape_cast %90 : vector<1x8x8x128xf32> to vector<8x8x128xf32>
    %92 = vector.shape_cast %89 : vector<8x8x128xf32> to vector<1x8x8x128xf32>
    tpu.vector_store %arg7[%c0_58, %c0_59, %c0_60, %c0_61], %92 {strides = array<i32>} : memref<1x8x8x128xf32, #tpu.memory_space<vmem>>, vector<1x8x8x128xf32>,
    return
  }
  func.func @transform_0(%arg0: i32, %arg1: i32) -> (i32, i32, i32, i32) {
    %c0_i32 = arith.constant 0 : i32
    %c0_i32_0 = arith.constant 0 : i32
    %c0_i32_1 = arith.constant 0 : i32
    %c0_i32_2 = arith.constant 0 : i32
    return %arg0, %c0_i32, %c0_i32_0, %c0_i32_1 : i32, i32, i32, i32
  }
  func.func @transform_1(%arg0: i32, %arg1: i32) -> (i32, i32) {
    %c0_i32 = arith.constant 0 : i32
    %c0_i32_0 = arith.constant 0 : i32
    %c0_i32_1 = arith.constant 0 : i32
    return %c0_i32, %c0_i32_0 : i32, i32
  }
  func.func @transform_2(%arg0: i32, %arg1: i32) -> (i32, i32) {
    %c0_i32 = arith.constant 0 : i32
    %c0_i32_0 = arith.constant 0 : i32
    %c0_i32_1 = arith.constant 0 : i32
    return %c0_i32, %c0_i32_0 : i32, i32
  }
  func.func @transform_3(%arg0: i32, %arg1: i32) -> (i32, i32, i32, i32) {
    %c0_i32 = arith.constant 0 : i32
    %c0_i32_0 = arith.constant 0 : i32
    %c0_i32_1 = arith.constant 0 : i32
    %c0_i32_2 = arith.constant 0 : i32
    return %c0_i32, %c0_i32_0, %c0_i32_1, %arg1 : i32, i32, i32, i32
  }
  func.func @transform_4(%arg0: i32, %arg1: i32) -> (i32, i32, i32, i32) {
    %c0_i32 = arith.constant 0 : i32
    %c0_i32_0 = arith.constant 0 : i32
    %c0_i32_1 = arith.constant 0 : i32
    return %arg0, %c0_i32, %c0_i32_0, %arg1 : i32, i32, i32, i32
  }
  func.func @transform_5(%arg0: i32, %arg1: i32) -> (i32, i32, i32, i32) {
    %c0_i32 = arith.constant 0 : i32
    %c0_i32_0 = arith.constant 0 : i32
    %c0_i32_1 = arith.constant 0 : i32
    return %arg0, %c0_i32, %c0_i32_0, %arg1 : i32, i32, i32, i32
  }
}

</mosaic_0001>

<llo_original>
// kernel: _lambda_.4
$region0: #{_lambda_.4}
  #allocation0 [shape = 'u32[]', space=smem, size = 0x4, offset = 0x4, fixed_abs, tag = 'smem constant byte address 0x4 - core index']
  #allocation1 [shape = 'u32[144,128]{1,0:T(1,128)}', space=vmem, size = 0x12000, scoped, tag = 'internal scratch']
  #allocation2 [shape = 'f32[128,128]{1,0:T(8,128)}', space=vmem, size = 0x10000, scoped, tag = 'scratch operand']
  %s0 = inlined_call_operand.hbm [shape: bf16[128,1152], index: 0, kind: input, shape index: {}]
  %s1 = inlined_call_operand.hbm [shape: bf16[1152,128], index: 1, kind: input, shape index: {}]
  %s2 = inlined_call_operand.hbm [shape: f32[128,128], index: 2, kind: output, shape index: {}]
  %s3 = sld [smem:[#allocation0]]
  $region57: #{_lambda_.4} parent=0
    _
  %s5 = ssub.s32 1, %s3
  %s6 = scalar_select 0, %s5, %s3
  $region1: #{_lambda_.4} parent=0
    #allocation3 [shape = 'u8[65536]{0}', space=vmem, size = 0x10000, scoped, tag = 'input window, operand 0']
    #allocation4 [shape = 's32[2]{0}', space=sflag, size = 0x8, scoped, tag = 'scoped memory for _lambda_.4']
    #allocation5 [shape = 's32[2]{0}', space=sflag, size = 0x8, scoped, tag = 'scoped memory for _lambda_.4']
    #allocation6 [shape = 'u8[65536]{0}', space=vmem, size = 0x10000, scoped, tag = 'input window, operand 1']
    #allocation7 [shape = 's32[2]{0}', space=sflag, size = 0x8, scoped, tag = 'scoped memory for _lambda_.4']
    #allocation8 [shape = 'u8[65536]{0}', space=vmem, size = 0x10000, scoped, tag = 'output window, operand 0, single buffered']
    %7 = vsyncpa [#allocation4], 0
    %s8 = scalar_lea.sflag [#allocation4], 1
    %9 = vsyncpa %s8, 0
    %10 = vsyncpa [#allocation7], 0
    %s11 = scalar_lea.sflag [#allocation7], 1
    %12 = vsyncpa %s11, 0
    %13 = vsyncpa [#allocation5], 0
    loop: start=0, step=1, limit=11
    $region2: #{_lambda_.4} parent=1 // loop_pre_header
      _
    $region3: #{_lambda_.4} parent=1 // loop_header
      %s15 = sphi 0, %s19
      %p16 = scmp.ge.s32.totalorder %s15, 11
      %s22 = sphi 0, %s41
      %s23 = sphi 0, %s37
      %s24 = sphi 0, %s33
      %s25 = sphi 0, %s22
      %s26 = sphi 0, %s23
      %s27 = sphi 0, %s24
      %s28 = sphi 0, %s25
      %s29 = sphi 0, %s26
      %s30 = sphi 0, %s27
      %s46 = sphi 0, %s48
      %s49 = sphi 0, %s46
      %s50 = sphi 0, %s49
      %s66 = sphi 0, %s50
      %s74 = sphi 0, %s76
      %s77 = sphi 0, %s74
      %s78 = sphi 0, %s77
      %s94 = sphi 0, %s78
      %s102 = sphi 0, %s104
      %s105 = sphi 0, %s102
      %s106 = sphi 0, %s105
      %s122 = sphi 0, %s106
    $region4: #{_lambda_.4} parent=1 // loop_header_branch
      %18 = sbr.rel (%p16) target = $region8
    $region5: #{_lambda_.4} parent=1 // loop_body
      %s20 = ssub.s32 %s15, 1
      %s21 = ssub.s32 %s15, 2
      %s31 = sadd.s32 1, %s24
      %p32 = scmp.ge.s32.totalorder %s31, 9
      %s33 = scalar_select %p32, 0, %s31
      %s34 = sadd.s32 1, %s23
      %s35 = scalar_select %p32, %s34, %s23
      %p36 = scmp.ge.s32.totalorder %s35, 1
      %s37 = scalar_select %p36, 0, %s35
      %s38 = sadd.s32 1, %s22
      %s39 = scalar_select %p36, %s38, %s22
      %p40 = scmp.ge.s32.totalorder %s39, 1
      %s41 = scalar_select %p40, 0, %s39
      %s42 = ssub.s32 %s22, %s41
      %s43 = ssub.s32 %s24, %s33
      %s44 = sor.u32 %s42, %s43
      %p45 = scmp.eq.s32.totalorder %s44, 0
      %s47 = sadd.s32 %s46, 1
      %s48 = scalar_select %p45, %s46, %s47
      %p51 = pneg %p45
      %p52 = scmp.eq.s32.totalorder %s15, 8
      %p53 = por %p51, %p52
      %p54 = scmp.ne.s32.totalorder %s46, %s49
      %p55 = scmp.eq.s32.totalorder %s15, 0
      %p56 = por %p54, %p55
      %p57 = scmp.ne.s32.totalorder %s46, %s49
      %p58 = scmp.eq.s32.totalorder %s20, 8
      %p59 = por %p57, %p58
      %p60 = scmp.ne.s32.totalorder %s49, %s50
      %p61 = scmp.eq.s32.totalorder %s20, 0
      %p62 = por %p60, %p61
      %p63 = scmp.ne.s32.totalorder %s49, %s50
      %p64 = scmp.eq.s32.totalorder %s21, 8
      %p65 = por %p63, %p64
      %p67 = scmp.ne.s32.totalorder %s50, %s66
      %p68 = scmp.eq.s32.totalorder %s21, 0
      %p69 = por %p67, %p68
      %s70 = ssub.s32 %s24, %s33
      %s71 = ssub.s32 %s23, %s37
      %s72 = sor.u32 %s70, %s71
      %p73 = scmp.eq.s32.totalorder %s72, 0
      %s75 = sadd.s32 %s74, 1
      %s76 = scalar_select %p73, %s74, %s75
      %p79 = pneg %p73
      %p80 = scmp.eq.s32.totalorder %s15, 8
      %p81 = por %p79, %p80
      %p82 = scmp.ne.s32.totalorder %s74, %s77
      %p83 = scmp.eq.s32.totalorder %s15, 0
      %p84 = por %p82, %p83
      %p85 = scmp.ne.s32.totalorder %s74, %s77
      %p86 = scmp.eq.s32.totalorder %s20, 8
      %p87 = por %p85, %p86
      %p88 = scmp.ne.s32.totalorder %s77, %s78
      %p89 = scmp.eq.s32.totalorder %s20, 0
      %p90 = por %p88, %p89
      %p91 = scmp.ne.s32.totalorder %s77, %s78
      %p92 = scmp.eq.s32.totalorder %s21, 8
      %p93 = por %p91, %p92
      %p95 = scmp.ne.s32.totalorder %s78, %s94
      %p96 = scmp.eq.s32.totalorder %s21, 0
      %p97 = por %p95, %p96
      %s98 = ssub.s32 %s22, %s41
      %s99 = ssub.s32 %s23, %s37
      %s100 = sor.u32 %s98, %s99
      %p101 = scmp.eq.s32.totalorder %s100, 0
      %s103 = sadd.s32 %s102, 1
      %s104 = scalar_select %p101, %s102, %s103
      %p107 = pneg %p101
      %p108 = scmp.eq.s32.totalorder %s15, 8
      %p109 = por %p107, %p108
      %p110 = scmp.ne.s32.totalorder %s102, %s105
      %p111 = scmp.eq.s32.totalorder %s15, 0
      %p112 = por %p110, %p111
      %p113 = scmp.ne.s32.totalorder %s102, %s105
      %p114 = scmp.eq.s32.totalorder %s20, 8
      %p115 = por %p113, %p114
      %p116 = scmp.ne.s32.totalorder %s105, %s106
      %p117 = scmp.eq.s32.totalorder %s20, 0
      %p118 = por %p116, %p117
      %p119 = scmp.ne.s32.totalorder %s105, %s106
      %p120 = scmp.eq.s32.totalorder %s21, 8
      %p121 = por %p119, %p120
      %p123 = scmp.ne.s32.totalorder %s106, %s122
      %p124 = scmp.eq.s32.totalorder %s21, 0
      %p125 = por %p123, %p124
      %p126 = scmp.le.s32.totalorder 1, %s15
      %p127 = scmp.lt.s32.totalorder %s15, 10
      %p128 = pnand %p126, %p127
      %p129 = pneg %p128
      // Predicated region
      $region9: #{_lambda_.4} parent=5 // pred_check
        _
      $region10: #{_lambda_.4} parent=5 // pred_check_branch
        %131 = sbr.rel (%p128) target = $region12
      $region11: #{_lambda_.4} parent=5 // pred_region
        %s132 = ssub.s32 %s15, 1
      $region12: #{_lambda_.4} parent=5 // pred_fallthru
        _
      %p133 = scmp.lt.s32.totalorder %s15, 9
      // Predicated region
      $region13: #{_lambda_.4} parent=5 // pred_check
        %p134 = pneg %p133
      $region14: #{_lambda_.4} parent=5 // pred_check_branch
        %136 = sbr.rel (%p134) target = $region16
      $region15: #{_lambda_.4} parent=5 // pred_region
        // Predicated region
        $region17: #{_lambda_.4} parent=15 // pred_check
          %p137 = pneg %p56
        $region18: #{_lambda_.4} parent=15 // pred_check_branch
          %139 = sbr.rel (%p137) target = $region20
        $region19: #{_lambda_.4} parent=15 // pred_region
          %s140 = sand.u32 %s46, 1
          %s141 = scalar_lea.sflag [#allocation4], %s140
          %s142 = sand.u32 %s46, 1
          %s143 = smul.addr %s142, 64
          %s144 = scalar_lea.vmem [#allocation3], %s143
          %s145 = smul.u32 16, %s22
          %s147 = ssub.s32 1024, 1024
          %148 = vsyncadd %s141, %s147
          %s149 = smul.addr %s145, 9
          %s150 = sadd.s32 %s24, %s149
          %s151 = smul.addr %s150, 64
          %s152 = scalar_lea.hbm %s0, %s151
          %s153 = sshll.u32 %s144, 4
          %s154 = int_to_ptr.vmem [resolvable:$true] %s153
          %159 = dma.hbm_to_vmem [thread:$0]  %s152, 1024, %s154, %s141, 576, 64, 4
        $region20: #{_lambda_.4} parent=15 // pred_fallthru
          _
        // Predicated region
        $region21: #{_lambda_.4} parent=15 // pred_check
          %p160 = pneg %p84
        $region22: #{_lambda_.4} parent=15 // pred_check_branch
          %162 = sbr.rel (%p160) target = $region24
        $region23: #{_lambda_.4} parent=15 // pred_region
          %s163 = sand.u32 %s74, 1
          %s164 = scalar_lea.sflag [#allocation7], %s163
          %s165 = sand.u32 %s74, 1
          %s166 = smul.addr %s165, 64
          %s167 = scalar_lea.vmem [#allocation6], %s166
          %s168 = smul.u32 16, %s24
          %s170 = ssub.s32 1024, 1024
          %171 = vsyncadd %s164, %s170
          %s172 = sadd.s32 %s23, %s168
          %s173 = smul.addr %s172, 64
          %s174 = scalar_lea.hbm %s1, %s173
          %s175 = sshll.u32 %s167, 4
          %s176 = int_to_ptr.vmem [resolvable:$true] %s175
          %181 = dma.hbm_to_vmem [thread:$0]  %s174, 1024, %s176, %s164, 64, 64, 4
        $region24: #{_lambda_.4} parent=15 // pred_fallthru
          _
      $region16: #{_lambda_.4} parent=5 // pred_fallthru
        _
      %p182 = scmp.le.s32.totalorder 1, %s15
      %p183 = scmp.lt.s32.totalorder %s15, 10
      %p184 = pnand %p182, %p183
      %p185 = pneg %p184
      // Predicated region
      $region25: #{_lambda_.4} parent=5 // pred_check
        _
      $region26: #{_lambda_.4} parent=5 // pred_check_branch
        %187 = sbr.rel (%p184) target = $region28
      $region27: #{_lambda_.4} parent=5 // pred_region
        %s188 = ssub.s32 %s15, 1
        %s189 = sand.u32 %s49, 1
        %s190 = scalar_lea.sflag [#allocation4], %s189
        %s191 = sand.u32 %s49, 1
        %s192 = smul.addr %s191, 64
        %s193 = scalar_lea.vmem [#allocation3], %s192
        // Predicated region
        $region29: #{_lambda_.4} parent=27 // pred_check
          %p194 = pneg %p62
        $region30: #{_lambda_.4} parent=27 // pred_check_branch
          %196 = sbr.rel (%p194) target = $region32
        $region31: #{_lambda_.4} parent=27 // pred_region
          %197 = dma.done %s190, 1024
        $region32: #{_lambda_.4} parent=27 // pred_fallthru
          _
        %s198 = sand.u32 %s77, 1
        %s199 = scalar_lea.sflag [#allocation7], %s198
        %s200 = sand.u32 %s77, 1
        %s201 = smul.addr %s200, 64
        %s202 = scalar_lea.vmem [#allocation6], %s201
        // Predicated region
        $region33: #{_lambda_.4} parent=27 // pred_check
          %p203 = pneg %p90
        $region34: #{_lambda_.4} parent=27 // pred_check_branch
          %205 = sbr.rel (%p203) target = $region36
        $region35: #{_lambda_.4} parent=27 // pred_region
          %206 = dma.done %s199, 1024
        $region36: #{_lambda_.4} parent=27 // pred_fallthru
          _
        %s207 = sand.u32 %s49, 1
        %s208 = scalar_lea.sflag [#allocation4], %s207
        %s209 = sand.u32 %s49, 1
        %s210 = smul.addr %s209, 64
        %s211 = scalar_lea.vmem [#allocation3], %s210
        %p212 = pneg %p62
        %p213 = pneg %p59
        %s214 = sand.u32 %s77, 1
        %s215 = scalar_lea.sflag [#allocation7], %s214
        %s216 = sand.u32 %s77, 1
        %s217 = smul.addr %s216, 64
        %s218 = scalar_lea.vmem [#allocation6], %s217
        %p219 = pneg %p90
        %p220 = pneg %p87
        %p221 = pneg %p118
        %p222 = pneg %p115
        %s223 = smul.u32 16, %s25
        %s224 = smul.u32 16, %s27
        %s225 = smul.u32 16, %s25
        %p227 = scmp.eq.s32.totalorder %s27, 0
        // Predicated region
        $region37: #{_lambda_.4} parent=27 // pred_check
          %p228 = pneg %p227
        $region38: #{_lambda_.4} parent=27 // pred_check_branch
          %230 = sbr.rel (%p228) target = $region40
        $region39: #{_lambda_.4} parent=27 // pred_region
          %231 = vst [vmem:[#allocation2] sm:$0xff] 0.0
          %232 = vst [vmem:[#allocation2 + $0x8] sm:$0xff] 0.0
          %233 = vst [vmem:[#allocation2 + $0x10] sm:$0xff] 0.0
          %234 = vst [vmem:[#allocation2 + $0x18] sm:$0xff] 0.0
          %235 = vst [vmem:[#allocation2 + $0x20] sm:$0xff] 0.0
          %236 = vst [vmem:[#allocation2 + $0x28] sm:$0xff] 0.0
          %237 = vst [vmem:[#allocation2 + $0x30] sm:$0xff] 0.0
          %238 = vst [vmem:[#allocation2 + $0x38] sm:$0xff] 0.0
          %239 = vst [vmem:[#allocation2 + $0x40] sm:$0xff] 0.0
          %240 = vst [vmem:[#allocation2 + $0x48] sm:$0xff] 0.0
          %241 = vst [vmem:[#allocation2 + $0x50] sm:$0xff] 0.0
          %242 = vst [vmem:[#allocation2 + $0x58] sm:$0xff] 0.0
          %243 = vst [vmem:[#allocation2 + $0x60] sm:$0xff] 0.0
          %244 = vst [vmem:[#allocation2 + $0x68] sm:$0xff] 0.0
          %245 = vst [vmem:[#allocation2 + $0x70] sm:$0xff] 0.0
          %246 = vst [vmem:[#allocation2 + $0x78] sm:$0xff] 0.0
        $region40: #{_lambda_.4} parent=27 // pred_fallthru
          _
        %v247 = vld [vmem:[#allocation2] sm:$0xff]
        %v248 = vld [vmem:[#allocation2 + $0x8] sm:$0xff]
        %v249 = vld [vmem:[#allocation2 + $0x10] sm:$0xff]
        %v250 = vld [vmem:[#allocation2 + $0x18] sm:$0xff]
        %v251 = vld [vmem:[#allocation2 + $0x20] sm:$0xff]
        %v252 = vld [vmem:[#allocation2 + $0x28] sm:$0xff]
        %v253 = vld [vmem:[#allocation2 + $0x30] sm:$0xff]
        %v254 = vld [vmem:[#allocation2 + $0x38] sm:$0xff]
        %v255 = vld [vmem:[#allocation2 + $0x40] sm:$0xff]
        %v256 = vld [vmem:[#allocation2 + $0x48] sm:$0xff]
        %v257 = vld [vmem:[#allocation2 + $0x50] sm:$0xff]
        %v258 = vld [vmem:[#allocation2 + $0x58] sm:$0xff]
        %v259 = vld [vmem:[#allocation2 + $0x60] sm:$0xff]
        %v260 = vld [vmem:[#allocation2 + $0x68] sm:$0xff]
        %v261 = vld [vmem:[#allocation2 + $0x70] sm:$0xff]
        %v262 = vld [vmem:[#allocation2 + $0x78] sm:$0xff]
        %v263 = vld [vmem:[%s193] sm:$0xf]
        %v264 = vld [vmem:[%s193 + $0x4] sm:$0xf]
        %v265 = vld [vmem:[%s193 + $0x8] sm:$0xf]
        %v266 = vld [vmem:[%s193 + $0xc] sm:$0xf]
        %v267 = vld [vmem:[%s193 + $0x10] sm:$0xf]
        %v268 = vld [vmem:[%s193 + $0x14] sm:$0xf]
        %v269 = vld [vmem:[%s193 + $0x18] sm:$0xf]
        %v270 = vld [vmem:[%s193 + $0x1c] sm:$0xf]
        %v271 = vld [vmem:[%s193 + $0x20] sm:$0xf]
        %v272 = vld [vmem:[%s193 + $0x24] sm:$0xf]
        %v273 = vld [vmem:[%s193 + $0x28] sm:$0xf]
        %v274 = vld [vmem:[%s193 + $0x2c] sm:$0xf]
        %v275 = vld [vmem:[%s193 + $0x30] sm:$0xf]
        %v276 = vld [vmem:[%s193 + $0x34] sm:$0xf]
        %v277 = vld [vmem:[%s193 + $0x38] sm:$0xf]
        %v278 = vld [vmem:[%s193 + $0x3c] sm:$0xf]
        %v279 = vld [vmem:[%s202] sm:$0xf]
        %v280 = vld [vmem:[%s202 + $0x4] sm:$0xf]
        %v281 = vld [vmem:[%s202 + $0x8] sm:$0xf]
        %v282 = vld [vmem:[%s202 + $0xc] sm:$0xf]
        %v283 = vld [vmem:[%s202 + $0x10] sm:$0xf]
        %v284 = vld [vmem:[%s202 + $0x14] sm:$0xf]
        %v285 = vld [vmem:[%s202 + $0x18] sm:$0xf]
        %v286 = vld [vmem:[%s202 + $0x1c] sm:$0xf]
        %v287 = vld [vmem:[%s202 + $0x20] sm:$0xf]
        %v288 = vld [vmem:[%s202 + $0x24] sm:$0xf]
        %v289 = vld [vmem:[%s202 + $0x28] sm:$0xf]
        %v290 = vld [vmem:[%s202 + $0x2c] sm:$0xf]
        %v291 = vld [vmem:[%s202 + $0x30] sm:$0xf]
        %v292 = vld [vmem:[%s202 + $0x34] sm:$0xf]
        %v293 = vld [vmem:[%s202 + $0x38] sm:$0xf]
        %v294 = vld [vmem:[%s202 + $0x3c] sm:$0xf]
        %v311 = vunpack.c.l.b16 %v263
        %v312 = vunpack.c.l.b16 %v264
        %v313 = vunpack.c.l.b16 %v265
        %v314 = vunpack.c.l.b16 %v266
        %v315 = vunpack.c.l.b16 %v267
        %v316 = vunpack.c.l.b16 %v268
        %v317 = vunpack.c.l.b16 %v269
        %v318 = vunpack.c.l.b16 %v270
        %v319 = vunpack.c.l.b16 %v271
        %v320 = vunpack.c.l.b16 %v272
        %v321 = vunpack.c.l.b16 %v273
        %v322 = vunpack.c.l.b16 %v274
        %v323 = vunpack.c.l.b16 %v275
        %v324 = vunpack.c.l.b16 %v276
        %v325 = vunpack.c.l.b16 %v277
        %v326 = vunpack.c.l.b16 %v278
        %v327 = vpack.c.b16 %v312, %v311
        %v328 = vpack.c.b16 %v314, %v313
        %v329 = vpack.c.b16 %v316, %v315
        %v330 = vpack.c.b16 %v318, %v317
        %v331 = vpack.c.b16 %v320, %v319
        %v332 = vpack.c.b16 %v322, %v321
        %v333 = vpack.c.b16 %v324, %v323
        %v334 = vpack.c.b16 %v326, %v325
        %v359 = vunpack.c.l.b16 %v279
        %v360 = vunpack.c.l.b16 %v280
        %v361 = vunpack.c.l.b16 %v281
        %v362 = vunpack.c.l.b16 %v282
        %v363 = vunpack.c.l.b16 %v283
        %v364 = vunpack.c.l.b16 %v284
        %v365 = vunpack.c.l.b16 %v285
        %v366 = vunpack.c.l.b16 %v286
        %v367 = vunpack.c.l.b16 %v287
        %v368 = vunpack.c.l.b16 %v288
        %v369 = vunpack.c.l.b16 %v289
        %v370 = vunpack.c.l.b16 %v290
        %v371 = vunpack.c.l.b16 %v291
        %v372 = vunpack.c.l.b16 %v292
        %v373 = vunpack.c.l.b16 %v293
        %v374 = vunpack.c.l.b16 %v294
        %v375 = vpack.c.b16 %v360, %v359
        %v376 = vpack.c.b16 %v362, %v361
        %v377 = vpack.c.b16 %v364, %v363
        %v378 = vpack.c.b16 %v366, %v365
        %v379 = vpack.c.b16 %v368, %v367
        %v380 = vpack.c.b16 %v370, %v369
        %v381 = vpack.c.b16 %v372, %v371
        %v382 = vpack.c.b16 %v374, %v373
        %391 = vmatprep.subr.bf16.mxu0 0
        %392 = vmatpush1.bf16.msra.mxu0 %v375
        %393 = vmatprep.subr.bf16.mxu0 0
        %394 = vmatpush1.bf16.msra.mxu0 %v376
        %395 = vmatprep.subr.bf16.mxu0 0
        %396 = vmatpush1.bf16.msra.mxu0 %v377
        %397 = vmatprep.subr.bf16.mxu0 0
        %398 = vmatpush1.bf16.msra.mxu0 %v378
        %399 = vmatprep.subr.bf16.mxu0 0
        %400 = vmatpush1.bf16.msra.mxu0 %v379
        %401 = vmatprep.subr.bf16.mxu0 0
        %402 = vmatpush1.bf16.msra.mxu0 %v380
        %403 = vmatprep.subr.bf16.mxu0 0
        %404 = vmatpush1.bf16.msra.mxu0 %v381
        %405 = vmatprep.subr.bf16.mxu0 0
        %406 = vmatpush1.bf16.msra.mxu0 %v382
        %407 = vmatprep.subr.bf16.mxu0 0
        %408 = vmatpush1.bf16.msra.mxu0 0
        %409 = vmatprep.subr.bf16.mxu0 0
        %410 = vmatpush1.bf16.msra.mxu0 0
        %411 = vmatprep.subr.bf16.mxu0 0
        %412 = vmatpush1.bf16.msra.mxu0 0
        %413 = vmatprep.subr.bf16.mxu0 0
        %414 = vmatpush1.bf16.msra.mxu0 0
        %415 = vmatprep.subr.bf16.mxu0 0
        %416 = vmatpush1.bf16.msra.mxu0 0
        %417 = vmatprep.subr.bf16.mxu0 0
        %418 = vmatpush1.bf16.msra.mxu0 0
        %419 = vmatprep.subr.bf16.mxu0 0
        %420 = vmatpush1.bf16.msra.mxu0 0
        %421 = vmatprep.subr.bf16.mxu0 0
        %422 = vmatpush1.bf16.msra.mxu0 0
        %423 = vmatprep.mubr.bf16.mxu0 0
        %424 = vmatmul.mubr.bf16.gmra.mrb[0].mxu0 %v327
        %v425 = vpop.f32.mrb[0].mxu0
        %v426 = vadd.f32 0.0, %v425
        %v427 = vpop.f32.mrb[0].mxu0
        %v428 = vpop.f32.mrb[0].mxu0
        %v429 = vadd.f32 0.0, %v428
        %v430 = vpop.f32.mrb[0].mxu0
        %431 = vmatprep.mubr.bf16.mxu0 0
        %432 = vmatmul.mubr.bf16.gmra.mrb[0].mxu0 %v328
        %v433 = vpop.f32.mrb[0].mxu0
        %v434 = vadd.f32 0.0, %v433
        %v435 = vpop.f32.mrb[0].mxu0
        %v436 = vpop.f32.mrb[0].mxu0
        %v437 = vadd.f32 0.0, %v436
        %v438 = vpop.f32.mrb[0].mxu0
        %439 = vmatprep.mubr.bf16.mxu0 0
        %440 = vmatmul.mubr.bf16.gmra.mrb[0].mxu0 %v329
        %v441 = vpop.f32.mrb[0].mxu0
        %v442 = vadd.f32 0.0, %v441
        %v443 = vpop.f32.mrb[0].mxu0
        %v444 = vpop.f32.mrb[0].mxu0
        %v445 = vadd.f32 0.0, %v444
        %v446 = vpop.f32.mrb[0].mxu0
        %447 = vmatprep.mubr.bf16.mxu0 0
        %448 = vmatmul.mubr.bf16.gmra.mrb[0].mxu0 %v330
        %v449 = vpop.f32.mrb[0].mxu0
        %v450 = vadd.f32 0.0, %v449
        %v451 = vpop.f32.mrb[0].mxu0
        %v452 = vpop.f32.mrb[0].mxu0
        %v453 = vadd.f32 0.0, %v452
        %v454 = vpop.f32.mrb[0].mxu0
        %455 = vmatprep.mubr.bf16.mxu0 0
        %456 = vmatmul.mubr.bf16.gmra.mrb[0].mxu0 %v331
        %v457 = vpop.f32.mrb[0].mxu0
        %v458 = vadd.f32 0.0, %v457
        %v459 = vpop.f32.mrb[0].mxu0
        %v460 = vpop.f32.mrb[0].mxu0
        %v461 = vadd.f32 0.0, %v460
        %v462 = vpop.f32.mrb[0].mxu0
        %463 = vmatprep.mubr.bf16.mxu0 0
        %464 = vmatmul.mubr.bf16.gmra.mrb[0].mxu0 %v332
        %v465 = vpop.f32.mrb[0].mxu0
        %v466 = vadd.f32 0.0, %v465
        %v467 = vpop.f32.mrb[0].mxu0
        %v468 = vpop.f32.mrb[0].mxu0
        %v469 = vadd.f32 0.0, %v468
        %v470 = vpop.f32.mrb[0].mxu0
        %471 = vmatprep.mubr.bf16.mxu0 0
        %472 = vmatmul.mubr.bf16.gmra.mrb[0].mxu0 %v333
        %v473 = vpop.f32.mrb[0].mxu0
        %v474 = vadd.f32 0.0, %v473
        %v475 = vpop.f32.mrb[0].mxu0
        %v476 = vpop.f32.mrb[0].mxu0
        %v477 = vadd.f32 0.0, %v476
        %v478 = vpop.f32.mrb[0].mxu0
        %479 = vmatprep.mubr.bf16.mxu0 0
        %480 = vmatmul.mubr.bf16.gmra.mrb[0].mxu0 %v334
        %v481 = vpop.f32.mrb[0].mxu0
        %v482 = vadd.f32 0.0, %v481
        %v483 = vpop.f32.mrb[0].mxu0
        %v484 = vpop.f32.mrb[0].mxu0
        %v485 = vadd.f32 0.0, %v484
        %v486 = vpop.f32.mrb[0].mxu0
        %487 = vdwg.mxu0
        %v488 = vadd.f32 %v247, %v426
        %v489 = vadd.f32 %v248, %v429
        %v490 = vadd.f32 %v249, %v434
        %v491 = vadd.f32 %v250, %v437
        %v492 = vadd.f32 %v251, %v442
        %v493 = vadd.f32 %v252, %v445
        %v494 = vadd.f32 %v253, %v450
        %v495 = vadd.f32 %v254, %v453
        %v496 = vadd.f32 %v255, %v458
        %v497 = vadd.f32 %v256, %v461
        %v498 = vadd.f32 %v257, %v466
        %v499 = vadd.f32 %v258, %v469
        %v500 = vadd.f32 %v259, %v474
        %v501 = vadd.f32 %v260, %v477
        %v502 = vadd.f32 %v261, %v482
        %v503 = vadd.f32 %v262, %v485
        %504 = vst [vmem:[#allocation2] sm:$0xff] %v488
        %505 = vst [vmem:[#allocation2 + $0x8] sm:$0xff] %v489
        %506 = vst [vmem:[#allocation2 + $0x10] sm:$0xff] %v490
        %507 = vst [vmem:[#allocation2 + $0x18] sm:$0xff] %v491
        %508 = vst [vmem:[#allocation2 + $0x20] sm:$0xff] %v492
        %509 = vst [vmem:[#allocation2 + $0x28] sm:$0xff] %v493
        %510 = vst [vmem:[#allocation2 + $0x30] sm:$0xff] %v494
        %511 = vst [vmem:[#allocation2 + $0x38] sm:$0xff] %v495
        %512 = vst [vmem:[#allocation2 + $0x40] sm:$0xff] %v496
        %513 = vst [vmem:[#allocation2 + $0x48] sm:$0xff] %v497
        %514 = vst [vmem:[#allocation2 + $0x50] sm:$0xff] %v498
        %515 = vst [vmem:[#allocation2 + $0x58] sm:$0xff] %v499
        %516 = vst [vmem:[#allocation2 + $0x60] sm:$0xff] %v500
        %517 = vst [vmem:[#allocation2 + $0x68] sm:$0xff] %v501
        %518 = vst [vmem:[#allocation2 + $0x70] sm:$0xff] %v502
        %519 = vst [vmem:[#allocation2 + $0x78] sm:$0xff] %v503
        %p520 = scmp.eq.s32.totalorder %s27, 8
        // Predicated region
        $region41: #{_lambda_.4} parent=27 // pred_check
          %p521 = pneg %p520
        $region42: #{_lambda_.4} parent=27 // pred_check_branch
          %523 = sbr.rel (%p521) target = $region44
        $region43: #{_lambda_.4} parent=27 // pred_region
          %v524 = vld [vmem:[#allocation2] sm:$0xff]
          %v525 = vld [vmem:[#allocation2 + $0x8] sm:$0xff]
          %v526 = vld [vmem:[#allocation2 + $0x10] sm:$0xff]
          %v527 = vld [vmem:[#allocation2 + $0x18] sm:$0xff]
          %v528 = vld [vmem:[#allocation2 + $0x20] sm:$0xff]
          %v529 = vld [vmem:[#allocation2 + $0x28] sm:$0xff]
          %v530 = vld [vmem:[#allocation2 + $0x30] sm:$0xff]
          %v531 = vld [vmem:[#allocation2 + $0x38] sm:$0xff]
          %v532 = vld [vmem:[#allocation2 + $0x40] sm:$0xff]
          %v533 = vld [vmem:[#allocation2 + $0x48] sm:$0xff]
          %v534 = vld [vmem:[#allocation2 + $0x50] sm:$0xff]
          %v535 = vld [vmem:[#allocation2 + $0x58] sm:$0xff]
          %v536 = vld [vmem:[#allocation2 + $0x60] sm:$0xff]
          %v537 = vld [vmem:[#allocation2 + $0x68] sm:$0xff]
          %v538 = vld [vmem:[#allocation2 + $0x70] sm:$0xff]
          %v539 = vld [vmem:[#allocation2 + $0x78] sm:$0xff]
          %540 = vst [vmem:[#allocation8] sm:$0xff] %v524
          %541 = vst [vmem:[#allocation8 + $0x8] sm:$0xff] %v525
          %542 = vst [vmem:[#allocation8 + $0x10] sm:$0xff] %v526
          %543 = vst [vmem:[#allocation8 + $0x18] sm:$0xff] %v527
          %544 = vst [vmem:[#allocation8 + $0x20] sm:$0xff] %v528
          %545 = vst [vmem:[#allocation8 + $0x28] sm:$0xff] %v529
          %546 = vst [vmem:[#allocation8 + $0x30] sm:$0xff] %v530
          %547 = vst [vmem:[#allocation8 + $0x38] sm:$0xff] %v531
          %548 = vst [vmem:[#allocation8 + $0x40] sm:$0xff] %v532
          %549 = vst [vmem:[#allocation8 + $0x48] sm:$0xff] %v533
          %550 = vst [vmem:[#allocation8 + $0x50] sm:$0xff] %v534
          %551 = vst [vmem:[#allocation8 + $0x58] sm:$0xff] %v535
          %552 = vst [vmem:[#allocation8 + $0x60] sm:$0xff] %v536
          %553 = vst [vmem:[#allocation8 + $0x68] sm:$0xff] %v537
          %554 = vst [vmem:[#allocation8 + $0x70] sm:$0xff] %v538
          %555 = vst [vmem:[#allocation8 + $0x78] sm:$0xff] %v539
        $region44: #{_lambda_.4} parent=27 // pred_fallthru
          _
        // Predicated region
        $region45: #{_lambda_.4} parent=27 // pred_check
          %p556 = pneg %p115
        $region46: #{_lambda_.4} parent=27 // pred_check_branch
          %558 = sbr.rel (%p556) target = $region48
        $region47: #{_lambda_.4} parent=27 // pred_region
          %s559 = smul.u32 16, %s25
          %s561 = ssub.s32 2048, 2048
          %562 = vsyncadd [#allocation5], %s561
          %s563 = sadd.s32 %s26, %s559
          %s564 = smul.addr %s563, 128
          %s565 = scalar_lea.hbm %s2, %s564
          %s566 = sshll.u32 [#allocation8], 4
          %s567 = int_to_ptr.vmem [resolvable:$true] %s566
          %572 = dma.vmem_to_hbm [thread:$0]  %s567, 2048, %s565, [#allocation5], 128, 128, 8
        $region48: #{_lambda_.4} parent=27 // pred_fallthru
          _
        // Predicated region
        $region49: #{_lambda_.4} parent=27 // pred_check
          %p573 = pneg %p115
        $region50: #{_lambda_.4} parent=27 // pred_check_branch
          %575 = sbr.rel (%p573) target = $region52
        $region51: #{_lambda_.4} parent=27 // pred_region
          %576 = dma.done [#allocation5], 2048
        $region52: #{_lambda_.4} parent=27 // pred_fallthru
          _
      $region28: #{_lambda_.4} parent=5 // pred_fallthru
        _
      %p577 = scmp.le.s32.totalorder 2, %s15
      // Predicated region
      $region53: #{_lambda_.4} parent=5 // pred_check
        %p578 = pneg %p577
      $region54: #{_lambda_.4} parent=5 // pred_check_branch
        %580 = sbr.rel (%p578) target = $region56
      $region55: #{_lambda_.4} parent=5 // pred_region
        %s581 = ssub.s32 %s15, 2
      $region56: #{_lambda_.4} parent=5 // pred_fallthru
        _
    $region6: #{_lambda_.4} parent=1 // loop_footer
      %s19 = sadd.s32 1, %s15
    $region7: #{_lambda_.4} parent=1 // loop_footer_branch
      %14 = sbr.rel target = $region3
    $region8: #{_lambda_.4} parent=1 // loop_exit
      _
    %582 = vsyncpa [#allocation4], 1
    %s583 = scalar_lea.sflag [#allocation4], 1
    %584 = vsyncpa %s583, 1
    %585 = vsyncpa [#allocation7], 1
    %s586 = scalar_lea.sflag [#allocation7], 1
    %587 = vsyncpa %s586, 1
    %588 = vsyncpa [#allocation5], 1
    %s589 = scalar_lea.sflag [#allocation5], 1
    %590 = vsyncpa %s589, 1

// kernel: _lambda_.6
$region0: #{_lambda_.6}
  #allocation0 [shape = 'u32[]', space=smem, size = 0x4, offset = 0x4, fixed_abs, tag = 'smem constant byte address 0x4 - core index']
  #allocation1 [shape = 'u32[144,128]{1,0:T(1,128)}', space=vmem, size = 0x12000, scoped, tag = 'internal scratch']
  %s0 = inlined_call_operand.hbm [shape: f32[2,10,10,128], index: 0, kind: input, shape index: {}]
  %s1 = inlined_call_operand.hbm [shape: f32[1,128], index: 1, kind: input, shape index: {}]
  %s2 = inlined_call_operand.hbm [shape: f32[1,128], index: 2, kind: input, shape index: {}]
  %s3 = inlined_call_operand.hbm [shape: bf16[3,3,128,128], index: 3, kind: input, shape index: {}]
  %s4 = inlined_call_operand.hbm [shape: f32[2,8,8,128], index: 4, kind: output, shape index: {}]
  %s5 = sld [smem:[#allocation0]]
  $region65: #{_lambda_.6} parent=0
    _
  %s7 = ssub.s32 1, %s5
  %s8 = scalar_select 0, %s7, %s5
  $region1: #{_lambda_.6} parent=0
    #allocation2 [shape = 'u8[163840]{0}', space=vmem, size = 0x28000, scoped, tag = 'input window, operand 0']
    #allocation3 [shape = 's32[2]{0}', space=sflag, size = 0x8, scoped, tag = 'scoped memory for _lambda_.6']
    #allocation4 [shape = 's32[2]{0}', space=sflag, size = 0x8, scoped, tag = 'scoped memory for _lambda_.6']
    #allocation5 [shape = 'u8[512]{0}', space=vmem, size = 0x400, scoped, tag = 'input window, operand 1, single buffered']
    #allocation6 [shape = 's32[1]{0}', space=sflag, size = 0x4, scoped, tag = 'scoped memory for _lambda_.6']
    #allocation7 [shape = 'u8[512]{0}', space=vmem, size = 0x400, scoped, tag = 'input window, operand 2, single buffered']
    #allocation8 [shape = 'u8[294912]{0}', space=vmem, size = 0x48000, scoped, tag = 'input window, operand 3, single buffered']
    #allocation9 [shape = 's32[1]{0}', space=sflag, size = 0x4, scoped, tag = 'scoped memory for _lambda_.6']
    #allocation10 [shape = 'u8[65536]{0}', space=vmem, size = 0x10000, scoped, tag = 'output window, operand 0']
    %9 = vsyncpa [#allocation3], 0
    %s10 = scalar_lea.sflag [#allocation3], 1
    %11 = vsyncpa %s10, 0
    %12 = vsyncpa [#allocation6], 0
    %13 = vsyncpa [#allocation9], 0
    %14 = vsyncpa [#allocation4], 0
    %s15 = scalar_lea.sflag [#allocation4], 1
    %16 = vsyncpa %s15, 0
    loop: start=0, step=1, limit=4
    $region2: #{_lambda_.6} parent=1 // loop_pre_header
      _
    $region3: #{_lambda_.6} parent=1 // loop_header
      %s18 = sphi 0, %s22
      %p19 = scmp.ge.s32.totalorder %s18, 4
      %s25 = sphi 0, %s37
      %s26 = sphi 0, %s33
      %s27 = sphi 0, %s25
      %s28 = sphi 0, %s26
      %s29 = sphi 0, %s27
      %s30 = sphi 0, %s28
      %s40 = sphi 0, %s42
      %s43 = sphi 0, %s40
      %s44 = sphi 0, %s43
      %s60 = sphi 0, %s44
      %s64 = sphi 0, %s64
      %s66 = sphi 0, %s64
      %s67 = sphi 0, %s66
      %s81 = sphi 0, %s67
      %s85 = sphi 0, %s85
      %s87 = sphi 0, %s85
      %s88 = sphi 0, %s87
      %s102 = sphi 0, %s88
      %s108 = sphi 0, %s110
      %s111 = sphi 0, %s108
      %s112 = sphi 0, %s111
      %s128 = sphi 0, %s112
      %s136 = sphi 0, %s138
      %s139 = sphi 0, %s136
      %s140 = sphi 0, %s139
      %s156 = sphi 0, %s140
    $region4: #{_lambda_.6} parent=1 // loop_header_branch
      %21 = sbr.rel (%p19) target = $region8
    $region5: #{_lambda_.6} parent=1 // loop_body
      %s23 = ssub.s32 %s18, 1
      %s24 = ssub.s32 %s18, 2
      %s31 = sadd.s32 1, %s26
      %p32 = scmp.ge.s32.totalorder %s31, 1
      %s33 = scalar_select %p32, 0, %s31
      %s34 = sadd.s32 1, %s25
      %s35 = scalar_select %p32, %s34, %s25
      %p36 = scmp.ge.s32.totalorder %s35, 2
      %s37 = scalar_select %p36, 0, %s35
      %s38 = ssub.s32 %s25, %s37
      %p39 = scmp.eq.s32.totalorder %s38, 0
      %s41 = sadd.s32 %s40, 1
      %s42 = scalar_select %p39, %s40, %s41
      %p45 = pneg %p39
      %p46 = scmp.eq.s32.totalorder %s18, 1
      %p47 = por %p45, %p46
      %p48 = scmp.ne.s32.totalorder %s40, %s43
      %p49 = scmp.eq.s32.totalorder %s18, 0
      %p50 = por %p48, %p49
      %p51 = scmp.ne.s32.totalorder %s40, %s43
      %p52 = scmp.eq.s32.totalorder %s23, 1
      %p53 = por %p51, %p52
      %p54 = scmp.ne.s32.totalorder %s43, %s44
      %p55 = scmp.eq.s32.totalorder %s23, 0
      %p56 = por %p54, %p55
      %p57 = scmp.ne.s32.totalorder %s43, %s44
      %p58 = scmp.eq.s32.totalorder %s24, 1
      %p59 = por %p57, %p58
      %p61 = scmp.ne.s32.totalorder %s44, %s60
      %p62 = scmp.eq.s32.totalorder %s24, 0
      %p63 = por %p61, %p62
      %s65 = sadd.s32 %s64, 1
      %p68 = scmp.eq.s32.totalorder %s18, 1
      %p69 = scmp.ne.s32.totalorder %s64, %s66
      %p70 = scmp.eq.s32.totalorder %s18, 0
      %p71 = por %p69, %p70
      %p72 = scmp.ne.s32.totalorder %s64, %s66
      %p73 = scmp.eq.s32.totalorder %s23, 1
      %p74 = por %p72, %p73
      %p75 = scmp.ne.s32.totalorder %s66, %s67
      %p76 = scmp.eq.s32.totalorder %s23, 0
      %p77 = por %p75, %p76
      %p78 = scmp.ne.s32.totalorder %s66, %s67
      %p79 = scmp.eq.s32.totalorder %s24, 1
      %p80 = por %p78, %p79
      %p82 = scmp.ne.s32.totalorder %s67, %s81
      %p83 = scmp.eq.s32.totalorder %s24, 0
      %p84 = por %p82, %p83
      %s86 = sadd.s32 %s85, 1
      %p89 = scmp.eq.s32.totalorder %s18, 1
      %p90 = scmp.ne.s32.totalorder %s85, %s87
      %p91 = scmp.eq.s32.totalorder %s18, 0
      %p92 = por %p90, %p91
      %p93 = scmp.ne.s32.totalorder %s85, %s87
      %p94 = scmp.eq.s32.totalorder %s23, 1
      %p95 = por %p93, %p94
      %p96 = scmp.ne.s32.totalorder %s87, %s88
      %p97 = scmp.eq.s32.totalorder %s23, 0
      %p98 = por %p96, %p97
      %p99 = scmp.ne.s32.totalorder %s87, %s88
      %p100 = scmp.eq.s32.totalorder %s24, 1
      %p101 = por %p99, %p100
      %p103 = scmp.ne.s32.totalorder %s88, %s102
      %p104 = scmp.eq.s32.totalorder %s24, 0
      %p105 = por %p103, %p104
      %s106 = ssub.s32 %s26, %s33
      %p107 = scmp.eq.s32.totalorder %s106, 0
      %s109 = sadd.s32 %s108, 1
      %s110 = scalar_select %p107, %s108, %s109
      %p113 = pneg %p107
      %p114 = scmp.eq.s32.totalorder %s18, 1
      %p115 = por %p113, %p114
      %p116 = scmp.ne.s32.totalorder %s108, %s111
      %p117 = scmp.eq.s32.totalorder %s18, 0
      %p118 = por %p116, %p117
      %p119 = scmp.ne.s32.totalorder %s108, %s111
      %p120 = scmp.eq.s32.totalorder %s23, 1
      %p121 = por %p119, %p120
      %p122 = scmp.ne.s32.totalorder %s111, %s112
      %p123 = scmp.eq.s32.totalorder %s23, 0
      %p124 = por %p122, %p123
      %p125 = scmp.ne.s32.totalorder %s111, %s112
      %p126 = scmp.eq.s32.totalorder %s24, 1
      %p127 = por %p125, %p126
      %p129 = scmp.ne.s32.totalorder %s112, %s128
      %p130 = scmp.eq.s32.totalorder %s24, 0
      %p131 = por %p129, %p130
      %s132 = ssub.s32 %s25, %s37
      %s133 = ssub.s32 %s26, %s33
      %s134 = sor.u32 %s132, %s133
      %p135 = scmp.eq.s32.totalorder %s134, 0
      %s137 = sadd.s32 %s136, 1
      %s138 = scalar_select %p135, %s136, %s137
      %p141 = pneg %p135
      %p142 = scmp.eq.s32.totalorder %s18, 1
      %p143 = por %p141, %p142
      %p144 = scmp.ne.s32.totalorder %s136, %s139
      %p145 = scmp.eq.s32.totalorder %s18, 0
      %p146 = por %p144, %p145
      %p147 = scmp.ne.s32.totalorder %s136, %s139
      %p148 = scmp.eq.s32.totalorder %s23, 1
      %p149 = por %p147, %p148
      %p150 = scmp.ne.s32.totalorder %s139, %s140
      %p151 = scmp.eq.s32.totalorder %s23, 0
      %p152 = por %p150, %p151
      %p153 = scmp.ne.s32.totalorder %s139, %s140
      %p154 = scmp.eq.s32.totalorder %s24, 1
      %p155 = por %p153, %p154
      %p157 = scmp.ne.s32.totalorder %s140, %s156
      %p158 = scmp.eq.s32.totalorder %s24, 0
      %p159 = por %p157, %p158
      %p160 = scmp.le.s32.totalorder 1, %s18
      %p161 = scmp.lt.s32.totalorder %s18, 3
      %p162 = pnand %p160, %p161
      %p163 = pneg %p162
      // Predicated region
      $region9: #{_lambda_.6} parent=5 // pred_check
        _
      $region10: #{_lambda_.6} parent=5 // pred_check_branch
        %165 = sbr.rel (%p162) target = $region12
      $region11: #{_lambda_.6} parent=5 // pred_region
        %s166 = ssub.s32 %s18, 1
        // Predicated region
        $region13: #{_lambda_.6} parent=11 // pred_check
          %p167 = pneg %p77
        $region14: #{_lambda_.6} parent=11 // pred_check_branch
          %169 = sbr.rel (%p167) target = $region16
        $region15: #{_lambda_.6} parent=11 // pred_region
          %s171 = ssub.s32 16, 16
          %172 = vsyncadd [#allocation6], %s171
          %s174 = sshll.u32 [#allocation5], 4
          %s175 = int_to_ptr.vmem [resolvable:$true] %s174
          %177 = dma.hbm_to_vmem [thread:$0]  %s1, 16, %s175, [#allocation6]
        $region16: #{_lambda_.6} parent=11 // pred_fallthru
          _
        // Predicated region
        $region17: #{_lambda_.6} parent=11 // pred_check
          %p178 = pneg %p98
        $region18: #{_lambda_.6} parent=11 // pred_check_branch
          %180 = sbr.rel (%p178) target = $region20
        $region19: #{_lambda_.6} parent=11 // pred_region
          %s182 = ssub.s32 16, 16
          %183 = vsyncadd [#allocation6], %s182
          %s185 = sshll.u32 [#allocation7], 4
          %s186 = int_to_ptr.vmem [resolvable:$true] %s185
          %188 = dma.hbm_to_vmem [thread:$0]  %s2, 16, %s186, [#allocation6]
        $region20: #{_lambda_.6} parent=11 // pred_fallthru
          _
        // Predicated region
        $region21: #{_lambda_.6} parent=11 // pred_check
          %p189 = pneg %p124
        $region22: #{_lambda_.6} parent=11 // pred_check_branch
          %191 = sbr.rel (%p189) target = $region24
        $region23: #{_lambda_.6} parent=11 // pred_region
          %s193 = ssub.s32 9216, 9216
          %194 = vsyncadd [#allocation9], %s193
          %s195 = smul.addr %s28, 64
          %s196 = scalar_lea.hbm %s3, %s195
          %s197 = sshll.u32 [#allocation8], 4
          %s198 = int_to_ptr.vmem [resolvable:$true] %s197
          %203 = dma.hbm_to_vmem [thread:$0]  %s196, 9216, %s198, [#allocation9], 64, 64, 4
        $region24: #{_lambda_.6} parent=11 // pred_fallthru
          _
      $region12: #{_lambda_.6} parent=5 // pred_fallthru
        _
      %p204 = scmp.lt.s32.totalorder %s18, 2
      // Predicated region
      $region25: #{_lambda_.6} parent=5 // pred_check
        %p205 = pneg %p204
      $region26: #{_lambda_.6} parent=5 // pred_check_branch
        %207 = sbr.rel (%p205) target = $region28
      $region27: #{_lambda_.6} parent=5 // pred_region
        // Predicated region
        $region29: #{_lambda_.6} parent=27 // pred_check
          %p208 = pneg %p50
        $region30: #{_lambda_.6} parent=27 // pred_check_branch
          %210 = sbr.rel (%p208) target = $region32
        $region31: #{_lambda_.6} parent=27 // pred_region
          %s211 = sand.u32 %s40, 1
          %s212 = scalar_lea.sflag [#allocation3], %s211
          %s213 = sand.u32 %s40, 1
          %s214 = smul.addr %s213, 160
          %s215 = scalar_lea.vmem [#allocation2], %s214
          %s217 = ssub.s32 2560, 2560
          %218 = vsyncadd %s212, %s217
          %s219 = smul.addr %s25, 20
          %s220 = smul.addr %s219, 128
          %s221 = scalar_lea.hbm %s0, %s220
          %s222 = sshll.u32 %s215, 4
          %s223 = int_to_ptr.vmem [resolvable:$true] %s222
          %228 = dma.hbm_to_vmem [thread:$0]  %s221, 2560, %s223, %s212, 128, 128, 8
        $region32: #{_lambda_.6} parent=27 // pred_fallthru
          _
      $region28: #{_lambda_.6} parent=5 // pred_fallthru
        _
      %p229 = scmp.le.s32.totalorder 1, %s18
      %p230 = scmp.lt.s32.totalorder %s18, 3
      %p231 = pnand %p229, %p230
      %p232 = pneg %p231
      // Predicated region
      $region33: #{_lambda_.6} parent=5 // pred_check
        _
      $region34: #{_lambda_.6} parent=5 // pred_check_branch
        %234 = sbr.rel (%p231) target = $region36
      $region35: #{_lambda_.6} parent=5 // pred_region
        %s235 = ssub.s32 %s18, 1
        %s236 = sand.u32 %s43, 1
        %s237 = scalar_lea.sflag [#allocation3], %s236
        %s238 = sand.u32 %s43, 1
        %s239 = smul.addr %s238, 160
        %s240 = scalar_lea.vmem [#allocation2], %s239
        // Predicated region
        $region37: #{_lambda_.6} parent=35 // pred_check
          %p241 = pneg %p56
        $region38: #{_lambda_.6} parent=35 // pred_check_branch
          %243 = sbr.rel (%p241) target = $region40
        $region39: #{_lambda_.6} parent=35 // pred_region
          %244 = dma.done %s237, 2560
        $region40: #{_lambda_.6} parent=35 // pred_fallthru
          _
        // Predicated region
        $region41: #{_lambda_.6} parent=35 // pred_check
          %p245 = pneg %p77
        $region42: #{_lambda_.6} parent=35 // pred_check_branch
          %247 = sbr.rel (%p245) target = $region44
        $region43: #{_lambda_.6} parent=35 // pred_region
          %248 = dma.done [#allocation6], 16
        $region44: #{_lambda_.6} parent=35 // pred_fallthru
          _
        // Predicated region
        $region45: #{_lambda_.6} parent=35 // pred_check
          %p249 = pneg %p98
        $region46: #{_lambda_.6} parent=35 // pred_check_branch
          %251 = sbr.rel (%p249) target = $region48
        $region47: #{_lambda_.6} parent=35 // pred_region
          %252 = dma.done [#allocation6], 16
        $region48: #{_lambda_.6} parent=35 // pred_fallthru
          _
        // Predicated region
        $region49: #{_lambda_.6} parent=35 // pred_check
          %p253 = pneg %p124
        $region50: #{_lambda_.6} parent=35 // pred_check_branch
          %255 = sbr.rel (%p253) target = $region52
        $region51: #{_lambda_.6} parent=35 // pred_region
          %256 = dma.done [#allocation9], 9216
        $region52: #{_lambda_.6} parent=35 // pred_fallthru
          _
        %s257 = sand.u32 %s43, 1
        %s258 = scalar_lea.sflag [#allocation3], %s257
        %s259 = sand.u32 %s43, 1
        %s260 = smul.addr %s259, 160
        %s261 = scalar_lea.vmem [#allocation2], %s260
        %p262 = pneg %p56
        %p263 = pneg %p53
        %p264 = pneg %p77
        %p265 = pneg %p74
        %p266 = pneg %p98
        %p267 = pneg %p95
        %p268 = pneg %p124
        %p269 = pneg %p121
        %p270 = pneg %p152
        %p271 = pneg %p149
        %s272 = sand.u32 %s139, 1
        %s273 = scalar_lea.sflag [#allocation4], %s272
        %s274 = sand.u32 %s139, 1
        %s275 = smul.addr %s274, 64
        %s276 = scalar_lea.vmem [#allocation10], %s275
        %v278 = vld [vmem:[%s240] sm:$0xff]
        %v279 = vld [vmem:[%s240 + $0x8] sm:$0x3]
        %v280 = vld [vmem:[%s240 + $0x10] sm:$0xff]
        %v281 = vld [vmem:[%s240 + $0x18] sm:$0x3]
        %v282 = vld [vmem:[%s240 + $0x20] sm:$0xff]
        %v283 = vld [vmem:[%s240 + $0x28] sm:$0x3]
        %v284 = vld [vmem:[%s240 + $0x30] sm:$0xff]
        %v285 = vld [vmem:[%s240 + $0x38] sm:$0x3]
        %v286 = vld [vmem:[%s240 + $0x40] sm:$0xff]
        %v287 = vld [vmem:[%s240 + $0x48] sm:$0x3]
        %v288 = vld [vmem:[%s240 + $0x50] sm:$0xff]
        %v289 = vld [vmem:[%s240 + $0x58] sm:$0x3]
        %v290 = vld [vmem:[%s240 + $0x60] sm:$0xff]
        %v291 = vld [vmem:[%s240 + $0x68] sm:$0x3]
        %v292 = vld [vmem:[%s240 + $0x70] sm:$0xff]
        %v293 = vld [vmem:[%s240 + $0x78] sm:$0x3]
        %v294 = vld [vmem:[%s240 + $0x80] sm:$0xff]
        %v295 = vld [vmem:[%s240 + $0x88] sm:$0x3]
        %v296 = vld [vmem:[%s240 + $0x90] sm:$0xff]
        %v297 = vld [vmem:[%s240 + $0x98] sm:$0x3]
        %v298 = vld [vmem:[#allocation5] sm:$0x1]
        %v299 = vld [vmem:[#allocation7] sm:$0x1]
        %v301 = vlaneseq
        %v302 = vshrl.u32 %v301, 7
        %v303 = vsub.s32 0, %v302
        %v304 = vrot.slane %v298, %v303
        %v306 = vmul.f32 %v278, %v304
        %v307 = vmul.f32 %v279, %v304
        %v308 = vmul.f32 %v280, %v304
        %v309 = vmul.f32 %v281, %v304
        %v310 = vmul.f32 %v282, %v304
        %v311 = vmul.f32 %v283, %v304
        %v312 = vmul.f32 %v284, %v304
        %v313 = vmul.f32 %v285, %v304
        %v314 = vmul.f32 %v286, %v304
        %v315 = vmul.f32 %v287, %v304
        %v316 = vmul.f32 %v288, %v304
        %v317 = vmul.f32 %v289, %v304
        %v318 = vmul.f32 %v290, %v304
        %v319 = vmul.f32 %v291, %v304
        %v320 = vmul.f32 %v292, %v304
        %v321 = vmul.f32 %v293, %v304
        %v322 = vmul.f32 %v294, %v304
        %v323 = vmul.f32 %v295, %v304
        %v324 = vmul.f32 %v296, %v304
        %v325 = vmul.f32 %v297, %v304
        %v327 = vlaneseq
        %v328 = vshrl.u32 %v327, 7
        %v329 = vsub.s32 0, %v328
        %v330 = vrot.slane %v299, %v329
        %v332 = vadd.f32 %v306, %v330
        %v333 = vadd.f32 %v307, %v330
        %v334 = vadd.f32 %v308, %v330
        %v335 = vadd.f32 %v309, %v330
        %v336 = vadd.f32 %v310, %v330
        %v337 = vadd.f32 %v311, %v330
        %v338 = vadd.f32 %v312, %v330
        %v339 = vadd.f32 %v313, %v330
        %v340 = vadd.f32 %v314, %v330
        %v341 = vadd.f32 %v315, %v330
        %v342 = vadd.f32 %v316, %v330
        %v343 = vadd.f32 %v317, %v330
        %v344 = vadd.f32 %v318, %v330
        %v345 = vadd.f32 %v319, %v330
        %v346 = vadd.f32 %v320, %v330
        %v347 = vadd.f32 %v321, %v330
        %v348 = vadd.f32 %v322, %v330
        %v349 = vadd.f32 %v323, %v330
        %v350 = vadd.f32 %v324, %v330
        %v351 = vadd.f32 %v325, %v330
        %v352 = vmax.f32 %v332, 0.0
        %v353 = vmax.f32 %v333, 0.0
        %v354 = vmax.f32 %v334, 0.0
        %v355 = vmax.f32 %v335, 0.0
        %v356 = vmax.f32 %v336, 0.0
        %v357 = vmax.f32 %v337, 0.0
        %v358 = vmax.f32 %v338, 0.0
        %v359 = vmax.f32 %v339, 0.0
        %v360 = vmax.f32 %v340, 0.0
        %v361 = vmax.f32 %v341, 0.0
        %v362 = vmax.f32 %v342, 0.0
        %v363 = vmax.f32 %v343, 0.0
        %v364 = vmax.f32 %v344, 0.0
        %v365 = vmax.f32 %v345, 0.0
        %v366 = vmax.f32 %v346, 0.0
        %v367 = vmax.f32 %v347, 0.0
        %v368 = vmax.f32 %v348, 0.0
        %v369 = vmax.f32 %v349, 0.0
        %v370 = vmax.f32 %v350, 0.0
        %v371 = vmax.f32 %v351, 0.0
        %v372 = vlaneseq
        %v373 = vshrl.u32 %v372, 7
        %v374 = vadd.s32 %v373, 8
        %vm375 = vcmp.ge.s32.totalorder %v373, 1
        %vm376 = vcmp.ge.s32.totalorder %v374, 1
        %vm377 = vmand 0, %vm375
        %vm378 = vmand 0, %vm376
        %vm379 = vmand 1, %vm375
        %vm380 = vmand 1, %vm376
        %vm381 = vcmp.le.s32.totalorder %v373, 8
        %vm382 = vcmp.le.s32.totalorder %v374, 8
        %vm383 = vmand %vm377, %vm381
        %vm384 = vmand %vm378, %vm382
        %vm385 = vmand %vm379, %vm381
        %vm386 = vmand %vm380, %vm382
        %v387 = vsel %vm383, 1, 0
        %v388 = vsel %vm384, 1, 0
        %v389 = vsel %vm385, 1, 0
        %v390 = vsel %vm386, 1, 0
        %vm391 = vcmp.eq.s32.totalorder %v387, 1
        %vm392 = vcmp.eq.s32.totalorder %v388, 1
        %vm393 = vcmp.eq.s32.totalorder %v389, 1
        %vm394 = vcmp.eq.s32.totalorder %v390, 1
        %v395 = vsel %vm391, %v352, 0.0
        %v396 = vsel %vm392, %v353, 0.0
        %v397 = vsel %vm393, %v354, 0.0
        %v398 = vsel %vm394, %v355, 0.0
        %v399 = vsel %vm393, %v356, 0.0
        %v400 = vsel %vm394, %v357, 0.0
        %v401 = vsel %vm393, %v358, 0.0
        %v402 = vsel %vm394, %v359, 0.0
        %v403 = vsel %vm393, %v360, 0.0
        %v404 = vsel %vm394, %v361, 0.0
        %v405 = vsel %vm393, %v362, 0.0
        %v406 = vsel %vm394, %v363, 0.0
        %v407 = vsel %vm393, %v364, 0.0
        %v408 = vsel %vm394, %v365, 0.0
        %v409 = vsel %vm393, %v366, 0.0
        %v410 = vsel %vm394, %v367, 0.0
        %v411 = vsel %vm393, %v368, 0.0
        %v412 = vsel %vm394, %v369, 0.0
        %v413 = vsel %vm391, %v370, 0.0
        %v414 = vsel %vm392, %v371, 0.0
        %v415 = vpack.c.bf16 %v396, %v395
        %v416 = vpack.c.bf16 %v398, %v397
        %v417 = vpack.c.bf16 %v400, %v399
        %v418 = vpack.c.bf16 %v402, %v401
        %v419 = vpack.c.bf16 %v404, %v403
        %v420 = vpack.c.bf16 %v406, %v405
        %v421 = vpack.c.bf16 %v408, %v407
        %v422 = vpack.c.bf16 %v410, %v409
        %v423 = vpack.c.bf16 %v412, %v411
        %v424 = vpack.c.bf16 %v414, %v413
        %v425 = vld [vmem:[#allocation8] sm:$0xf]
        %v426 = vld [vmem:[#allocation8 + $0x4] sm:$0xf]
        %v427 = vld [vmem:[#allocation8 + $0x8] sm:$0xf]
        %v428 = vld [vmem:[#allocation8 + $0xc] sm:$0xf]
        %v429 = vld [vmem:[#allocation8 + $0x10] sm:$0xf]
        %v430 = vld [vmem:[#allocation8 + $0x14] sm:$0xf]
        %v431 = vld [vmem:[#allocation8 + $0x18] sm:$0xf]
        %v432 = vld [vmem:[#allocation8 + $0x1c] sm:$0xf]
        %v433 = vld [vmem:[#allocation8 + $0x20] sm:$0xf]
        %v434 = vld [vmem:[#allocation8 + $0x24] sm:$0xf]
        %v435 = vld [vmem:[#allocation8 + $0x28] sm:$0xf]
        %v436 = vld [vmem:[#allocation8 + $0x2c] sm:$0xf]
        %v437 = vld [vmem:[#allocation8 + $0x30] sm:$0xf]
        %v438 = vld [vmem:[#allocation8 + $0x34] sm:$0xf]
        %v439 = vld [vmem:[#allocation8 + $0x38] sm:$0xf]
        %v440 = vld [vmem:[#allocation8 + $0x3c] sm:$0xf]
        %v449 = vunpack.c.l.b16 %v415
        %v450 = vunpack.c.h.b16 %v415
        %v451 = vunpack.c.l.b16 %v416
        %v452 = vunpack.c.h.b16 %v416
        %v453 = vunpack.c.l.b16 %v417
        %v454 = vunpack.c.h.b16 %v417
        %v455 = vunpack.c.l.b16 %v418
        %v456 = vunpack.c.h.b16 %v418
        %v457 = vunpack.c.l.b16 %v419
        %v458 = vunpack.c.h.b16 %v419
        %v459 = vunpack.c.l.b16 %v420
        %v460 = vunpack.c.h.b16 %v420
        %v461 = vunpack.c.l.b16 %v421
        %v462 = vunpack.c.h.b16 %v421
        %v463 = vunpack.c.l.b16 %v422
        %v464 = vunpack.c.h.b16 %v422
        %v465 = vpack.c.b16 %v449, %v449
        %v466 = vpack.c.b16 %v450, %v450
        %v467 = vpack.c.b16 %v451, %v451
        %v468 = vpack.c.b16 %v452, %v452
        %v469 = vpack.c.b16 %v453, %v453
        %v470 = vpack.c.b16 %v454, %v454
        %v471 = vpack.c.b16 %v455, %v455
        %v472 = vpack.c.b16 %v456, %v456
        %v473 = vpack.c.b16 %v457, %v457
        %v474 = vpack.c.b16 %v458, %v458
        %v475 = vpack.c.b16 %v459, %v459
        %v476 = vpack.c.b16 %v460, %v460
        %v477 = vpack.c.b16 %v461, %v461
        %v478 = vpack.c.b16 %v462, %v462
        %v479 = vpack.c.b16 %v463, %v463
        %v480 = vpack.c.b16 %v464, %v464
        %vm481 = vsmask.f32 3328
        %vm482 = vsmask.f32 7440
        %vm483 = vmor %vm481, %vm482
        %v485 = vshrl.u32 %v465, 16
        %v487 = vrot.slane %v485, 4
        %v488 = vshll.u32 %v465, 16
        %v490 = vrot.slane %v488, 5
        %v491 = vor.u32 %v487, %v490
        %v492 = vrot.slane %v491, 4
        %v494 = vshll.u32 %v466, 16
        %v496 = vrot.slane %v494, 5
        %v497 = vsel %vm483, %v492, %v496
        %v499 = vshrl.u32 %v467, 16
        %v501 = vrot.slane %v499, 4
        %v502 = vshll.u32 %v467, 16
        %v504 = vrot.slane %v502, 5
        %v505 = vor.u32 %v501, %v504
        %v506 = vrot.slane %v505, 4
        %v508 = vshll.u32 %v468, 16
        %v510 = vrot.slane %v508, 5
        %v511 = vsel %vm483, %v506, %v510
        %v513 = vshrl.u32 %v469, 16
        %v515 = vrot.slane %v513, 4
        %v516 = vshll.u32 %v469, 16
        %v518 = vrot.slane %v516, 5
        %v519 = vor.u32 %v515, %v518
        %v520 = vrot.slane %v519, 4
        %v522 = vshll.u32 %v470, 16
        %v524 = vrot.slane %v522, 5
        %v525 = vsel %vm483, %v520, %v524
        %v527 = vshrl.u32 %v471, 16
        %v529 = vrot.slane %v527, 4
        %v530 = vshll.u32 %v471, 16
        %v532 = vrot.slane %v530, 5
        %v533 = vor.u32 %v529, %v532
        %v534 = vrot.slane %v533, 4
        %v536 = vshll.u32 %v472, 16
        %v538 = vrot.slane %v536, 5
        %v539 = vsel %vm483, %v534, %v538
        %v541 = vshrl.u32 %v473, 16
        %v543 = vrot.slane %v541, 4
        %v544 = vshll.u32 %v473, 16
        %v546 = vrot.slane %v544, 5
        %v547 = vor.u32 %v543, %v546
        %v548 = vrot.slane %v547, 4
        %v550 = vshll.u32 %v474, 16
        %v552 = vrot.slane %v550, 5
        %v553 = vsel %vm483, %v548, %v552
        %v555 = vshrl.u32 %v475, 16
        %v557 = vrot.slane %v555, 4
        %v558 = vshll.u32 %v475, 16
        %v560 = vrot.slane %v558, 5
        %v561 = vor.u32 %v557, %v560
        %v562 = vrot.slane %v561, 4
        %v564 = vshll.u32 %v476, 16
        %v566 = vrot.slane %v564, 5
        %v567 = vsel %vm483, %v562, %v566
        %v569 = vshrl.u32 %v477, 16
        %v571 = vrot.slane %v569, 4
        %v572 = vshll.u32 %v477, 16
        %v574 = vrot.slane %v572, 5
        %v575 = vor.u32 %v571, %v574
        %v576 = vrot.slane %v575, 4
        %v578 = vshll.u32 %v478, 16
        %v580 = vrot.slane %v578, 5
        %v581 = vsel %vm483, %v576, %v580
        %v583 = vshrl.u32 %v479, 16
        %v585 = vrot.slane %v583, 4
        %v586 = vshll.u32 %v479, 16
        %v588 = vrot.slane %v586, 5
        %v589 = vor.u32 %v585, %v588
        %v590 = vrot.slane %v589, 4
        %v592 = vshll.u32 %v480, 16
        %v594 = vrot.slane %v592, 5
        %v595 = vsel %vm483, %v590, %v594
        %s596 = scalar_lea.vmem [#allocation8], 64
        %v597 = vld [vmem:[%s596] sm:$0xf]
        %v598 = vld [vmem:[%s596 + $0x4] sm:$0xf]
        %v599 = vld [vmem:[%s596 + $0x8] sm:$0xf]
        %v600 = vld [vmem:[%s596 + $0xc] sm:$0xf]
        %v601 = vld [vmem:[%s596 + $0x10] sm:$0xf]
        %v602 = vld [vmem:[%s596 + $0x14] sm:$0xf]
        %v603 = vld [vmem:[%s596 + $0x18] sm:$0xf]
        %v604 = vld [vmem:[%s596 + $0x1c] sm:$0xf]
        %v605 = vld [vmem:[%s596 + $0x20] sm:$0xf]
        %v606 = vld [vmem:[%s596 + $0x24] sm:$0xf]
        %v607 = vld [vmem:[%s596 + $0x28] sm:$0xf]
        %v608 = vld [vmem:[%s596 + $0x2c] sm:$0xf]
        %v609 = vld [vmem:[%s596 + $0x30] sm:$0xf]
        %v610 = vld [vmem:[%s596 + $0x34] sm:$0xf]
        %v611 = vld [vmem:[%s596 + $0x38] sm:$0xf]
        %v612 = vld [vmem:[%s596 + $0x3c] sm:$0xf]
        %v613 = vunpack.c.l.b16 %v497
        %v614 = vunpack.c.l.b16 %v511
        %v615 = vunpack.c.l.b16 %v525
        %v616 = vunpack.c.l.b16 %v539
        %v617 = vunpack.c.l.b16 %v553
        %v618 = vunpack.c.l.b16 %v567
        %v619 = vunpack.c.l.b16 %v581
        %v620 = vunpack.c.l.b16 %v595
        %v621 = vpack.c.b16 %v614, %v613
        %v622 = vpack.c.b16 %v616, %v615
        %v623 = vpack.c.b16 %v618, %v617
        %v624 = vpack.c.b16 %v620, %v619
        %v645 = vunpack.c.l.b16 %v597
        %v646 = vunpack.c.l.b16 %v598
        %v647 = vunpack.c.l.b16 %v599
        %v648 = vunpack.c.l.b16 %v600
        %v649 = vunpack.c.l.b16 %v601
        %v650 = vunpack.c.l.b16 %v602
        %v651 = vunpack.c.l.b16 %v603
        %v652 = vunpack.c.l.b16 %v604
        %v653 = vunpack.c.l.b16 %v605
        %v654 = vunpack.c.l.b16 %v606
        %v655 = vunpack.c.l.b16 %v607
        %v656 = vunpack.c.l.b16 %v608
        %v657 = vunpack.c.l.b16 %v609
        %v658 = vunpack.c.l.b16 %v610
        %v659 = vunpack.c.l.b16 %v611
        %v660 = vunpack.c.l.b16 %v612
        %v661 = vpack.c.b16 %v646, %v645
        %v662 = vpack.c.b16 %v648, %v647
        %v663 = vpack.c.b16 %v650, %v649
        %v664 = vpack.c.b16 %v652, %v651
        %v665 = vpack.c.b16 %v654, %v653
        %v666 = vpack.c.b16 %v656, %v655
        %v667 = vpack.c.b16 %v658, %v657
        %v668 = vpack.c.b16 %v660, %v659
        %677 = vmatprep.subr.bf16.mxu0 0
        %678 = vmatpush1.bf16.msra.mxu0 %v661
        %679 = vmatprep.subr.bf16.mxu0 0
        %680 = vmatpush1.bf16.msra.mxu0 %v662
        %681 = vmatprep.subr.bf16.mxu0 0
        %682 = vmatpush1.bf16.msra.mxu0 %v663
        %683 = vmatprep.subr.bf16.mxu0 0
        %684 = vmatpush1.bf16.msra.mxu0 %v664
        %685 = vmatprep.subr.bf16.mxu0 0
        %686 = vmatpush1.bf16.msra.mxu0 %v665
        %687 = vmatprep.subr.bf16.mxu0 0
        %688 = vmatpush1.bf16.msra.mxu0 %v666
        %689 = vmatprep.subr.bf16.mxu0 0
        %690 = vmatpush1.bf16.msra.mxu0 %v667
        %691 = vmatprep.subr.bf16.mxu0 0
        %692 = vmatpush1.bf16.msra.mxu0 %v668
        %693 = vmatprep.subr.bf16.mxu0 0
        %694 = vmatpush1.bf16.msra.mxu0 0
        %695 = vmatprep.subr.bf16.mxu0 0
        %696 = vmatpush1.bf16.msra.mxu0 0
        %697 = vmatprep.subr.bf16.mxu0 0
        %698 = vmatpush1.bf16.msra.mxu0 0
        %699 = vmatprep.subr.bf16.mxu0 0
        %700 = vmatpush1.bf16.msra.mxu0 0
        %701 = vmatprep.subr.bf16.mxu0 0
        %702 = vmatpush1.bf16.msra.mxu0 0
        %703 = vmatprep.subr.bf16.mxu0 0
        %704 = vmatpush1.bf16.msra.mxu0 0
        %705 = vmatprep.subr.bf16.mxu0 0
        %706 = vmatpush1.bf16.msra.mxu0 0
        %707 = vmatprep.subr.bf16.mxu0 0
        %708 = vmatpush1.bf16.msra.mxu0 0
        %709 = vmatprep.mubr.bf16.mxu0 0
        %710 = vmatmul.mubr.bf16.gmra.mrb[0].mxu0 %v621
        %v711 = vpop.f32.mrb[0].mxu0
        %v712 = vadd.f32 0.0, %v711
        %v713 = vpop.f32.mrb[0].mxu0
        %v714 = vpop.f32.mrb[0].mxu0
        %v715 = vadd.f32 0.0, %v714
        %v716 = vpop.f32.mrb[0].mxu0
        %717 = vmatprep.mubr.bf16.mxu0 0
        %718 = vmatmul.mubr.bf16.gmra.mrb[0].mxu0 %v622
        %v719 = vpop.f32.mrb[0].mxu0
        %v720 = vadd.f32 0.0, %v719
        %v721 = vpop.f32.mrb[0].mxu0
        %v722 = vpop.f32.mrb[0].mxu0
        %v723 = vadd.f32 0.0, %v722
        %v724 = vpop.f32.mrb[0].mxu0
        %725 = vmatprep.mubr.bf16.mxu0 0
        %726 = vmatmul.mubr.bf16.gmra.mrb[0].mxu0 %v623
        %v727 = vpop.f32.mrb[0].mxu0
        %v728 = vadd.f32 0.0, %v727
        %v729 = vpop.f32.mrb[0].mxu0
        %v730 = vpop.f32.mrb[0].mxu0
        %v731 = vadd.f32 0.0, %v730
        %v732 = vpop.f32.mrb[0].mxu0
        %733 = vmatprep.mubr.bf16.mxu0 0
        %734 = vmatmul.mubr.bf16.gmra.mrb[0].mxu0 %v624
        %v735 = vpop.f32.mrb[0].mxu0
        %v736 = vadd.f32 0.0, %v735
        %v737 = vpop.f32.mrb[0].mxu0
        %v738 = vpop.f32.mrb[0].mxu0
        %v739 = vadd.f32 0.0, %v738
        %v740 = vpop.f32.mrb[0].mxu0
        %741 = vdwg.mxu0
        %v742 = vpack.c.b16 %v451, %v449
        %v743 = vpack.c.b16 %v455, %v453
        %v744 = vpack.c.b16 %v459, %v457
        %v745 = vpack.c.b16 %v463, %v461
        %v766 = vunpack.c.l.b16 %v425
        %v767 = vunpack.c.l.b16 %v426
        %v768 = vunpack.c.l.b16 %v427
        %v769 = vunpack.c.l.b16 %v428
        %v770 = vunpack.c.l.b16 %v429
        %v771 = vunpack.c.l.b16 %v430
        %v772 = vunpack.c.l.b16 %v431
        %v773 = vunpack.c.l.b16 %v432
        %v774 = vunpack.c.l.b16 %v433
        %v775 = vunpack.c.l.b16 %v434
        %v776 = vunpack.c.l.b16 %v435
        %v777 = vunpack.c.l.b16 %v436
        %v778 = vunpack.c.l.b16 %v437
        %v779 = vunpack.c.l.b16 %v438
        %v780 = vunpack.c.l.b16 %v439
        %v781 = vunpack.c.l.b16 %v440
        %v782 = vpack.c.b16 %v767, %v766
        %v783 = vpack.c.b16 %v769, %v768
        %v784 = vpack.c.b16 %v771, %v770
        %v785 = vpack.c.b16 %v773, %v772
        %v786 = vpack.c.b16 %v775, %v774
        %v787 = vpack.c.b16 %v777, %v776
        %v788 = vpack.c.b16 %v779, %v778
        %v789 = vpack.c.b16 %v781, %v780
        %798 = vmatprep.subr.bf16.mxu0 0
        %799 = vmatpush1.bf16.msra.mxu0 %v782
        %800 = vmatprep.subr.bf16.mxu0 0
        %801 = vmatpush1.bf16.msra.mxu0 %v783
        %802 = vmatprep.subr.bf16.mxu0 0
        %803 = vmatpush1.bf16.msra.mxu0 %v784
        %804 = vmatprep.subr.bf16.mxu0 0
        %805 = vmatpush1.bf16.msra.mxu0 %v785
        %806 = vmatprep.subr.bf16.mxu0 0
        %807 = vmatpush1.bf16.msra.mxu0 %v786
        %808 = vmatprep.subr.bf16.mxu0 0
        %809 = vmatpush1.bf16.msra.mxu0 %v787
        %810 = vmatprep.subr.bf16.mxu0 0
        %811 = vmatpush1.bf16.msra.mxu0 %v788
        %812 = vmatprep.subr.bf16.mxu0 0
        %813 = vmatpush1.bf16.msra.mxu0 %v789
        %814 = vmatprep.subr.bf16.mxu0 0
        %815 = vmatpush1.bf16.msra.mxu0 0
        %816 = vmatprep.subr.bf16.mxu0 0
        %817 = vmatpush1.bf16.msra.mxu0 0
        %818 = vmatprep.subr.bf16.mxu0 0
        %819 = vmatpush1.bf16.msra.mxu0 0
        %820 = vmatprep.subr.bf16.mxu0 0
        %821 = vmatpush1.bf16.msra.mxu0 0
        %822 = vmatprep.subr.bf16.mxu0 0
        %823 = vmatpush1.bf16.msra.mxu0 0
        %824 = vmatprep.subr.bf16.mxu0 0
        %825 = vmatpush1.bf16.msra.mxu0 0
        %826 = vmatprep.subr.bf16.mxu0 0
        %827 = vmatpush1.bf16.msra.mxu0 0
        %828 = vmatprep.subr.bf16.mxu0 0
        %829 = vmatpush1.bf16.msra.mxu0 0
        %830 = vmatprep.mubr.bf16.mxu0 0
        %831 = vmatmul.mubr.bf16.gmra.mrb[0].mxu0 %v742
        %v832 = vpop.f32.mrb[0].mxu0
        %v833 = vadd.f32 %v712, %v832
        %v834 = vpop.f32.mrb[0].mxu0
        %v835 = vpop.f32.mrb[0].mxu0
        %v836 = vadd.f32 %v715, %v835
        %v837 = vpop.f32.mrb[0].mxu0
        %838 = vmatprep.mubr.bf16.mxu0 0
        %839 = vmatmul.mubr.bf16.gmra.mrb[0].mxu0 %v743
        %v840 = vpop.f32.mrb[0].mxu0
        %v841 = vadd.f32 %v720, %v840
        %v842 = vpop.f32.mrb[0].mxu0
        %v843 = vpop.f32.mrb[0].mxu0
        %v844 = vadd.f32 %v723, %v843
        %v845 = vpop.f32.mrb[0].mxu0
        %846 = vmatprep.mubr.bf16.mxu0 0
        %847 = vmatmul.mubr.bf16.gmra.mrb[0].mxu0 %v744
        %v848 = vpop.f32.mrb[0].mxu0
        %v849 = vadd.f32 %v728, %v848
        %v850 = vpop.f32.mrb[0].mxu0
        %v851 = vpop.f32.mrb[0].mxu0
        %v852 = vadd.f32 %v731, %v851
        %v853 = vpop.f32.mrb[0].mxu0
        %854 = vmatprep.mubr.bf16.mxu0 0
        %855 = vmatmul.mubr.bf16.gmra.mrb[0].mxu0 %v745
        %v856 = vpop.f32.mrb[0].mxu0
        %v857 = vadd.f32 %v736, %v856
        %v858 = vpop.f32.mrb[0].mxu0
        %v859 = vpop.f32.mrb[0].mxu0
        %v860 = vadd.f32 %v739, %v859
        %v861 = vpop.f32.mrb[0].mxu0
        %862 = vdwg.mxu0
        %vm863 = vcmask 1042432
        %vm864 = vcmask 1046532
        %vm865 = vmor %vm863, %vm864
        %v866 = vrot.slane %v465, 5
        %v867 = vrot.slane %v866, 4
        %v868 = vrot.slane %v466, 5
        %v869 = vsel %vm865, %v867, %v868
        %v870 = vrot.slane %v467, 5
        %v871 = vrot.slane %v870, 4
        %v872 = vrot.slane %v468, 5
        %v873 = vsel %vm865, %v871, %v872
        %v874 = vrot.slane %v469, 5
        %v875 = vrot.slane %v874, 4
        %v876 = vrot.slane %v470, 5
        %v877 = vsel %vm865, %v875, %v876
        %v878 = vrot.slane %v471, 5
        %v879 = vrot.slane %v878, 4
        %v880 = vrot.slane %v472, 5
        %v881 = vsel %vm865, %v879, %v880
        %v882 = vrot.slane %v473, 5
        %v883 = vrot.slane %v882, 4
        %v884 = vrot.slane %v474, 5
        %v885 = vsel %vm865, %v883, %v884
        %v886 = vrot.slane %v475, 5
        %v887 = vrot.slane %v886, 4
        %v888 = vrot.slane %v476, 5
        %v889 = vsel %vm865, %v887, %v888
        %v890 = vrot.slane %v477, 5
        %v891 = vrot.slane %v890, 4
        %v892 = vrot.slane %v478, 5
        %v893 = vsel %vm865, %v891, %v892
        %v894 = vrot.slane %v479, 5
        %v895 = vrot.slane %v894, 4
        %v896 = vrot.slane %v480, 5
        %v897 = vsel %vm865, %v895, %v896
        %s898 = scalar_lea.vmem [#allocation8], 128
        %v899 = vld [vmem:[%s898] sm:$0xf]
        %v900 = vld [vmem:[%s898 + $0x4] sm:$0xf]
        %v901 = vld [vmem:[%s898 + $0x8] sm:$0xf]
        %v902 = vld [vmem:[%s898 + $0xc] sm:$0xf]
        %v903 = vld [vmem:[%s898 + $0x10] sm:$0xf]
        %v904 = vld [vmem:[%s898 + $0x14] sm:$0xf]
        %v905 = vld [vmem:[%s898 + $0x18] sm:$0xf]
        %v906 = vld [vmem:[%s898 + $0x1c] sm:$0xf]
        %v907 = vld [vmem:[%s898 + $0x20] sm:$0xf]
        %v908 = vld [vmem:[%s898 + $0x24] sm:$0xf]
        %v909 = vld [vmem:[%s898 + $0x28] sm:$0xf]
        %v910 = vld [vmem:[%s898 + $0x2c] sm:$0xf]
        %v911 = vld [vmem:[%s898 + $0x30] sm:$0xf]
        %v912 = vld [vmem:[%s898 + $0x34] sm:$0xf]
        %v913 = vld [vmem:[%s898 + $0x38] sm:$0xf]
        %v914 = vld [vmem:[%s898 + $0x3c] sm:$0xf]
        %v915 = vunpack.c.l.b16 %v869
        %v916 = vunpack.c.l.b16 %v873
        %v917 = vunpack.c.l.b16 %v877
        %v918 = vunpack.c.l.b16 %v881
        %v919 = vunpack.c.l.b16 %v885
        %v920 = vunpack.c.l.b16 %v889
        %v921 = vunpack.c.l.b16 %v893
        %v922 = vunpack.c.l.b16 %v897
        %v923 = vpack.c.b16 %v916, %v915
        %v924 = vpack.c.b16 %v918, %v917
        %v925 = vpack.c.b16 %v920, %v919
        %v926 = vpack.c.b16 %v922, %v921
        %v947 = vunpack.c.l.b16 %v899
        %v948 = vunpack.c.l.b16 %v900
        %v949 = vunpack.c.l.b16 %v901
        %v950 = vunpack.c.l.b16 %v902
        %v951 = vunpack.c.l.b16 %v903
        %v952 = vunpack.c.l.b16 %v904
        %v953 = vunpack.c.l.b16 %v905
        %v954 = vunpack.c.l.b16 %v906
        %v955 = vunpack.c.l.b16 %v907
        %v956 = vunpack.c.l.b16 %v908
        %v957 = vunpack.c.l.b16 %v909
        %v958 = vunpack.c.l.b16 %v910
        %v959 = vunpack.c.l.b16 %v911
        %v960 = vunpack.c.l.b16 %v912
        %v961 = vunpack.c.l.b16 %v913
        %v962 = vunpack.c.l.b16 %v914
        %v963 = vpack.c.b16 %v948, %v947
        %v964 = vpack.c.b16 %v950, %v949
        %v965 = vpack.c.b16 %v952, %v951
        %v966 = vpack.c.b16 %v954, %v953
        %v967 = vpack.c.b16 %v956, %v955
        %v968 = vpack.c.b16 %v958, %v957
        %v969 = vpack.c.b16 %v960, %v959
        %v970 = vpack.c.b16 %v962, %v961
        %979 = vmatprep.subr.bf16.mxu0 0
        %980 = vmatpush1.bf16.msra.mxu0 %v963
        %981 = vmatprep.subr.bf16.mxu0 0
        %982 = vmatpush1.bf16.msra.mxu0 %v964
        %983 = vmatprep.subr.bf16.mxu0 0
        %984 = vmatpush1.bf16.msra.mxu0 %v965
        %985 = vmatprep.subr.bf16.mxu0 0
        %986 = vmatpush1.bf16.msra.mxu0 %v966
        %987 = vmatprep.subr.bf16.mxu0 0
        %988 = vmatpush1.bf16.msra.mxu0 %v967
        %989 = vmatprep.subr.bf16.mxu0 0
        %990 = vmatpush1.bf16.msra.mxu0 %v968
        %991 = vmatprep.subr.bf16.mxu0 0
        %992 = vmatpush1.bf16.msra.mxu0 %v969
        %993 = vmatprep.subr.bf16.mxu0 0
        %994 = vmatpush1.bf16.msra.mxu0 %v970
        %995 = vmatprep.subr.bf16.mxu0 0
        %996 = vmatpush1.bf16.msra.mxu0 0
        %997 = vmatprep.subr.bf16.mxu0 0
        %998 = vmatpush1.bf16.msra.mxu0 0
        %999 = vmatprep.subr.bf16.mxu0 0
        %1000 = vmatpush1.bf16.msra.mxu0 0
        %1001 = vmatprep.subr.bf16.mxu0 0
        %1002 = vmatpush1.bf16.msra.mxu0 0
        %1003 = vmatprep.subr.bf16.mxu0 0
        %1004 = vmatpush1.bf16.msra.mxu0 0
        %1005 = vmatprep.subr.bf16.mxu0 0
        %1006 = vmatpush1.bf16.msra.mxu0 0
        %1007 = vmatprep.subr.bf16.mxu0 0
        %1008 = vmatpush1.bf16.msra.mxu0 0
        %1009 = vmatprep.subr.bf16.mxu0 0
        %1010 = vmatpush1.bf16.msra.mxu0 0
        %1011 = vmatprep.mubr.bf16.mxu0 0
        %1012 = vmatmul.mubr.bf16.gmra.mrb[0].mxu0 %v923
        %v1013 = vpop.f32.mrb[0].mxu0
        %v1014 = vadd.f32 0.0, %v1013
        %v1015 = vpop.f32.mrb[0].mxu0
        %v1016 = vpop.f32.mrb[0].mxu0
        %v1017 = vadd.f32 0.0, %v1016
        %v1018 = vpop.f32.mrb[0].mxu0
        %1019 = vmatprep.mubr.bf16.mxu0 0
        %1020 = vmatmul.mubr.bf16.gmra.mrb[0].mxu0 %v924
        %v1021 = vpop.f32.mrb[0].mxu0
        %v1022 = vadd.f32 0.0, %v1021
        %v1023 = vpop.f32.mrb[0].mxu0
        %v1024 = vpop.f32.mrb[0].mxu0
        %v1025 = vadd.f32 0.0, %v1024
        %v1026 = vpop.f32.mrb[0].mxu0
        %1027 = vmatprep.mubr.bf16.mxu0 0
        %1028 = vmatmul.mubr.bf16.gmra.mrb[0].mxu0 %v925
        %v1029 = vpop.f32.mrb[0].mxu0
        %v1030 = vadd.f32 0.0, %v1029
        %v1031 = vpop.f32.mrb[0].mxu0
        %v1032 = vpop.f32.mrb[0].mxu0
        %v1033 = vadd.f32 0.0, %v1032
        %v1034 = vpop.f32.mrb[0].mxu0
        %1035 = vmatprep.mubr.bf16.mxu0 0
        %1036 = vmatmul.mubr.bf16.gmra.mrb[0].mxu0 %v926
        %v1037 = vpop.f32.mrb[0].mxu0
        %v1038 = vadd.f32 0.0, %v1037
        %v1039 = vpop.f32.mrb[0].mxu0
        %v1040 = vpop.f32.mrb[0].mxu0
        %v1041 = vadd.f32 0.0, %v1040
        %v1042 = vpop.f32.mrb[0].mxu0
        %1043 = vdwg.mxu0
        %v1044 = vadd.f32 %v833, %v1014
        %v1045 = vadd.f32 %v836, %v1017
        %v1046 = vadd.f32 %v841, %v1022
        %v1047 = vadd.f32 %v844, %v1025
        %v1048 = vadd.f32 %v849, %v1030
        %v1049 = vadd.f32 %v852, %v1033
        %v1050 = vadd.f32 %v857, %v1038
        %v1051 = vadd.f32 %v860, %v1041
        %s1052 = scalar_lea.vmem [#allocation8], 192
        %v1053 = vld [vmem:[%s1052] sm:$0xf]
        %v1054 = vld [vmem:[%s1052 + $0x4] sm:$0xf]
        %v1055 = vld [vmem:[%s1052 + $0x8] sm:$0xf]
        %v1056 = vld [vmem:[%s1052 + $0xc] sm:$0xf]
        %v1057 = vld [vmem:[%s1052 + $0x10] sm:$0xf]
        %v1058 = vld [vmem:[%s1052 + $0x14] sm:$0xf]
        %v1059 = vld [vmem:[%s1052 + $0x18] sm:$0xf]
        %v1060 = vld [vmem:[%s1052 + $0x1c] sm:$0xf]
        %v1061 = vld [vmem:[%s1052 + $0x20] sm:$0xf]
        %v1062 = vld [vmem:[%s1052 + $0x24] sm:$0xf]
        %v1063 = vld [vmem:[%s1052 + $0x28] sm:$0xf]
        %v1064 = vld [vmem:[%s1052 + $0x2c] sm:$0xf]
        %v1065 = vld [vmem:[%s1052 + $0x30] sm:$0xf]
        %v1066 = vld [vmem:[%s1052 + $0x34] sm:$0xf]
        %v1067 = vld [vmem:[%s1052 + $0x38] sm:$0xf]
        %v1068 = vld [vmem:[%s1052 + $0x3c] sm:$0xf]
        %v1070 = vunpack.c.l.b16 %v423
        %v1071 = vpack.c.b16 %v453, %v451
        %v1072 = vpack.c.b16 %v457, %v455
        %v1073 = vpack.c.b16 %v461, %v459
        %v1074 = vpack.c.b16 %v1070, %v463
        %v1095 = vunpack.c.l.b16 %v1053
        %v1096 = vunpack.c.l.b16 %v1054
        %v1097 = vunpack.c.l.b16 %v1055
        %v1098 = vunpack.c.l.b16 %v1056
        %v1099 = vunpack.c.l.b16 %v1057
        %v1100 = vunpack.c.l.b16 %v1058
        %v1101 = vunpack.c.l.b16 %v1059
        %v1102 = vunpack.c.l.b16 %v1060
        %v1103 = vunpack.c.l.b16 %v1061
        %v1104 = vunpack.c.l.b16 %v1062
        %v1105 = vunpack.c.l.b16 %v1063
        %v1106 = vunpack.c.l.b16 %v1064
        %v1107 = vunpack.c.l.b16 %v1065
        %v1108 = vunpack.c.l.b16 %v1066
        %v1109 = vunpack.c.l.b16 %v1067
        %v1110 = vunpack.c.l.b16 %v1068
        %v1111 = vpack.c.b16 %v1096, %v1095
        %v1112 = vpack.c.b16 %v1098, %v1097
        %v1113 = vpack.c.b16 %v1100, %v1099
        %v1114 = vpack.c.b16 %v1102, %v1101
        %v1115 = vpack.c.b16 %v1104, %v1103
        %v1116 = vpack.c.b16 %v1106, %v1105
        %v1117 = vpack.c.b16 %v1108, %v1107
        %v1118 = vpack.c.b16 %v1110, %v1109
        %1127 = vmatprep.subr.bf16.mxu0 0
        %1128 = vmatpush1.bf16.msra.mxu0 %v1111
        %1129 = vmatprep.subr.bf16.mxu0 0
        %1130 = vmatpush1.bf16.msra.mxu0 %v1112
        %1131 = vmatprep.subr.bf16.mxu0 0
        %1132 = vmatpush1.bf16.msra.mxu0 %v1113
        %1133 = vmatprep.subr.bf16.mxu0 0
        %1134 = vmatpush1.bf16.msra.mxu0 %v1114
        %1135 = vmatprep.subr.bf16.mxu0 0
        %1136 = vmatpush1.bf16.msra.mxu0 %v1115
        %1137 = vmatprep.subr.bf16.mxu0 0
        %1138 = vmatpush1.bf16.msra.mxu0 %v1116
        %1139 = vmatprep.subr.bf16.mxu0 0
        %1140 = vmatpush1.bf16.msra.mxu0 %v1117
        %1141 = vmatprep.subr.bf16.mxu0 0
        %1142 = vmatpush1.bf16.msra.mxu0 %v1118
        %1143 = vmatprep.subr.bf16.mxu0 0
        %1144 = vmatpush1.bf16.msra.mxu0 0
        %1145 = vmatprep.subr.bf16.mxu0 0
        %1146 = vmatpush1.bf16.msra.mxu0 0
        %1147 = vmatprep.subr.bf16.mxu0 0
        %1148 = vmatpush1.bf16.msra.mxu0 0
        %1149 = vmatprep.subr.bf16.mxu0 0
        %1150 = vmatpush1.bf16.msra.mxu0 0
        %1151 = vmatprep.subr.bf16.mxu0 0
        %1152 = vmatpush1.bf16.msra.mxu0 0
        %1153 = vmatprep.subr.bf16.mxu0 0
        %1154 = vmatpush1.bf16.msra.mxu0 0
        %1155 = vmatprep.subr.bf16.mxu0 0
        %1156 = vmatpush1.bf16.msra.mxu0 0
        %1157 = vmatprep.subr.bf16.mxu0 0
        %1158 = vmatpush1.bf16.msra.mxu0 0
        %1159 = vmatprep.mubr.bf16.mxu0 0
        %1160 = vmatmul.mubr.bf16.gmra.mrb[0].mxu0 %v1071
        %v1161 = vpop.f32.mrb[0].mxu0
        %v1162 = vadd.f32 0.0, %v1161
        %v1163 = vpop.f32.mrb[0].mxu0
        %v1164 = vpop.f32.mrb[0].mxu0
        %v1165 = vadd.f32 0.0, %v1164
        %v1166 = vpop.f32.mrb[0].mxu0
        %1167 = vmatprep.mubr.bf16.mxu0 0
        %1168 = vmatmul.mubr.bf16.gmra.mrb[0].mxu0 %v1072
        %v1169 = vpop.f32.mrb[0].mxu0
        %v1170 = vadd.f32 0.0, %v1169
        %v1171 = vpop.f32.mrb[0].mxu0
        %v1172 = vpop.f32.mrb[0].mxu0
        %v1173 = vadd.f32 0.0, %v1172
        %v1174 = vpop.f32.mrb[0].mxu0
        %1175 = vmatprep.mubr.bf16.mxu0 0
        %1176 = vmatmul.mubr.bf16.gmra.mrb[0].mxu0 %v1073
        %v1177 = vpop.f32.mrb[0].mxu0
        %v1178 = vadd.f32 0.0, %v1177
        %v1179 = vpop.f32.mrb[0].mxu0
        %v1180 = vpop.f32.mrb[0].mxu0
        %v1181 = vadd.f32 0.0, %v1180
        %v1182 = vpop.f32.mrb[0].mxu0
        %1183 = vmatprep.mubr.bf16.mxu0 0
        %1184 = vmatmul.mubr.bf16.gmra.mrb[0].mxu0 %v1074
        %v1185 = vpop.f32.mrb[0].mxu0
        %v1186 = vadd.f32 0.0, %v1185
        %v1187 = vpop.f32.mrb[0].mxu0
        %v1188 = vpop.f32.mrb[0].mxu0
        %v1189 = vadd.f32 0.0, %v1188
        %v1190 = vpop.f32.mrb[0].mxu0
        %1191 = vdwg.mxu0
        %v1192 = vadd.f32 %v1044, %v1162
        %v1193 = vadd.f32 %v1045, %v1165
        %v1194 = vadd.f32 %v1046, %v1170
        %v1195 = vadd.f32 %v1047, %v1173
        %v1196 = vadd.f32 %v1048, %v1178
        %v1197 = vadd.f32 %v1049, %v1181
        %v1198 = vadd.f32 %v1050, %v1186
        %v1199 = vadd.f32 %v1051, %v1189
        %v1200 = vunpack.c.h.b16 %v423
        %v1201 = vpack.c.b16 %v1070, %v1070
        %v1202 = vpack.c.b16 %v1200, %v1200
        %v1204 = vshrl.u32 %v1201, 16
        %v1206 = vrot.slane %v1204, 4
        %v1207 = vshll.u32 %v1201, 16
        %v1209 = vrot.slane %v1207, 5
        %v1210 = vor.u32 %v1206, %v1209
        %v1211 = vrot.slane %v1210, 4
        %v1213 = vshll.u32 %v1202, 16
        %v1215 = vrot.slane %v1213, 5
        %v1216 = vsel %vm483, %v1211, %v1215
        %s1217 = scalar_lea.vmem [#allocation8], 256
        %v1218 = vld [vmem:[%s1217] sm:$0xf]
        %v1219 = vld [vmem:[%s1217 + $0x4] sm:$0xf]
        %v1220 = vld [vmem:[%s1217 + $0x8] sm:$0xf]
        %v1221 = vld [vmem:[%s1217 + $0xc] sm:$0xf]
        %v1222 = vld [vmem:[%s1217 + $0x10] sm:$0xf]
        %v1223 = vld [vmem:[%s1217 + $0x14] sm:$0xf]
        %v1224 = vld [vmem:[%s1217 + $0x18] sm:$0xf]
        %v1225 = vld [vmem:[%s1217 + $0x1c] sm:$0xf]
        %v1226 = vld [vmem:[%s1217 + $0x20] sm:$0xf]
        %v1227 = vld [vmem:[%s1217 + $0x24] sm:$0xf]
        %v1228 = vld [vmem:[%s1217 + $0x28] sm:$0xf]
        %v1229 = vld [vmem:[%s1217 + $0x2c] sm:$0xf]
        %v1230 = vld [vmem:[%s1217 + $0x30] sm:$0xf]
        %v1231 = vld [vmem:[%s1217 + $0x34] sm:$0xf]
        %v1232 = vld [vmem:[%s1217 + $0x38] sm:$0xf]
        %v1233 = vld [vmem:[%s1217 + $0x3c] sm:$0xf]
        %v1234 = vunpack.c.l.b16 %v1216
        %v1235 = vpack.c.b16 %v615, %v614
        %v1236 = vpack.c.b16 %v617, %v616
        %v1237 = vpack.c.b16 %v619, %v618
        %v1238 = vpack.c.b16 %v1234, %v620
        %v1259 = vunpack.c.l.b16 %v1218
        %v1260 = vunpack.c.l.b16 %v1219
        %v1261 = vunpack.c.l.b16 %v1220
        %v1262 = vunpack.c.l.b16 %v1221
        %v1263 = vunpack.c.l.b16 %v1222
        %v1264 = vunpack.c.l.b16 %v1223
        %v1265 = vunpack.c.l.b16 %v1224
        %v1266 = vunpack.c.l.b16 %v1225
        %v1267 = vunpack.c.l.b16 %v1226
        %v1268 = vunpack.c.l.b16 %v1227
        %v1269 = vunpack.c.l.b16 %v1228
        %v1270 = vunpack.c.l.b16 %v1229
        %v1271 = vunpack.c.l.b16 %v1230
        %v1272 = vunpack.c.l.b16 %v1231
        %v1273 = vunpack.c.l.b16 %v1232
        %v1274 = vunpack.c.l.b16 %v1233
        %v1275 = vpack.c.b16 %v1260, %v1259
        %v1276 = vpack.c.b16 %v1262, %v1261
        %v1277 = vpack.c.b16 %v1264, %v1263
        %v1278 = vpack.c.b16 %v1266, %v1265
        %v1279 = vpack.c.b16 %v1268, %v1267
        %v1280 = vpack.c.b16 %v1270, %v1269
        %v1281 = vpack.c.b16 %v1272, %v1271
        %v1282 = vpack.c.b16 %v1274, %v1273
        %1291 = vmatprep.subr.bf16.mxu0 0
        %1292 = vmatpush1.bf16.msra.mxu0 %v1275
        %1293 = vmatprep.subr.bf16.mxu0 0
        %1294 = vmatpush1.bf16.msra.mxu0 %v1276
        %1295 = vmatprep.subr.bf16.mxu0 0
        %1296 = vmatpush1.bf16.msra.mxu0 %v1277
        %1297 = vmatprep.subr.bf16.mxu0 0
        %1298 = vmatpush1.bf16.msra.mxu0 %v1278
        %1299 = vmatprep.subr.bf16.mxu0 0
        %1300 = vmatpush1.bf16.msra.mxu0 %v1279
        %1301 = vmatprep.subr.bf16.mxu0 0
        %1302 = vmatpush1.bf16.msra.mxu0 %v1280
        %1303 = vmatprep.subr.bf16.mxu0 0
        %1304 = vmatpush1.bf16.msra.mxu0 %v1281
        %1305 = vmatprep.subr.bf16.mxu0 0
        %1306 = vmatpush1.bf16.msra.mxu0 %v1282
        %1307 = vmatprep.subr.bf16.mxu0 0
        %1308 = vmatpush1.bf16.msra.mxu0 0
        %1309 = vmatprep.subr.bf16.mxu0 0
        %1310 = vmatpush1.bf16.msra.mxu0 0
        %1311 = vmatprep.subr.bf16.mxu0 0
        %1312 = vmatpush1.bf16.msra.mxu0 0
        %1313 = vmatprep.subr.bf16.mxu0 0
        %1314 = vmatpush1.bf16.msra.mxu0 0
        %1315 = vmatprep.subr.bf16.mxu0 0
        %1316 = vmatpush1.bf16.msra.mxu0 0
        %1317 = vmatprep.subr.bf16.mxu0 0
        %1318 = vmatpush1.bf16.msra.mxu0 0
        %1319 = vmatprep.subr.bf16.mxu0 0
        %1320 = vmatpush1.bf16.msra.mxu0 0
        %1321 = vmatprep.subr.bf16.mxu0 0
        %1322 = vmatpush1.bf16.msra.mxu0 0
        %1323 = vmatprep.mubr.bf16.mxu0 0
        %1324 = vmatmul.mubr.bf16.gmra.mrb[0].mxu0 %v1235
        %v1325 = vpop.f32.mrb[0].mxu0
        %v1326 = vadd.f32 0.0, %v1325
        %v1327 = vpop.f32.mrb[0].mxu0
        %v1328 = vpop.f32.mrb[0].mxu0
        %v1329 = vadd.f32 0.0, %v1328
        %v1330 = vpop.f32.mrb[0].mxu0
        %1331 = vmatprep.mubr.bf16.mxu0 0
        %1332 = vmatmul.mubr.bf16.gmra.mrb[0].mxu0 %v1236
        %v1333 = vpop.f32.mrb[0].mxu0
        %v1334 = vadd.f32 0.0, %v1333
        %v1335 = vpop.f32.mrb[0].mxu0
        %v1336 = vpop.f32.mrb[0].mxu0
        %v1337 = vadd.f32 0.0, %v1336
        %v1338 = vpop.f32.mrb[0].mxu0
        %1339 = vmatprep.mubr.bf16.mxu0 0
        %1340 = vmatmul.mubr.bf16.gmra.mrb[0].mxu0 %v1237
        %v1341 = vpop.f32.mrb[0].mxu0
        %v1342 = vadd.f32 0.0, %v1341
        %v1343 = vpop.f32.mrb[0].mxu0
        %v1344 = vpop.f32.mrb[0].mxu0
        %v1345 = vadd.f32 0.0, %v1344
        %v1346 = vpop.f32.mrb[0].mxu0
        %1347 = vmatprep.mubr.bf16.mxu0 0
        %1348 = vmatmul.mubr.bf16.gmra.mrb[0].mxu0 %v1238
        %v1349 = vpop.f32.mrb[0].mxu0
        %v1350 = vadd.f32 0.0, %v1349
        %v1351 = vpop.f32.mrb[0].mxu0
        %v1352 = vpop.f32.mrb[0].mxu0
        %v1353 = vadd.f32 0.0, %v1352
        %v1354 = vpop.f32.mrb[0].mxu0
        %1355 = vdwg.mxu0
        %v1356 = vadd.f32 %v1192, %v1326
        %v1357 = vadd.f32 %v1193, %v1329
        %v1358 = vadd.f32 %v1194, %v1334
        %v1359 = vadd.f32 %v1195, %v1337
        %v1360 = vadd.f32 %v1196, %v1342
        %v1361 = vadd.f32 %v1197, %v1345
        %v1362 = vadd.f32 %v1198, %v1350
        %v1363 = vadd.f32 %v1199, %v1353
        %v1364 = vrot.slane %v1201, 5
        %v1365 = vrot.slane %v1364, 4
        %v1366 = vrot.slane %v1202, 5
        %v1367 = vsel %vm865, %v1365, %v1366
        %s1368 = scalar_lea.vmem [#allocation8], 320
        %v1369 = vld [vmem:[%s1368] sm:$0xf]
        %v1370 = vld [vmem:[%s1368 + $0x4] sm:$0xf]
        %v1371 = vld [vmem:[%s1368 + $0x8] sm:$0xf]
        %v1372 = vld [vmem:[%s1368 + $0xc] sm:$0xf]
        %v1373 = vld [vmem:[%s1368 + $0x10] sm:$0xf]
        %v1374 = vld [vmem:[%s1368 + $0x14] sm:$0xf]
        %v1375 = vld [vmem:[%s1368 + $0x18] sm:$0xf]
        %v1376 = vld [vmem:[%s1368 + $0x1c] sm:$0xf]
        %v1377 = vld [vmem:[%s1368 + $0x20] sm:$0xf]
        %v1378 = vld [vmem:[%s1368 + $0x24] sm:$0xf]
        %v1379 = vld [vmem:[%s1368 + $0x28] sm:$0xf]
        %v1380 = vld [vmem:[%s1368 + $0x2c] sm:$0xf]
        %v1381 = vld [vmem:[%s1368 + $0x30] sm:$0xf]
        %v1382 = vld [vmem:[%s1368 + $0x34] sm:$0xf]
        %v1383 = vld [vmem:[%s1368 + $0x38] sm:$0xf]
        %v1384 = vld [vmem:[%s1368 + $0x3c] sm:$0xf]
        %v1385 = vunpack.c.l.b16 %v1367
        %v1386 = vpack.c.b16 %v917, %v916
        %v1387 = vpack.c.b16 %v919, %v918
        %v1388 = vpack.c.b16 %v921, %v920
        %v1389 = vpack.c.b16 %v1385, %v922
        %v1410 = vunpack.c.l.b16 %v1369
        %v1411 = vunpack.c.l.b16 %v1370
        %v1412 = vunpack.c.l.b16 %v1371
        %v1413 = vunpack.c.l.b16 %v1372
        %v1414 = vunpack.c.l.b16 %v1373
        %v1415 = vunpack.c.l.b16 %v1374
        %v1416 = vunpack.c.l.b16 %v1375
        %v1417 = vunpack.c.l.b16 %v1376
        %v1418 = vunpack.c.l.b16 %v1377
        %v1419 = vunpack.c.l.b16 %v1378
        %v1420 = vunpack.c.l.b16 %v1379
        %v1421 = vunpack.c.l.b16 %v1380
        %v1422 = vunpack.c.l.b16 %v1381
        %v1423 = vunpack.c.l.b16 %v1382
        %v1424 = vunpack.c.l.b16 %v1383
        %v1425 = vunpack.c.l.b16 %v1384
        %v1426 = vpack.c.b16 %v1411, %v1410
        %v1427 = vpack.c.b16 %v1413, %v1412
        %v1428 = vpack.c.b16 %v1415, %v1414
        %v1429 = vpack.c.b16 %v1417, %v1416
        %v1430 = vpack.c.b16 %v1419, %v1418
        %v1431 = vpack.c.b16 %v1421, %v1420
        %v1432 = vpack.c.b16 %v1423, %v1422
        %v1433 = vpack.c.b16 %v1425, %v1424
        %1442 = vmatprep.subr.bf16.mxu0 0
        %1443 = vmatpush1.bf16.msra.mxu0 %v1426
        %1444 = vmatprep.subr.bf16.mxu0 0
        %1445 = vmatpush1.bf16.msra.mxu0 %v1427
        %1446 = vmatprep.subr.bf16.mxu0 0
        %1447 = vmatpush1.bf16.msra.mxu0 %v1428
        %1448 = vmatprep.subr.bf16.mxu0 0
        %1449 = vmatpush1.bf16.msra.mxu0 %v1429
        %1450 = vmatprep.subr.bf16.mxu0 0
        %1451 = vmatpush1.bf16.msra.mxu0 %v1430
        %1452 = vmatprep.subr.bf16.mxu0 0
        %1453 = vmatpush1.bf16.msra.mxu0 %v1431
        %1454 = vmatprep.subr.bf16.mxu0 0
        %1455 = vmatpush1.bf16.msra.mxu0 %v1432
        %1456 = vmatprep.subr.bf16.mxu0 0
        %1457 = vmatpush1.bf16.msra.mxu0 %v1433
        %1458 = vmatprep.subr.bf16.mxu0 0
        %1459 = vmatpush1.bf16.msra.mxu0 0
        %1460 = vmatprep.subr.bf16.mxu0 0
        %1461 = vmatpush1.bf16.msra.mxu0 0
        %1462 = vmatprep.subr.bf16.mxu0 0
        %1463 = vmatpush1.bf16.msra.mxu0 0
        %1464 = vmatprep.subr.bf16.mxu0 0
        %1465 = vmatpush1.bf16.msra.mxu0 0
        %1466 = vmatprep.subr.bf16.mxu0 0
        %1467 = vmatpush1.bf16.msra.mxu0 0
        %1468 = vmatprep.subr.bf16.mxu0 0
        %1469 = vmatpush1.bf16.msra.mxu0 0
        %1470 = vmatprep.subr.bf16.mxu0 0
        %1471 = vmatpush1.bf16.msra.mxu0 0
        %1472 = vmatprep.subr.bf16.mxu0 0
        %1473 = vmatpush1.bf16.msra.mxu0 0
        %1474 = vmatprep.mubr.bf16.mxu0 0
        %1475 = vmatmul.mubr.bf16.gmra.mrb[0].mxu0 %v1386
        %v1476 = vpop.f32.mrb[0].mxu0
        %v1477 = vadd.f32 0.0, %v1476
        %v1478 = vpop.f32.mrb[0].mxu0
        %v1479 = vpop.f32.mrb[0].mxu0
        %v1480 = vadd.f32 0.0, %v1479
        %v1481 = vpop.f32.mrb[0].mxu0
        %1482 = vmatprep.mubr.bf16.mxu0 0
        %1483 = vmatmul.mubr.bf16.gmra.mrb[0].mxu0 %v1387
        %v1484 = vpop.f32.mrb[0].mxu0
        %v1485 = vadd.f32 0.0, %v1484
        %v1486 = vpop.f32.mrb[0].mxu0
        %v1487 = vpop.f32.mrb[0].mxu0
        %v1488 = vadd.f32 0.0, %v1487
        %v1489 = vpop.f32.mrb[0].mxu0
        %1490 = vmatprep.mubr.bf16.mxu0 0
        %1491 = vmatmul.mubr.bf16.gmra.mrb[0].mxu0 %v1388
        %v1492 = vpop.f32.mrb[0].mxu0
        %v1493 = vadd.f32 0.0, %v1492
        %v1494 = vpop.f32.mrb[0].mxu0
        %v1495 = vpop.f32.mrb[0].mxu0
        %v1496 = vadd.f32 0.0, %v1495
        %v1497 = vpop.f32.mrb[0].mxu0
        %1498 = vmatprep.mubr.bf16.mxu0 0
        %1499 = vmatmul.mubr.bf16.gmra.mrb[0].mxu0 %v1389
        %v1500 = vpop.f32.mrb[0].mxu0
        %v1501 = vadd.f32 0.0, %v1500
        %v1502 = vpop.f32.mrb[0].mxu0
        %v1503 = vpop.f32.mrb[0].mxu0
        %v1504 = vadd.f32 0.0, %v1503
        %v1505 = vpop.f32.mrb[0].mxu0
        %1506 = vdwg.mxu0
        %v1507 = vadd.f32 %v1356, %v1477
        %v1508 = vadd.f32 %v1357, %v1480
        %v1509 = vadd.f32 %v1358, %v1485
        %v1510 = vadd.f32 %v1359, %v1488
        %v1511 = vadd.f32 %v1360, %v1493
        %v1512 = vadd.f32 %v1361, %v1496
        %v1513 = vadd.f32 %v1362, %v1501
        %v1514 = vadd.f32 %v1363, %v1504
        %s1515 = scalar_lea.vmem [#allocation8], 384
        %v1516 = vld [vmem:[%s1515] sm:$0xf]
        %v1517 = vld [vmem:[%s1515 + $0x4] sm:$0xf]
        %v1518 = vld [vmem:[%s1515 + $0x8] sm:$0xf]
        %v1519 = vld [vmem:[%s1515 + $0xc] sm:$0xf]
        %v1520 = vld [vmem:[%s1515 + $0x10] sm:$0xf]
        %v1521 = vld [vmem:[%s1515 + $0x14] sm:$0xf]
        %v1522 = vld [vmem:[%s1515 + $0x18] sm:$0xf]
        %v1523 = vld [vmem:[%s1515 + $0x1c] sm:$0xf]
        %v1524 = vld [vmem:[%s1515 + $0x20] sm:$0xf]
        %v1525 = vld [vmem:[%s1515 + $0x24] sm:$0xf]
        %v1526 = vld [vmem:[%s1515 + $0x28] sm:$0xf]
        %v1527 = vld [vmem:[%s1515 + $0x2c] sm:$0xf]
        %v1528 = vld [vmem:[%s1515 + $0x30] sm:$0xf]
        %v1529 = vld [vmem:[%s1515 + $0x34] sm:$0xf]
        %v1530 = vld [vmem:[%s1515 + $0x38] sm:$0xf]
        %v1531 = vld [vmem:[%s1515 + $0x3c] sm:$0xf]
        %v1533 = vunpack.c.l.b16 %v424
        %v1534 = vpack.c.b16 %v1533, %v1070
        %v1552 = vunpack.c.l.b16 %v1516
        %v1553 = vunpack.c.l.b16 %v1517
        %v1554 = vunpack.c.l.b16 %v1518
        %v1555 = vunpack.c.l.b16 %v1519
        %v1556 = vunpack.c.l.b16 %v1520
        %v1557 = vunpack.c.l.b16 %v1521
        %v1558 = vunpack.c.l.b16 %v1522
        %v1559 = vunpack.c.l.b16 %v1523
        %v1560 = vunpack.c.l.b16 %v1524
        %v1561 = vunpack.c.l.b16 %v1525
        %v1562 = vunpack.c.l.b16 %v1526
        %v1563 = vunpack.c.l.b16 %v1527
        %v1564 = vunpack.c.l.b16 %v1528
        %v1565 = vunpack.c.l.b16 %v1529
        %v1566 = vunpack.c.l.b16 %v1530
        %v1567 = vunpack.c.l.b16 %v1531
        %v1568 = vpack.c.b16 %v1553, %v1552
        %v1569 = vpack.c.b16 %v1555, %v1554
        %v1570 = vpack.c.b16 %v1557, %v1556
        %v1571 = vpack.c.b16 %v1559, %v1558
        %v1572 = vpack.c.b16 %v1561, %v1560
        %v1573 = vpack.c.b16 %v1563, %v1562
        %v1574 = vpack.c.b16 %v1565, %v1564
        %v1575 = vpack.c.b16 %v1567, %v1566
        %1584 = vmatprep.subr.bf16.mxu0 0
        %1585 = vmatpush1.bf16.msra.mxu0 %v1568
        %1586 = vmatprep.subr.bf16.mxu0 0
        %1587 = vmatpush1.bf16.msra.mxu0 %v1569
        %1588 = vmatprep.subr.bf16.mxu0 0
        %1589 = vmatpush1.bf16.msra.mxu0 %v1570
        %1590 = vmatprep.subr.bf16.mxu0 0
        %1591 = vmatpush1.bf16.msra.mxu0 %v1571
        %1592 = vmatprep.subr.bf16.mxu0 0
        %1593 = vmatpush1.bf16.msra.mxu0 %v1572
        %1594 = vmatprep.subr.bf16.mxu0 0
        %1595 = vmatpush1.bf16.msra.mxu0 %v1573
        %1596 = vmatprep.subr.bf16.mxu0 0
        %1597 = vmatpush1.bf16.msra.mxu0 %v1574
        %1598 = vmatprep.subr.bf16.mxu0 0
        %1599 = vmatpush1.bf16.msra.mxu0 %v1575
        %1600 = vmatprep.subr.bf16.mxu0 0
        %1601 = vmatpush1.bf16.msra.mxu0 0
        %1602 = vmatprep.subr.bf16.mxu0 0
        %1603 = vmatpush1.bf16.msra.mxu0 0
        %1604 = vmatprep.subr.bf16.mxu0 0
        %1605 = vmatpush1.bf16.msra.mxu0 0
        %1606 = vmatprep.subr.bf16.mxu0 0
        %1607 = vmatpush1.bf16.msra.mxu0 0
        %1608 = vmatprep.subr.bf16.mxu0 0
        %1609 = vmatpush1.bf16.msra.mxu0 0
        %1610 = vmatprep.subr.bf16.mxu0 0
        %1611 = vmatpush1.bf16.msra.mxu0 0
        %1612 = vmatprep.subr.bf16.mxu0 0
        %1613 = vmatpush1.bf16.msra.mxu0 0
        %1614 = vmatprep.subr.bf16.mxu0 0
        %1615 = vmatpush1.bf16.msra.mxu0 0
        %1616 = vmatprep.mubr.bf16.mxu0 0
        %1617 = vmatmul.mubr.bf16.gmra.mrb[0].mxu0 %v743
        %v1618 = vpop.f32.mrb[0].mxu0
        %v1619 = vadd.f32 0.0, %v1618
        %v1620 = vpop.f32.mrb[0].mxu0
        %v1621 = vpop.f32.mrb[0].mxu0
        %v1622 = vadd.f32 0.0, %v1621
        %v1623 = vpop.f32.mrb[0].mxu0
        %1624 = vmatprep.mubr.bf16.mxu0 0
        %1625 = vmatmul.mubr.bf16.gmra.mrb[0].mxu0 %v744
        %v1626 = vpop.f32.mrb[0].mxu0
        %v1627 = vadd.f32 0.0, %v1626
        %v1628 = vpop.f32.mrb[0].mxu0
        %v1629 = vpop.f32.mrb[0].mxu0
        %v1630 = vadd.f32 0.0, %v1629
        %v1631 = vpop.f32.mrb[0].mxu0
        %1632 = vmatprep.mubr.bf16.mxu0 0
        %1633 = vmatmul.mubr.bf16.gmra.mrb[0].mxu0 %v745
        %v1634 = vpop.f32.mrb[0].mxu0
        %v1635 = vadd.f32 0.0, %v1634
        %v1636 = vpop.f32.mrb[0].mxu0
        %v1637 = vpop.f32.mrb[0].mxu0
        %v1638 = vadd.f32 0.0, %v1637
        %v1639 = vpop.f32.mrb[0].mxu0
        %1640 = vmatprep.mubr.bf16.mxu0 0
        %1641 = vmatmul.mubr.bf16.gmra.mrb[0].mxu0 %v1534
        %v1642 = vpop.f32.mrb[0].mxu0
        %v1643 = vadd.f32 0.0, %v1642
        %v1644 = vpop.f32.mrb[0].mxu0
        %v1645 = vpop.f32.mrb[0].mxu0
        %v1646 = vadd.f32 0.0, %v1645
        %v1647 = vpop.f32.mrb[0].mxu0
        %1648 = vdwg.mxu0
        %v1649 = vadd.f32 %v1507, %v1619
        %v1650 = vadd.f32 %v1508, %v1622
        %v1651 = vadd.f32 %v1509, %v1627
        %v1652 = vadd.f32 %v1510, %v1630
        %v1653 = vadd.f32 %v1511, %v1635
        %v1654 = vadd.f32 %v1512, %v1638
        %v1655 = vadd.f32 %v1513, %v1643
        %v1656 = vadd.f32 %v1514, %v1646
        %v1657 = vunpack.c.h.b16 %v424
        %v1658 = vpack.c.b16 %v1533, %v1533
        %v1659 = vpack.c.b16 %v1657, %v1657
        %v1661 = vshrl.u32 %v1658, 16
        %v1663 = vrot.slane %v1661, 4
        %v1664 = vshll.u32 %v1658, 16
        %v1666 = vrot.slane %v1664, 5
        %v1667 = vor.u32 %v1663, %v1666
        %v1668 = vrot.slane %v1667, 4
        %v1670 = vshll.u32 %v1659, 16
        %v1672 = vrot.slane %v1670, 5
        %v1673 = vsel %vm483, %v1668, %v1672
        %s1674 = scalar_lea.vmem [#allocation8], 448
        %v1675 = vld [vmem:[%s1674] sm:$0xf]
        %v1676 = vld [vmem:[%s1674 + $0x4] sm:$0xf]
        %v1677 = vld [vmem:[%s1674 + $0x8] sm:$0xf]
        %v1678 = vld [vmem:[%s1674 + $0xc] sm:$0xf]
        %v1679 = vld [vmem:[%s1674 + $0x10] sm:$0xf]
        %v1680 = vld [vmem:[%s1674 + $0x14] sm:$0xf]
        %v1681 = vld [vmem:[%s1674 + $0x18] sm:$0xf]
        %v1682 = vld [vmem:[%s1674 + $0x1c] sm:$0xf]
        %v1683 = vld [vmem:[%s1674 + $0x20] sm:$0xf]
        %v1684 = vld [vmem:[%s1674 + $0x24] sm:$0xf]
        %v1685 = vld [vmem:[%s1674 + $0x28] sm:$0xf]
        %v1686 = vld [vmem:[%s1674 + $0x2c] sm:$0xf]
        %v1687 = vld [vmem:[%s1674 + $0x30] sm:$0xf]
        %v1688 = vld [vmem:[%s1674 + $0x34] sm:$0xf]
        %v1689 = vld [vmem:[%s1674 + $0x38] sm:$0xf]
        %v1690 = vld [vmem:[%s1674 + $0x3c] sm:$0xf]
        %v1691 = vunpack.c.l.b16 %v1673
        %v1692 = vpack.c.b16 %v1691, %v1234
        %v1710 = vunpack.c.l.b16 %v1675
        %v1711 = vunpack.c.l.b16 %v1676
        %v1712 = vunpack.c.l.b16 %v1677
        %v1713 = vunpack.c.l.b16 %v1678
        %v1714 = vunpack.c.l.b16 %v1679
        %v1715 = vunpack.c.l.b16 %v1680
        %v1716 = vunpack.c.l.b16 %v1681
        %v1717 = vunpack.c.l.b16 %v1682
        %v1718 = vunpack.c.l.b16 %v1683
        %v1719 = vunpack.c.l.b16 %v1684
        %v1720 = vunpack.c.l.b16 %v1685
        %v1721 = vunpack.c.l.b16 %v1686
        %v1722 = vunpack.c.l.b16 %v1687
        %v1723 = vunpack.c.l.b16 %v1688
        %v1724 = vunpack.c.l.b16 %v1689
        %v1725 = vunpack.c.l.b16 %v1690
        %v1726 = vpack.c.b16 %v1711, %v1710
        %v1727 = vpack.c.b16 %v1713, %v1712
        %v1728 = vpack.c.b16 %v1715, %v1714
        %v1729 = vpack.c.b16 %v1717, %v1716
        %v1730 = vpack.c.b16 %v1719, %v1718
        %v1731 = vpack.c.b16 %v1721, %v1720
        %v1732 = vpack.c.b16 %v1723, %v1722
        %v1733 = vpack.c.b16 %v1725, %v1724
        %1742 = vmatprep.subr.bf16.mxu0 0
        %1743 = vmatpush1.bf16.msra.mxu0 %v1726
        %1744 = vmatprep.subr.bf16.mxu0 0
        %1745 = vmatpush1.bf16.msra.mxu0 %v1727
        %1746 = vmatprep.subr.bf16.mxu0 0
        %1747 = vmatpush1.bf16.msra.mxu0 %v1728
        %1748 = vmatprep.subr.bf16.mxu0 0
        %1749 = vmatpush1.bf16.msra.mxu0 %v1729
        %1750 = vmatprep.subr.bf16.mxu0 0
        %1751 = vmatpush1.bf16.msra.mxu0 %v1730
        %1752 = vmatprep.subr.bf16.mxu0 0
        %1753 = vmatpush1.bf16.msra.mxu0 %v1731
        %1754 = vmatprep.subr.bf16.mxu0 0
        %1755 = vmatpush1.bf16.msra.mxu0 %v1732
        %1756 = vmatprep.subr.bf16.mxu0 0
        %1757 = vmatpush1.bf16.msra.mxu0 %v1733
        %1758 = vmatprep.subr.bf16.mxu0 0
        %1759 = vmatpush1.bf16.msra.mxu0 0
        %1760 = vmatprep.subr.bf16.mxu0 0
        %1761 = vmatpush1.bf16.msra.mxu0 0
        %1762 = vmatprep.subr.bf16.mxu0 0
        %1763 = vmatpush1.bf16.msra.mxu0 0
        %1764 = vmatprep.subr.bf16.mxu0 0
        %1765 = vmatpush1.bf16.msra.mxu0 0
        %1766 = vmatprep.subr.bf16.mxu0 0
        %1767 = vmatpush1.bf16.msra.mxu0 0
        %1768 = vmatprep.subr.bf16.mxu0 0
        %1769 = vmatpush1.bf16.msra.mxu0 0
        %1770 = vmatprep.subr.bf16.mxu0 0
        %1771 = vmatpush1.bf16.msra.mxu0 0
        %1772 = vmatprep.subr.bf16.mxu0 0
        %1773 = vmatpush1.bf16.msra.mxu0 0
        %1774 = vmatprep.mubr.bf16.mxu0 0
        %1775 = vmatmul.mubr.bf16.gmra.mrb[0].mxu0 %v622
        %v1776 = vpop.f32.mrb[0].mxu0
        %v1777 = vadd.f32 0.0, %v1776
        %v1778 = vpop.f32.mrb[0].mxu0
        %v1779 = vpop.f32.mrb[0].mxu0
        %v1780 = vadd.f32 0.0, %v1779
        %v1781 = vpop.f32.mrb[0].mxu0
        %1782 = vmatprep.mubr.bf16.mxu0 0
        %1783 = vmatmul.mubr.bf16.gmra.mrb[0].mxu0 %v623
        %v1784 = vpop.f32.mrb[0].mxu0
        %v1785 = vadd.f32 0.0, %v1784
        %v1786 = vpop.f32.mrb[0].mxu0
        %v1787 = vpop.f32.mrb[0].mxu0
        %v1788 = vadd.f32 0.0, %v1787
        %v1789 = vpop.f32.mrb[0].mxu0
        %1790 = vmatprep.mubr.bf16.mxu0 0
        %1791 = vmatmul.mubr.bf16.gmra.mrb[0].mxu0 %v624
        %v1792 = vpop.f32.mrb[0].mxu0
        %v1793 = vadd.f32 0.0, %v1792
        %v1794 = vpop.f32.mrb[0].mxu0
        %v1795 = vpop.f32.mrb[0].mxu0
        %v1796 = vadd.f32 0.0, %v1795
        %v1797 = vpop.f32.mrb[0].mxu0
        %1798 = vmatprep.mubr.bf16.mxu0 0
        %1799 = vmatmul.mubr.bf16.gmra.mrb[0].mxu0 %v1692
        %v1800 = vpop.f32.mrb[0].mxu0
        %v1801 = vadd.f32 0.0, %v1800
        %v1802 = vpop.f32.mrb[0].mxu0
        %v1803 = vpop.f32.mrb[0].mxu0
        %v1804 = vadd.f32 0.0, %v1803
        %v1805 = vpop.f32.mrb[0].mxu0
        %1806 = vdwg.mxu0
        %v1807 = vadd.f32 %v1649, %v1777
        %v1808 = vadd.f32 %v1650, %v1780
        %v1809 = vadd.f32 %v1651, %v1785
        %v1810 = vadd.f32 %v1652, %v1788
        %v1811 = vadd.f32 %v1653, %v1793
        %v1812 = vadd.f32 %v1654, %v1796
        %v1813 = vadd.f32 %v1655, %v1801
        %v1814 = vadd.f32 %v1656, %v1804
        %v1815 = vrot.slane %v1658, 5
        %v1816 = vrot.slane %v1815, 4
        %v1817 = vrot.slane %v1659, 5
        %v1818 = vsel %vm865, %v1816, %v1817
        %s1819 = scalar_lea.vmem [#allocation8], 512
        %v1820 = vld [vmem:[%s1819] sm:$0xf]
        %v1821 = vld [vmem:[%s1819 + $0x4] sm:$0xf]
        %v1822 = vld [vmem:[%s1819 + $0x8] sm:$0xf]
        %v1823 = vld [vmem:[%s1819 + $0xc] sm:$0xf]
        %v1824 = vld [vmem:[%s1819 + $0x10] sm:$0xf]
        %v1825 = vld [vmem:[%s1819 + $0x14] sm:$0xf]
        %v1826 = vld [vmem:[%s1819 + $0x18] sm:$0xf]
        %v1827 = vld [vmem:[%s1819 + $0x1c] sm:$0xf]
        %v1828 = vld [vmem:[%s1819 + $0x20] sm:$0xf]
        %v1829 = vld [vmem:[%s1819 + $0x24] sm:$0xf]
        %v1830 = vld [vmem:[%s1819 + $0x28] sm:$0xf]
        %v1831 = vld [vmem:[%s1819 + $0x2c] sm:$0xf]
        %v1832 = vld [vmem:[%s1819 + $0x30] sm:$0xf]
        %v1833 = vld [vmem:[%s1819 + $0x34] sm:$0xf]
        %v1834 = vld [vmem:[%s1819 + $0x38] sm:$0xf]
        %v1835 = vld [vmem:[%s1819 + $0x3c] sm:$0xf]
        %v1836 = vunpack.c.l.b16 %v1818
        %v1837 = vpack.c.b16 %v1836, %v1385
        %v1855 = vunpack.c.l.b16 %v1820
        %v1856 = vunpack.c.l.b16 %v1821
        %v1857 = vunpack.c.l.b16 %v1822
        %v1858 = vunpack.c.l.b16 %v1823
        %v1859 = vunpack.c.l.b16 %v1824
        %v1860 = vunpack.c.l.b16 %v1825
        %v1861 = vunpack.c.l.b16 %v1826
        %v1862 = vunpack.c.l.b16 %v1827
        %v1863 = vunpack.c.l.b16 %v1828
        %v1864 = vunpack.c.l.b16 %v1829
        %v1865 = vunpack.c.l.b16 %v1830
        %v1866 = vunpack.c.l.b16 %v1831
        %v1867 = vunpack.c.l.b16 %v1832
        %v1868 = vunpack.c.l.b16 %v1833
        %v1869 = vunpack.c.l.b16 %v1834
        %v1870 = vunpack.c.l.b16 %v1835
        %v1871 = vpack.c.b16 %v1856, %v1855
        %v1872 = vpack.c.b16 %v1858, %v1857
        %v1873 = vpack.c.b16 %v1860, %v1859
        %v1874 = vpack.c.b16 %v1862, %v1861
        %v1875 = vpack.c.b16 %v1864, %v1863
        %v1876 = vpack.c.b16 %v1866, %v1865
        %v1877 = vpack.c.b16 %v1868, %v1867
        %v1878 = vpack.c.b16 %v1870, %v1869
        %1887 = vmatprep.subr.bf16.mxu0 0
        %1888 = vmatpush1.bf16.msra.mxu0 %v1871
        %1889 = vmatprep.subr.bf16.mxu0 0
        %1890 = vmatpush1.bf16.msra.mxu0 %v1872
        %1891 = vmatprep.subr.bf16.mxu0 0
        %1892 = vmatpush1.bf16.msra.mxu0 %v1873
        %1893 = vmatprep.subr.bf16.mxu0 0
        %1894 = vmatpush1.bf16.msra.mxu0 %v1874
        %1895 = vmatprep.subr.bf16.mxu0 0
        %1896 = vmatpush1.bf16.msra.mxu0 %v1875
        %1897 = vmatprep.subr.bf16.mxu0 0
        %1898 = vmatpush1.bf16.msra.mxu0 %v1876
        %1899 = vmatprep.subr.bf16.mxu0 0
        %1900 = vmatpush1.bf16.msra.mxu0 %v1877
        %1901 = vmatprep.subr.bf16.mxu0 0
        %1902 = vmatpush1.bf16.msra.mxu0 %v1878
        %1903 = vmatprep.subr.bf16.mxu0 0
        %1904 = vmatpush1.bf16.msra.mxu0 0
        %1905 = vmatprep.subr.bf16.mxu0 0
        %1906 = vmatpush1.bf16.msra.mxu0 0
        %1907 = vmatprep.subr.bf16.mxu0 0
        %1908 = vmatpush1.bf16.msra.mxu0 0
        %1909 = vmatprep.subr.bf16.mxu0 0
        %1910 = vmatpush1.bf16.msra.mxu0 0
        %1911 = vmatprep.subr.bf16.mxu0 0
        %1912 = vmatpush1.bf16.msra.mxu0 0
        %1913 = vmatprep.subr.bf16.mxu0 0
        %1914 = vmatpush1.bf16.msra.mxu0 0
        %1915 = vmatprep.subr.bf16.mxu0 0
        %1916 = vmatpush1.bf16.msra.mxu0 0
        %1917 = vmatprep.subr.bf16.mxu0 0
        %1918 = vmatpush1.bf16.msra.mxu0 0
        %1919 = vmatprep.mubr.bf16.mxu0 0
        %1920 = vmatmul.mubr.bf16.gmra.mrb[0].mxu0 %v924
        %v1921 = vpop.f32.mrb[0].mxu0
        %v1922 = vadd.f32 0.0, %v1921
        %v1923 = vpop.f32.mrb[0].mxu0
        %v1924 = vpop.f32.mrb[0].mxu0
        %v1925 = vadd.f32 0.0, %v1924
        %v1926 = vpop.f32.mrb[0].mxu0
        %1927 = vmatprep.mubr.bf16.mxu0 0
        %1928 = vmatmul.mubr.bf16.gmra.mrb[0].mxu0 %v925
        %v1929 = vpop.f32.mrb[0].mxu0
        %v1930 = vadd.f32 0.0, %v1929
        %v1931 = vpop.f32.mrb[0].mxu0
        %v1932 = vpop.f32.mrb[0].mxu0
        %v1933 = vadd.f32 0.0, %v1932
        %v1934 = vpop.f32.mrb[0].mxu0
        %1935 = vmatprep.mubr.bf16.mxu0 0
        %1936 = vmatmul.mubr.bf16.gmra.mrb[0].mxu0 %v926
        %v1937 = vpop.f32.mrb[0].mxu0
        %v1938 = vadd.f32 0.0, %v1937
        %v1939 = vpop.f32.mrb[0].mxu0
        %v1940 = vpop.f32.mrb[0].mxu0
        %v1941 = vadd.f32 0.0, %v1940
        %v1942 = vpop.f32.mrb[0].mxu0
        %1943 = vmatprep.mubr.bf16.mxu0 0
        %1944 = vmatmul.mubr.bf16.gmra.mrb[0].mxu0 %v1837
        %v1945 = vpop.f32.mrb[0].mxu0
        %v1946 = vadd.f32 0.0, %v1945
        %v1947 = vpop.f32.mrb[0].mxu0
        %v1948 = vpop.f32.mrb[0].mxu0
        %v1949 = vadd.f32 0.0, %v1948
        %v1950 = vpop.f32.mrb[0].mxu0
        %1951 = vdwg.mxu0
        %v1952 = vadd.f32 %v1807, %v1922
        %v1953 = vadd.f32 %v1808, %v1925
        %v1954 = vadd.f32 %v1809, %v1930
        %v1955 = vadd.f32 %v1810, %v1933
        %v1956 = vadd.f32 %v1811, %v1938
        %v1957 = vadd.f32 %v1812, %v1941
        %v1958 = vadd.f32 %v1813, %v1946
        %v1959 = vadd.f32 %v1814, %v1949
        %1960 = vst [vmem:[%s276] sm:$0xff] %v1952
        %1961 = vst [vmem:[%s276 + $0x8] sm:$0xff] %v1953
        %1962 = vst [vmem:[%s276 + $0x10] sm:$0xff] %v1954
        %1963 = vst [vmem:[%s276 + $0x18] sm:$0xff] %v1955
        %1964 = vst [vmem:[%s276 + $0x20] sm:$0xff] %v1956
        %1965 = vst [vmem:[%s276 + $0x28] sm:$0xff] %v1957
        %1966 = vst [vmem:[%s276 + $0x30] sm:$0xff] %v1958
        %1967 = vst [vmem:[%s276 + $0x38] sm:$0xff] %v1959
        %s1968 = sand.u32 %s139, 1
        %s1969 = scalar_lea.sflag [#allocation4], %s1968
        %s1970 = sand.u32 %s139, 1
        %s1971 = smul.addr %s1970, 64
        %s1972 = scalar_lea.vmem [#allocation10], %s1971
        // Predicated region
        $region53: #{_lambda_.6} parent=35 // pred_check
          %p1973 = pneg %p149
        $region54: #{_lambda_.6} parent=35 // pred_check_branch
          %1975 = sbr.rel (%p1973) target = $region56
        $region55: #{_lambda_.6} parent=35 // pred_region
          %s1977 = ssub.s32 1024, 1024
          %1978 = vsyncadd %s1969, %s1977
          %s1979 = smul.addr %s27, 8
          %s1980 = sadd.s32 %s28, %s1979
          %s1981 = smul.addr %s1980, 128
          %s1982 = scalar_lea.hbm %s4, %s1981
          %s1983 = sshll.u32 %s1972, 4
          %s1984 = int_to_ptr.vmem [resolvable:$true] %s1983
          %1989 = dma.vmem_to_hbm [thread:$0]  %s1984, 1024, %s1982, %s1969, 128, 128, 8
        $region56: #{_lambda_.6} parent=35 // pred_fallthru
          _
      $region36: #{_lambda_.6} parent=5 // pred_fallthru
        _
      %p1990 = scmp.le.s32.totalorder 2, %s18
      // Predicated region
      $region57: #{_lambda_.6} parent=5 // pred_check
        %p1991 = pneg %p1990
      $region58: #{_lambda_.6} parent=5 // pred_check_branch
        %1993 = sbr.rel (%p1991) target = $region60
      $region59: #{_lambda_.6} parent=5 // pred_region
        %s1994 = ssub.s32 %s18, 2
        // Predicated region
        $region61: #{_lambda_.6} parent=59 // pred_check
          %p1995 = pneg %p155
        $region62: #{_lambda_.6} parent=59 // pred_check_branch
          %1997 = sbr.rel (%p1995) target = $region64
        $region63: #{_lambda_.6} parent=59 // pred_region
          %s1998 = sand.u32 %s140, 1
          %s1999 = scalar_lea.sflag [#allocation4], %s1998
          %s2000 = sand.u32 %s140, 1
          %s2001 = smul.addr %s2000, 64
          %s2002 = scalar_lea.vmem [#allocation10], %s2001
          %2003 = dma.done %s1999, 1024
        $region64: #{_lambda_.6} parent=59 // pred_fallthru
          _
      $region60: #{_lambda_.6} parent=5 // pred_fallthru
        _
    $region6: #{_lambda_.6} parent=1 // loop_footer
      %s22 = sadd.s32 1, %s18
    $region7: #{_lambda_.6} parent=1 // loop_footer_branch
      %17 = sbr.rel target = $region3
    $region8: #{_lambda_.6} parent=1 // loop_exit
      _
    %2004 = vsyncpa [#allocation3], 1
    %s2005 = scalar_lea.sflag [#allocation3], 1
    %2006 = vsyncpa %s2005, 1
    %2007 = vsyncpa [#allocation6], 1
    %2008 = vsyncpa [#allocation9], 1
    %2009 = vsyncpa [#allocation4], 1
    %s2010 = scalar_lea.sflag [#allocation4], 1
    %2011 = vsyncpa %s2010, 1

// kernel: _lambda_.7
$region0: #{_lambda_.7}
  #allocation0 [shape = 'u32[]', space=smem, size = 0x4, offset = 0x4, fixed_abs, tag = 'smem constant byte address 0x4 - core index']
  #allocation1 [shape = 'u32[144,128]{1,0:T(1,128)}', space=vmem, size = 0x12000, scoped, tag = 'internal scratch']
  %s0 = inlined_call_operand.hbm [shape: f32[2,10,10,128], index: 0, kind: input, shape index: {}]
  %s1 = inlined_call_operand.hbm [shape: f32[1,128], index: 1, kind: input, shape index: {}]
  %s2 = inlined_call_operand.hbm [shape: f32[1,128], index: 2, kind: input, shape index: {}]
  %s3 = inlined_call_operand.hbm [shape: bf16[3,3,128,128], index: 3, kind: input, shape index: {}]
  %s4 = inlined_call_operand.hbm [shape: f32[2,8,8,128], index: 4, kind: input, shape index: {}]
  %s5 = inlined_call_operand.hbm [shape: f32[2,8,8,128], index: 5, kind: output, shape index: {}]
  %s6 = sld [smem:[#allocation0]]
  $region73: #{_lambda_.7} parent=0
    _
  %s8 = ssub.s32 1, %s6
  %s9 = scalar_select 0, %s8, %s6
  $region1: #{_lambda_.7} parent=0
    #allocation2 [shape = 'u8[163840]{0}', space=vmem, size = 0x28000, scoped, tag = 'input window, operand 0']
    #allocation3 [shape = 's32[2]{0}', space=sflag, size = 0x8, scoped, tag = 'scoped memory for _lambda_.7']
    #allocation4 [shape = 's32[2]{0}', space=sflag, size = 0x8, scoped, tag = 'scoped memory for _lambda_.7']
    #allocation5 [shape = 'u8[512]{0}', space=vmem, size = 0x400, scoped, tag = 'input window, operand 1, single buffered']
    #allocation6 [shape = 's32[1]{0}', space=sflag, size = 0x4, scoped, tag = 'scoped memory for _lambda_.7']
    #allocation7 [shape = 'u8[512]{0}', space=vmem, size = 0x400, scoped, tag = 'input window, operand 2, single buffered']
    #allocation8 [shape = 'u8[294912]{0}', space=vmem, size = 0x48000, scoped, tag = 'input window, operand 3, single buffered']
    #allocation9 [shape = 's32[1]{0}', space=sflag, size = 0x4, scoped, tag = 'scoped memory for _lambda_.7']
    #allocation10 [shape = 'u8[65536]{0}', space=vmem, size = 0x10000, scoped, tag = 'input window, operand 4']
    #allocation11 [shape = 'u8[65536]{0}', space=vmem, size = 0x10000, scoped, tag = 'output window, operand 0']
    %10 = vsyncpa [#allocation3], 0
    %s11 = scalar_lea.sflag [#allocation3], 1
    %12 = vsyncpa %s11, 0
    %13 = vsyncpa [#allocation6], 0
    %14 = vsyncpa [#allocation9], 0
    %15 = vsyncpa [#allocation4], 0
    %s16 = scalar_lea.sflag [#allocation4], 1
    %17 = vsyncpa %s16, 0
    loop: start=0, step=1, limit=4
    $region2: #{_lambda_.7} parent=1 // loop_pre_header
      _
    $region3: #{_lambda_.7} parent=1 // loop_header
      %s19 = sphi 0, %s23
      %p20 = scmp.ge.s32.totalorder %s19, 4
      %s26 = sphi 0, %s38
      %s27 = sphi 0, %s34
      %s28 = sphi 0, %s26
      %s29 = sphi 0, %s27
      %s30 = sphi 0, %s28
      %s31 = sphi 0, %s29
      %s41 = sphi 0, %s43
      %s44 = sphi 0, %s41
      %s45 = sphi 0, %s44
      %s61 = sphi 0, %s45
      %s65 = sphi 0, %s65
      %s67 = sphi 0, %s65
      %s68 = sphi 0, %s67
      %s82 = sphi 0, %s68
      %s86 = sphi 0, %s86
      %s88 = sphi 0, %s86
      %s89 = sphi 0, %s88
      %s103 = sphi 0, %s89
      %s109 = sphi 0, %s111
      %s112 = sphi 0, %s109
      %s113 = sphi 0, %s112
      %s129 = sphi 0, %s113
      %s137 = sphi 0, %s139
      %s140 = sphi 0, %s137
      %s141 = sphi 0, %s140
      %s157 = sphi 0, %s141
      %s165 = sphi 0, %s167
      %s168 = sphi 0, %s165
      %s169 = sphi 0, %s168
      %s185 = sphi 0, %s169
    $region4: #{_lambda_.7} parent=1 // loop_header_branch
      %22 = sbr.rel (%p20) target = $region8
    $region5: #{_lambda_.7} parent=1 // loop_body
      %s24 = ssub.s32 %s19, 1
      %s25 = ssub.s32 %s19, 2
      %s32 = sadd.s32 1, %s27
      %p33 = scmp.ge.s32.totalorder %s32, 1
      %s34 = scalar_select %p33, 0, %s32
      %s35 = sadd.s32 1, %s26
      %s36 = scalar_select %p33, %s35, %s26
      %p37 = scmp.ge.s32.totalorder %s36, 2
      %s38 = scalar_select %p37, 0, %s36
      %s39 = ssub.s32 %s26, %s38
      %p40 = scmp.eq.s32.totalorder %s39, 0
      %s42 = sadd.s32 %s41, 1
      %s43 = scalar_select %p40, %s41, %s42
      %p46 = pneg %p40
      %p47 = scmp.eq.s32.totalorder %s19, 1
      %p48 = por %p46, %p47
      %p49 = scmp.ne.s32.totalorder %s41, %s44
      %p50 = scmp.eq.s32.totalorder %s19, 0
      %p51 = por %p49, %p50
      %p52 = scmp.ne.s32.totalorder %s41, %s44
      %p53 = scmp.eq.s32.totalorder %s24, 1
      %p54 = por %p52, %p53
      %p55 = scmp.ne.s32.totalorder %s44, %s45
      %p56 = scmp.eq.s32.totalorder %s24, 0
      %p57 = por %p55, %p56
      %p58 = scmp.ne.s32.totalorder %s44, %s45
      %p59 = scmp.eq.s32.totalorder %s25, 1
      %p60 = por %p58, %p59
      %p62 = scmp.ne.s32.totalorder %s45, %s61
      %p63 = scmp.eq.s32.totalorder %s25, 0
      %p64 = por %p62, %p63
      %s66 = sadd.s32 %s65, 1
      %p69 = scmp.eq.s32.totalorder %s19, 1
      %p70 = scmp.ne.s32.totalorder %s65, %s67
      %p71 = scmp.eq.s32.totalorder %s19, 0
      %p72 = por %p70, %p71
      %p73 = scmp.ne.s32.totalorder %s65, %s67
      %p74 = scmp.eq.s32.totalorder %s24, 1
      %p75 = por %p73, %p74
      %p76 = scmp.ne.s32.totalorder %s67, %s68
      %p77 = scmp.eq.s32.totalorder %s24, 0
      %p78 = por %p76, %p77
      %p79 = scmp.ne.s32.totalorder %s67, %s68
      %p80 = scmp.eq.s32.totalorder %s25, 1
      %p81 = por %p79, %p80
      %p83 = scmp.ne.s32.totalorder %s68, %s82
      %p84 = scmp.eq.s32.totalorder %s25, 0
      %p85 = por %p83, %p84
      %s87 = sadd.s32 %s86, 1
      %p90 = scmp.eq.s32.totalorder %s19, 1
      %p91 = scmp.ne.s32.totalorder %s86, %s88
      %p92 = scmp.eq.s32.totalorder %s19, 0
      %p93 = por %p91, %p92
      %p94 = scmp.ne.s32.totalorder %s86, %s88
      %p95 = scmp.eq.s32.totalorder %s24, 1
      %p96 = por %p94, %p95
      %p97 = scmp.ne.s32.totalorder %s88, %s89
      %p98 = scmp.eq.s32.totalorder %s24, 0
      %p99 = por %p97, %p98
      %p100 = scmp.ne.s32.totalorder %s88, %s89
      %p101 = scmp.eq.s32.totalorder %s25, 1
      %p102 = por %p100, %p101
      %p104 = scmp.ne.s32.totalorder %s89, %s103
      %p105 = scmp.eq.s32.totalorder %s25, 0
      %p106 = por %p104, %p105
      %s107 = ssub.s32 %s27, %s34
      %p108 = scmp.eq.s32.totalorder %s107, 0
      %s110 = sadd.s32 %s109, 1
      %s111 = scalar_select %p108, %s109, %s110
      %p114 = pneg %p108
      %p115 = scmp.eq.s32.totalorder %s19, 1
      %p116 = por %p114, %p115
      %p117 = scmp.ne.s32.totalorder %s109, %s112
      %p118 = scmp.eq.s32.totalorder %s19, 0
      %p119 = por %p117, %p118
      %p120 = scmp.ne.s32.totalorder %s109, %s112
      %p121 = scmp.eq.s32.totalorder %s24, 1
      %p122 = por %p120, %p121
      %p123 = scmp.ne.s32.totalorder %s112, %s113
      %p124 = scmp.eq.s32.totalorder %s24, 0
      %p125 = por %p123, %p124
      %p126 = scmp.ne.s32.totalorder %s112, %s113
      %p127 = scmp.eq.s32.totalorder %s25, 1
      %p128 = por %p126, %p127
      %p130 = scmp.ne.s32.totalorder %s113, %s129
      %p131 = scmp.eq.s32.totalorder %s25, 0
      %p132 = por %p130, %p131
      %s133 = ssub.s32 %s26, %s38
      %s134 = ssub.s32 %s27, %s34
      %s135 = sor.u32 %s133, %s134
      %p136 = scmp.eq.s32.totalorder %s135, 0
      %s138 = sadd.s32 %s137, 1
      %s139 = scalar_select %p136, %s137, %s138
      %p142 = pneg %p136
      %p143 = scmp.eq.s32.totalorder %s19, 1
      %p144 = por %p142, %p143
      %p145 = scmp.ne.s32.totalorder %s137, %s140
      %p146 = scmp.eq.s32.totalorder %s19, 0
      %p147 = por %p145, %p146
      %p148 = scmp.ne.s32.totalorder %s137, %s140
      %p149 = scmp.eq.s32.totalorder %s24, 1
      %p150 = por %p148, %p149
      %p151 = scmp.ne.s32.totalorder %s140, %s141
      %p152 = scmp.eq.s32.totalorder %s24, 0
      %p153 = por %p151, %p152
      %p154 = scmp.ne.s32.totalorder %s140, %s141
      %p155 = scmp.eq.s32.totalorder %s25, 1
      %p156 = por %p154, %p155
      %p158 = scmp.ne.s32.totalorder %s141, %s157
      %p159 = scmp.eq.s32.totalorder %s25, 0
      %p160 = por %p158, %p159
      %s161 = ssub.s32 %s26, %s38
      %s162 = ssub.s32 %s27, %s34
      %s163 = sor.u32 %s161, %s162
      %p164 = scmp.eq.s32.totalorder %s163, 0
      %s166 = sadd.s32 %s165, 1
      %s167 = scalar_select %p164, %s165, %s166
      %p170 = pneg %p164
      %p171 = scmp.eq.s32.totalorder %s19, 1
      %p172 = por %p170, %p171
      %p173 = scmp.ne.s32.totalorder %s165, %s168
      %p174 = scmp.eq.s32.totalorder %s19, 0
      %p175 = por %p173, %p174
      %p176 = scmp.ne.s32.totalorder %s165, %s168
      %p177 = scmp.eq.s32.totalorder %s24, 1
      %p178 = por %p176, %p177
      %p179 = scmp.ne.s32.totalorder %s168, %s169
      %p180 = scmp.eq.s32.totalorder %s24, 0
      %p181 = por %p179, %p180
      %p182 = scmp.ne.s32.totalorder %s168, %s169
      %p183 = scmp.eq.s32.totalorder %s25, 1
      %p184 = por %p182, %p183
      %p186 = scmp.ne.s32.totalorder %s169, %s185
      %p187 = scmp.eq.s32.totalorder %s25, 0
      %p188 = por %p186, %p187
      %p189 = scmp.le.s32.totalorder 1, %s19
      %p190 = scmp.lt.s32.totalorder %s19, 3
      %p191 = pnand %p189, %p190
      %p192 = pneg %p191
      // Predicated region
      $region9: #{_lambda_.7} parent=5 // pred_check
        _
      $region10: #{_lambda_.7} parent=5 // pred_check_branch
        %194 = sbr.rel (%p191) target = $region12
      $region11: #{_lambda_.7} parent=5 // pred_region
        %s195 = ssub.s32 %s19, 1
        // Predicated region
        $region13: #{_lambda_.7} parent=11 // pred_check
          %p196 = pneg %p78
        $region14: #{_lambda_.7} parent=11 // pred_check_branch
          %198 = sbr.rel (%p196) target = $region16
        $region15: #{_lambda_.7} parent=11 // pred_region
          %s200 = ssub.s32 16, 16
          %201 = vsyncadd [#allocation6], %s200
          %s203 = sshll.u32 [#allocation5], 4
          %s204 = int_to_ptr.vmem [resolvable:$true] %s203
          %206 = dma.hbm_to_vmem [thread:$0]  %s1, 16, %s204, [#allocation6]
        $region16: #{_lambda_.7} parent=11 // pred_fallthru
          _
        // Predicated region
        $region17: #{_lambda_.7} parent=11 // pred_check
          %p207 = pneg %p99
        $region18: #{_lambda_.7} parent=11 // pred_check_branch
          %209 = sbr.rel (%p207) target = $region20
        $region19: #{_lambda_.7} parent=11 // pred_region
          %s211 = ssub.s32 16, 16
          %212 = vsyncadd [#allocation6], %s211
          %s214 = sshll.u32 [#allocation7], 4
          %s215 = int_to_ptr.vmem [resolvable:$true] %s214
          %217 = dma.hbm_to_vmem [thread:$0]  %s2, 16, %s215, [#allocation6]
        $region20: #{_lambda_.7} parent=11 // pred_fallthru
          _
        // Predicated region
        $region21: #{_lambda_.7} parent=11 // pred_check
          %p218 = pneg %p125
        $region22: #{_lambda_.7} parent=11 // pred_check_branch
          %220 = sbr.rel (%p218) target = $region24
        $region23: #{_lambda_.7} parent=11 // pred_region
          %s222 = ssub.s32 9216, 9216
          %223 = vsyncadd [#allocation9], %s222
          %s224 = smul.addr %s29, 64
          %s225 = scalar_lea.hbm %s3, %s224
          %s226 = sshll.u32 [#allocation8], 4
          %s227 = int_to_ptr.vmem [resolvable:$true] %s226
          %232 = dma.hbm_to_vmem [thread:$0]  %s225, 9216, %s227, [#allocation9], 64, 64, 4
        $region24: #{_lambda_.7} parent=11 // pred_fallthru
          _
      $region12: #{_lambda_.7} parent=5 // pred_fallthru
        _
      %p233 = scmp.lt.s32.totalorder %s19, 2
      // Predicated region
      $region25: #{_lambda_.7} parent=5 // pred_check
        %p234 = pneg %p233
      $region26: #{_lambda_.7} parent=5 // pred_check_branch
        %236 = sbr.rel (%p234) target = $region28
      $region27: #{_lambda_.7} parent=5 // pred_region
        // Predicated region
        $region29: #{_lambda_.7} parent=27 // pred_check
          %p237 = pneg %p51
        $region30: #{_lambda_.7} parent=27 // pred_check_branch
          %239 = sbr.rel (%p237) target = $region32
        $region31: #{_lambda_.7} parent=27 // pred_region
          %s240 = sand.u32 %s19, 1
          %s241 = scalar_lea.sflag [#allocation3], %s240
          %s242 = sand.u32 %s41, 1
          %s243 = smul.addr %s242, 160
          %s244 = scalar_lea.vmem [#allocation2], %s243
          %s246 = ssub.s32 2560, 2560
          %247 = vsyncadd %s241, %s246
          %s248 = smul.addr %s26, 20
          %s249 = smul.addr %s248, 128
          %s250 = scalar_lea.hbm %s0, %s249
          %s251 = sshll.u32 %s244, 4
          %s252 = int_to_ptr.vmem [resolvable:$true] %s251
          %257 = dma.hbm_to_vmem [thread:$0]  %s250, 2560, %s252, %s241, 128, 128, 8
        $region32: #{_lambda_.7} parent=27 // pred_fallthru
          _
        // Predicated region
        $region33: #{_lambda_.7} parent=27 // pred_check
          %p258 = pneg %p147
        $region34: #{_lambda_.7} parent=27 // pred_check_branch
          %260 = sbr.rel (%p258) target = $region36
        $region35: #{_lambda_.7} parent=27 // pred_region
          %s261 = sand.u32 %s19, 1
          %s262 = scalar_lea.sflag [#allocation3], %s261
          %s263 = sand.u32 %s137, 1
          %s264 = smul.addr %s263, 64
          %s265 = scalar_lea.vmem [#allocation10], %s264
          %s267 = ssub.s32 1024, 1024
          %268 = vsyncadd %s262, %s267
          %s269 = smul.addr %s26, 8
          %s270 = sadd.s32 %s27, %s269
          %s271 = smul.addr %s270, 128
          %s272 = scalar_lea.hbm %s4, %s271
          %s273 = sshll.u32 %s265, 4
          %s274 = int_to_ptr.vmem [resolvable:$true] %s273
          %279 = dma.hbm_to_vmem [thread:$0]  %s272, 1024, %s274, %s262, 128, 128, 8
        $region36: #{_lambda_.7} parent=27 // pred_fallthru
          _
      $region28: #{_lambda_.7} parent=5 // pred_fallthru
        _
      %p280 = scmp.le.s32.totalorder 1, %s19
      %p281 = scmp.lt.s32.totalorder %s19, 3
      %p282 = pnand %p280, %p281
      %p283 = pneg %p282
      // Predicated region
      $region37: #{_lambda_.7} parent=5 // pred_check
        _
      $region38: #{_lambda_.7} parent=5 // pred_check_branch
        %285 = sbr.rel (%p282) target = $region40
      $region39: #{_lambda_.7} parent=5 // pred_region
        %s286 = ssub.s32 %s19, 1
        %s287 = sand.u32 %s24, 1
        %s288 = scalar_lea.sflag [#allocation3], %s287
        %s289 = sand.u32 %s44, 1
        %s290 = smul.addr %s289, 160
        %s291 = scalar_lea.vmem [#allocation2], %s290
        // Predicated region
        $region41: #{_lambda_.7} parent=39 // pred_check
          %p292 = pneg %p57
        $region42: #{_lambda_.7} parent=39 // pred_check_branch
          %294 = sbr.rel (%p292) target = $region44
        $region43: #{_lambda_.7} parent=39 // pred_region
          %295 = dma.done %s288, 2560
        $region44: #{_lambda_.7} parent=39 // pred_fallthru
          _
        // Predicated region
        $region45: #{_lambda_.7} parent=39 // pred_check
          %p296 = pneg %p78
        $region46: #{_lambda_.7} parent=39 // pred_check_branch
          %298 = sbr.rel (%p296) target = $region48
        $region47: #{_lambda_.7} parent=39 // pred_region
          %299 = dma.done [#allocation6], 16
        $region48: #{_lambda_.7} parent=39 // pred_fallthru
          _
        // Predicated region
        $region49: #{_lambda_.7} parent=39 // pred_check
          %p300 = pneg %p99
        $region50: #{_lambda_.7} parent=39 // pred_check_branch
          %302 = sbr.rel (%p300) target = $region52
        $region51: #{_lambda_.7} parent=39 // pred_region
          %303 = dma.done [#allocation6], 16
        $region52: #{_lambda_.7} parent=39 // pred_fallthru
          _
        // Predicated region
        $region53: #{_lambda_.7} parent=39 // pred_check
          %p304 = pneg %p125
        $region54: #{_lambda_.7} parent=39 // pred_check_branch
          %306 = sbr.rel (%p304) target = $region56
        $region55: #{_lambda_.7} parent=39 // pred_region
          %307 = dma.done [#allocation9], 9216
        $region56: #{_lambda_.7} parent=39 // pred_fallthru
          _
        %s308 = sand.u32 %s24, 1
        %s309 = scalar_lea.sflag [#allocation3], %s308
        %s310 = sand.u32 %s140, 1
        %s311 = smul.addr %s310, 64
        %s312 = scalar_lea.vmem [#allocation10], %s311
        // Predicated region
        $region57: #{_lambda_.7} parent=39 // pred_check
          %p313 = pneg %p153
        $region58: #{_lambda_.7} parent=39 // pred_check_branch
          %315 = sbr.rel (%p313) target = $region60
        $region59: #{_lambda_.7} parent=39 // pred_region
          %316 = dma.done %s309, 1024
        $region60: #{_lambda_.7} parent=39 // pred_fallthru
          _
        %s317 = sand.u32 %s24, 1
        %s318 = scalar_lea.sflag [#allocation3], %s317
        %s319 = sand.u32 %s44, 1
        %s320 = smul.addr %s319, 160
        %s321 = scalar_lea.vmem [#allocation2], %s320
        %p322 = pneg %p57
        %p323 = pneg %p54
        %p324 = pneg %p78
        %p325 = pneg %p75
        %p326 = pneg %p99
        %p327 = pneg %p96
        %p328 = pneg %p125
        %p329 = pneg %p122
        %s330 = sand.u32 %s24, 1
        %s331 = scalar_lea.sflag [#allocation3], %s330
        %s332 = sand.u32 %s140, 1
        %s333 = smul.addr %s332, 64
        %s334 = scalar_lea.vmem [#allocation10], %s333
        %p335 = pneg %p153
        %p336 = pneg %p150
        %p337 = pneg %p181
        %p338 = pneg %p178
        %s339 = sand.u32 %s168, 1
        %s340 = scalar_lea.sflag [#allocation4], %s339
        %s341 = sand.u32 %s168, 1
        %s342 = smul.addr %s341, 64
        %s343 = scalar_lea.vmem [#allocation11], %s342
        %v345 = vld [vmem:[%s291] sm:$0xff]
        %v346 = vld [vmem:[%s291 + $0x8] sm:$0x3]
        %v347 = vld [vmem:[%s291 + $0x10] sm:$0xff]
        %v348 = vld [vmem:[%s291 + $0x18] sm:$0x3]
        %v349 = vld [vmem:[%s291 + $0x20] sm:$0xff]
        %v350 = vld [vmem:[%s291 + $0x28] sm:$0x3]
        %v351 = vld [vmem:[%s291 + $0x30] sm:$0xff]
        %v352 = vld [vmem:[%s291 + $0x38] sm:$0x3]
        %v353 = vld [vmem:[%s291 + $0x40] sm:$0xff]
        %v354 = vld [vmem:[%s291 + $0x48] sm:$0x3]
        %v355 = vld [vmem:[%s291 + $0x50] sm:$0xff]
        %v356 = vld [vmem:[%s291 + $0x58] sm:$0x3]
        %v357 = vld [vmem:[%s291 + $0x60] sm:$0xff]
        %v358 = vld [vmem:[%s291 + $0x68] sm:$0x3]
        %v359 = vld [vmem:[%s291 + $0x70] sm:$0xff]
        %v360 = vld [vmem:[%s291 + $0x78] sm:$0x3]
        %v361 = vld [vmem:[%s291 + $0x80] sm:$0xff]
        %v362 = vld [vmem:[%s291 + $0x88] sm:$0x3]
        %v363 = vld [vmem:[%s291 + $0x90] sm:$0xff]
        %v364 = vld [vmem:[%s291 + $0x98] sm:$0x3]
        %v365 = vld [vmem:[#allocation5] sm:$0x1]
        %v366 = vld [vmem:[#allocation7] sm:$0x1]
        %v368 = vlaneseq
        %v369 = vshrl.u32 %v368, 7
        %v370 = vsub.s32 0, %v369
        %v371 = vrot.slane %v365, %v370
        %v373 = vmul.f32 %v345, %v371
        %v374 = vmul.f32 %v346, %v371
        %v375 = vmul.f32 %v347, %v371
        %v376 = vmul.f32 %v348, %v371
        %v377 = vmul.f32 %v349, %v371
        %v378 = vmul.f32 %v350, %v371
        %v379 = vmul.f32 %v351, %v371
        %v380 = vmul.f32 %v352, %v371
        %v381 = vmul.f32 %v353, %v371
        %v382 = vmul.f32 %v354, %v371
        %v383 = vmul.f32 %v355, %v371
        %v384 = vmul.f32 %v356, %v371
        %v385 = vmul.f32 %v357, %v371
        %v386 = vmul.f32 %v358, %v371
        %v387 = vmul.f32 %v359, %v371
        %v388 = vmul.f32 %v360, %v371
        %v389 = vmul.f32 %v361, %v371
        %v390 = vmul.f32 %v362, %v371
        %v391 = vmul.f32 %v363, %v371
        %v392 = vmul.f32 %v364, %v371
        %v394 = vlaneseq
        %v395 = vshrl.u32 %v394, 7
        %v396 = vsub.s32 0, %v395
        %v397 = vrot.slane %v366, %v396
        %v399 = vadd.f32 %v373, %v397
        %v400 = vadd.f32 %v374, %v397
        %v401 = vadd.f32 %v375, %v397
        %v402 = vadd.f32 %v376, %v397
        %v403 = vadd.f32 %v377, %v397
        %v404 = vadd.f32 %v378, %v397
        %v405 = vadd.f32 %v379, %v397
        %v406 = vadd.f32 %v380, %v397
        %v407 = vadd.f32 %v381, %v397
        %v408 = vadd.f32 %v382, %v397
        %v409 = vadd.f32 %v383, %v397
        %v410 = vadd.f32 %v384, %v397
        %v411 = vadd.f32 %v385, %v397
        %v412 = vadd.f32 %v386, %v397
        %v413 = vadd.f32 %v387, %v397
        %v414 = vadd.f32 %v388, %v397
        %v415 = vadd.f32 %v389, %v397
        %v416 = vadd.f32 %v390, %v397
        %v417 = vadd.f32 %v391, %v397
        %v418 = vadd.f32 %v392, %v397
        %v419 = vmax.f32 %v399, 0.0
        %v420 = vmax.f32 %v400, 0.0
        %v421 = vmax.f32 %v401, 0.0
        %v422 = vmax.f32 %v402, 0.0
        %v423 = vmax.f32 %v403, 0.0
        %v424 = vmax.f32 %v404, 0.0
        %v425 = vmax.f32 %v405, 0.0
        %v426 = vmax.f32 %v406, 0.0
        %v427 = vmax.f32 %v407, 0.0
        %v428 = vmax.f32 %v408, 0.0
        %v429 = vmax.f32 %v409, 0.0
        %v430 = vmax.f32 %v410, 0.0
        %v431 = vmax.f32 %v411, 0.0
        %v432 = vmax.f32 %v412, 0.0
        %v433 = vmax.f32 %v413, 0.0
        %v434 = vmax.f32 %v414, 0.0
        %v435 = vmax.f32 %v415, 0.0
        %v436 = vmax.f32 %v416, 0.0
        %v437 = vmax.f32 %v417, 0.0
        %v438 = vmax.f32 %v418, 0.0
        %v439 = vlaneseq
        %v440 = vshrl.u32 %v439, 7
        %v441 = vadd.s32 %v440, 8
        %vm442 = vcmp.ge.s32.totalorder %v440, 1
        %vm443 = vcmp.ge.s32.totalorder %v441, 1
        %vm444 = vmand 0, %vm442
        %vm445 = vmand 0, %vm443
        %vm446 = vmand 1, %vm442
        %vm447 = vmand 1, %vm443
        %vm448 = vcmp.le.s32.totalorder %v440, 8
        %vm449 = vcmp.le.s32.totalorder %v441, 8
        %vm450 = vmand %vm444, %vm448
        %vm451 = vmand %vm445, %vm449
        %vm452 = vmand %vm446, %vm448
        %vm453 = vmand %vm447, %vm449
        %v454 = vsel %vm450, 1, 0
        %v455 = vsel %vm451, 1, 0
        %v456 = vsel %vm452, 1, 0
        %v457 = vsel %vm453, 1, 0
        %vm458 = vcmp.eq.s32.totalorder %v454, 1
        %vm459 = vcmp.eq.s32.totalorder %v455, 1
        %vm460 = vcmp.eq.s32.totalorder %v456, 1
        %vm461 = vcmp.eq.s32.totalorder %v457, 1
        %v462 = vsel %vm458, %v419, 0.0
        %v463 = vsel %vm459, %v420, 0.0
        %v464 = vsel %vm460, %v421, 0.0
        %v465 = vsel %vm461, %v422, 0.0
        %v466 = vsel %vm460, %v423, 0.0
        %v467 = vsel %vm461, %v424, 0.0
        %v468 = vsel %vm460, %v425, 0.0
        %v469 = vsel %vm461, %v426, 0.0
        %v470 = vsel %vm460, %v427, 0.0
        %v471 = vsel %vm461, %v428, 0.0
        %v472 = vsel %vm460, %v429, 0.0
        %v473 = vsel %vm461, %v430, 0.0
        %v474 = vsel %vm460, %v431, 0.0
        %v475 = vsel %vm461, %v432, 0.0
        %v476 = vsel %vm460, %v433, 0.0
        %v477 = vsel %vm461, %v434, 0.0
        %v478 = vsel %vm460, %v435, 0.0
        %v479 = vsel %vm461, %v436, 0.0
        %v480 = vsel %vm458, %v437, 0.0
        %v481 = vsel %vm459, %v438, 0.0
        %v482 = vpack.c.bf16 %v463, %v462
        %v483 = vpack.c.bf16 %v465, %v464
        %v484 = vpack.c.bf16 %v467, %v466
        %v485 = vpack.c.bf16 %v469, %v468
        %v486 = vpack.c.bf16 %v471, %v470
        %v487 = vpack.c.bf16 %v473, %v472
        %v488 = vpack.c.bf16 %v475, %v474
        %v489 = vpack.c.bf16 %v477, %v476
        %v490 = vpack.c.bf16 %v479, %v478
        %v491 = vpack.c.bf16 %v481, %v480
        %v492 = vld [vmem:[#allocation8] sm:$0xf]
        %v493 = vld [vmem:[#allocation8 + $0x4] sm:$0xf]
        %v494 = vld [vmem:[#allocation8 + $0x8] sm:$0xf]
        %v495 = vld [vmem:[#allocation8 + $0xc] sm:$0xf]
        %v496 = vld [vmem:[#allocation8 + $0x10] sm:$0xf]
        %v497 = vld [vmem:[#allocation8 + $0x14] sm:$0xf]
        %v498 = vld [vmem:[#allocation8 + $0x18] sm:$0xf]
        %v499 = vld [vmem:[#allocation8 + $0x1c] sm:$0xf]
        %v500 = vld [vmem:[#allocation8 + $0x20] sm:$0xf]
        %v501 = vld [vmem:[#allocation8 + $0x24] sm:$0xf]
        %v502 = vld [vmem:[#allocation8 + $0x28] sm:$0xf]
        %v503 = vld [vmem:[#allocation8 + $0x2c] sm:$0xf]
        %v504 = vld [vmem:[#allocation8 + $0x30] sm:$0xf]
        %v505 = vld [vmem:[#allocation8 + $0x34] sm:$0xf]
        %v506 = vld [vmem:[#allocation8 + $0x38] sm:$0xf]
        %v507 = vld [vmem:[#allocation8 + $0x3c] sm:$0xf]
        %v516 = vunpack.c.l.b16 %v482
        %v517 = vunpack.c.h.b16 %v482
        %v518 = vunpack.c.l.b16 %v483
        %v519 = vunpack.c.h.b16 %v483
        %v520 = vunpack.c.l.b16 %v484
        %v521 = vunpack.c.h.b16 %v484
        %v522 = vunpack.c.l.b16 %v485
        %v523 = vunpack.c.h.b16 %v485
        %v524 = vunpack.c.l.b16 %v486
        %v525 = vunpack.c.h.b16 %v486
        %v526 = vunpack.c.l.b16 %v487
        %v527 = vunpack.c.h.b16 %v487
        %v528 = vunpack.c.l.b16 %v488
        %v529 = vunpack.c.h.b16 %v488
        %v530 = vunpack.c.l.b16 %v489
        %v531 = vunpack.c.h.b16 %v489
        %v532 = vpack.c.b16 %v516, %v516
        %v533 = vpack.c.b16 %v517, %v517
        %v534 = vpack.c.b16 %v518, %v518
        %v535 = vpack.c.b16 %v519, %v519
        %v536 = vpack.c.b16 %v520, %v520
        %v537 = vpack.c.b16 %v521, %v521
        %v538 = vpack.c.b16 %v522, %v522
        %v539 = vpack.c.b16 %v523, %v523
        %v540 = vpack.c.b16 %v524, %v524
        %v541 = vpack.c.b16 %v525, %v525
        %v542 = vpack.c.b16 %v526, %v526
        %v543 = vpack.c.b16 %v527, %v527
        %v544 = vpack.c.b16 %v528, %v528
        %v545 = vpack.c.b16 %v529, %v529
        %v546 = vpack.c.b16 %v530, %v530
        %v547 = vpack.c.b16 %v531, %v531
        %vm548 = vsmask.f32 3328
        %vm549 = vsmask.f32 7440
        %vm550 = vmor %vm548, %vm549
        %v552 = vshrl.u32 %v532, 16
        %v554 = vrot.slane %v552, 4
        %v555 = vshll.u32 %v532, 16
        %v557 = vrot.slane %v555, 5
        %v558 = vor.u32 %v554, %v557
        %v559 = vrot.slane %v558, 4
        %v561 = vshll.u32 %v533, 16
        %v563 = vrot.slane %v561, 5
        %v564 = vsel %vm550, %v559, %v563
        %v566 = vshrl.u32 %v534, 16
        %v568 = vrot.slane %v566, 4
        %v569 = vshll.u32 %v534, 16
        %v571 = vrot.slane %v569, 5
        %v572 = vor.u32 %v568, %v571
        %v573 = vrot.slane %v572, 4
        %v575 = vshll.u32 %v535, 16
        %v577 = vrot.slane %v575, 5
        %v578 = vsel %vm550, %v573, %v577
        %v580 = vshrl.u32 %v536, 16
        %v582 = vrot.slane %v580, 4
        %v583 = vshll.u32 %v536, 16
        %v585 = vrot.slane %v583, 5
        %v586 = vor.u32 %v582, %v585
        %v587 = vrot.slane %v586, 4
        %v589 = vshll.u32 %v537, 16
        %v591 = vrot.slane %v589, 5
        %v592 = vsel %vm550, %v587, %v591
        %v594 = vshrl.u32 %v538, 16
        %v596 = vrot.slane %v594, 4
        %v597 = vshll.u32 %v538, 16
        %v599 = vrot.slane %v597, 5
        %v600 = vor.u32 %v596, %v599
        %v601 = vrot.slane %v600, 4
        %v603 = vshll.u32 %v539, 16
        %v605 = vrot.slane %v603, 5
        %v606 = vsel %vm550, %v601, %v605
        %v608 = vshrl.u32 %v540, 16
        %v610 = vrot.slane %v608, 4
        %v611 = vshll.u32 %v540, 16
        %v613 = vrot.slane %v611, 5
        %v614 = vor.u32 %v610, %v613
        %v615 = vrot.slane %v614, 4
        %v617 = vshll.u32 %v541, 16
        %v619 = vrot.slane %v617, 5
        %v620 = vsel %vm550, %v615, %v619
        %v622 = vshrl.u32 %v542, 16
        %v624 = vrot.slane %v622, 4
        %v625 = vshll.u32 %v542, 16
        %v627 = vrot.slane %v625, 5
        %v628 = vor.u32 %v624, %v627
        %v629 = vrot.slane %v628, 4
        %v631 = vshll.u32 %v543, 16
        %v633 = vrot.slane %v631, 5
        %v634 = vsel %vm550, %v629, %v633
        %v636 = vshrl.u32 %v544, 16
        %v638 = vrot.slane %v636, 4
        %v639 = vshll.u32 %v544, 16
        %v641 = vrot.slane %v639, 5
        %v642 = vor.u32 %v638, %v641
        %v643 = vrot.slane %v642, 4
        %v645 = vshll.u32 %v545, 16
        %v647 = vrot.slane %v645, 5
        %v648 = vsel %vm550, %v643, %v647
        %v650 = vshrl.u32 %v546, 16
        %v652 = vrot.slane %v650, 4
        %v653 = vshll.u32 %v546, 16
        %v655 = vrot.slane %v653, 5
        %v656 = vor.u32 %v652, %v655
        %v657 = vrot.slane %v656, 4
        %v659 = vshll.u32 %v547, 16
        %v661 = vrot.slane %v659, 5
        %v662 = vsel %vm550, %v657, %v661
        %s663 = scalar_lea.vmem [#allocation8], 64
        %v664 = vld [vmem:[%s663] sm:$0xf]
        %v665 = vld [vmem:[%s663 + $0x4] sm:$0xf]
        %v666 = vld [vmem:[%s663 + $0x8] sm:$0xf]
        %v667 = vld [vmem:[%s663 + $0xc] sm:$0xf]
        %v668 = vld [vmem:[%s663 + $0x10] sm:$0xf]
        %v669 = vld [vmem:[%s663 + $0x14] sm:$0xf]
        %v670 = vld [vmem:[%s663 + $0x18] sm:$0xf]
        %v671 = vld [vmem:[%s663 + $0x1c] sm:$0xf]
        %v672 = vld [vmem:[%s663 + $0x20] sm:$0xf]
        %v673 = vld [vmem:[%s663 + $0x24] sm:$0xf]
        %v674 = vld [vmem:[%s663 + $0x28] sm:$0xf]
        %v675 = vld [vmem:[%s663 + $0x2c] sm:$0xf]
        %v676 = vld [vmem:[%s663 + $0x30] sm:$0xf]
        %v677 = vld [vmem:[%s663 + $0x34] sm:$0xf]
        %v678 = vld [vmem:[%s663 + $0x38] sm:$0xf]
        %v679 = vld [vmem:[%s663 + $0x3c] sm:$0xf]
        %v680 = vunpack.c.l.b16 %v564
        %v681 = vunpack.c.l.b16 %v578
        %v682 = vunpack.c.l.b16 %v592
        %v683 = vunpack.c.l.b16 %v606
        %v684 = vunpack.c.l.b16 %v620
        %v685 = vunpack.c.l.b16 %v634
        %v686 = vunpack.c.l.b16 %v648
        %v687 = vunpack.c.l.b16 %v662
        %v688 = vpack.c.b16 %v681, %v680
        %v689 = vpack.c.b16 %v683, %v682
        %v690 = vpack.c.b16 %v685, %v684
        %v691 = vpack.c.b16 %v687, %v686
        %v712 = vunpack.c.l.b16 %v664
        %v713 = vunpack.c.l.b16 %v665
        %v714 = vunpack.c.l.b16 %v666
        %v715 = vunpack.c.l.b16 %v667
        %v716 = vunpack.c.l.b16 %v668
        %v717 = vunpack.c.l.b16 %v669
        %v718 = vunpack.c.l.b16 %v670
        %v719 = vunpack.c.l.b16 %v671
        %v720 = vunpack.c.l.b16 %v672
        %v721 = vunpack.c.l.b16 %v673
        %v722 = vunpack.c.l.b16 %v674
        %v723 = vunpack.c.l.b16 %v675
        %v724 = vunpack.c.l.b16 %v676
        %v725 = vunpack.c.l.b16 %v677
        %v726 = vunpack.c.l.b16 %v678
        %v727 = vunpack.c.l.b16 %v679
        %v728 = vpack.c.b16 %v713, %v712
        %v729 = vpack.c.b16 %v715, %v714
        %v730 = vpack.c.b16 %v717, %v716
        %v731 = vpack.c.b16 %v719, %v718
        %v732 = vpack.c.b16 %v721, %v720
        %v733 = vpack.c.b16 %v723, %v722
        %v734 = vpack.c.b16 %v725, %v724
        %v735 = vpack.c.b16 %v727, %v726
        %744 = vmatprep.subr.bf16.mxu0 0
        %745 = vmatpush1.bf16.msra.mxu0 %v728
        %746 = vmatprep.subr.bf16.mxu0 0
        %747 = vmatpush1.bf16.msra.mxu0 %v729
        %748 = vmatprep.subr.bf16.mxu0 0
        %749 = vmatpush1.bf16.msra.mxu0 %v730
        %750 = vmatprep.subr.bf16.mxu0 0
        %751 = vmatpush1.bf16.msra.mxu0 %v731
        %752 = vmatprep.subr.bf16.mxu0 0
        %753 = vmatpush1.bf16.msra.mxu0 %v732
        %754 = vmatprep.subr.bf16.mxu0 0
        %755 = vmatpush1.bf16.msra.mxu0 %v733
        %756 = vmatprep.subr.bf16.mxu0 0
        %757 = vmatpush1.bf16.msra.mxu0 %v734
        %758 = vmatprep.subr.bf16.mxu0 0
        %759 = vmatpush1.bf16.msra.mxu0 %v735
        %760 = vmatprep.subr.bf16.mxu0 0
        %761 = vmatpush1.bf16.msra.mxu0 0
        %762 = vmatprep.subr.bf16.mxu0 0
        %763 = vmatpush1.bf16.msra.mxu0 0
        %764 = vmatprep.subr.bf16.mxu0 0
        %765 = vmatpush1.bf16.msra.mxu0 0
        %766 = vmatprep.subr.bf16.mxu0 0
        %767 = vmatpush1.bf16.msra.mxu0 0
        %768 = vmatprep.subr.bf16.mxu0 0
        %769 = vmatpush1.bf16.msra.mxu0 0
        %770 = vmatprep.subr.bf16.mxu0 0
        %771 = vmatpush1.bf16.msra.mxu0 0
        %772 = vmatprep.subr.bf16.mxu0 0
        %773 = vmatpush1.bf16.msra.mxu0 0
        %774 = vmatprep.subr.bf16.mxu0 0
        %775 = vmatpush1.bf16.msra.mxu0 0
        %776 = vmatprep.mubr.bf16.mxu0 0
        %777 = vmatmul.mubr.bf16.gmra.mrb[0].mxu0 %v688
        %v778 = vpop.f32.mrb[0].mxu0
        %v779 = vadd.f32 0.0, %v778
        %v780 = vpop.f32.mrb[0].mxu0
        %v781 = vpop.f32.mrb[0].mxu0
        %v782 = vadd.f32 0.0, %v781
        %v783 = vpop.f32.mrb[0].mxu0
        %784 = vmatprep.mubr.bf16.mxu0 0
        %785 = vmatmul.mubr.bf16.gmra.mrb[0].mxu0 %v689
        %v786 = vpop.f32.mrb[0].mxu0
        %v787 = vadd.f32 0.0, %v786
        %v788 = vpop.f32.mrb[0].mxu0
        %v789 = vpop.f32.mrb[0].mxu0
        %v790 = vadd.f32 0.0, %v789
        %v791 = vpop.f32.mrb[0].mxu0
        %792 = vmatprep.mubr.bf16.mxu0 0
        %793 = vmatmul.mubr.bf16.gmra.mrb[0].mxu0 %v690
        %v794 = vpop.f32.mrb[0].mxu0
        %v795 = vadd.f32 0.0, %v794
        %v796 = vpop.f32.mrb[0].mxu0
        %v797 = vpop.f32.mrb[0].mxu0
        %v798 = vadd.f32 0.0, %v797
        %v799 = vpop.f32.mrb[0].mxu0
        %800 = vmatprep.mubr.bf16.mxu0 0
        %801 = vmatmul.mubr.bf16.gmra.mrb[0].mxu0 %v691
        %v802 = vpop.f32.mrb[0].mxu0
        %v803 = vadd.f32 0.0, %v802
        %v804 = vpop.f32.mrb[0].mxu0
        %v805 = vpop.f32.mrb[0].mxu0
        %v806 = vadd.f32 0.0, %v805
        %v807 = vpop.f32.mrb[0].mxu0
        %808 = vdwg.mxu0
        %v809 = vpack.c.b16 %v518, %v516
        %v810 = vpack.c.b16 %v522, %v520
        %v811 = vpack.c.b16 %v526, %v524
        %v812 = vpack.c.b16 %v530, %v528
        %v833 = vunpack.c.l.b16 %v492
        %v834 = vunpack.c.l.b16 %v493
        %v835 = vunpack.c.l.b16 %v494
        %v836 = vunpack.c.l.b16 %v495
        %v837 = vunpack.c.l.b16 %v496
        %v838 = vunpack.c.l.b16 %v497
        %v839 = vunpack.c.l.b16 %v498
        %v840 = vunpack.c.l.b16 %v499
        %v841 = vunpack.c.l.b16 %v500
        %v842 = vunpack.c.l.b16 %v501
        %v843 = vunpack.c.l.b16 %v502
        %v844 = vunpack.c.l.b16 %v503
        %v845 = vunpack.c.l.b16 %v504
        %v846 = vunpack.c.l.b16 %v505
        %v847 = vunpack.c.l.b16 %v506
        %v848 = vunpack.c.l.b16 %v507
        %v849 = vpack.c.b16 %v834, %v833
        %v850 = vpack.c.b16 %v836, %v835
        %v851 = vpack.c.b16 %v838, %v837
        %v852 = vpack.c.b16 %v840, %v839
        %v853 = vpack.c.b16 %v842, %v841
        %v854 = vpack.c.b16 %v844, %v843
        %v855 = vpack.c.b16 %v846, %v845
        %v856 = vpack.c.b16 %v848, %v847
        %865 = vmatprep.subr.bf16.mxu0 0
        %866 = vmatpush1.bf16.msra.mxu0 %v849
        %867 = vmatprep.subr.bf16.mxu0 0
        %868 = vmatpush1.bf16.msra.mxu0 %v850
        %869 = vmatprep.subr.bf16.mxu0 0
        %870 = vmatpush1.bf16.msra.mxu0 %v851
        %871 = vmatprep.subr.bf16.mxu0 0
        %872 = vmatpush1.bf16.msra.mxu0 %v852
        %873 = vmatprep.subr.bf16.mxu0 0
        %874 = vmatpush1.bf16.msra.mxu0 %v853
        %875 = vmatprep.subr.bf16.mxu0 0
        %876 = vmatpush1.bf16.msra.mxu0 %v854
        %877 = vmatprep.subr.bf16.mxu0 0
        %878 = vmatpush1.bf16.msra.mxu0 %v855
        %879 = vmatprep.subr.bf16.mxu0 0
        %880 = vmatpush1.bf16.msra.mxu0 %v856
        %881 = vmatprep.subr.bf16.mxu0 0
        %882 = vmatpush1.bf16.msra.mxu0 0
        %883 = vmatprep.subr.bf16.mxu0 0
        %884 = vmatpush1.bf16.msra.mxu0 0
        %885 = vmatprep.subr.bf16.mxu0 0
        %886 = vmatpush1.bf16.msra.mxu0 0
        %887 = vmatprep.subr.bf16.mxu0 0
        %888 = vmatpush1.bf16.msra.mxu0 0
        %889 = vmatprep.subr.bf16.mxu0 0
        %890 = vmatpush1.bf16.msra.mxu0 0
        %891 = vmatprep.subr.bf16.mxu0 0
        %892 = vmatpush1.bf16.msra.mxu0 0
        %893 = vmatprep.subr.bf16.mxu0 0
        %894 = vmatpush1.bf16.msra.mxu0 0
        %895 = vmatprep.subr.bf16.mxu0 0
        %896 = vmatpush1.bf16.msra.mxu0 0
        %897 = vmatprep.mubr.bf16.mxu0 0
        %898 = vmatmul.mubr.bf16.gmra.mrb[0].mxu0 %v809
        %v899 = vpop.f32.mrb[0].mxu0
        %v900 = vadd.f32 %v779, %v899
        %v901 = vpop.f32.mrb[0].mxu0
        %v902 = vpop.f32.mrb[0].mxu0
        %v903 = vadd.f32 %v782, %v902
        %v904 = vpop.f32.mrb[0].mxu0
        %905 = vmatprep.mubr.bf16.mxu0 0
        %906 = vmatmul.mubr.bf16.gmra.mrb[0].mxu0 %v810
        %v907 = vpop.f32.mrb[0].mxu0
        %v908 = vadd.f32 %v787, %v907
        %v909 = vpop.f32.mrb[0].mxu0
        %v910 = vpop.f32.mrb[0].mxu0
        %v911 = vadd.f32 %v790, %v910
        %v912 = vpop.f32.mrb[0].mxu0
        %913 = vmatprep.mubr.bf16.mxu0 0
        %914 = vmatmul.mubr.bf16.gmra.mrb[0].mxu0 %v811
        %v915 = vpop.f32.mrb[0].mxu0
        %v916 = vadd.f32 %v795, %v915
        %v917 = vpop.f32.mrb[0].mxu0
        %v918 = vpop.f32.mrb[0].mxu0
        %v919 = vadd.f32 %v798, %v918
        %v920 = vpop.f32.mrb[0].mxu0
        %921 = vmatprep.mubr.bf16.mxu0 0
        %922 = vmatmul.mubr.bf16.gmra.mrb[0].mxu0 %v812
        %v923 = vpop.f32.mrb[0].mxu0
        %v924 = vadd.f32 %v803, %v923
        %v925 = vpop.f32.mrb[0].mxu0
        %v926 = vpop.f32.mrb[0].mxu0
        %v927 = vadd.f32 %v806, %v926
        %v928 = vpop.f32.mrb[0].mxu0
        %929 = vdwg.mxu0
        %vm930 = vcmask 1042432
        %vm931 = vcmask 1046532
        %vm932 = vmor %vm930, %vm931
        %v933 = vrot.slane %v532, 5
        %v934 = vrot.slane %v933, 4
        %v935 = vrot.slane %v533, 5
        %v936 = vsel %vm932, %v934, %v935
        %v937 = vrot.slane %v534, 5
        %v938 = vrot.slane %v937, 4
        %v939 = vrot.slane %v535, 5
        %v940 = vsel %vm932, %v938, %v939
        %v941 = vrot.slane %v536, 5
        %v942 = vrot.slane %v941, 4
        %v943 = vrot.slane %v537, 5
        %v944 = vsel %vm932, %v942, %v943
        %v945 = vrot.slane %v538, 5
        %v946 = vrot.slane %v945, 4
        %v947 = vrot.slane %v539, 5
        %v948 = vsel %vm932, %v946, %v947
        %v949 = vrot.slane %v540, 5
        %v950 = vrot.slane %v949, 4
        %v951 = vrot.slane %v541, 5
        %v952 = vsel %vm932, %v950, %v951
        %v953 = vrot.slane %v542, 5
        %v954 = vrot.slane %v953, 4
        %v955 = vrot.slane %v543, 5
        %v956 = vsel %vm932, %v954, %v955
        %v957 = vrot.slane %v544, 5
        %v958 = vrot.slane %v957, 4
        %v959 = vrot.slane %v545, 5
        %v960 = vsel %vm932, %v958, %v959
        %v961 = vrot.slane %v546, 5
        %v962 = vrot.slane %v961, 4
        %v963 = vrot.slane %v547, 5
        %v964 = vsel %vm932, %v962, %v963
        %s965 = scalar_lea.vmem [#allocation8], 128
        %v966 = vld [vmem:[%s965] sm:$0xf]
        %v967 = vld [vmem:[%s965 + $0x4] sm:$0xf]
        %v968 = vld [vmem:[%s965 + $0x8] sm:$0xf]
        %v969 = vld [vmem:[%s965 + $0xc] sm:$0xf]
        %v970 = vld [vmem:[%s965 + $0x10] sm:$0xf]
        %v971 = vld [vmem:[%s965 + $0x14] sm:$0xf]
        %v972 = vld [vmem:[%s965 + $0x18] sm:$0xf]
        %v973 = vld [vmem:[%s965 + $0x1c] sm:$0xf]
        %v974 = vld [vmem:[%s965 + $0x20] sm:$0xf]
        %v975 = vld [vmem:[%s965 + $0x24] sm:$0xf]
        %v976 = vld [vmem:[%s965 + $0x28] sm:$0xf]
        %v977 = vld [vmem:[%s965 + $0x2c] sm:$0xf]
        %v978 = vld [vmem:[%s965 + $0x30] sm:$0xf]
        %v979 = vld [vmem:[%s965 + $0x34] sm:$0xf]
        %v980 = vld [vmem:[%s965 + $0x38] sm:$0xf]
        %v981 = vld [vmem:[%s965 + $0x3c] sm:$0xf]
        %v982 = vunpack.c.l.b16 %v936
        %v983 = vunpack.c.l.b16 %v940
        %v984 = vunpack.c.l.b16 %v944
        %v985 = vunpack.c.l.b16 %v948
        %v986 = vunpack.c.l.b16 %v952
        %v987 = vunpack.c.l.b16 %v956
        %v988 = vunpack.c.l.b16 %v960
        %v989 = vunpack.c.l.b16 %v964
        %v990 = vpack.c.b16 %v983, %v982
        %v991 = vpack.c.b16 %v985, %v984
        %v992 = vpack.c.b16 %v987, %v986
        %v993 = vpack.c.b16 %v989, %v988
        %v1014 = vunpack.c.l.b16 %v966
        %v1015 = vunpack.c.l.b16 %v967
        %v1016 = vunpack.c.l.b16 %v968
        %v1017 = vunpack.c.l.b16 %v969
        %v1018 = vunpack.c.l.b16 %v970
        %v1019 = vunpack.c.l.b16 %v971
        %v1020 = vunpack.c.l.b16 %v972
        %v1021 = vunpack.c.l.b16 %v973
        %v1022 = vunpack.c.l.b16 %v974
        %v1023 = vunpack.c.l.b16 %v975
        %v1024 = vunpack.c.l.b16 %v976
        %v1025 = vunpack.c.l.b16 %v977
        %v1026 = vunpack.c.l.b16 %v978
        %v1027 = vunpack.c.l.b16 %v979
        %v1028 = vunpack.c.l.b16 %v980
        %v1029 = vunpack.c.l.b16 %v981
        %v1030 = vpack.c.b16 %v1015, %v1014
        %v1031 = vpack.c.b16 %v1017, %v1016
        %v1032 = vpack.c.b16 %v1019, %v1018
        %v1033 = vpack.c.b16 %v1021, %v1020
        %v1034 = vpack.c.b16 %v1023, %v1022
        %v1035 = vpack.c.b16 %v1025, %v1024
        %v1036 = vpack.c.b16 %v1027, %v1026
        %v1037 = vpack.c.b16 %v1029, %v1028
        %1046 = vmatprep.subr.bf16.mxu0 0
        %1047 = vmatpush1.bf16.msra.mxu0 %v1030
        %1048 = vmatprep.subr.bf16.mxu0 0
        %1049 = vmatpush1.bf16.msra.mxu0 %v1031
        %1050 = vmatprep.subr.bf16.mxu0 0
        %1051 = vmatpush1.bf16.msra.mxu0 %v1032
        %1052 = vmatprep.subr.bf16.mxu0 0
        %1053 = vmatpush1.bf16.msra.mxu0 %v1033
        %1054 = vmatprep.subr.bf16.mxu0 0
        %1055 = vmatpush1.bf16.msra.mxu0 %v1034
        %1056 = vmatprep.subr.bf16.mxu0 0
        %1057 = vmatpush1.bf16.msra.mxu0 %v1035
        %1058 = vmatprep.subr.bf16.mxu0 0
        %1059 = vmatpush1.bf16.msra.mxu0 %v1036
        %1060 = vmatprep.subr.bf16.mxu0 0
        %1061 = vmatpush1.bf16.msra.mxu0 %v1037
        %1062 = vmatprep.subr.bf16.mxu0 0
        %1063 = vmatpush1.bf16.msra.mxu0 0
        %1064 = vmatprep.subr.bf16.mxu0 0
        %1065 = vmatpush1.bf16.msra.mxu0 0
        %1066 = vmatprep.subr.bf16.mxu0 0
        %1067 = vmatpush1.bf16.msra.mxu0 0
        %1068 = vmatprep.subr.bf16.mxu0 0
        %1069 = vmatpush1.bf16.msra.mxu0 0
        %1070 = vmatprep.subr.bf16.mxu0 0
        %1071 = vmatpush1.bf16.msra.mxu0 0
        %1072 = vmatprep.subr.bf16.mxu0 0
        %1073 = vmatpush1.bf16.msra.mxu0 0
        %1074 = vmatprep.subr.bf16.mxu0 0
        %1075 = vmatpush1.bf16.msra.mxu0 0
        %1076 = vmatprep.subr.bf16.mxu0 0
        %1077 = vmatpush1.bf16.msra.mxu0 0
        %1078 = vmatprep.mubr.bf16.mxu0 0
        %1079 = vmatmul.mubr.bf16.gmra.mrb[0].mxu0 %v990
        %v1080 = vpop.f32.mrb[0].mxu0
        %v1081 = vadd.f32 0.0, %v1080
        %v1082 = vpop.f32.mrb[0].mxu0
        %v1083 = vpop.f32.mrb[0].mxu0
        %v1084 = vadd.f32 0.0, %v1083
        %v1085 = vpop.f32.mrb[0].mxu0
        %1086 = vmatprep.mubr.bf16.mxu0 0
        %1087 = vmatmul.mubr.bf16.gmra.mrb[0].mxu0 %v991
        %v1088 = vpop.f32.mrb[0].mxu0
        %v1089 = vadd.f32 0.0, %v1088
        %v1090 = vpop.f32.mrb[0].mxu0
        %v1091 = vpop.f32.mrb[0].mxu0
        %v1092 = vadd.f32 0.0, %v1091
        %v1093 = vpop.f32.mrb[0].mxu0
        %1094 = vmatprep.mubr.bf16.mxu0 0
        %1095 = vmatmul.mubr.bf16.gmra.mrb[0].mxu0 %v992
        %v1096 = vpop.f32.mrb[0].mxu0
        %v1097 = vadd.f32 0.0, %v1096
        %v1098 = vpop.f32.mrb[0].mxu0
        %v1099 = vpop.f32.mrb[0].mxu0
        %v1100 = vadd.f32 0.0, %v1099
        %v1101 = vpop.f32.mrb[0].mxu0
        %1102 = vmatprep.mubr.bf16.mxu0 0
        %1103 = vmatmul.mubr.bf16.gmra.mrb[0].mxu0 %v993
        %v1104 = vpop.f32.mrb[0].mxu0
        %v1105 = vadd.f32 0.0, %v1104
        %v1106 = vpop.f32.mrb[0].mxu0
        %v1107 = vpop.f32.mrb[0].mxu0
        %v1108 = vadd.f32 0.0, %v1107
        %v1109 = vpop.f32.mrb[0].mxu0
        %1110 = vdwg.mxu0
        %v1111 = vadd.f32 %v900, %v1081
        %v1112 = vadd.f32 %v903, %v1084
        %v1113 = vadd.f32 %v908, %v1089
        %v1114 = vadd.f32 %v911, %v1092
        %v1115 = vadd.f32 %v916, %v1097
        %v1116 = vadd.f32 %v919, %v1100
        %v1117 = vadd.f32 %v924, %v1105
        %v1118 = vadd.f32 %v927, %v1108
        %s1119 = scalar_lea.vmem [#allocation8], 192
        %v1120 = vld [vmem:[%s1119] sm:$0xf]
        %v1121 = vld [vmem:[%s1119 + $0x4] sm:$0xf]
        %v1122 = vld [vmem:[%s1119 + $0x8] sm:$0xf]
        %v1123 = vld [vmem:[%s1119 + $0xc] sm:$0xf]
        %v1124 = vld [vmem:[%s1119 + $0x10] sm:$0xf]
        %v1125 = vld [vmem:[%s1119 + $0x14] sm:$0xf]
        %v1126 = vld [vmem:[%s1119 + $0x18] sm:$0xf]
        %v1127 = vld [vmem:[%s1119 + $0x1c] sm:$0xf]
        %v1128 = vld [vmem:[%s1119 + $0x20] sm:$0xf]
        %v1129 = vld [vmem:[%s1119 + $0x24] sm:$0xf]
        %v1130 = vld [vmem:[%s1119 + $0x28] sm:$0xf]
        %v1131 = vld [vmem:[%s1119 + $0x2c] sm:$0xf]
        %v1132 = vld [vmem:[%s1119 + $0x30] sm:$0xf]
        %v1133 = vld [vmem:[%s1119 + $0x34] sm:$0xf]
        %v1134 = vld [vmem:[%s1119 + $0x38] sm:$0xf]
        %v1135 = vld [vmem:[%s1119 + $0x3c] sm:$0xf]
        %v1137 = vunpack.c.l.b16 %v490
        %v1138 = vpack.c.b16 %v520, %v518
        %v1139 = vpack.c.b16 %v524, %v522
        %v1140 = vpack.c.b16 %v528, %v526
        %v1141 = vpack.c.b16 %v1137, %v530
        %v1162 = vunpack.c.l.b16 %v1120
        %v1163 = vunpack.c.l.b16 %v1121
        %v1164 = vunpack.c.l.b16 %v1122
        %v1165 = vunpack.c.l.b16 %v1123
        %v1166 = vunpack.c.l.b16 %v1124
        %v1167 = vunpack.c.l.b16 %v1125
        %v1168 = vunpack.c.l.b16 %v1126
        %v1169 = vunpack.c.l.b16 %v1127
        %v1170 = vunpack.c.l.b16 %v1128
        %v1171 = vunpack.c.l.b16 %v1129
        %v1172 = vunpack.c.l.b16 %v1130
        %v1173 = vunpack.c.l.b16 %v1131
        %v1174 = vunpack.c.l.b16 %v1132
        %v1175 = vunpack.c.l.b16 %v1133
        %v1176 = vunpack.c.l.b16 %v1134
        %v1177 = vunpack.c.l.b16 %v1135
        %v1178 = vpack.c.b16 %v1163, %v1162
        %v1179 = vpack.c.b16 %v1165, %v1164
        %v1180 = vpack.c.b16 %v1167, %v1166
        %v1181 = vpack.c.b16 %v1169, %v1168
        %v1182 = vpack.c.b16 %v1171, %v1170
        %v1183 = vpack.c.b16 %v1173, %v1172
        %v1184 = vpack.c.b16 %v1175, %v1174
        %v1185 = vpack.c.b16 %v1177, %v1176
        %1194 = vmatprep.subr.bf16.mxu0 0
        %1195 = vmatpush1.bf16.msra.mxu0 %v1178
        %1196 = vmatprep.subr.bf16.mxu0 0
        %1197 = vmatpush1.bf16.msra.mxu0 %v1179
        %1198 = vmatprep.subr.bf16.mxu0 0
        %1199 = vmatpush1.bf16.msra.mxu0 %v1180
        %1200 = vmatprep.subr.bf16.mxu0 0
        %1201 = vmatpush1.bf16.msra.mxu0 %v1181
        %1202 = vmatprep.subr.bf16.mxu0 0
        %1203 = vmatpush1.bf16.msra.mxu0 %v1182
        %1204 = vmatprep.subr.bf16.mxu0 0
        %1205 = vmatpush1.bf16.msra.mxu0 %v1183
        %1206 = vmatprep.subr.bf16.mxu0 0
        %1207 = vmatpush1.bf16.msra.mxu0 %v1184
        %1208 = vmatprep.subr.bf16.mxu0 0
        %1209 = vmatpush1.bf16.msra.mxu0 %v1185
        %1210 = vmatprep.subr.bf16.mxu0 0
        %1211 = vmatpush1.bf16.msra.mxu0 0
        %1212 = vmatprep.subr.bf16.mxu0 0
        %1213 = vmatpush1.bf16.msra.mxu0 0
        %1214 = vmatprep.subr.bf16.mxu0 0
        %1215 = vmatpush1.bf16.msra.mxu0 0
        %1216 = vmatprep.subr.bf16.mxu0 0
        %1217 = vmatpush1.bf16.msra.mxu0 0
        %1218 = vmatprep.subr.bf16.mxu0 0
        %1219 = vmatpush1.bf16.msra.mxu0 0
        %1220 = vmatprep.subr.bf16.mxu0 0
        %1221 = vmatpush1.bf16.msra.mxu0 0
        %1222 = vmatprep.subr.bf16.mxu0 0
        %1223 = vmatpush1.bf16.msra.mxu0 0
        %1224 = vmatprep.subr.bf16.mxu0 0
        %1225 = vmatpush1.bf16.msra.mxu0 0
        %1226 = vmatprep.mubr.bf16.mxu0 0
        %1227 = vmatmul.mubr.bf16.gmra.mrb[0].mxu0 %v1138
        %v1228 = vpop.f32.mrb[0].mxu0
        %v1229 = vadd.f32 0.0, %v1228
        %v1230 = vpop.f32.mrb[0].mxu0
        %v1231 = vpop.f32.mrb[0].mxu0
        %v1232 = vadd.f32 0.0, %v1231
        %v1233 = vpop.f32.mrb[0].mxu0
        %1234 = vmatprep.mubr.bf16.mxu0 0
        %1235 = vmatmul.mubr.bf16.gmra.mrb[0].mxu0 %v1139
        %v1236 = vpop.f32.mrb[0].mxu0
        %v1237 = vadd.f32 0.0, %v1236
        %v1238 = vpop.f32.mrb[0].mxu0
        %v1239 = vpop.f32.mrb[0].mxu0
        %v1240 = vadd.f32 0.0, %v1239
        %v1241 = vpop.f32.mrb[0].mxu0
        %1242 = vmatprep.mubr.bf16.mxu0 0
        %1243 = vmatmul.mubr.bf16.gmra.mrb[0].mxu0 %v1140
        %v1244 = vpop.f32.mrb[0].mxu0
        %v1245 = vadd.f32 0.0, %v1244
        %v1246 = vpop.f32.mrb[0].mxu0
        %v1247 = vpop.f32.mrb[0].mxu0
        %v1248 = vadd.f32 0.0, %v1247
        %v1249 = vpop.f32.mrb[0].mxu0
        %1250 = vmatprep.mubr.bf16.mxu0 0
        %1251 = vmatmul.mubr.bf16.gmra.mrb[0].mxu0 %v1141
        %v1252 = vpop.f32.mrb[0].mxu0
        %v1253 = vadd.f32 0.0, %v1252
        %v1254 = vpop.f32.mrb[0].mxu0
        %v1255 = vpop.f32.mrb[0].mxu0
        %v1256 = vadd.f32 0.0, %v1255
        %v1257 = vpop.f32.mrb[0].mxu0
        %1258 = vdwg.mxu0
        %v1259 = vadd.f32 %v1111, %v1229
        %v1260 = vadd.f32 %v1112, %v1232
        %v1261 = vadd.f32 %v1113, %v1237
        %v1262 = vadd.f32 %v1114, %v1240
        %v1263 = vadd.f32 %v1115, %v1245
        %v1264 = vadd.f32 %v1116, %v1248
        %v1265 = vadd.f32 %v1117, %v1253
        %v1266 = vadd.f32 %v1118, %v1256
        %v1267 = vunpack.c.h.b16 %v490
        %v1268 = vpack.c.b16 %v1137, %v1137
        %v1269 = vpack.c.b16 %v1267, %v1267
        %v1271 = vshrl.u32 %v1268, 16
        %v1273 = vrot.slane %v1271, 4
        %v1274 = vshll.u32 %v1268, 16
        %v1276 = vrot.slane %v1274, 5
        %v1277 = vor.u32 %v1273, %v1276
        %v1278 = vrot.slane %v1277, 4
        %v1280 = vshll.u32 %v1269, 16
        %v1282 = vrot.slane %v1280, 5
        %v1283 = vsel %vm550, %v1278, %v1282
        %s1284 = scalar_lea.vmem [#allocation8], 256
        %v1285 = vld [vmem:[%s1284] sm:$0xf]
        %v1286 = vld [vmem:[%s1284 + $0x4] sm:$0xf]
        %v1287 = vld [vmem:[%s1284 + $0x8] sm:$0xf]
        %v1288 = vld [vmem:[%s1284 + $0xc] sm:$0xf]
        %v1289 = vld [vmem:[%s1284 + $0x10] sm:$0xf]
        %v1290 = vld [vmem:[%s1284 + $0x14] sm:$0xf]
        %v1291 = vld [vmem:[%s1284 + $0x18] sm:$0xf]
        %v1292 = vld [vmem:[%s1284 + $0x1c] sm:$0xf]
        %v1293 = vld [vmem:[%s1284 + $0x20] sm:$0xf]
        %v1294 = vld [vmem:[%s1284 + $0x24] sm:$0xf]
        %v1295 = vld [vmem:[%s1284 + $0x28] sm:$0xf]
        %v1296 = vld [vmem:[%s1284 + $0x2c] sm:$0xf]
        %v1297 = vld [vmem:[%s1284 + $0x30] sm:$0xf]
        %v1298 = vld [vmem:[%s1284 + $0x34] sm:$0xf]
        %v1299 = vld [vmem:[%s1284 + $0x38] sm:$0xf]
        %v1300 = vld [vmem:[%s1284 + $0x3c] sm:$0xf]
        %v1301 = vunpack.c.l.b16 %v1283
        %v1302 = vpack.c.b16 %v682, %v681
        %v1303 = vpack.c.b16 %v684, %v683
        %v1304 = vpack.c.b16 %v686, %v685
        %v1305 = vpack.c.b16 %v1301, %v687
        %v1326 = vunpack.c.l.b16 %v1285
        %v1327 = vunpack.c.l.b16 %v1286
        %v1328 = vunpack.c.l.b16 %v1287
        %v1329 = vunpack.c.l.b16 %v1288
        %v1330 = vunpack.c.l.b16 %v1289
        %v1331 = vunpack.c.l.b16 %v1290
        %v1332 = vunpack.c.l.b16 %v1291
        %v1333 = vunpack.c.l.b16 %v1292
        %v1334 = vunpack.c.l.b16 %v1293
        %v1335 = vunpack.c.l.b16 %v1294
        %v1336 = vunpack.c.l.b16 %v1295
        %v1337 = vunpack.c.l.b16 %v1296
        %v1338 = vunpack.c.l.b16 %v1297
        %v1339 = vunpack.c.l.b16 %v1298
        %v1340 = vunpack.c.l.b16 %v1299
        %v1341 = vunpack.c.l.b16 %v1300
        %v1342 = vpack.c.b16 %v1327, %v1326
        %v1343 = vpack.c.b16 %v1329, %v1328
        %v1344 = vpack.c.b16 %v1331, %v1330
        %v1345 = vpack.c.b16 %v1333, %v1332
        %v1346 = vpack.c.b16 %v1335, %v1334
        %v1347 = vpack.c.b16 %v1337, %v1336
        %v1348 = vpack.c.b16 %v1339, %v1338
        %v1349 = vpack.c.b16 %v1341, %v1340
        %1358 = vmatprep.subr.bf16.mxu0 0
        %1359 = vmatpush1.bf16.msra.mxu0 %v1342
        %1360 = vmatprep.subr.bf16.mxu0 0
        %1361 = vmatpush1.bf16.msra.mxu0 %v1343
        %1362 = vmatprep.subr.bf16.mxu0 0
        %1363 = vmatpush1.bf16.msra.mxu0 %v1344
        %1364 = vmatprep.subr.bf16.mxu0 0
        %1365 = vmatpush1.bf16.msra.mxu0 %v1345
        %1366 = vmatprep.subr.bf16.mxu0 0
        %1367 = vmatpush1.bf16.msra.mxu0 %v1346
        %1368 = vmatprep.subr.bf16.mxu0 0
        %1369 = vmatpush1.bf16.msra.mxu0 %v1347
        %1370 = vmatprep.subr.bf16.mxu0 0
        %1371 = vmatpush1.bf16.msra.mxu0 %v1348
        %1372 = vmatprep.subr.bf16.mxu0 0
        %1373 = vmatpush1.bf16.msra.mxu0 %v1349
        %1374 = vmatprep.subr.bf16.mxu0 0
        %1375 = vmatpush1.bf16.msra.mxu0 0
        %1376 = vmatprep.subr.bf16.mxu0 0
        %1377 = vmatpush1.bf16.msra.mxu0 0
        %1378 = vmatprep.subr.bf16.mxu0 0
        %1379 = vmatpush1.bf16.msra.mxu0 0
        %1380 = vmatprep.subr.bf16.mxu0 0
        %1381 = vmatpush1.bf16.msra.mxu0 0
        %1382 = vmatprep.subr.bf16.mxu0 0
        %1383 = vmatpush1.bf16.msra.mxu0 0
        %1384 = vmatprep.subr.bf16.mxu0 0
        %1385 = vmatpush1.bf16.msra.mxu0 0
        %1386 = vmatprep.subr.bf16.mxu0 0
        %1387 = vmatpush1.bf16.msra.mxu0 0
        %1388 = vmatprep.subr.bf16.mxu0 0
        %1389 = vmatpush1.bf16.msra.mxu0 0
        %1390 = vmatprep.mubr.bf16.mxu0 0
        %1391 = vmatmul.mubr.bf16.gmra.mrb[0].mxu0 %v1302
        %v1392 = vpop.f32.mrb[0].mxu0
        %v1393 = vadd.f32 0.0, %v1392
        %v1394 = vpop.f32.mrb[0].mxu0
        %v1395 = vpop.f32.mrb[0].mxu0
        %v1396 = vadd.f32 0.0, %v1395
        %v1397 = vpop.f32.mrb[0].mxu0
        %1398 = vmatprep.mubr.bf16.mxu0 0
        %1399 = vmatmul.mubr.bf16.gmra.mrb[0].mxu0 %v1303
        %v1400 = vpop.f32.mrb[0].mxu0
        %v1401 = vadd.f32 0.0, %v1400
        %v1402 = vpop.f32.mrb[0].mxu0
        %v1403 = vpop.f32.mrb[0].mxu0
        %v1404 = vadd.f32 0.0, %v1403
        %v1405 = vpop.f32.mrb[0].mxu0
        %1406 = vmatprep.mubr.bf16.mxu0 0
        %1407 = vmatmul.mubr.bf16.gmra.mrb[0].mxu0 %v1304
        %v1408 = vpop.f32.mrb[0].mxu0
        %v1409 = vadd.f32 0.0, %v1408
        %v1410 = vpop.f32.mrb[0].mxu0
        %v1411 = vpop.f32.mrb[0].mxu0
        %v1412 = vadd.f32 0.0, %v1411
        %v1413 = vpop.f32.mrb[0].mxu0
        %1414 = vmatprep.mubr.bf16.mxu0 0
        %1415 = vmatmul.mubr.bf16.gmra.mrb[0].mxu0 %v1305
        %v1416 = vpop.f32.mrb[0].mxu0
        %v1417 = vadd.f32 0.0, %v1416
        %v1418 = vpop.f32.mrb[0].mxu0
        %v1419 = vpop.f32.mrb[0].mxu0
        %v1420 = vadd.f32 0.0, %v1419
        %v1421 = vpop.f32.mrb[0].mxu0
        %1422 = vdwg.mxu0
        %v1423 = vadd.f32 %v1259, %v1393
        %v1424 = vadd.f32 %v1260, %v1396
        %v1425 = vadd.f32 %v1261, %v1401
        %v1426 = vadd.f32 %v1262, %v1404
        %v1427 = vadd.f32 %v1263, %v1409
        %v1428 = vadd.f32 %v1264, %v1412
        %v1429 = vadd.f32 %v1265, %v1417
        %v1430 = vadd.f32 %v1266, %v1420
        %v1431 = vrot.slane %v1268, 5
        %v1432 = vrot.slane %v1431, 4
        %v1433 = vrot.slane %v1269, 5
        %v1434 = vsel %vm932, %v1432, %v1433
        %s1435 = scalar_lea.vmem [#allocation8], 320
        %v1436 = vld [vmem:[%s1435] sm:$0xf]
        %v1437 = vld [vmem:[%s1435 + $0x4] sm:$0xf]
        %v1438 = vld [vmem:[%s1435 + $0x8] sm:$0xf]
        %v1439 = vld [vmem:[%s1435 + $0xc] sm:$0xf]
        %v1440 = vld [vmem:[%s1435 + $0x10] sm:$0xf]
        %v1441 = vld [vmem:[%s1435 + $0x14] sm:$0xf]
        %v1442 = vld [vmem:[%s1435 + $0x18] sm:$0xf]
        %v1443 = vld [vmem:[%s1435 + $0x1c] sm:$0xf]
        %v1444 = vld [vmem:[%s1435 + $0x20] sm:$0xf]
        %v1445 = vld [vmem:[%s1435 + $0x24] sm:$0xf]
        %v1446 = vld [vmem:[%s1435 + $0x28] sm:$0xf]
        %v1447 = vld [vmem:[%s1435 + $0x2c] sm:$0xf]
        %v1448 = vld [vmem:[%s1435 + $0x30] sm:$0xf]
        %v1449 = vld [vmem:[%s1435 + $0x34] sm:$0xf]
        %v1450 = vld [vmem:[%s1435 + $0x38] sm:$0xf]
        %v1451 = vld [vmem:[%s1435 + $0x3c] sm:$0xf]
        %v1452 = vunpack.c.l.b16 %v1434
        %v1453 = vpack.c.b16 %v984, %v983
        %v1454 = vpack.c.b16 %v986, %v985
        %v1455 = vpack.c.b16 %v988, %v987
        %v1456 = vpack.c.b16 %v1452, %v989
        %v1477 = vunpack.c.l.b16 %v1436
        %v1478 = vunpack.c.l.b16 %v1437
        %v1479 = vunpack.c.l.b16 %v1438
        %v1480 = vunpack.c.l.b16 %v1439
        %v1481 = vunpack.c.l.b16 %v1440
        %v1482 = vunpack.c.l.b16 %v1441
        %v1483 = vunpack.c.l.b16 %v1442
        %v1484 = vunpack.c.l.b16 %v1443
        %v1485 = vunpack.c.l.b16 %v1444
        %v1486 = vunpack.c.l.b16 %v1445
        %v1487 = vunpack.c.l.b16 %v1446
        %v1488 = vunpack.c.l.b16 %v1447
        %v1489 = vunpack.c.l.b16 %v1448
        %v1490 = vunpack.c.l.b16 %v1449
        %v1491 = vunpack.c.l.b16 %v1450
        %v1492 = vunpack.c.l.b16 %v1451
        %v1493 = vpack.c.b16 %v1478, %v1477
        %v1494 = vpack.c.b16 %v1480, %v1479
        %v1495 = vpack.c.b16 %v1482, %v1481
        %v1496 = vpack.c.b16 %v1484, %v1483
        %v1497 = vpack.c.b16 %v1486, %v1485
        %v1498 = vpack.c.b16 %v1488, %v1487
        %v1499 = vpack.c.b16 %v1490, %v1489
        %v1500 = vpack.c.b16 %v1492, %v1491
        %1509 = vmatprep.subr.bf16.mxu0 0
        %1510 = vmatpush1.bf16.msra.mxu0 %v1493
        %1511 = vmatprep.subr.bf16.mxu0 0
        %1512 = vmatpush1.bf16.msra.mxu0 %v1494
        %1513 = vmatprep.subr.bf16.mxu0 0
        %1514 = vmatpush1.bf16.msra.mxu0 %v1495
        %1515 = vmatprep.subr.bf16.mxu0 0
        %1516 = vmatpush1.bf16.msra.mxu0 %v1496
        %1517 = vmatprep.subr.bf16.mxu0 0
        %1518 = vmatpush1.bf16.msra.mxu0 %v1497
        %1519 = vmatprep.subr.bf16.mxu0 0
        %1520 = vmatpush1.bf16.msra.mxu0 %v1498
        %1521 = vmatprep.subr.bf16.mxu0 0
        %1522 = vmatpush1.bf16.msra.mxu0 %v1499
        %1523 = vmatprep.subr.bf16.mxu0 0
        %1524 = vmatpush1.bf16.msra.mxu0 %v1500
        %1525 = vmatprep.subr.bf16.mxu0 0
        %1526 = vmatpush1.bf16.msra.mxu0 0
        %1527 = vmatprep.subr.bf16.mxu0 0
        %1528 = vmatpush1.bf16.msra.mxu0 0
        %1529 = vmatprep.subr.bf16.mxu0 0
        %1530 = vmatpush1.bf16.msra.mxu0 0
        %1531 = vmatprep.subr.bf16.mxu0 0
        %1532 = vmatpush1.bf16.msra.mxu0 0
        %1533 = vmatprep.subr.bf16.mxu0 0
        %1534 = vmatpush1.bf16.msra.mxu0 0
        %1535 = vmatprep.subr.bf16.mxu0 0
        %1536 = vmatpush1.bf16.msra.mxu0 0
        %1537 = vmatprep.subr.bf16.mxu0 0
        %1538 = vmatpush1.bf16.msra.mxu0 0
        %1539 = vmatprep.subr.bf16.mxu0 0
        %1540 = vmatpush1.bf16.msra.mxu0 0
        %1541 = vmatprep.mubr.bf16.mxu0 0
        %1542 = vmatmul.mubr.bf16.gmra.mrb[0].mxu0 %v1453
        %v1543 = vpop.f32.mrb[0].mxu0
        %v1544 = vadd.f32 0.0, %v1543
        %v1545 = vpop.f32.mrb[0].mxu0
        %v1546 = vpop.f32.mrb[0].mxu0
        %v1547 = vadd.f32 0.0, %v1546
        %v1548 = vpop.f32.mrb[0].mxu0
        %1549 = vmatprep.mubr.bf16.mxu0 0
        %1550 = vmatmul.mubr.bf16.gmra.mrb[0].mxu0 %v1454
        %v1551 = vpop.f32.mrb[0].mxu0
        %v1552 = vadd.f32 0.0, %v1551
        %v1553 = vpop.f32.mrb[0].mxu0
        %v1554 = vpop.f32.mrb[0].mxu0
        %v1555 = vadd.f32 0.0, %v1554
        %v1556 = vpop.f32.mrb[0].mxu0
        %1557 = vmatprep.mubr.bf16.mxu0 0
        %1558 = vmatmul.mubr.bf16.gmra.mrb[0].mxu0 %v1455
        %v1559 = vpop.f32.mrb[0].mxu0
        %v1560 = vadd.f32 0.0, %v1559
        %v1561 = vpop.f32.mrb[0].mxu0
        %v1562 = vpop.f32.mrb[0].mxu0
        %v1563 = vadd.f32 0.0, %v1562
        %v1564 = vpop.f32.mrb[0].mxu0
        %1565 = vmatprep.mubr.bf16.mxu0 0
        %1566 = vmatmul.mubr.bf16.gmra.mrb[0].mxu0 %v1456
        %v1567 = vpop.f32.mrb[0].mxu0
        %v1568 = vadd.f32 0.0, %v1567
        %v1569 = vpop.f32.mrb[0].mxu0
        %v1570 = vpop.f32.mrb[0].mxu0
        %v1571 = vadd.f32 0.0, %v1570
        %v1572 = vpop.f32.mrb[0].mxu0
        %1573 = vdwg.mxu0
        %v1574 = vadd.f32 %v1423, %v1544
        %v1575 = vadd.f32 %v1424, %v1547
        %v1576 = vadd.f32 %v1425, %v1552
        %v1577 = vadd.f32 %v1426, %v1555
        %v1578 = vadd.f32 %v1427, %v1560
        %v1579 = vadd.f32 %v1428, %v1563
        %v1580 = vadd.f32 %v1429, %v1568
        %v1581 = vadd.f32 %v1430, %v1571
        %s1582 = scalar_lea.vmem [#allocation8], 384
        %v1583 = vld [vmem:[%s1582] sm:$0xf]
        %v1584 = vld [vmem:[%s1582 + $0x4] sm:$0xf]
        %v1585 = vld [vmem:[%s1582 + $0x8] sm:$0xf]
        %v1586 = vld [vmem:[%s1582 + $0xc] sm:$0xf]
        %v1587 = vld [vmem:[%s1582 + $0x10] sm:$0xf]
        %v1588 = vld [vmem:[%s1582 + $0x14] sm:$0xf]
        %v1589 = vld [vmem:[%s1582 + $0x18] sm:$0xf]
        %v1590 = vld [vmem:[%s1582 + $0x1c] sm:$0xf]
        %v1591 = vld [vmem:[%s1582 + $0x20] sm:$0xf]
        %v1592 = vld [vmem:[%s1582 + $0x24] sm:$0xf]
        %v1593 = vld [vmem:[%s1582 + $0x28] sm:$0xf]
        %v1594 = vld [vmem:[%s1582 + $0x2c] sm:$0xf]
        %v1595 = vld [vmem:[%s1582 + $0x30] sm:$0xf]
        %v1596 = vld [vmem:[%s1582 + $0x34] sm:$0xf]
        %v1597 = vld [vmem:[%s1582 + $0x38] sm:$0xf]
        %v1598 = vld [vmem:[%s1582 + $0x3c] sm:$0xf]
        %v1600 = vunpack.c.l.b16 %v491
        %v1601 = vpack.c.b16 %v1600, %v1137
        %v1619 = vunpack.c.l.b16 %v1583
        %v1620 = vunpack.c.l.b16 %v1584
        %v1621 = vunpack.c.l.b16 %v1585
        %v1622 = vunpack.c.l.b16 %v1586
        %v1623 = vunpack.c.l.b16 %v1587
        %v1624 = vunpack.c.l.b16 %v1588
        %v1625 = vunpack.c.l.b16 %v1589
        %v1626 = vunpack.c.l.b16 %v1590
        %v1627 = vunpack.c.l.b16 %v1591
        %v1628 = vunpack.c.l.b16 %v1592
        %v1629 = vunpack.c.l.b16 %v1593
        %v1630 = vunpack.c.l.b16 %v1594
        %v1631 = vunpack.c.l.b16 %v1595
        %v1632 = vunpack.c.l.b16 %v1596
        %v1633 = vunpack.c.l.b16 %v1597
        %v1634 = vunpack.c.l.b16 %v1598
        %v1635 = vpack.c.b16 %v1620, %v1619
        %v1636 = vpack.c.b16 %v1622, %v1621
        %v1637 = vpack.c.b16 %v1624, %v1623
        %v1638 = vpack.c.b16 %v1626, %v1625
        %v1639 = vpack.c.b16 %v1628, %v1627
        %v1640 = vpack.c.b16 %v1630, %v1629
        %v1641 = vpack.c.b16 %v1632, %v1631
        %v1642 = vpack.c.b16 %v1634, %v1633
        %1651 = vmatprep.subr.bf16.mxu0 0
        %1652 = vmatpush1.bf16.msra.mxu0 %v1635
        %1653 = vmatprep.subr.bf16.mxu0 0
        %1654 = vmatpush1.bf16.msra.mxu0 %v1636
        %1655 = vmatprep.subr.bf16.mxu0 0
        %1656 = vmatpush1.bf16.msra.mxu0 %v1637
        %1657 = vmatprep.subr.bf16.mxu0 0
        %1658 = vmatpush1.bf16.msra.mxu0 %v1638
        %1659 = vmatprep.subr.bf16.mxu0 0
        %1660 = vmatpush1.bf16.msra.mxu0 %v1639
        %1661 = vmatprep.subr.bf16.mxu0 0
        %1662 = vmatpush1.bf16.msra.mxu0 %v1640
        %1663 = vmatprep.subr.bf16.mxu0 0
        %1664 = vmatpush1.bf16.msra.mxu0 %v1641
        %1665 = vmatprep.subr.bf16.mxu0 0
        %1666 = vmatpush1.bf16.msra.mxu0 %v1642
        %1667 = vmatprep.subr.bf16.mxu0 0
        %1668 = vmatpush1.bf16.msra.mxu0 0
        %1669 = vmatprep.subr.bf16.mxu0 0
        %1670 = vmatpush1.bf16.msra.mxu0 0
        %1671 = vmatprep.subr.bf16.mxu0 0
        %1672 = vmatpush1.bf16.msra.mxu0 0
        %1673 = vmatprep.subr.bf16.mxu0 0
        %1674 = vmatpush1.bf16.msra.mxu0 0
        %1675 = vmatprep.subr.bf16.mxu0 0
        %1676 = vmatpush1.bf16.msra.mxu0 0
        %1677 = vmatprep.subr.bf16.mxu0 0
        %1678 = vmatpush1.bf16.msra.mxu0 0
        %1679 = vmatprep.subr.bf16.mxu0 0
        %1680 = vmatpush1.bf16.msra.mxu0 0
        %1681 = vmatprep.subr.bf16.mxu0 0
        %1682 = vmatpush1.bf16.msra.mxu0 0
        %1683 = vmatprep.mubr.bf16.mxu0 0
        %1684 = vmatmul.mubr.bf16.gmra.mrb[0].mxu0 %v810
        %v1685 = vpop.f32.mrb[0].mxu0
        %v1686 = vadd.f32 0.0, %v1685
        %v1687 = vpop.f32.mrb[0].mxu0
        %v1688 = vpop.f32.mrb[0].mxu0
        %v1689 = vadd.f32 0.0, %v1688
        %v1690 = vpop.f32.mrb[0].mxu0
        %1691 = vmatprep.mubr.bf16.mxu0 0
        %1692 = vmatmul.mubr.bf16.gmra.mrb[0].mxu0 %v811
        %v1693 = vpop.f32.mrb[0].mxu0
        %v1694 = vadd.f32 0.0, %v1693
        %v1695 = vpop.f32.mrb[0].mxu0
        %v1696 = vpop.f32.mrb[0].mxu0
        %v1697 = vadd.f32 0.0, %v1696
        %v1698 = vpop.f32.mrb[0].mxu0
        %1699 = vmatprep.mubr.bf16.mxu0 0
        %1700 = vmatmul.mubr.bf16.gmra.mrb[0].mxu0 %v812
        %v1701 = vpop.f32.mrb[0].mxu0
        %v1702 = vadd.f32 0.0, %v1701
        %v1703 = vpop.f32.mrb[0].mxu0
        %v1704 = vpop.f32.mrb[0].mxu0
        %v1705 = vadd.f32 0.0, %v1704
        %v1706 = vpop.f32.mrb[0].mxu0
        %1707 = vmatprep.mubr.bf16.mxu0 0
        %1708 = vmatmul.mubr.bf16.gmra.mrb[0].mxu0 %v1601
        %v1709 = vpop.f32.mrb[0].mxu0
        %v1710 = vadd.f32 0.0, %v1709
        %v1711 = vpop.f32.mrb[0].mxu0
        %v1712 = vpop.f32.mrb[0].mxu0
        %v1713 = vadd.f32 0.0, %v1712
        %v1714 = vpop.f32.mrb[0].mxu0
        %1715 = vdwg.mxu0
        %v1716 = vadd.f32 %v1574, %v1686
        %v1717 = vadd.f32 %v1575, %v1689
        %v1718 = vadd.f32 %v1576, %v1694
        %v1719 = vadd.f32 %v1577, %v1697
        %v1720 = vadd.f32 %v1578, %v1702
        %v1721 = vadd.f32 %v1579, %v1705
        %v1722 = vadd.f32 %v1580, %v1710
        %v1723 = vadd.f32 %v1581, %v1713
        %v1724 = vunpack.c.h.b16 %v491
        %v1725 = vpack.c.b16 %v1600, %v1600
        %v1726 = vpack.c.b16 %v1724, %v1724
        %v1728 = vshrl.u32 %v1725, 16
        %v1730 = vrot.slane %v1728, 4
        %v1731 = vshll.u32 %v1725, 16
        %v1733 = vrot.slane %v1731, 5
        %v1734 = vor.u32 %v1730, %v1733
        %v1735 = vrot.slane %v1734, 4
        %v1737 = vshll.u32 %v1726, 16
        %v1739 = vrot.slane %v1737, 5
        %v1740 = vsel %vm550, %v1735, %v1739
        %s1741 = scalar_lea.vmem [#allocation8], 448
        %v1742 = vld [vmem:[%s1741] sm:$0xf]
        %v1743 = vld [vmem:[%s1741 + $0x4] sm:$0xf]
        %v1744 = vld [vmem:[%s1741 + $0x8] sm:$0xf]
        %v1745 = vld [vmem:[%s1741 + $0xc] sm:$0xf]
        %v1746 = vld [vmem:[%s1741 + $0x10] sm:$0xf]
        %v1747 = vld [vmem:[%s1741 + $0x14] sm:$0xf]
        %v1748 = vld [vmem:[%s1741 + $0x18] sm:$0xf]
        %v1749 = vld [vmem:[%s1741 + $0x1c] sm:$0xf]
        %v1750 = vld [vmem:[%s1741 + $0x20] sm:$0xf]
        %v1751 = vld [vmem:[%s1741 + $0x24] sm:$0xf]
        %v1752 = vld [vmem:[%s1741 + $0x28] sm:$0xf]
        %v1753 = vld [vmem:[%s1741 + $0x2c] sm:$0xf]
        %v1754 = vld [vmem:[%s1741 + $0x30] sm:$0xf]
        %v1755 = vld [vmem:[%s1741 + $0x34] sm:$0xf]
        %v1756 = vld [vmem:[%s1741 + $0x38] sm:$0xf]
        %v1757 = vld [vmem:[%s1741 + $0x3c] sm:$0xf]
        %v1758 = vunpack.c.l.b16 %v1740
        %v1759 = vpack.c.b16 %v1758, %v1301
        %v1777 = vunpack.c.l.b16 %v1742
        %v1778 = vunpack.c.l.b16 %v1743
        %v1779 = vunpack.c.l.b16 %v1744
        %v1780 = vunpack.c.l.b16 %v1745
        %v1781 = vunpack.c.l.b16 %v1746
        %v1782 = vunpack.c.l.b16 %v1747
        %v1783 = vunpack.c.l.b16 %v1748
        %v1784 = vunpack.c.l.b16 %v1749
        %v1785 = vunpack.c.l.b16 %v1750
        %v1786 = vunpack.c.l.b16 %v1751
        %v1787 = vunpack.c.l.b16 %v1752
        %v1788 = vunpack.c.l.b16 %v1753
        %v1789 = vunpack.c.l.b16 %v1754
        %v1790 = vunpack.c.l.b16 %v1755
        %v1791 = vunpack.c.l.b16 %v1756
        %v1792 = vunpack.c.l.b16 %v1757
        %v1793 = vpack.c.b16 %v1778, %v1777
        %v1794 = vpack.c.b16 %v1780, %v1779
        %v1795 = vpack.c.b16 %v1782, %v1781
        %v1796 = vpack.c.b16 %v1784, %v1783
        %v1797 = vpack.c.b16 %v1786, %v1785
        %v1798 = vpack.c.b16 %v1788, %v1787
        %v1799 = vpack.c.b16 %v1790, %v1789
        %v1800 = vpack.c.b16 %v1792, %v1791
        %1809 = vmatprep.subr.bf16.mxu0 0
        %1810 = vmatpush1.bf16.msra.mxu0 %v1793
        %1811 = vmatprep.subr.bf16.mxu0 0
        %1812 = vmatpush1.bf16.msra.mxu0 %v1794
        %1813 = vmatprep.subr.bf16.mxu0 0
        %1814 = vmatpush1.bf16.msra.mxu0 %v1795
        %1815 = vmatprep.subr.bf16.mxu0 0
        %1816 = vmatpush1.bf16.msra.mxu0 %v1796
        %1817 = vmatprep.subr.bf16.mxu0 0
        %1818 = vmatpush1.bf16.msra.mxu0 %v1797
        %1819 = vmatprep.subr.bf16.mxu0 0
        %1820 = vmatpush1.bf16.msra.mxu0 %v1798
        %1821 = vmatprep.subr.bf16.mxu0 0
        %1822 = vmatpush1.bf16.msra.mxu0 %v1799
        %1823 = vmatprep.subr.bf16.mxu0 0
        %1824 = vmatpush1.bf16.msra.mxu0 %v1800
        %1825 = vmatprep.subr.bf16.mxu0 0
        %1826 = vmatpush1.bf16.msra.mxu0 0
        %1827 = vmatprep.subr.bf16.mxu0 0
        %1828 = vmatpush1.bf16.msra.mxu0 0
        %1829 = vmatprep.subr.bf16.mxu0 0
        %1830 = vmatpush1.bf16.msra.mxu0 0
        %1831 = vmatprep.subr.bf16.mxu0 0
        %1832 = vmatpush1.bf16.msra.mxu0 0
        %1833 = vmatprep.subr.bf16.mxu0 0
        %1834 = vmatpush1.bf16.msra.mxu0 0
        %1835 = vmatprep.subr.bf16.mxu0 0
        %1836 = vmatpush1.bf16.msra.mxu0 0
        %1837 = vmatprep.subr.bf16.mxu0 0
        %1838 = vmatpush1.bf16.msra.mxu0 0
        %1839 = vmatprep.subr.bf16.mxu0 0
        %1840 = vmatpush1.bf16.msra.mxu0 0
        %1841 = vmatprep.mubr.bf16.mxu0 0
        %1842 = vmatmul.mubr.bf16.gmra.mrb[0].mxu0 %v689
        %v1843 = vpop.f32.mrb[0].mxu0
        %v1844 = vadd.f32 0.0, %v1843
        %v1845 = vpop.f32.mrb[0].mxu0
        %v1846 = vpop.f32.mrb[0].mxu0
        %v1847 = vadd.f32 0.0, %v1846
        %v1848 = vpop.f32.mrb[0].mxu0
        %1849 = vmatprep.mubr.bf16.mxu0 0
        %1850 = vmatmul.mubr.bf16.gmra.mrb[0].mxu0 %v690
        %v1851 = vpop.f32.mrb[0].mxu0
        %v1852 = vadd.f32 0.0, %v1851
        %v1853 = vpop.f32.mrb[0].mxu0
        %v1854 = vpop.f32.mrb[0].mxu0
        %v1855 = vadd.f32 0.0, %v1854
        %v1856 = vpop.f32.mrb[0].mxu0
        %1857 = vmatprep.mubr.bf16.mxu0 0
        %1858 = vmatmul.mubr.bf16.gmra.mrb[0].mxu0 %v691
        %v1859 = vpop.f32.mrb[0].mxu0
        %v1860 = vadd.f32 0.0, %v1859
        %v1861 = vpop.f32.mrb[0].mxu0
        %v1862 = vpop.f32.mrb[0].mxu0
        %v1863 = vadd.f32 0.0, %v1862
        %v1864 = vpop.f32.mrb[0].mxu0
        %1865 = vmatprep.mubr.bf16.mxu0 0
        %1866 = vmatmul.mubr.bf16.gmra.mrb[0].mxu0 %v1759
        %v1867 = vpop.f32.mrb[0].mxu0
        %v1868 = vadd.f32 0.0, %v1867
        %v1869 = vpop.f32.mrb[0].mxu0
        %v1870 = vpop.f32.mrb[0].mxu0
        %v1871 = vadd.f32 0.0, %v1870
        %v1872 = vpop.f32.mrb[0].mxu0
        %1873 = vdwg.mxu0
        %v1874 = vadd.f32 %v1716, %v1844
        %v1875 = vadd.f32 %v1717, %v1847
        %v1876 = vadd.f32 %v1718, %v1852
        %v1877 = vadd.f32 %v1719, %v1855
        %v1878 = vadd.f32 %v1720, %v1860
        %v1879 = vadd.f32 %v1721, %v1863
        %v1880 = vadd.f32 %v1722, %v1868
        %v1881 = vadd.f32 %v1723, %v1871
        %v1882 = vrot.slane %v1725, 5
        %v1883 = vrot.slane %v1882, 4
        %v1884 = vrot.slane %v1726, 5
        %v1885 = vsel %vm932, %v1883, %v1884
        %s1886 = scalar_lea.vmem [#allocation8], 512
        %v1887 = vld [vmem:[%s1886] sm:$0xf]
        %v1888 = vld [vmem:[%s1886 + $0x4] sm:$0xf]
        %v1889 = vld [vmem:[%s1886 + $0x8] sm:$0xf]
        %v1890 = vld [vmem:[%s1886 + $0xc] sm:$0xf]
        %v1891 = vld [vmem:[%s1886 + $0x10] sm:$0xf]
        %v1892 = vld [vmem:[%s1886 + $0x14] sm:$0xf]
        %v1893 = vld [vmem:[%s1886 + $0x18] sm:$0xf]
        %v1894 = vld [vmem:[%s1886 + $0x1c] sm:$0xf]
        %v1895 = vld [vmem:[%s1886 + $0x20] sm:$0xf]
        %v1896 = vld [vmem:[%s1886 + $0x24] sm:$0xf]
        %v1897 = vld [vmem:[%s1886 + $0x28] sm:$0xf]
        %v1898 = vld [vmem:[%s1886 + $0x2c] sm:$0xf]
        %v1899 = vld [vmem:[%s1886 + $0x30] sm:$0xf]
        %v1900 = vld [vmem:[%s1886 + $0x34] sm:$0xf]
        %v1901 = vld [vmem:[%s1886 + $0x38] sm:$0xf]
        %v1902 = vld [vmem:[%s1886 + $0x3c] sm:$0xf]
        %v1903 = vunpack.c.l.b16 %v1885
        %v1904 = vpack.c.b16 %v1903, %v1452
        %v1922 = vunpack.c.l.b16 %v1887
        %v1923 = vunpack.c.l.b16 %v1888
        %v1924 = vunpack.c.l.b16 %v1889
        %v1925 = vunpack.c.l.b16 %v1890
        %v1926 = vunpack.c.l.b16 %v1891
        %v1927 = vunpack.c.l.b16 %v1892
        %v1928 = vunpack.c.l.b16 %v1893
        %v1929 = vunpack.c.l.b16 %v1894
        %v1930 = vunpack.c.l.b16 %v1895
        %v1931 = vunpack.c.l.b16 %v1896
        %v1932 = vunpack.c.l.b16 %v1897
        %v1933 = vunpack.c.l.b16 %v1898
        %v1934 = vunpack.c.l.b16 %v1899
        %v1935 = vunpack.c.l.b16 %v1900
        %v1936 = vunpack.c.l.b16 %v1901
        %v1937 = vunpack.c.l.b16 %v1902
        %v1938 = vpack.c.b16 %v1923, %v1922
        %v1939 = vpack.c.b16 %v1925, %v1924
        %v1940 = vpack.c.b16 %v1927, %v1926
        %v1941 = vpack.c.b16 %v1929, %v1928
        %v1942 = vpack.c.b16 %v1931, %v1930
        %v1943 = vpack.c.b16 %v1933, %v1932
        %v1944 = vpack.c.b16 %v1935, %v1934
        %v1945 = vpack.c.b16 %v1937, %v1936
        %1954 = vmatprep.subr.bf16.mxu0 0
        %1955 = vmatpush1.bf16.msra.mxu0 %v1938
        %1956 = vmatprep.subr.bf16.mxu0 0
        %1957 = vmatpush1.bf16.msra.mxu0 %v1939
        %1958 = vmatprep.subr.bf16.mxu0 0
        %1959 = vmatpush1.bf16.msra.mxu0 %v1940
        %1960 = vmatprep.subr.bf16.mxu0 0
        %1961 = vmatpush1.bf16.msra.mxu0 %v1941
        %1962 = vmatprep.subr.bf16.mxu0 0
        %1963 = vmatpush1.bf16.msra.mxu0 %v1942
        %1964 = vmatprep.subr.bf16.mxu0 0
        %1965 = vmatpush1.bf16.msra.mxu0 %v1943
        %1966 = vmatprep.subr.bf16.mxu0 0
        %1967 = vmatpush1.bf16.msra.mxu0 %v1944
        %1968 = vmatprep.subr.bf16.mxu0 0
        %1969 = vmatpush1.bf16.msra.mxu0 %v1945
        %1970 = vmatprep.subr.bf16.mxu0 0
        %1971 = vmatpush1.bf16.msra.mxu0 0
        %1972 = vmatprep.subr.bf16.mxu0 0
        %1973 = vmatpush1.bf16.msra.mxu0 0
        %1974 = vmatprep.subr.bf16.mxu0 0
        %1975 = vmatpush1.bf16.msra.mxu0 0
        %1976 = vmatprep.subr.bf16.mxu0 0
        %1977 = vmatpush1.bf16.msra.mxu0 0
        %1978 = vmatprep.subr.bf16.mxu0 0
        %1979 = vmatpush1.bf16.msra.mxu0 0
        %1980 = vmatprep.subr.bf16.mxu0 0
        %1981 = vmatpush1.bf16.msra.mxu0 0
        %1982 = vmatprep.subr.bf16.mxu0 0
        %1983 = vmatpush1.bf16.msra.mxu0 0
        %1984 = vmatprep.subr.bf16.mxu0 0
        %1985 = vmatpush1.bf16.msra.mxu0 0
        %1986 = vmatprep.mubr.bf16.mxu0 0
        %1987 = vmatmul.mubr.bf16.gmra.mrb[0].mxu0 %v991
        %v1988 = vpop.f32.mrb[0].mxu0
        %v1989 = vadd.f32 0.0, %v1988
        %v1990 = vpop.f32.mrb[0].mxu0
        %v1991 = vpop.f32.mrb[0].mxu0
        %v1992 = vadd.f32 0.0, %v1991
        %v1993 = vpop.f32.mrb[0].mxu0
        %1994 = vmatprep.mubr.bf16.mxu0 0
        %1995 = vmatmul.mubr.bf16.gmra.mrb[0].mxu0 %v992
        %v1996 = vpop.f32.mrb[0].mxu0
        %v1997 = vadd.f32 0.0, %v1996
        %v1998 = vpop.f32.mrb[0].mxu0
        %v1999 = vpop.f32.mrb[0].mxu0
        %v2000 = vadd.f32 0.0, %v1999
        %v2001 = vpop.f32.mrb[0].mxu0
        %2002 = vmatprep.mubr.bf16.mxu0 0
        %2003 = vmatmul.mubr.bf16.gmra.mrb[0].mxu0 %v993
        %v2004 = vpop.f32.mrb[0].mxu0
        %v2005 = vadd.f32 0.0, %v2004
        %v2006 = vpop.f32.mrb[0].mxu0
        %v2007 = vpop.f32.mrb[0].mxu0
        %v2008 = vadd.f32 0.0, %v2007
        %v2009 = vpop.f32.mrb[0].mxu0
        %2010 = vmatprep.mubr.bf16.mxu0 0
        %2011 = vmatmul.mubr.bf16.gmra.mrb[0].mxu0 %v1904
        %v2012 = vpop.f32.mrb[0].mxu0
        %v2013 = vadd.f32 0.0, %v2012
        %v2014 = vpop.f32.mrb[0].mxu0
        %v2015 = vpop.f32.mrb[0].mxu0
        %v2016 = vadd.f32 0.0, %v2015
        %v2017 = vpop.f32.mrb[0].mxu0
        %2018 = vdwg.mxu0
        %v2019 = vadd.f32 %v1874, %v1989
        %v2020 = vadd.f32 %v1875, %v1992
        %v2021 = vadd.f32 %v1876, %v1997
        %v2022 = vadd.f32 %v1877, %v2000
        %v2023 = vadd.f32 %v1878, %v2005
        %v2024 = vadd.f32 %v1879, %v2008
        %v2025 = vadd.f32 %v1880, %v2013
        %v2026 = vadd.f32 %v1881, %v2016
        %v2027 = vld [vmem:[%s312] sm:$0xff]
        %v2028 = vld [vmem:[%s312 + $0x8] sm:$0xff]
        %v2029 = vld [vmem:[%s312 + $0x10] sm:$0xff]
        %v2030 = vld [vmem:[%s312 + $0x18] sm:$0xff]
        %v2031 = vld [vmem:[%s312 + $0x20] sm:$0xff]
        %v2032 = vld [vmem:[%s312 + $0x28] sm:$0xff]
        %v2033 = vld [vmem:[%s312 + $0x30] sm:$0xff]
        %v2034 = vld [vmem:[%s312 + $0x38] sm:$0xff]
        %v2035 = vadd.f32 %v2019, %v2027
        %v2036 = vadd.f32 %v2020, %v2028
        %v2037 = vadd.f32 %v2021, %v2029
        %v2038 = vadd.f32 %v2022, %v2030
        %v2039 = vadd.f32 %v2023, %v2031
        %v2040 = vadd.f32 %v2024, %v2032
        %v2041 = vadd.f32 %v2025, %v2033
        %v2042 = vadd.f32 %v2026, %v2034
        %2043 = vst [vmem:[%s343] sm:$0xff] %v2035
        %2044 = vst [vmem:[%s343 + $0x8] sm:$0xff] %v2036
        %2045 = vst [vmem:[%s343 + $0x10] sm:$0xff] %v2037
        %2046 = vst [vmem:[%s343 + $0x18] sm:$0xff] %v2038
        %2047 = vst [vmem:[%s343 + $0x20] sm:$0xff] %v2039
        %2048 = vst [vmem:[%s343 + $0x28] sm:$0xff] %v2040
        %2049 = vst [vmem:[%s343 + $0x30] sm:$0xff] %v2041
        %2050 = vst [vmem:[%s343 + $0x38] sm:$0xff] %v2042
        %s2051 = sand.u32 %s168, 1
        %s2052 = scalar_lea.sflag [#allocation4], %s2051
        %s2053 = sand.u32 %s168, 1
        %s2054 = smul.addr %s2053, 64
        %s2055 = scalar_lea.vmem [#allocation11], %s2054
        // Predicated region
        $region61: #{_lambda_.7} parent=39 // pred_check
          %p2056 = pneg %p178
        $region62: #{_lambda_.7} parent=39 // pred_check_branch
          %2058 = sbr.rel (%p2056) target = $region64
        $region63: #{_lambda_.7} parent=39 // pred_region
          %s2060 = ssub.s32 1024, 1024
          %2061 = vsyncadd %s2052, %s2060
          %s2062 = smul.addr %s28, 8
          %s2063 = sadd.s32 %s29, %s2062
          %s2064 = smul.addr %s2063, 128
          %s2065 = scalar_lea.hbm %s5, %s2064
          %s2066 = sshll.u32 %s2055, 4
          %s2067 = int_to_ptr.vmem [resolvable:$true] %s2066
          %2072 = dma.vmem_to_hbm [thread:$0]  %s2067, 1024, %s2065, %s2052, 128, 128, 8
        $region64: #{_lambda_.7} parent=39 // pred_fallthru
          _
      $region40: #{_lambda_.7} parent=5 // pred_fallthru
        _
      %p2073 = scmp.le.s32.totalorder 2, %s19
      // Predicated region
      $region65: #{_lambda_.7} parent=5 // pred_check
        %p2074 = pneg %p2073
      $region66: #{_lambda_.7} parent=5 // pred_check_branch
        %2076 = sbr.rel (%p2074) target = $region68
      $region67: #{_lambda_.7} parent=5 // pred_region
        %s2077 = ssub.s32 %s19, 2
        // Predicated region
        $region69: #{_lambda_.7} parent=67 // pred_check
          %p2078 = pneg %p184
        $region70: #{_lambda_.7} parent=67 // pred_check_branch
          %2080 = sbr.rel (%p2078) target = $region72
        $region71: #{_lambda_.7} parent=67 // pred_region
          %s2081 = sand.u32 %s169, 1
          %s2082 = scalar_lea.sflag [#allocation4], %s2081
          %s2083 = sand.u32 %s169, 1
          %s2084 = smul.addr %s2083, 64
          %s2085 = scalar_lea.vmem [#allocation11], %s2084
          %2086 = dma.done %s2082, 1024
        $region72: #{_lambda_.7} parent=67 // pred_fallthru
          _
      $region68: #{_lambda_.7} parent=5 // pred_fallthru
        _
    $region6: #{_lambda_.7} parent=1 // loop_footer
      %s23 = sadd.s32 1, %s19
    $region7: #{_lambda_.7} parent=1 // loop_footer_branch
      %18 = sbr.rel target = $region3
    $region8: #{_lambda_.7} parent=1 // loop_exit
      _
    %2087 = vsyncpa [#allocation3], 1
    %s2088 = scalar_lea.sflag [#allocation3], 1
    %2089 = vsyncpa %s2088, 1
    %2090 = vsyncpa [#allocation6], 1
    %2091 = vsyncpa [#allocation9], 1
    %2092 = vsyncpa [#allocation4], 1
    %s2093 = scalar_lea.sflag [#allocation4], 1
    %2094 = vsyncpa %s2093, 1

// kernel: _lambda_.5
$region0: #{_lambda_.5}
  #allocation0 [shape = 'u32[]', space=smem, size = 0x4, offset = 0x4, fixed_abs, tag = 'smem constant byte address 0x4 - core index']
  #allocation1 [shape = 'u32[144,128]{1,0:T(1,128)}', space=vmem, size = 0x12000, scoped, tag = 'internal scratch']
  %s0 = inlined_call_operand.hbm [shape: f32[2,10,10,128], index: 0, kind: input, shape index: {}]
  %s1 = inlined_call_operand.hbm [shape: f32[1,128], index: 1, kind: input, shape index: {}]
  %s2 = inlined_call_operand.hbm [shape: f32[1,128], index: 2, kind: input, shape index: {}]
  %s3 = inlined_call_operand.hbm [shape: bf16[3,3,128,128], index: 3, kind: input, shape index: {}]
  %s4 = inlined_call_operand.hbm [shape: f32[2,8,8,128], index: 4, kind: input, shape index: {}]
  %s5 = inlined_call_operand.hbm [shape: f32[1,128], index: 5, kind: input, shape index: {}]
  %s6 = inlined_call_operand.hbm [shape: f32[1,128], index: 6, kind: input, shape index: {}]
  %s7 = inlined_call_operand.hbm [shape: bf16[128,128], index: 7, kind: input, shape index: {}]
  %s8 = inlined_call_operand.hbm [shape: f32[2,8,8,128], index: 8, kind: output, shape index: {}]
  %s9 = sld [smem:[#allocation0]]
  $region97: #{_lambda_.5} parent=0
    _
  %s11 = ssub.s32 1, %s9
  %s12 = scalar_select 0, %s11, %s9
  $region1: #{_lambda_.5} parent=0
    #allocation2 [shape = 'u8[163840]{0}', space=vmem, size = 0x28000, scoped, tag = 'input window, operand 0']
    #allocation3 [shape = 's32[2]{0}', space=sflag, size = 0x8, scoped, tag = 'scoped memory for _lambda_.5']
    #allocation4 [shape = 's32[2]{0}', space=sflag, size = 0x8, scoped, tag = 'scoped memory for _lambda_.5']
    #allocation5 [shape = 'u8[512]{0}', space=vmem, size = 0x400, scoped, tag = 'input window, operand 1, single buffered']
    #allocation6 [shape = 's32[1]{0}', space=sflag, size = 0x4, scoped, tag = 'scoped memory for _lambda_.5']
    #allocation7 [shape = 'u8[512]{0}', space=vmem, size = 0x400, scoped, tag = 'input window, operand 2, single buffered']
    #allocation8 [shape = 'u8[294912]{0}', space=vmem, size = 0x48000, scoped, tag = 'input window, operand 3, single buffered']
    #allocation9 [shape = 's32[1]{0}', space=sflag, size = 0x4, scoped, tag = 'scoped memory for _lambda_.5']
    #allocation10 [shape = 'u8[65536]{0}', space=vmem, size = 0x10000, scoped, tag = 'input window, operand 4']
    #allocation11 [shape = 'u8[512]{0}', space=vmem, size = 0x400, scoped, tag = 'input window, operand 5, single buffered']
    #allocation12 [shape = 'u8[512]{0}', space=vmem, size = 0x400, scoped, tag = 'input window, operand 6, single buffered']
    #allocation13 [shape = 'u8[32768]{0}', space=vmem, size = 0x8000, scoped, tag = 'input window, operand 7, single buffered']
    #allocation14 [shape = 's32[1]{0}', space=sflag, size = 0x4, scoped, tag = 'scoped memory for _lambda_.5']
    #allocation15 [shape = 'u8[65536]{0}', space=vmem, size = 0x10000, scoped, tag = 'output window, operand 0']
    %13 = vsyncpa [#allocation3], 0
    %s14 = scalar_lea.sflag [#allocation3], 1
    %15 = vsyncpa %s14, 0
    %16 = vsyncpa [#allocation6], 0
    %17 = vsyncpa [#allocation9], 0
    %18 = vsyncpa [#allocation14], 0
    %19 = vsyncpa [#allocation4], 0
    %s20 = scalar_lea.sflag [#allocation4], 1
    %21 = vsyncpa %s20, 0
    loop: start=0, step=1, limit=4
    $region2: #{_lambda_.5} parent=1 // loop_pre_header
      _
    $region3: #{_lambda_.5} parent=1 // loop_header
      %s23 = sphi 0, %s27
      %p24 = scmp.ge.s32.totalorder %s23, 4
      %s30 = sphi 0, %s42
      %s31 = sphi 0, %s38
      %s32 = sphi 0, %s30
      %s33 = sphi 0, %s31
      %s34 = sphi 0, %s32
      %s35 = sphi 0, %s33
      %s45 = sphi 0, %s47
      %s48 = sphi 0, %s45
      %s49 = sphi 0, %s48
      %s65 = sphi 0, %s49
      %s69 = sphi 0, %s69
      %s71 = sphi 0, %s69
      %s72 = sphi 0, %s71
      %s86 = sphi 0, %s72
      %s90 = sphi 0, %s90
      %s92 = sphi 0, %s90
      %s93 = sphi 0, %s92
      %s107 = sphi 0, %s93
      %s113 = sphi 0, %s115
      %s116 = sphi 0, %s113
      %s117 = sphi 0, %s116
      %s133 = sphi 0, %s117
      %s139 = sphi 0, %s141
      %s142 = sphi 0, %s139
      %s143 = sphi 0, %s142
      %s159 = sphi 0, %s143
      %s163 = sphi 0, %s163
      %s165 = sphi 0, %s163
      %s166 = sphi 0, %s165
      %s180 = sphi 0, %s166
      %s184 = sphi 0, %s184
      %s186 = sphi 0, %s184
      %s187 = sphi 0, %s186
      %s201 = sphi 0, %s187
      %s207 = sphi 0, %s209
      %s210 = sphi 0, %s207
      %s211 = sphi 0, %s210
      %s227 = sphi 0, %s211
      %s235 = sphi 0, %s237
      %s238 = sphi 0, %s235
      %s239 = sphi 0, %s238
      %s255 = sphi 0, %s239
    $region4: #{_lambda_.5} parent=1 // loop_header_branch
      %26 = sbr.rel (%p24) target = $region8
    $region5: #{_lambda_.5} parent=1 // loop_body
      %s28 = ssub.s32 %s23, 1
      %s29 = ssub.s32 %s23, 2
      %s36 = sadd.s32 1, %s31
      %p37 = scmp.ge.s32.totalorder %s36, 1
      %s38 = scalar_select %p37, 0, %s36
      %s39 = sadd.s32 1, %s30
      %s40 = scalar_select %p37, %s39, %s30
      %p41 = scmp.ge.s32.totalorder %s40, 2
      %s42 = scalar_select %p41, 0, %s40
      %s43 = ssub.s32 %s30, %s42
      %p44 = scmp.eq.s32.totalorder %s43, 0
      %s46 = sadd.s32 %s45, 1
      %s47 = scalar_select %p44, %s45, %s46
      %p50 = pneg %p44
      %p51 = scmp.eq.s32.totalorder %s23, 1
      %p52 = por %p50, %p51
      %p53 = scmp.ne.s32.totalorder %s45, %s48
      %p54 = scmp.eq.s32.totalorder %s23, 0
      %p55 = por %p53, %p54
      %p56 = scmp.ne.s32.totalorder %s45, %s48
      %p57 = scmp.eq.s32.totalorder %s28, 1
      %p58 = por %p56, %p57
      %p59 = scmp.ne.s32.totalorder %s48, %s49
      %p60 = scmp.eq.s32.totalorder %s28, 0
      %p61 = por %p59, %p60
      %p62 = scmp.ne.s32.totalorder %s48, %s49
      %p63 = scmp.eq.s32.totalorder %s29, 1
      %p64 = por %p62, %p63
      %p66 = scmp.ne.s32.totalorder %s49, %s65
      %p67 = scmp.eq.s32.totalorder %s29, 0
      %p68 = por %p66, %p67
      %s70 = sadd.s32 %s69, 1
      %p73 = scmp.eq.s32.totalorder %s23, 1
      %p74 = scmp.ne.s32.totalorder %s69, %s71
      %p75 = scmp.eq.s32.totalorder %s23, 0
      %p76 = por %p74, %p75
      %p77 = scmp.ne.s32.totalorder %s69, %s71
      %p78 = scmp.eq.s32.totalorder %s28, 1
      %p79 = por %p77, %p78
      %p80 = scmp.ne.s32.totalorder %s71, %s72
      %p81 = scmp.eq.s32.totalorder %s28, 0
      %p82 = por %p80, %p81
      %p83 = scmp.ne.s32.totalorder %s71, %s72
      %p84 = scmp.eq.s32.totalorder %s29, 1
      %p85 = por %p83, %p84
      %p87 = scmp.ne.s32.totalorder %s72, %s86
      %p88 = scmp.eq.s32.totalorder %s29, 0
      %p89 = por %p87, %p88
      %s91 = sadd.s32 %s90, 1
      %p94 = scmp.eq.s32.totalorder %s23, 1
      %p95 = scmp.ne.s32.totalorder %s90, %s92
      %p96 = scmp.eq.s32.totalorder %s23, 0
      %p97 = por %p95, %p96
      %p98 = scmp.ne.s32.totalorder %s90, %s92
      %p99 = scmp.eq.s32.totalorder %s28, 1
      %p100 = por %p98, %p99
      %p101 = scmp.ne.s32.totalorder %s92, %s93
      %p102 = scmp.eq.s32.totalorder %s28, 0
      %p103 = por %p101, %p102
      %p104 = scmp.ne.s32.totalorder %s92, %s93
      %p105 = scmp.eq.s32.totalorder %s29, 1
      %p106 = por %p104, %p105
      %p108 = scmp.ne.s32.totalorder %s93, %s107
      %p109 = scmp.eq.s32.totalorder %s29, 0
      %p110 = por %p108, %p109
      %s111 = ssub.s32 %s31, %s38
      %p112 = scmp.eq.s32.totalorder %s111, 0
      %s114 = sadd.s32 %s113, 1
      %s115 = scalar_select %p112, %s113, %s114
      %p118 = pneg %p112
      %p119 = scmp.eq.s32.totalorder %s23, 1
      %p120 = por %p118, %p119
      %p121 = scmp.ne.s32.totalorder %s113, %s116
      %p122 = scmp.eq.s32.totalorder %s23, 0
      %p123 = por %p121, %p122
      %p124 = scmp.ne.s32.totalorder %s113, %s116
      %p125 = scmp.eq.s32.totalorder %s28, 1
      %p126 = por %p124, %p125
      %p127 = scmp.ne.s32.totalorder %s116, %s117
      %p128 = scmp.eq.s32.totalorder %s28, 0
      %p129 = por %p127, %p128
      %p130 = scmp.ne.s32.totalorder %s116, %s117
      %p131 = scmp.eq.s32.totalorder %s29, 1
      %p132 = por %p130, %p131
      %p134 = scmp.ne.s32.totalorder %s117, %s133
      %p135 = scmp.eq.s32.totalorder %s29, 0
      %p136 = por %p134, %p135
      %s137 = ssub.s32 %s30, %s42
      %p138 = scmp.eq.s32.totalorder %s137, 0
      %s140 = sadd.s32 %s139, 1
      %s141 = scalar_select %p138, %s139, %s140
      %p144 = pneg %p138
      %p145 = scmp.eq.s32.totalorder %s23, 1
      %p146 = por %p144, %p145
      %p147 = scmp.ne.s32.totalorder %s139, %s142
      %p148 = scmp.eq.s32.totalorder %s23, 0
      %p149 = por %p147, %p148
      %p150 = scmp.ne.s32.totalorder %s139, %s142
      %p151 = scmp.eq.s32.totalorder %s28, 1
      %p152 = por %p150, %p151
      %p153 = scmp.ne.s32.totalorder %s142, %s143
      %p154 = scmp.eq.s32.totalorder %s28, 0
      %p155 = por %p153, %p154
      %p156 = scmp.ne.s32.totalorder %s142, %s143
      %p157 = scmp.eq.s32.totalorder %s29, 1
      %p158 = por %p156, %p157
      %p160 = scmp.ne.s32.totalorder %s143, %s159
      %p161 = scmp.eq.s32.totalorder %s29, 0
      %p162 = por %p160, %p161
      %s164 = sadd.s32 %s163, 1
      %p167 = scmp.eq.s32.totalorder %s23, 1
      %p168 = scmp.ne.s32.totalorder %s163, %s165
      %p169 = scmp.eq.s32.totalorder %s23, 0
      %p170 = por %p168, %p169
      %p171 = scmp.ne.s32.totalorder %s163, %s165
      %p172 = scmp.eq.s32.totalorder %s28, 1
      %p173 = por %p171, %p172
      %p174 = scmp.ne.s32.totalorder %s165, %s166
      %p175 = scmp.eq.s32.totalorder %s28, 0
      %p176 = por %p174, %p175
      %p177 = scmp.ne.s32.totalorder %s165, %s166
      %p178 = scmp.eq.s32.totalorder %s29, 1
      %p179 = por %p177, %p178
      %p181 = scmp.ne.s32.totalorder %s166, %s180
      %p182 = scmp.eq.s32.totalorder %s29, 0
      %p183 = por %p181, %p182
      %s185 = sadd.s32 %s184, 1
      %p188 = scmp.eq.s32.totalorder %s23, 1
      %p189 = scmp.ne.s32.totalorder %s184, %s186
      %p190 = scmp.eq.s32.totalorder %s23, 0
      %p191 = por %p189, %p190
      %p192 = scmp.ne.s32.totalorder %s184, %s186
      %p193 = scmp.eq.s32.totalorder %s28, 1
      %p194 = por %p192, %p193
      %p195 = scmp.ne.s32.totalorder %s186, %s187
      %p196 = scmp.eq.s32.totalorder %s28, 0
      %p197 = por %p195, %p196
      %p198 = scmp.ne.s32.totalorder %s186, %s187
      %p199 = scmp.eq.s32.totalorder %s29, 1
      %p200 = por %p198, %p199
      %p202 = scmp.ne.s32.totalorder %s187, %s201
      %p203 = scmp.eq.s32.totalorder %s29, 0
      %p204 = por %p202, %p203
      %s205 = ssub.s32 %s31, %s38
      %p206 = scmp.eq.s32.totalorder %s205, 0
      %s208 = sadd.s32 %s207, 1
      %s209 = scalar_select %p206, %s207, %s208
      %p212 = pneg %p206
      %p213 = scmp.eq.s32.totalorder %s23, 1
      %p214 = por %p212, %p213
      %p215 = scmp.ne.s32.totalorder %s207, %s210
      %p216 = scmp.eq.s32.totalorder %s23, 0
      %p217 = por %p215, %p216
      %p218 = scmp.ne.s32.totalorder %s207, %s210
      %p219 = scmp.eq.s32.totalorder %s28, 1
      %p220 = por %p218, %p219
      %p221 = scmp.ne.s32.totalorder %s210, %s211
      %p222 = scmp.eq.s32.totalorder %s28, 0
      %p223 = por %p221, %p222
      %p224 = scmp.ne.s32.totalorder %s210, %s211
      %p225 = scmp.eq.s32.totalorder %s29, 1
      %p226 = por %p224, %p225
      %p228 = scmp.ne.s32.totalorder %s211, %s227
      %p229 = scmp.eq.s32.totalorder %s29, 0
      %p230 = por %p228, %p229
      %s231 = ssub.s32 %s30, %s42
      %s232 = ssub.s32 %s31, %s38
      %s233 = sor.u32 %s231, %s232
      %p234 = scmp.eq.s32.totalorder %s233, 0
      %s236 = sadd.s32 %s235, 1
      %s237 = scalar_select %p234, %s235, %s236
      %p240 = pneg %p234
      %p241 = scmp.eq.s32.totalorder %s23, 1
      %p242 = por %p240, %p241
      %p243 = scmp.ne.s32.totalorder %s235, %s238
      %p244 = scmp.eq.s32.totalorder %s23, 0
      %p245 = por %p243, %p244
      %p246 = scmp.ne.s32.totalorder %s235, %s238
      %p247 = scmp.eq.s32.totalorder %s28, 1
      %p248 = por %p246, %p247
      %p249 = scmp.ne.s32.totalorder %s238, %s239
      %p250 = scmp.eq.s32.totalorder %s28, 0
      %p251 = por %p249, %p250
      %p252 = scmp.ne.s32.totalorder %s238, %s239
      %p253 = scmp.eq.s32.totalorder %s29, 1
      %p254 = por %p252, %p253
      %p256 = scmp.ne.s32.totalorder %s239, %s255
      %p257 = scmp.eq.s32.totalorder %s29, 0
      %p258 = por %p256, %p257
      %p259 = scmp.le.s32.totalorder 1, %s23
      %p260 = scmp.lt.s32.totalorder %s23, 3
      %p261 = pnand %p259, %p260
      %p262 = pneg %p261
      // Predicated region
      $region9: #{_lambda_.5} parent=5 // pred_check
        _
      $region10: #{_lambda_.5} parent=5 // pred_check_branch
        %264 = sbr.rel (%p261) target = $region12
      $region11: #{_lambda_.5} parent=5 // pred_region
        %s265 = ssub.s32 %s23, 1
        // Predicated region
        $region13: #{_lambda_.5} parent=11 // pred_check
          %p266 = pneg %p82
        $region14: #{_lambda_.5} parent=11 // pred_check_branch
          %268 = sbr.rel (%p266) target = $region16
        $region15: #{_lambda_.5} parent=11 // pred_region
          %s270 = ssub.s32 16, 16
          %271 = vsyncadd [#allocation6], %s270
          %s273 = sshll.u32 [#allocation5], 4
          %s274 = int_to_ptr.vmem [resolvable:$true] %s273
          %276 = dma.hbm_to_vmem [thread:$0]  %s1, 16, %s274, [#allocation6]
        $region16: #{_lambda_.5} parent=11 // pred_fallthru
          _
        // Predicated region
        $region17: #{_lambda_.5} parent=11 // pred_check
          %p277 = pneg %p103
        $region18: #{_lambda_.5} parent=11 // pred_check_branch
          %279 = sbr.rel (%p277) target = $region20
        $region19: #{_lambda_.5} parent=11 // pred_region
          %s281 = ssub.s32 16, 16
          %282 = vsyncadd [#allocation6], %s281
          %s284 = sshll.u32 [#allocation7], 4
          %s285 = int_to_ptr.vmem [resolvable:$true] %s284
          %287 = dma.hbm_to_vmem [thread:$0]  %s2, 16, %s285, [#allocation6]
        $region20: #{_lambda_.5} parent=11 // pred_fallthru
          _
        // Predicated region
        $region21: #{_lambda_.5} parent=11 // pred_check
          %p288 = pneg %p129
        $region22: #{_lambda_.5} parent=11 // pred_check_branch
          %290 = sbr.rel (%p288) target = $region24
        $region23: #{_lambda_.5} parent=11 // pred_region
          %s292 = ssub.s32 9216, 9216
          %293 = vsyncadd [#allocation9], %s292
          %s294 = smul.addr %s33, 64
          %s295 = scalar_lea.hbm %s3, %s294
          %s296 = sshll.u32 [#allocation8], 4
          %s297 = int_to_ptr.vmem [resolvable:$true] %s296
          %302 = dma.hbm_to_vmem [thread:$0]  %s295, 9216, %s297, [#allocation9], 64, 64, 4
        $region24: #{_lambda_.5} parent=11 // pred_fallthru
          _
        // Predicated region
        $region25: #{_lambda_.5} parent=11 // pred_check
          %p303 = pneg %p176
        $region26: #{_lambda_.5} parent=11 // pred_check_branch
          %305 = sbr.rel (%p303) target = $region28
        $region27: #{_lambda_.5} parent=11 // pred_region
          %s307 = ssub.s32 16, 16
          %308 = vsyncadd [#allocation6], %s307
          %s310 = sshll.u32 [#allocation11], 4
          %s311 = int_to_ptr.vmem [resolvable:$true] %s310
          %313 = dma.hbm_to_vmem [thread:$0]  %s5, 16, %s311, [#allocation6]
        $region28: #{_lambda_.5} parent=11 // pred_fallthru
          _
        // Predicated region
        $region29: #{_lambda_.5} parent=11 // pred_check
          %p314 = pneg %p197
        $region30: #{_lambda_.5} parent=11 // pred_check_branch
          %316 = sbr.rel (%p314) target = $region32
        $region31: #{_lambda_.5} parent=11 // pred_region
          %s318 = ssub.s32 16, 16
          %319 = vsyncadd [#allocation9], %s318
          %s321 = sshll.u32 [#allocation12], 4
          %s322 = int_to_ptr.vmem [resolvable:$true] %s321
          %324 = dma.hbm_to_vmem [thread:$0]  %s6, 16, %s322, [#allocation9]
        $region32: #{_lambda_.5} parent=11 // pred_fallthru
          _
        // Predicated region
        $region33: #{_lambda_.5} parent=11 // pred_check
          %p325 = pneg %p223
        $region34: #{_lambda_.5} parent=11 // pred_check_branch
          %327 = sbr.rel (%p325) target = $region36
        $region35: #{_lambda_.5} parent=11 // pred_region
          %s329 = ssub.s32 1024, 1024
          %330 = vsyncadd [#allocation14], %s329
          %s331 = smul.addr %s33, 64
          %s332 = scalar_lea.hbm %s7, %s331
          %s333 = sshll.u32 [#allocation13], 4
          %s334 = int_to_ptr.vmem [resolvable:$true] %s333
          %339 = dma.hbm_to_vmem [thread:$0]  %s332, 1024, %s334, [#allocation14], 64, 64, 4
        $region36: #{_lambda_.5} parent=11 // pred_fallthru
          _
      $region12: #{_lambda_.5} parent=5 // pred_fallthru
        _
      %p340 = scmp.lt.s32.totalorder %s23, 2
      // Predicated region
      $region37: #{_lambda_.5} parent=5 // pred_check
        %p341 = pneg %p340
      $region38: #{_lambda_.5} parent=5 // pred_check_branch
        %343 = sbr.rel (%p341) target = $region40
      $region39: #{_lambda_.5} parent=5 // pred_region
        // Predicated region
        $region41: #{_lambda_.5} parent=39 // pred_check
          %p344 = pneg %p55
        $region42: #{_lambda_.5} parent=39 // pred_check_branch
          %346 = sbr.rel (%p344) target = $region44
        $region43: #{_lambda_.5} parent=39 // pred_region
          %s347 = sand.u32 %s23, 1
          %s348 = scalar_lea.sflag [#allocation3], %s347
          %s349 = sand.u32 %s45, 1
          %s350 = smul.addr %s349, 160
          %s351 = scalar_lea.vmem [#allocation2], %s350
          %s353 = ssub.s32 2560, 2560
          %354 = vsyncadd %s348, %s353
          %s355 = smul.addr %s30, 20
          %s356 = smul.addr %s355, 128
          %s357 = scalar_lea.hbm %s0, %s356
          %s358 = sshll.u32 %s351, 4
          %s359 = int_to_ptr.vmem [resolvable:$true] %s358
          %364 = dma.hbm_to_vmem [thread:$0]  %s357, 2560, %s359, %s348, 128, 128, 8
        $region44: #{_lambda_.5} parent=39 // pred_fallthru
          _
        // Predicated region
        $region45: #{_lambda_.5} parent=39 // pred_check
          %p365 = pneg %p149
        $region46: #{_lambda_.5} parent=39 // pred_check_branch
          %367 = sbr.rel (%p365) target = $region48
        $region47: #{_lambda_.5} parent=39 // pred_region
          %s368 = sand.u32 %s23, 1
          %s369 = scalar_lea.sflag [#allocation3], %s368
          %s370 = sand.u32 %s139, 1
          %s371 = smul.addr %s370, 64
          %s372 = scalar_lea.vmem [#allocation10], %s371
          %s374 = ssub.s32 1024, 1024
          %375 = vsyncadd %s369, %s374
          %s376 = smul.addr %s30, 8
          %s377 = smul.addr %s376, 128
          %s378 = scalar_lea.hbm %s4, %s377
          %s379 = sshll.u32 %s372, 4
          %s380 = int_to_ptr.vmem [resolvable:$true] %s379
          %385 = dma.hbm_to_vmem [thread:$0]  %s378, 1024, %s380, %s369, 128, 128, 8
        $region48: #{_lambda_.5} parent=39 // pred_fallthru
          _
      $region40: #{_lambda_.5} parent=5 // pred_fallthru
        _
      %p386 = scmp.le.s32.totalorder 1, %s23
      %p387 = scmp.lt.s32.totalorder %s23, 3
      %p388 = pnand %p386, %p387
      %p389 = pneg %p388
      // Predicated region
      $region49: #{_lambda_.5} parent=5 // pred_check
        _
      $region50: #{_lambda_.5} parent=5 // pred_check_branch
        %391 = sbr.rel (%p388) target = $region52
      $region51: #{_lambda_.5} parent=5 // pred_region
        %s392 = ssub.s32 %s23, 1
        %s393 = sand.u32 %s28, 1
        %s394 = scalar_lea.sflag [#allocation3], %s393
        %s395 = sand.u32 %s48, 1
        %s396 = smul.addr %s395, 160
        %s397 = scalar_lea.vmem [#allocation2], %s396
        // Predicated region
        $region53: #{_lambda_.5} parent=51 // pred_check
          %p398 = pneg %p61
        $region54: #{_lambda_.5} parent=51 // pred_check_branch
          %400 = sbr.rel (%p398) target = $region56
        $region55: #{_lambda_.5} parent=51 // pred_region
          %401 = dma.done %s394, 2560
        $region56: #{_lambda_.5} parent=51 // pred_fallthru
          _
        // Predicated region
        $region57: #{_lambda_.5} parent=51 // pred_check
          %p402 = pneg %p82
        $region58: #{_lambda_.5} parent=51 // pred_check_branch
          %404 = sbr.rel (%p402) target = $region60
        $region59: #{_lambda_.5} parent=51 // pred_region
          %405 = dma.done [#allocation6], 16
        $region60: #{_lambda_.5} parent=51 // pred_fallthru
          _
        // Predicated region
        $region61: #{_lambda_.5} parent=51 // pred_check
          %p406 = pneg %p103
        $region62: #{_lambda_.5} parent=51 // pred_check_branch
          %408 = sbr.rel (%p406) target = $region64
        $region63: #{_lambda_.5} parent=51 // pred_region
          %409 = dma.done [#allocation6], 16
        $region64: #{_lambda_.5} parent=51 // pred_fallthru
          _
        // Predicated region
        $region65: #{_lambda_.5} parent=51 // pred_check
          %p410 = pneg %p129
        $region66: #{_lambda_.5} parent=51 // pred_check_branch
          %412 = sbr.rel (%p410) target = $region68
        $region67: #{_lambda_.5} parent=51 // pred_region
          %413 = dma.done [#allocation9], 9216
        $region68: #{_lambda_.5} parent=51 // pred_fallthru
          _
        %s414 = sand.u32 %s28, 1
        %s415 = scalar_lea.sflag [#allocation3], %s414
        %s416 = sand.u32 %s142, 1
        %s417 = smul.addr %s416, 64
        %s418 = scalar_lea.vmem [#allocation10], %s417
        // Predicated region
        $region69: #{_lambda_.5} parent=51 // pred_check
          %p419 = pneg %p155
        $region70: #{_lambda_.5} parent=51 // pred_check_branch
          %421 = sbr.rel (%p419) target = $region72
        $region71: #{_lambda_.5} parent=51 // pred_region
          %422 = dma.done %s415, 1024
        $region72: #{_lambda_.5} parent=51 // pred_fallthru
          _
        // Predicated region
        $region73: #{_lambda_.5} parent=51 // pred_check
          %p423 = pneg %p176
        $region74: #{_lambda_.5} parent=51 // pred_check_branch
          %425 = sbr.rel (%p423) target = $region76
        $region75: #{_lambda_.5} parent=51 // pred_region
          %426 = dma.done [#allocation6], 16
        $region76: #{_lambda_.5} parent=51 // pred_fallthru
          _
        // Predicated region
        $region77: #{_lambda_.5} parent=51 // pred_check
          %p427 = pneg %p197
        $region78: #{_lambda_.5} parent=51 // pred_check_branch
          %429 = sbr.rel (%p427) target = $region80
        $region79: #{_lambda_.5} parent=51 // pred_region
          %430 = dma.done [#allocation9], 16
        $region80: #{_lambda_.5} parent=51 // pred_fallthru
          _
        // Predicated region
        $region81: #{_lambda_.5} parent=51 // pred_check
          %p431 = pneg %p223
        $region82: #{_lambda_.5} parent=51 // pred_check_branch
          %433 = sbr.rel (%p431) target = $region84
        $region83: #{_lambda_.5} parent=51 // pred_region
          %434 = dma.done [#allocation14], 1024
        $region84: #{_lambda_.5} parent=51 // pred_fallthru
          _
        %s435 = sand.u32 %s28, 1
        %s436 = scalar_lea.sflag [#allocation3], %s435
        %s437 = sand.u32 %s48, 1
        %s438 = smul.addr %s437, 160
        %s439 = scalar_lea.vmem [#allocation2], %s438
        %p440 = pneg %p61
        %p441 = pneg %p58
        %p442 = pneg %p82
        %p443 = pneg %p79
        %p444 = pneg %p103
        %p445 = pneg %p100
        %p446 = pneg %p129
        %p447 = pneg %p126
        %s448 = sand.u32 %s28, 1
        %s449 = scalar_lea.sflag [#allocation3], %s448
        %s450 = sand.u32 %s142, 1
        %s451 = smul.addr %s450, 64
        %s452 = scalar_lea.vmem [#allocation10], %s451
        %p453 = pneg %p155
        %p454 = pneg %p152
        %p455 = pneg %p176
        %p456 = pneg %p173
        %p457 = pneg %p197
        %p458 = pneg %p194
        %p459 = pneg %p223
        %p460 = pneg %p220
        %p461 = pneg %p251
        %p462 = pneg %p248
        %s463 = sand.u32 %s238, 1
        %s464 = scalar_lea.sflag [#allocation4], %s463
        %s465 = sand.u32 %s238, 1
        %s466 = smul.addr %s465, 64
        %s467 = scalar_lea.vmem [#allocation15], %s466
        %v469 = vld [vmem:[%s397] sm:$0xff]
        %v470 = vld [vmem:[%s397 + $0x8] sm:$0x3]
        %v471 = vld [vmem:[%s397 + $0x10] sm:$0xff]
        %v472 = vld [vmem:[%s397 + $0x18] sm:$0x3]
        %v473 = vld [vmem:[%s397 + $0x20] sm:$0xff]
        %v474 = vld [vmem:[%s397 + $0x28] sm:$0x3]
        %v475 = vld [vmem:[%s397 + $0x30] sm:$0xff]
        %v476 = vld [vmem:[%s397 + $0x38] sm:$0x3]
        %v477 = vld [vmem:[%s397 + $0x40] sm:$0xff]
        %v478 = vld [vmem:[%s397 + $0x48] sm:$0x3]
        %v479 = vld [vmem:[%s397 + $0x50] sm:$0xff]
        %v480 = vld [vmem:[%s397 + $0x58] sm:$0x3]
        %v481 = vld [vmem:[%s397 + $0x60] sm:$0xff]
        %v482 = vld [vmem:[%s397 + $0x68] sm:$0x3]
        %v483 = vld [vmem:[%s397 + $0x70] sm:$0xff]
        %v484 = vld [vmem:[%s397 + $0x78] sm:$0x3]
        %v485 = vld [vmem:[%s397 + $0x80] sm:$0xff]
        %v486 = vld [vmem:[%s397 + $0x88] sm:$0x3]
        %v487 = vld [vmem:[%s397 + $0x90] sm:$0xff]
        %v488 = vld [vmem:[%s397 + $0x98] sm:$0x3]
        %v489 = vld [vmem:[#allocation5] sm:$0x1]
        %v490 = vld [vmem:[#allocation7] sm:$0x1]
        %v492 = vlaneseq
        %v493 = vshrl.u32 %v492, 7
        %v494 = vsub.s32 0, %v493
        %v495 = vrot.slane %v489, %v494
        %v497 = vmul.f32 %v469, %v495
        %v498 = vmul.f32 %v470, %v495
        %v499 = vmul.f32 %v471, %v495
        %v500 = vmul.f32 %v472, %v495
        %v501 = vmul.f32 %v473, %v495
        %v502 = vmul.f32 %v474, %v495
        %v503 = vmul.f32 %v475, %v495
        %v504 = vmul.f32 %v476, %v495
        %v505 = vmul.f32 %v477, %v495
        %v506 = vmul.f32 %v478, %v495
        %v507 = vmul.f32 %v479, %v495
        %v508 = vmul.f32 %v480, %v495
        %v509 = vmul.f32 %v481, %v495
        %v510 = vmul.f32 %v482, %v495
        %v511 = vmul.f32 %v483, %v495
        %v512 = vmul.f32 %v484, %v495
        %v513 = vmul.f32 %v485, %v495
        %v514 = vmul.f32 %v486, %v495
        %v515 = vmul.f32 %v487, %v495
        %v516 = vmul.f32 %v488, %v495
        %v518 = vlaneseq
        %v519 = vshrl.u32 %v518, 7
        %v520 = vsub.s32 0, %v519
        %v521 = vrot.slane %v490, %v520
        %v523 = vadd.f32 %v497, %v521
        %v524 = vadd.f32 %v498, %v521
        %v525 = vadd.f32 %v499, %v521
        %v526 = vadd.f32 %v500, %v521
        %v527 = vadd.f32 %v501, %v521
        %v528 = vadd.f32 %v502, %v521
        %v529 = vadd.f32 %v503, %v521
        %v530 = vadd.f32 %v504, %v521
        %v531 = vadd.f32 %v505, %v521
        %v532 = vadd.f32 %v506, %v521
        %v533 = vadd.f32 %v507, %v521
        %v534 = vadd.f32 %v508, %v521
        %v535 = vadd.f32 %v509, %v521
        %v536 = vadd.f32 %v510, %v521
        %v537 = vadd.f32 %v511, %v521
        %v538 = vadd.f32 %v512, %v521
        %v539 = vadd.f32 %v513, %v521
        %v540 = vadd.f32 %v514, %v521
        %v541 = vadd.f32 %v515, %v521
        %v542 = vadd.f32 %v516, %v521
        %v543 = vmax.f32 %v523, 0.0
        %v544 = vmax.f32 %v524, 0.0
        %v545 = vmax.f32 %v525, 0.0
        %v546 = vmax.f32 %v526, 0.0
        %v547 = vmax.f32 %v527, 0.0
        %v548 = vmax.f32 %v528, 0.0
        %v549 = vmax.f32 %v529, 0.0
        %v550 = vmax.f32 %v530, 0.0
        %v551 = vmax.f32 %v531, 0.0
        %v552 = vmax.f32 %v532, 0.0
        %v553 = vmax.f32 %v533, 0.0
        %v554 = vmax.f32 %v534, 0.0
        %v555 = vmax.f32 %v535, 0.0
        %v556 = vmax.f32 %v536, 0.0
        %v557 = vmax.f32 %v537, 0.0
        %v558 = vmax.f32 %v538, 0.0
        %v559 = vmax.f32 %v539, 0.0
        %v560 = vmax.f32 %v540, 0.0
        %v561 = vmax.f32 %v541, 0.0
        %v562 = vmax.f32 %v542, 0.0
        %v563 = vlaneseq
        %v564 = vshrl.u32 %v563, 7
        %v565 = vadd.s32 %v564, 8
        %vm566 = vcmp.ge.s32.totalorder %v564, 1
        %vm567 = vcmp.ge.s32.totalorder %v565, 1
        %vm568 = vmand 0, %vm566
        %vm569 = vmand 0, %vm567
        %vm570 = vmand 1, %vm566
        %vm571 = vmand 1, %vm567
        %vm572 = vcmp.le.s32.totalorder %v564, 8
        %vm573 = vcmp.le.s32.totalorder %v565, 8
        %vm574 = vmand %vm568, %vm572
        %vm575 = vmand %vm569, %vm573
        %vm576 = vmand %vm570, %vm572
        %vm577 = vmand %vm571, %vm573
        %v578 = vsel %vm574, 1, 0
        %v579 = vsel %vm575, 1, 0
        %v580 = vsel %vm576, 1, 0
        %v581 = vsel %vm577, 1, 0
        %vm582 = vcmp.eq.s32.totalorder %v578, 1
        %vm583 = vcmp.eq.s32.totalorder %v579, 1
        %vm584 = vcmp.eq.s32.totalorder %v580, 1
        %vm585 = vcmp.eq.s32.totalorder %v581, 1
        %v586 = vsel %vm582, %v543, 0.0
        %v587 = vsel %vm583, %v544, 0.0
        %v588 = vsel %vm584, %v545, 0.0
        %v589 = vsel %vm585, %v546, 0.0
        %v590 = vsel %vm584, %v547, 0.0
        %v591 = vsel %vm585, %v548, 0.0
        %v592 = vsel %vm584, %v549, 0.0
        %v593 = vsel %vm585, %v550, 0.0
        %v594 = vsel %vm584, %v551, 0.0
        %v595 = vsel %vm585, %v552, 0.0
        %v596 = vsel %vm584, %v553, 0.0
        %v597 = vsel %vm585, %v554, 0.0
        %v598 = vsel %vm584, %v555, 0.0
        %v599 = vsel %vm585, %v556, 0.0
        %v600 = vsel %vm584, %v557, 0.0
        %v601 = vsel %vm585, %v558, 0.0
        %v602 = vsel %vm584, %v559, 0.0
        %v603 = vsel %vm585, %v560, 0.0
        %v604 = vsel %vm582, %v561, 0.0
        %v605 = vsel %vm583, %v562, 0.0
        %v606 = vpack.c.bf16 %v587, %v586
        %v607 = vpack.c.bf16 %v589, %v588
        %v608 = vpack.c.bf16 %v591, %v590
        %v609 = vpack.c.bf16 %v593, %v592
        %v610 = vpack.c.bf16 %v595, %v594
        %v611 = vpack.c.bf16 %v597, %v596
        %v612 = vpack.c.bf16 %v599, %v598
        %v613 = vpack.c.bf16 %v601, %v600
        %v614 = vpack.c.bf16 %v603, %v602
        %v615 = vpack.c.bf16 %v605, %v604
        %v616 = vld [vmem:[#allocation8] sm:$0xf]
        %v617 = vld [vmem:[#allocation8 + $0x4] sm:$0xf]
        %v618 = vld [vmem:[#allocation8 + $0x8] sm:$0xf]
        %v619 = vld [vmem:[#allocation8 + $0xc] sm:$0xf]
        %v620 = vld [vmem:[#allocation8 + $0x10] sm:$0xf]
        %v621 = vld [vmem:[#allocation8 + $0x14] sm:$0xf]
        %v622 = vld [vmem:[#allocation8 + $0x18] sm:$0xf]
        %v623 = vld [vmem:[#allocation8 + $0x1c] sm:$0xf]
        %v624 = vld [vmem:[#allocation8 + $0x20] sm:$0xf]
        %v625 = vld [vmem:[#allocation8 + $0x24] sm:$0xf]
        %v626 = vld [vmem:[#allocation8 + $0x28] sm:$0xf]
        %v627 = vld [vmem:[#allocation8 + $0x2c] sm:$0xf]
        %v628 = vld [vmem:[#allocation8 + $0x30] sm:$0xf]
        %v629 = vld [vmem:[#allocation8 + $0x34] sm:$0xf]
        %v630 = vld [vmem:[#allocation8 + $0x38] sm:$0xf]
        %v631 = vld [vmem:[#allocation8 + $0x3c] sm:$0xf]
        %v640 = vunpack.c.l.b16 %v606
        %v641 = vunpack.c.h.b16 %v606
        %v642 = vunpack.c.l.b16 %v607
        %v643 = vunpack.c.h.b16 %v607
        %v644 = vunpack.c.l.b16 %v608
        %v645 = vunpack.c.h.b16 %v608
        %v646 = vunpack.c.l.b16 %v609
        %v647 = vunpack.c.h.b16 %v609
        %v648 = vunpack.c.l.b16 %v610
        %v649 = vunpack.c.h.b16 %v610
        %v650 = vunpack.c.l.b16 %v611
        %v651 = vunpack.c.h.b16 %v611
        %v652 = vunpack.c.l.b16 %v612
        %v653 = vunpack.c.h.b16 %v612
        %v654 = vunpack.c.l.b16 %v613
        %v655 = vunpack.c.h.b16 %v613
        %v656 = vpack.c.b16 %v640, %v640
        %v657 = vpack.c.b16 %v641, %v641
        %v658 = vpack.c.b16 %v642, %v642
        %v659 = vpack.c.b16 %v643, %v643
        %v660 = vpack.c.b16 %v644, %v644
        %v661 = vpack.c.b16 %v645, %v645
        %v662 = vpack.c.b16 %v646, %v646
        %v663 = vpack.c.b16 %v647, %v647
        %v664 = vpack.c.b16 %v648, %v648
        %v665 = vpack.c.b16 %v649, %v649
        %v666 = vpack.c.b16 %v650, %v650
        %v667 = vpack.c.b16 %v651, %v651
        %v668 = vpack.c.b16 %v652, %v652
        %v669 = vpack.c.b16 %v653, %v653
        %v670 = vpack.c.b16 %v654, %v654
        %v671 = vpack.c.b16 %v655, %v655
        %vm672 = vsmask.f32 3328
        %vm673 = vsmask.f32 7440
        %vm674 = vmor %vm672, %vm673
        %v676 = vshrl.u32 %v656, 16
        %v678 = vrot.slane %v676, 4
        %v679 = vshll.u32 %v656, 16
        %v681 = vrot.slane %v679, 5
        %v682 = vor.u32 %v678, %v681
        %v683 = vrot.slane %v682, 4
        %v685 = vshll.u32 %v657, 16
        %v687 = vrot.slane %v685, 5
        %v688 = vsel %vm674, %v683, %v687
        %v690 = vshrl.u32 %v658, 16
        %v692 = vrot.slane %v690, 4
        %v693 = vshll.u32 %v658, 16
        %v695 = vrot.slane %v693, 5
        %v696 = vor.u32 %v692, %v695
        %v697 = vrot.slane %v696, 4
        %v699 = vshll.u32 %v659, 16
        %v701 = vrot.slane %v699, 5
        %v702 = vsel %vm674, %v697, %v701
        %v704 = vshrl.u32 %v660, 16
        %v706 = vrot.slane %v704, 4
        %v707 = vshll.u32 %v660, 16
        %v709 = vrot.slane %v707, 5
        %v710 = vor.u32 %v706, %v709
        %v711 = vrot.slane %v710, 4
        %v713 = vshll.u32 %v661, 16
        %v715 = vrot.slane %v713, 5
        %v716 = vsel %vm674, %v711, %v715
        %v718 = vshrl.u32 %v662, 16
        %v720 = vrot.slane %v718, 4
        %v721 = vshll.u32 %v662, 16
        %v723 = vrot.slane %v721, 5
        %v724 = vor.u32 %v720, %v723
        %v725 = vrot.slane %v724, 4
        %v727 = vshll.u32 %v663, 16
        %v729 = vrot.slane %v727, 5
        %v730 = vsel %vm674, %v725, %v729
        %v732 = vshrl.u32 %v664, 16
        %v734 = vrot.slane %v732, 4
        %v735 = vshll.u32 %v664, 16
        %v737 = vrot.slane %v735, 5
        %v738 = vor.u32 %v734, %v737
        %v739 = vrot.slane %v738, 4
        %v741 = vshll.u32 %v665, 16
        %v743 = vrot.slane %v741, 5
        %v744 = vsel %vm674, %v739, %v743
        %v746 = vshrl.u32 %v666, 16
        %v748 = vrot.slane %v746, 4
        %v749 = vshll.u32 %v666, 16
        %v751 = vrot.slane %v749, 5
        %v752 = vor.u32 %v748, %v751
        %v753 = vrot.slane %v752, 4
        %v755 = vshll.u32 %v667, 16
        %v757 = vrot.slane %v755, 5
        %v758 = vsel %vm674, %v753, %v757
        %v760 = vshrl.u32 %v668, 16
        %v762 = vrot.slane %v760, 4
        %v763 = vshll.u32 %v668, 16
        %v765 = vrot.slane %v763, 5
        %v766 = vor.u32 %v762, %v765
        %v767 = vrot.slane %v766, 4
        %v769 = vshll.u32 %v669, 16
        %v771 = vrot.slane %v769, 5
        %v772 = vsel %vm674, %v767, %v771
        %v774 = vshrl.u32 %v670, 16
        %v776 = vrot.slane %v774, 4
        %v777 = vshll.u32 %v670, 16
        %v779 = vrot.slane %v777, 5
        %v780 = vor.u32 %v776, %v779
        %v781 = vrot.slane %v780, 4
        %v783 = vshll.u32 %v671, 16
        %v785 = vrot.slane %v783, 5
        %v786 = vsel %vm674, %v781, %v785
        %s787 = scalar_lea.vmem [#allocation8], 64
        %v788 = vld [vmem:[%s787] sm:$0xf]
        %v789 = vld [vmem:[%s787 + $0x4] sm:$0xf]
        %v790 = vld [vmem:[%s787 + $0x8] sm:$0xf]
        %v791 = vld [vmem:[%s787 + $0xc] sm:$0xf]
        %v792 = vld [vmem:[%s787 + $0x10] sm:$0xf]
        %v793 = vld [vmem:[%s787 + $0x14] sm:$0xf]
        %v794 = vld [vmem:[%s787 + $0x18] sm:$0xf]
        %v795 = vld [vmem:[%s787 + $0x1c] sm:$0xf]
        %v796 = vld [vmem:[%s787 + $0x20] sm:$0xf]
        %v797 = vld [vmem:[%s787 + $0x24] sm:$0xf]
        %v798 = vld [vmem:[%s787 + $0x28] sm:$0xf]
        %v799 = vld [vmem:[%s787 + $0x2c] sm:$0xf]
        %v800 = vld [vmem:[%s787 + $0x30] sm:$0xf]
        %v801 = vld [vmem:[%s787 + $0x34] sm:$0xf]
        %v802 = vld [vmem:[%s787 + $0x38] sm:$0xf]
        %v803 = vld [vmem:[%s787 + $0x3c] sm:$0xf]
        %v804 = vunpack.c.l.b16 %v688
        %v805 = vunpack.c.l.b16 %v702
        %v806 = vunpack.c.l.b16 %v716
        %v807 = vunpack.c.l.b16 %v730
        %v808 = vunpack.c.l.b16 %v744
        %v809 = vunpack.c.l.b16 %v758
        %v810 = vunpack.c.l.b16 %v772
        %v811 = vunpack.c.l.b16 %v786
        %v812 = vpack.c.b16 %v805, %v804
        %v813 = vpack.c.b16 %v807, %v806
        %v814 = vpack.c.b16 %v809, %v808
        %v815 = vpack.c.b16 %v811, %v810
        %v836 = vunpack.c.l.b16 %v788
        %v837 = vunpack.c.l.b16 %v789
        %v838 = vunpack.c.l.b16 %v790
        %v839 = vunpack.c.l.b16 %v791
        %v840 = vunpack.c.l.b16 %v792
        %v841 = vunpack.c.l.b16 %v793
        %v842 = vunpack.c.l.b16 %v794
        %v843 = vunpack.c.l.b16 %v795
        %v844 = vunpack.c.l.b16 %v796
        %v845 = vunpack.c.l.b16 %v797
        %v846 = vunpack.c.l.b16 %v798
        %v847 = vunpack.c.l.b16 %v799
        %v848 = vunpack.c.l.b16 %v800
        %v849 = vunpack.c.l.b16 %v801
        %v850 = vunpack.c.l.b16 %v802
        %v851 = vunpack.c.l.b16 %v803
        %v852 = vpack.c.b16 %v837, %v836
        %v853 = vpack.c.b16 %v839, %v838
        %v854 = vpack.c.b16 %v841, %v840
        %v855 = vpack.c.b16 %v843, %v842
        %v856 = vpack.c.b16 %v845, %v844
        %v857 = vpack.c.b16 %v847, %v846
        %v858 = vpack.c.b16 %v849, %v848
        %v859 = vpack.c.b16 %v851, %v850
        %868 = vmatprep.subr.bf16.mxu0 0
        %869 = vmatpush1.bf16.msra.mxu0 %v852
        %870 = vmatprep.subr.bf16.mxu0 0
        %871 = vmatpush1.bf16.msra.mxu0 %v853
        %872 = vmatprep.subr.bf16.mxu0 0
        %873 = vmatpush1.bf16.msra.mxu0 %v854
        %874 = vmatprep.subr.bf16.mxu0 0
        %875 = vmatpush1.bf16.msra.mxu0 %v855
        %876 = vmatprep.subr.bf16.mxu0 0
        %877 = vmatpush1.bf16.msra.mxu0 %v856
        %878 = vmatprep.subr.bf16.mxu0 0
        %879 = vmatpush1.bf16.msra.mxu0 %v857
        %880 = vmatprep.subr.bf16.mxu0 0
        %881 = vmatpush1.bf16.msra.mxu0 %v858
        %882 = vmatprep.subr.bf16.mxu0 0
        %883 = vmatpush1.bf16.msra.mxu0 %v859
        %884 = vmatprep.subr.bf16.mxu0 0
        %885 = vmatpush1.bf16.msra.mxu0 0
        %886 = vmatprep.subr.bf16.mxu0 0
        %887 = vmatpush1.bf16.msra.mxu0 0
        %888 = vmatprep.subr.bf16.mxu0 0
        %889 = vmatpush1.bf16.msra.mxu0 0
        %890 = vmatprep.subr.bf16.mxu0 0
        %891 = vmatpush1.bf16.msra.mxu0 0
        %892 = vmatprep.subr.bf16.mxu0 0
        %893 = vmatpush1.bf16.msra.mxu0 0
        %894 = vmatprep.subr.bf16.mxu0 0
        %895 = vmatpush1.bf16.msra.mxu0 0
        %896 = vmatprep.subr.bf16.mxu0 0
        %897 = vmatpush1.bf16.msra.mxu0 0
        %898 = vmatprep.subr.bf16.mxu0 0
        %899 = vmatpush1.bf16.msra.mxu0 0
        %900 = vmatprep.mubr.bf16.mxu0 0
        %901 = vmatmul.mubr.bf16.gmra.mrb[0].mxu0 %v812
        %v902 = vpop.f32.mrb[0].mxu0
        %v903 = vadd.f32 0.0, %v902
        %v904 = vpop.f32.mrb[0].mxu0
        %v905 = vpop.f32.mrb[0].mxu0
        %v906 = vadd.f32 0.0, %v905
        %v907 = vpop.f32.mrb[0].mxu0
        %908 = vmatprep.mubr.bf16.mxu0 0
        %909 = vmatmul.mubr.bf16.gmra.mrb[0].mxu0 %v813
        %v910 = vpop.f32.mrb[0].mxu0
        %v911 = vadd.f32 0.0, %v910
        %v912 = vpop.f32.mrb[0].mxu0
        %v913 = vpop.f32.mrb[0].mxu0
        %v914 = vadd.f32 0.0, %v913
        %v915 = vpop.f32.mrb[0].mxu0
        %916 = vmatprep.mubr.bf16.mxu0 0
        %917 = vmatmul.mubr.bf16.gmra.mrb[0].mxu0 %v814
        %v918 = vpop.f32.mrb[0].mxu0
        %v919 = vadd.f32 0.0, %v918
        %v920 = vpop.f32.mrb[0].mxu0
        %v921 = vpop.f32.mrb[0].mxu0
        %v922 = vadd.f32 0.0, %v921
        %v923 = vpop.f32.mrb[0].mxu0
        %924 = vmatprep.mubr.bf16.mxu0 0
        %925 = vmatmul.mubr.bf16.gmra.mrb[0].mxu0 %v815
        %v926 = vpop.f32.mrb[0].mxu0
        %v927 = vadd.f32 0.0, %v926
        %v928 = vpop.f32.mrb[0].mxu0
        %v929 = vpop.f32.mrb[0].mxu0
        %v930 = vadd.f32 0.0, %v929
        %v931 = vpop.f32.mrb[0].mxu0
        %932 = vdwg.mxu0
        %v933 = vpack.c.b16 %v642, %v640
        %v934 = vpack.c.b16 %v646, %v644
        %v935 = vpack.c.b16 %v650, %v648
        %v936 = vpack.c.b16 %v654, %v652
        %v957 = vunpack.c.l.b16 %v616
        %v958 = vunpack.c.l.b16 %v617
        %v959 = vunpack.c.l.b16 %v618
        %v960 = vunpack.c.l.b16 %v619
        %v961 = vunpack.c.l.b16 %v620
        %v962 = vunpack.c.l.b16 %v621
        %v963 = vunpack.c.l.b16 %v622
        %v964 = vunpack.c.l.b16 %v623
        %v965 = vunpack.c.l.b16 %v624
        %v966 = vunpack.c.l.b16 %v625
        %v967 = vunpack.c.l.b16 %v626
        %v968 = vunpack.c.l.b16 %v627
        %v969 = vunpack.c.l.b16 %v628
        %v970 = vunpack.c.l.b16 %v629
        %v971 = vunpack.c.l.b16 %v630
        %v972 = vunpack.c.l.b16 %v631
        %v973 = vpack.c.b16 %v958, %v957
        %v974 = vpack.c.b16 %v960, %v959
        %v975 = vpack.c.b16 %v962, %v961
        %v976 = vpack.c.b16 %v964, %v963
        %v977 = vpack.c.b16 %v966, %v965
        %v978 = vpack.c.b16 %v968, %v967
        %v979 = vpack.c.b16 %v970, %v969
        %v980 = vpack.c.b16 %v972, %v971
        %989 = vmatprep.subr.bf16.mxu0 0
        %990 = vmatpush1.bf16.msra.mxu0 %v973
        %991 = vmatprep.subr.bf16.mxu0 0
        %992 = vmatpush1.bf16.msra.mxu0 %v974
        %993 = vmatprep.subr.bf16.mxu0 0
        %994 = vmatpush1.bf16.msra.mxu0 %v975
        %995 = vmatprep.subr.bf16.mxu0 0
        %996 = vmatpush1.bf16.msra.mxu0 %v976
        %997 = vmatprep.subr.bf16.mxu0 0
        %998 = vmatpush1.bf16.msra.mxu0 %v977
        %999 = vmatprep.subr.bf16.mxu0 0
        %1000 = vmatpush1.bf16.msra.mxu0 %v978
        %1001 = vmatprep.subr.bf16.mxu0 0
        %1002 = vmatpush1.bf16.msra.mxu0 %v979
        %1003 = vmatprep.subr.bf16.mxu0 0
        %1004 = vmatpush1.bf16.msra.mxu0 %v980
        %1005 = vmatprep.subr.bf16.mxu0 0
        %1006 = vmatpush1.bf16.msra.mxu0 0
        %1007 = vmatprep.subr.bf16.mxu0 0
        %1008 = vmatpush1.bf16.msra.mxu0 0
        %1009 = vmatprep.subr.bf16.mxu0 0
        %1010 = vmatpush1.bf16.msra.mxu0 0
        %1011 = vmatprep.subr.bf16.mxu0 0
        %1012 = vmatpush1.bf16.msra.mxu0 0
        %1013 = vmatprep.subr.bf16.mxu0 0
        %1014 = vmatpush1.bf16.msra.mxu0 0
        %1015 = vmatprep.subr.bf16.mxu0 0
        %1016 = vmatpush1.bf16.msra.mxu0 0
        %1017 = vmatprep.subr.bf16.mxu0 0
        %1018 = vmatpush1.bf16.msra.mxu0 0
        %1019 = vmatprep.subr.bf16.mxu0 0
        %1020 = vmatpush1.bf16.msra.mxu0 0
        %1021 = vmatprep.mubr.bf16.mxu0 0
        %1022 = vmatmul.mubr.bf16.gmra.mrb[0].mxu0 %v933
        %v1023 = vpop.f32.mrb[0].mxu0
        %v1024 = vadd.f32 %v903, %v1023
        %v1025 = vpop.f32.mrb[0].mxu0
        %v1026 = vpop.f32.mrb[0].mxu0
        %v1027 = vadd.f32 %v906, %v1026
        %v1028 = vpop.f32.mrb[0].mxu0
        %1029 = vmatprep.mubr.bf16.mxu0 0
        %1030 = vmatmul.mubr.bf16.gmra.mrb[0].mxu0 %v934
        %v1031 = vpop.f32.mrb[0].mxu0
        %v1032 = vadd.f32 %v911, %v1031
        %v1033 = vpop.f32.mrb[0].mxu0
        %v1034 = vpop.f32.mrb[0].mxu0
        %v1035 = vadd.f32 %v914, %v1034
        %v1036 = vpop.f32.mrb[0].mxu0
        %1037 = vmatprep.mubr.bf16.mxu0 0
        %1038 = vmatmul.mubr.bf16.gmra.mrb[0].mxu0 %v935
        %v1039 = vpop.f32.mrb[0].mxu0
        %v1040 = vadd.f32 %v919, %v1039
        %v1041 = vpop.f32.mrb[0].mxu0
        %v1042 = vpop.f32.mrb[0].mxu0
        %v1043 = vadd.f32 %v922, %v1042
        %v1044 = vpop.f32.mrb[0].mxu0
        %1045 = vmatprep.mubr.bf16.mxu0 0
        %1046 = vmatmul.mubr.bf16.gmra.mrb[0].mxu0 %v936
        %v1047 = vpop.f32.mrb[0].mxu0
        %v1048 = vadd.f32 %v927, %v1047
        %v1049 = vpop.f32.mrb[0].mxu0
        %v1050 = vpop.f32.mrb[0].mxu0
        %v1051 = vadd.f32 %v930, %v1050
        %v1052 = vpop.f32.mrb[0].mxu0
        %1053 = vdwg.mxu0
        %vm1054 = vcmask 1042432
        %vm1055 = vcmask 1046532
        %vm1056 = vmor %vm1054, %vm1055
        %v1057 = vrot.slane %v656, 5
        %v1058 = vrot.slane %v1057, 4
        %v1059 = vrot.slane %v657, 5
        %v1060 = vsel %vm1056, %v1058, %v1059
        %v1061 = vrot.slane %v658, 5
        %v1062 = vrot.slane %v1061, 4
        %v1063 = vrot.slane %v659, 5
        %v1064 = vsel %vm1056, %v1062, %v1063
        %v1065 = vrot.slane %v660, 5
        %v1066 = vrot.slane %v1065, 4
        %v1067 = vrot.slane %v661, 5
        %v1068 = vsel %vm1056, %v1066, %v1067
        %v1069 = vrot.slane %v662, 5
        %v1070 = vrot.slane %v1069, 4
        %v1071 = vrot.slane %v663, 5
        %v1072 = vsel %vm1056, %v1070, %v1071
        %v1073 = vrot.slane %v664, 5
        %v1074 = vrot.slane %v1073, 4
        %v1075 = vrot.slane %v665, 5
        %v1076 = vsel %vm1056, %v1074, %v1075
        %v1077 = vrot.slane %v666, 5
        %v1078 = vrot.slane %v1077, 4
        %v1079 = vrot.slane %v667, 5
        %v1080 = vsel %vm1056, %v1078, %v1079
        %v1081 = vrot.slane %v668, 5
        %v1082 = vrot.slane %v1081, 4
        %v1083 = vrot.slane %v669, 5
        %v1084 = vsel %vm1056, %v1082, %v1083
        %v1085 = vrot.slane %v670, 5
        %v1086 = vrot.slane %v1085, 4
        %v1087 = vrot.slane %v671, 5
        %v1088 = vsel %vm1056, %v1086, %v1087
        %s1089 = scalar_lea.vmem [#allocation8], 128
        %v1090 = vld [vmem:[%s1089] sm:$0xf]
        %v1091 = vld [vmem:[%s1089 + $0x4] sm:$0xf]
        %v1092 = vld [vmem:[%s1089 + $0x8] sm:$0xf]
        %v1093 = vld [vmem:[%s1089 + $0xc] sm:$0xf]
        %v1094 = vld [vmem:[%s1089 + $0x10] sm:$0xf]
        %v1095 = vld [vmem:[%s1089 + $0x14] sm:$0xf]
        %v1096 = vld [vmem:[%s1089 + $0x18] sm:$0xf]
        %v1097 = vld [vmem:[%s1089 + $0x1c] sm:$0xf]
        %v1098 = vld [vmem:[%s1089 + $0x20] sm:$0xf]
        %v1099 = vld [vmem:[%s1089 + $0x24] sm:$0xf]
        %v1100 = vld [vmem:[%s1089 + $0x28] sm:$0xf]
        %v1101 = vld [vmem:[%s1089 + $0x2c] sm:$0xf]
        %v1102 = vld [vmem:[%s1089 + $0x30] sm:$0xf]
        %v1103 = vld [vmem:[%s1089 + $0x34] sm:$0xf]
        %v1104 = vld [vmem:[%s1089 + $0x38] sm:$0xf]
        %v1105 = vld [vmem:[%s1089 + $0x3c] sm:$0xf]
        %v1106 = vunpack.c.l.b16 %v1060
        %v1107 = vunpack.c.l.b16 %v1064
        %v1108 = vunpack.c.l.b16 %v1068
        %v1109 = vunpack.c.l.b16 %v1072
        %v1110 = vunpack.c.l.b16 %v1076
        %v1111 = vunpack.c.l.b16 %v1080
        %v1112 = vunpack.c.l.b16 %v1084
        %v1113 = vunpack.c.l.b16 %v1088
        %v1114 = vpack.c.b16 %v1107, %v1106
        %v1115 = vpack.c.b16 %v1109, %v1108
        %v1116 = vpack.c.b16 %v1111, %v1110
        %v1117 = vpack.c.b16 %v1113, %v1112
        %v1138 = vunpack.c.l.b16 %v1090
        %v1139 = vunpack.c.l.b16 %v1091
        %v1140 = vunpack.c.l.b16 %v1092
        %v1141 = vunpack.c.l.b16 %v1093
        %v1142 = vunpack.c.l.b16 %v1094
        %v1143 = vunpack.c.l.b16 %v1095
        %v1144 = vunpack.c.l.b16 %v1096
        %v1145 = vunpack.c.l.b16 %v1097
        %v1146 = vunpack.c.l.b16 %v1098
        %v1147 = vunpack.c.l.b16 %v1099
        %v1148 = vunpack.c.l.b16 %v1100
        %v1149 = vunpack.c.l.b16 %v1101
        %v1150 = vunpack.c.l.b16 %v1102
        %v1151 = vunpack.c.l.b16 %v1103
        %v1152 = vunpack.c.l.b16 %v1104
        %v1153 = vunpack.c.l.b16 %v1105
        %v1154 = vpack.c.b16 %v1139, %v1138
        %v1155 = vpack.c.b16 %v1141, %v1140
        %v1156 = vpack.c.b16 %v1143, %v1142
        %v1157 = vpack.c.b16 %v1145, %v1144
        %v1158 = vpack.c.b16 %v1147, %v1146
        %v1159 = vpack.c.b16 %v1149, %v1148
        %v1160 = vpack.c.b16 %v1151, %v1150
        %v1161 = vpack.c.b16 %v1153, %v1152
        %1170 = vmatprep.subr.bf16.mxu0 0
        %1171 = vmatpush1.bf16.msra.mxu0 %v1154
        %1172 = vmatprep.subr.bf16.mxu0 0
        %1173 = vmatpush1.bf16.msra.mxu0 %v1155
        %1174 = vmatprep.subr.bf16.mxu0 0
        %1175 = vmatpush1.bf16.msra.mxu0 %v1156
        %1176 = vmatprep.subr.bf16.mxu0 0
        %1177 = vmatpush1.bf16.msra.mxu0 %v1157
        %1178 = vmatprep.subr.bf16.mxu0 0
        %1179 = vmatpush1.bf16.msra.mxu0 %v1158
        %1180 = vmatprep.subr.bf16.mxu0 0
        %1181 = vmatpush1.bf16.msra.mxu0 %v1159
        %1182 = vmatprep.subr.bf16.mxu0 0
        %1183 = vmatpush1.bf16.msra.mxu0 %v1160
        %1184 = vmatprep.subr.bf16.mxu0 0
        %1185 = vmatpush1.bf16.msra.mxu0 %v1161
        %1186 = vmatprep.subr.bf16.mxu0 0
        %1187 = vmatpush1.bf16.msra.mxu0 0
        %1188 = vmatprep.subr.bf16.mxu0 0
        %1189 = vmatpush1.bf16.msra.mxu0 0
        %1190 = vmatprep.subr.bf16.mxu0 0
        %1191 = vmatpush1.bf16.msra.mxu0 0
        %1192 = vmatprep.subr.bf16.mxu0 0
        %1193 = vmatpush1.bf16.msra.mxu0 0
        %1194 = vmatprep.subr.bf16.mxu0 0
        %1195 = vmatpush1.bf16.msra.mxu0 0
        %1196 = vmatprep.subr.bf16.mxu0 0
        %1197 = vmatpush1.bf16.msra.mxu0 0
        %1198 = vmatprep.subr.bf16.mxu0 0
        %1199 = vmatpush1.bf16.msra.mxu0 0
        %1200 = vmatprep.subr.bf16.mxu0 0
        %1201 = vmatpush1.bf16.msra.mxu0 0
        %1202 = vmatprep.mubr.bf16.mxu0 0
        %1203 = vmatmul.mubr.bf16.gmra.mrb[0].mxu0 %v1114
        %v1204 = vpop.f32.mrb[0].mxu0
        %v1205 = vadd.f32 0.0, %v1204
        %v1206 = vpop.f32.mrb[0].mxu0
        %v1207 = vpop.f32.mrb[0].mxu0
        %v1208 = vadd.f32 0.0, %v1207
        %v1209 = vpop.f32.mrb[0].mxu0
        %1210 = vmatprep.mubr.bf16.mxu0 0
        %1211 = vmatmul.mubr.bf16.gmra.mrb[0].mxu0 %v1115
        %v1212 = vpop.f32.mrb[0].mxu0
        %v1213 = vadd.f32 0.0, %v1212
        %v1214 = vpop.f32.mrb[0].mxu0
        %v1215 = vpop.f32.mrb[0].mxu0
        %v1216 = vadd.f32 0.0, %v1215
        %v1217 = vpop.f32.mrb[0].mxu0
        %1218 = vmatprep.mubr.bf16.mxu0 0
        %1219 = vmatmul.mubr.bf16.gmra.mrb[0].mxu0 %v1116
        %v1220 = vpop.f32.mrb[0].mxu0
        %v1221 = vadd.f32 0.0, %v1220
        %v1222 = vpop.f32.mrb[0].mxu0
        %v1223 = vpop.f32.mrb[0].mxu0
        %v1224 = vadd.f32 0.0, %v1223
        %v1225 = vpop.f32.mrb[0].mxu0
        %1226 = vmatprep.mubr.bf16.mxu0 0
        %1227 = vmatmul.mubr.bf16.gmra.mrb[0].mxu0 %v1117
        %v1228 = vpop.f32.mrb[0].mxu0
        %v1229 = vadd.f32 0.0, %v1228
        %v1230 = vpop.f32.mrb[0].mxu0
        %v1231 = vpop.f32.mrb[0].mxu0
        %v1232 = vadd.f32 0.0, %v1231
        %v1233 = vpop.f32.mrb[0].mxu0
        %1234 = vdwg.mxu0
        %v1235 = vadd.f32 %v1024, %v1205
        %v1236 = vadd.f32 %v1027, %v1208
        %v1237 = vadd.f32 %v1032, %v1213
        %v1238 = vadd.f32 %v1035, %v1216
        %v1239 = vadd.f32 %v1040, %v1221
        %v1240 = vadd.f32 %v1043, %v1224
        %v1241 = vadd.f32 %v1048, %v1229
        %v1242 = vadd.f32 %v1051, %v1232
        %s1243 = scalar_lea.vmem [#allocation8], 192
        %v1244 = vld [vmem:[%s1243] sm:$0xf]
        %v1245 = vld [vmem:[%s1243 + $0x4] sm:$0xf]
        %v1246 = vld [vmem:[%s1243 + $0x8] sm:$0xf]
        %v1247 = vld [vmem:[%s1243 + $0xc] sm:$0xf]
        %v1248 = vld [vmem:[%s1243 + $0x10] sm:$0xf]
        %v1249 = vld [vmem:[%s1243 + $0x14] sm:$0xf]
        %v1250 = vld [vmem:[%s1243 + $0x18] sm:$0xf]
        %v1251 = vld [vmem:[%s1243 + $0x1c] sm:$0xf]
        %v1252 = vld [vmem:[%s1243 + $0x20] sm:$0xf]
        %v1253 = vld [vmem:[%s1243 + $0x24] sm:$0xf]
        %v1254 = vld [vmem:[%s1243 + $0x28] sm:$0xf]
        %v1255 = vld [vmem:[%s1243 + $0x2c] sm:$0xf]
        %v1256 = vld [vmem:[%s1243 + $0x30] sm:$0xf]
        %v1257 = vld [vmem:[%s1243 + $0x34] sm:$0xf]
        %v1258 = vld [vmem:[%s1243 + $0x38] sm:$0xf]
        %v1259 = vld [vmem:[%s1243 + $0x3c] sm:$0xf]
        %v1261 = vunpack.c.l.b16 %v614
        %v1262 = vpack.c.b16 %v644, %v642
        %v1263 = vpack.c.b16 %v648, %v646
        %v1264 = vpack.c.b16 %v652, %v650
        %v1265 = vpack.c.b16 %v1261, %v654
        %v1286 = vunpack.c.l.b16 %v1244
        %v1287 = vunpack.c.l.b16 %v1245
        %v1288 = vunpack.c.l.b16 %v1246
        %v1289 = vunpack.c.l.b16 %v1247
        %v1290 = vunpack.c.l.b16 %v1248
        %v1291 = vunpack.c.l.b16 %v1249
        %v1292 = vunpack.c.l.b16 %v1250
        %v1293 = vunpack.c.l.b16 %v1251
        %v1294 = vunpack.c.l.b16 %v1252
        %v1295 = vunpack.c.l.b16 %v1253
        %v1296 = vunpack.c.l.b16 %v1254
        %v1297 = vunpack.c.l.b16 %v1255
        %v1298 = vunpack.c.l.b16 %v1256
        %v1299 = vunpack.c.l.b16 %v1257
        %v1300 = vunpack.c.l.b16 %v1258
        %v1301 = vunpack.c.l.b16 %v1259
        %v1302 = vpack.c.b16 %v1287, %v1286
        %v1303 = vpack.c.b16 %v1289, %v1288
        %v1304 = vpack.c.b16 %v1291, %v1290
        %v1305 = vpack.c.b16 %v1293, %v1292
        %v1306 = vpack.c.b16 %v1295, %v1294
        %v1307 = vpack.c.b16 %v1297, %v1296
        %v1308 = vpack.c.b16 %v1299, %v1298
        %v1309 = vpack.c.b16 %v1301, %v1300
        %1318 = vmatprep.subr.bf16.mxu0 0
        %1319 = vmatpush1.bf16.msra.mxu0 %v1302
        %1320 = vmatprep.subr.bf16.mxu0 0
        %1321 = vmatpush1.bf16.msra.mxu0 %v1303
        %1322 = vmatprep.subr.bf16.mxu0 0
        %1323 = vmatpush1.bf16.msra.mxu0 %v1304
        %1324 = vmatprep.subr.bf16.mxu0 0
        %1325 = vmatpush1.bf16.msra.mxu0 %v1305
        %1326 = vmatprep.subr.bf16.mxu0 0
        %1327 = vmatpush1.bf16.msra.mxu0 %v1306
        %1328 = vmatprep.subr.bf16.mxu0 0
        %1329 = vmatpush1.bf16.msra.mxu0 %v1307
        %1330 = vmatprep.subr.bf16.mxu0 0
        %1331 = vmatpush1.bf16.msra.mxu0 %v1308
        %1332 = vmatprep.subr.bf16.mxu0 0
        %1333 = vmatpush1.bf16.msra.mxu0 %v1309
        %1334 = vmatprep.subr.bf16.mxu0 0
        %1335 = vmatpush1.bf16.msra.mxu0 0
        %1336 = vmatprep.subr.bf16.mxu0 0
        %1337 = vmatpush1.bf16.msra.mxu0 0
        %1338 = vmatprep.subr.bf16.mxu0 0
        %1339 = vmatpush1.bf16.msra.mxu0 0
        %1340 = vmatprep.subr.bf16.mxu0 0
        %1341 = vmatpush1.bf16.msra.mxu0 0
        %1342 = vmatprep.subr.bf16.mxu0 0
        %1343 = vmatpush1.bf16.msra.mxu0 0
        %1344 = vmatprep.subr.bf16.mxu0 0
        %1345 = vmatpush1.bf16.msra.mxu0 0
        %1346 = vmatprep.subr.bf16.mxu0 0
        %1347 = vmatpush1.bf16.msra.mxu0 0
        %1348 = vmatprep.subr.bf16.mxu0 0
        %1349 = vmatpush1.bf16.msra.mxu0 0
        %1350 = vmatprep.mubr.bf16.mxu0 0
        %1351 = vmatmul.mubr.bf16.gmra.mrb[0].mxu0 %v1262
        %v1352 = vpop.f32.mrb[0].mxu0
        %v1353 = vadd.f32 0.0, %v1352
        %v1354 = vpop.f32.mrb[0].mxu0
        %v1355 = vpop.f32.mrb[0].mxu0
        %v1356 = vadd.f32 0.0, %v1355
        %v1357 = vpop.f32.mrb[0].mxu0
        %1358 = vmatprep.mubr.bf16.mxu0 0
        %1359 = vmatmul.mubr.bf16.gmra.mrb[0].mxu0 %v1263
        %v1360 = vpop.f32.mrb[0].mxu0
        %v1361 = vadd.f32 0.0, %v1360
        %v1362 = vpop.f32.mrb[0].mxu0
        %v1363 = vpop.f32.mrb[0].mxu0
        %v1364 = vadd.f32 0.0, %v1363
        %v1365 = vpop.f32.mrb[0].mxu0
        %1366 = vmatprep.mubr.bf16.mxu0 0
        %1367 = vmatmul.mubr.bf16.gmra.mrb[0].mxu0 %v1264
        %v1368 = vpop.f32.mrb[0].mxu0
        %v1369 = vadd.f32 0.0, %v1368
        %v1370 = vpop.f32.mrb[0].mxu0
        %v1371 = vpop.f32.mrb[0].mxu0
        %v1372 = vadd.f32 0.0, %v1371
        %v1373 = vpop.f32.mrb[0].mxu0
        %1374 = vmatprep.mubr.bf16.mxu0 0
        %1375 = vmatmul.mubr.bf16.gmra.mrb[0].mxu0 %v1265
        %v1376 = vpop.f32.mrb[0].mxu0
        %v1377 = vadd.f32 0.0, %v1376
        %v1378 = vpop.f32.mrb[0].mxu0
        %v1379 = vpop.f32.mrb[0].mxu0
        %v1380 = vadd.f32 0.0, %v1379
        %v1381 = vpop.f32.mrb[0].mxu0
        %1382 = vdwg.mxu0
        %v1383 = vadd.f32 %v1235, %v1353
        %v1384 = vadd.f32 %v1236, %v1356
        %v1385 = vadd.f32 %v1237, %v1361
        %v1386 = vadd.f32 %v1238, %v1364
        %v1387 = vadd.f32 %v1239, %v1369
        %v1388 = vadd.f32 %v1240, %v1372
        %v1389 = vadd.f32 %v1241, %v1377
        %v1390 = vadd.f32 %v1242, %v1380
        %v1391 = vunpack.c.h.b16 %v614
        %v1392 = vpack.c.b16 %v1261, %v1261
        %v1393 = vpack.c.b16 %v1391, %v1391
        %v1395 = vshrl.u32 %v1392, 16
        %v1397 = vrot.slane %v1395, 4
        %v1398 = vshll.u32 %v1392, 16
        %v1400 = vrot.slane %v1398, 5
        %v1401 = vor.u32 %v1397, %v1400
        %v1402 = vrot.slane %v1401, 4
        %v1404 = vshll.u32 %v1393, 16
        %v1406 = vrot.slane %v1404, 5
        %v1407 = vsel %vm674, %v1402, %v1406
        %s1408 = scalar_lea.vmem [#allocation8], 256
        %v1409 = vld [vmem:[%s1408] sm:$0xf]
        %v1410 = vld [vmem:[%s1408 + $0x4] sm:$0xf]
        %v1411 = vld [vmem:[%s1408 + $0x8] sm:$0xf]
        %v1412 = vld [vmem:[%s1408 + $0xc] sm:$0xf]
        %v1413 = vld [vmem:[%s1408 + $0x10] sm:$0xf]
        %v1414 = vld [vmem:[%s1408 + $0x14] sm:$0xf]
        %v1415 = vld [vmem:[%s1408 + $0x18] sm:$0xf]
        %v1416 = vld [vmem:[%s1408 + $0x1c] sm:$0xf]
        %v1417 = vld [vmem:[%s1408 + $0x20] sm:$0xf]
        %v1418 = vld [vmem:[%s1408 + $0x24] sm:$0xf]
        %v1419 = vld [vmem:[%s1408 + $0x28] sm:$0xf]
        %v1420 = vld [vmem:[%s1408 + $0x2c] sm:$0xf]
        %v1421 = vld [vmem:[%s1408 + $0x30] sm:$0xf]
        %v1422 = vld [vmem:[%s1408 + $0x34] sm:$0xf]
        %v1423 = vld [vmem:[%s1408 + $0x38] sm:$0xf]
        %v1424 = vld [vmem:[%s1408 + $0x3c] sm:$0xf]
        %v1425 = vunpack.c.l.b16 %v1407
        %v1426 = vpack.c.b16 %v806, %v805
        %v1427 = vpack.c.b16 %v808, %v807
        %v1428 = vpack.c.b16 %v810, %v809
        %v1429 = vpack.c.b16 %v1425, %v811
        %v1450 = vunpack.c.l.b16 %v1409
        %v1451 = vunpack.c.l.b16 %v1410
        %v1452 = vunpack.c.l.b16 %v1411
        %v1453 = vunpack.c.l.b16 %v1412
        %v1454 = vunpack.c.l.b16 %v1413
        %v1455 = vunpack.c.l.b16 %v1414
        %v1456 = vunpack.c.l.b16 %v1415
        %v1457 = vunpack.c.l.b16 %v1416
        %v1458 = vunpack.c.l.b16 %v1417
        %v1459 = vunpack.c.l.b16 %v1418
        %v1460 = vunpack.c.l.b16 %v1419
        %v1461 = vunpack.c.l.b16 %v1420
        %v1462 = vunpack.c.l.b16 %v1421
        %v1463 = vunpack.c.l.b16 %v1422
        %v1464 = vunpack.c.l.b16 %v1423
        %v1465 = vunpack.c.l.b16 %v1424
        %v1466 = vpack.c.b16 %v1451, %v1450
        %v1467 = vpack.c.b16 %v1453, %v1452
        %v1468 = vpack.c.b16 %v1455, %v1454
        %v1469 = vpack.c.b16 %v1457, %v1456
        %v1470 = vpack.c.b16 %v1459, %v1458
        %v1471 = vpack.c.b16 %v1461, %v1460
        %v1472 = vpack.c.b16 %v1463, %v1462
        %v1473 = vpack.c.b16 %v1465, %v1464
        %1482 = vmatprep.subr.bf16.mxu0 0
        %1483 = vmatpush1.bf16.msra.mxu0 %v1466
        %1484 = vmatprep.subr.bf16.mxu0 0
        %1485 = vmatpush1.bf16.msra.mxu0 %v1467
        %1486 = vmatprep.subr.bf16.mxu0 0
        %1487 = vmatpush1.bf16.msra.mxu0 %v1468
        %1488 = vmatprep.subr.bf16.mxu0 0
        %1489 = vmatpush1.bf16.msra.mxu0 %v1469
        %1490 = vmatprep.subr.bf16.mxu0 0
        %1491 = vmatpush1.bf16.msra.mxu0 %v1470
        %1492 = vmatprep.subr.bf16.mxu0 0
        %1493 = vmatpush1.bf16.msra.mxu0 %v1471
        %1494 = vmatprep.subr.bf16.mxu0 0
        %1495 = vmatpush1.bf16.msra.mxu0 %v1472
        %1496 = vmatprep.subr.bf16.mxu0 0
        %1497 = vmatpush1.bf16.msra.mxu0 %v1473
        %1498 = vmatprep.subr.bf16.mxu0 0
        %1499 = vmatpush1.bf16.msra.mxu0 0
        %1500 = vmatprep.subr.bf16.mxu0 0
        %1501 = vmatpush1.bf16.msra.mxu0 0
        %1502 = vmatprep.subr.bf16.mxu0 0
        %1503 = vmatpush1.bf16.msra.mxu0 0
        %1504 = vmatprep.subr.bf16.mxu0 0
        %1505 = vmatpush1.bf16.msra.mxu0 0
        %1506 = vmatprep.subr.bf16.mxu0 0
        %1507 = vmatpush1.bf16.msra.mxu0 0
        %1508 = vmatprep.subr.bf16.mxu0 0
        %1509 = vmatpush1.bf16.msra.mxu0 0
        %1510 = vmatprep.subr.bf16.mxu0 0
        %1511 = vmatpush1.bf16.msra.mxu0 0
        %1512 = vmatprep.subr.bf16.mxu0 0
        %1513 = vmatpush1.bf16.msra.mxu0 0
        %1514 = vmatprep.mubr.bf16.mxu0 0
        %1515 = vmatmul.mubr.bf16.gmra.mrb[0].mxu0 %v1426
        %v1516 = vpop.f32.mrb[0].mxu0
        %v1517 = vadd.f32 0.0, %v1516
        %v1518 = vpop.f32.mrb[0].mxu0
        %v1519 = vpop.f32.mrb[0].mxu0
        %v1520 = vadd.f32 0.0, %v1519
        %v1521 = vpop.f32.mrb[0].mxu0
        %1522 = vmatprep.mubr.bf16.mxu0 0
        %1523 = vmatmul.mubr.bf16.gmra.mrb[0].mxu0 %v1427
        %v1524 = vpop.f32.mrb[0].mxu0
        %v1525 = vadd.f32 0.0, %v1524
        %v1526 = vpop.f32.mrb[0].mxu0
        %v1527 = vpop.f32.mrb[0].mxu0
        %v1528 = vadd.f32 0.0, %v1527
        %v1529 = vpop.f32.mrb[0].mxu0
        %1530 = vmatprep.mubr.bf16.mxu0 0
        %1531 = vmatmul.mubr.bf16.gmra.mrb[0].mxu0 %v1428
        %v1532 = vpop.f32.mrb[0].mxu0
        %v1533 = vadd.f32 0.0, %v1532
        %v1534 = vpop.f32.mrb[0].mxu0
        %v1535 = vpop.f32.mrb[0].mxu0
        %v1536 = vadd.f32 0.0, %v1535
        %v1537 = vpop.f32.mrb[0].mxu0
        %1538 = vmatprep.mubr.bf16.mxu0 0
        %1539 = vmatmul.mubr.bf16.gmra.mrb[0].mxu0 %v1429
        %v1540 = vpop.f32.mrb[0].mxu0
        %v1541 = vadd.f32 0.0, %v1540
        %v1542 = vpop.f32.mrb[0].mxu0
        %v1543 = vpop.f32.mrb[0].mxu0
        %v1544 = vadd.f32 0.0, %v1543
        %v1545 = vpop.f32.mrb[0].mxu0
        %1546 = vdwg.mxu0
        %v1547 = vadd.f32 %v1383, %v1517
        %v1548 = vadd.f32 %v1384, %v1520
        %v1549 = vadd.f32 %v1385, %v1525
        %v1550 = vadd.f32 %v1386, %v1528
        %v1551 = vadd.f32 %v1387, %v1533
        %v1552 = vadd.f32 %v1388, %v1536
        %v1553 = vadd.f32 %v1389, %v1541
        %v1554 = vadd.f32 %v1390, %v1544
        %v1555 = vrot.slane %v1392, 5
        %v1556 = vrot.slane %v1555, 4
        %v1557 = vrot.slane %v1393, 5
        %v1558 = vsel %vm1056, %v1556, %v1557
        %s1559 = scalar_lea.vmem [#allocation8], 320
        %v1560 = vld [vmem:[%s1559] sm:$0xf]
        %v1561 = vld [vmem:[%s1559 + $0x4] sm:$0xf]
        %v1562 = vld [vmem:[%s1559 + $0x8] sm:$0xf]
        %v1563 = vld [vmem:[%s1559 + $0xc] sm:$0xf]
        %v1564 = vld [vmem:[%s1559 + $0x10] sm:$0xf]
        %v1565 = vld [vmem:[%s1559 + $0x14] sm:$0xf]
        %v1566 = vld [vmem:[%s1559 + $0x18] sm:$0xf]
        %v1567 = vld [vmem:[%s1559 + $0x1c] sm:$0xf]
        %v1568 = vld [vmem:[%s1559 + $0x20] sm:$0xf]
        %v1569 = vld [vmem:[%s1559 + $0x24] sm:$0xf]
        %v1570 = vld [vmem:[%s1559 + $0x28] sm:$0xf]
        %v1571 = vld [vmem:[%s1559 + $0x2c] sm:$0xf]
        %v1572 = vld [vmem:[%s1559 + $0x30] sm:$0xf]
        %v1573 = vld [vmem:[%s1559 + $0x34] sm:$0xf]
        %v1574 = vld [vmem:[%s1559 + $0x38] sm:$0xf]
        %v1575 = vld [vmem:[%s1559 + $0x3c] sm:$0xf]
        %v1576 = vunpack.c.l.b16 %v1558
        %v1577 = vpack.c.b16 %v1108, %v1107
        %v1578 = vpack.c.b16 %v1110, %v1109
        %v1579 = vpack.c.b16 %v1112, %v1111
        %v1580 = vpack.c.b16 %v1576, %v1113
        %v1601 = vunpack.c.l.b16 %v1560
        %v1602 = vunpack.c.l.b16 %v1561
        %v1603 = vunpack.c.l.b16 %v1562
        %v1604 = vunpack.c.l.b16 %v1563
        %v1605 = vunpack.c.l.b16 %v1564
        %v1606 = vunpack.c.l.b16 %v1565
        %v1607 = vunpack.c.l.b16 %v1566
        %v1608 = vunpack.c.l.b16 %v1567
        %v1609 = vunpack.c.l.b16 %v1568
        %v1610 = vunpack.c.l.b16 %v1569
        %v1611 = vunpack.c.l.b16 %v1570
        %v1612 = vunpack.c.l.b16 %v1571
        %v1613 = vunpack.c.l.b16 %v1572
        %v1614 = vunpack.c.l.b16 %v1573
        %v1615 = vunpack.c.l.b16 %v1574
        %v1616 = vunpack.c.l.b16 %v1575
        %v1617 = vpack.c.b16 %v1602, %v1601
        %v1618 = vpack.c.b16 %v1604, %v1603
        %v1619 = vpack.c.b16 %v1606, %v1605
        %v1620 = vpack.c.b16 %v1608, %v1607
        %v1621 = vpack.c.b16 %v1610, %v1609
        %v1622 = vpack.c.b16 %v1612, %v1611
        %v1623 = vpack.c.b16 %v1614, %v1613
        %v1624 = vpack.c.b16 %v1616, %v1615
        %1633 = vmatprep.subr.bf16.mxu0 0
        %1634 = vmatpush1.bf16.msra.mxu0 %v1617
        %1635 = vmatprep.subr.bf16.mxu0 0
        %1636 = vmatpush1.bf16.msra.mxu0 %v1618
        %1637 = vmatprep.subr.bf16.mxu0 0
        %1638 = vmatpush1.bf16.msra.mxu0 %v1619
        %1639 = vmatprep.subr.bf16.mxu0 0
        %1640 = vmatpush1.bf16.msra.mxu0 %v1620
        %1641 = vmatprep.subr.bf16.mxu0 0
        %1642 = vmatpush1.bf16.msra.mxu0 %v1621
        %1643 = vmatprep.subr.bf16.mxu0 0
        %1644 = vmatpush1.bf16.msra.mxu0 %v1622
        %1645 = vmatprep.subr.bf16.mxu0 0
        %1646 = vmatpush1.bf16.msra.mxu0 %v1623
        %1647 = vmatprep.subr.bf16.mxu0 0
        %1648 = vmatpush1.bf16.msra.mxu0 %v1624
        %1649 = vmatprep.subr.bf16.mxu0 0
        %1650 = vmatpush1.bf16.msra.mxu0 0
        %1651 = vmatprep.subr.bf16.mxu0 0
        %1652 = vmatpush1.bf16.msra.mxu0 0
        %1653 = vmatprep.subr.bf16.mxu0 0
        %1654 = vmatpush1.bf16.msra.mxu0 0
        %1655 = vmatprep.subr.bf16.mxu0 0
        %1656 = vmatpush1.bf16.msra.mxu0 0
        %1657 = vmatprep.subr.bf16.mxu0 0
        %1658 = vmatpush1.bf16.msra.mxu0 0
        %1659 = vmatprep.subr.bf16.mxu0 0
        %1660 = vmatpush1.bf16.msra.mxu0 0
        %1661 = vmatprep.subr.bf16.mxu0 0
        %1662 = vmatpush1.bf16.msra.mxu0 0
        %1663 = vmatprep.subr.bf16.mxu0 0
        %1664 = vmatpush1.bf16.msra.mxu0 0
        %1665 = vmatprep.mubr.bf16.mxu0 0
        %1666 = vmatmul.mubr.bf16.gmra.mrb[0].mxu0 %v1577
        %v1667 = vpop.f32.mrb[0].mxu0
        %v1668 = vadd.f32 0.0, %v1667
        %v1669 = vpop.f32.mrb[0].mxu0
        %v1670 = vpop.f32.mrb[0].mxu0
        %v1671 = vadd.f32 0.0, %v1670
        %v1672 = vpop.f32.mrb[0].mxu0
        %1673 = vmatprep.mubr.bf16.mxu0 0
        %1674 = vmatmul.mubr.bf16.gmra.mrb[0].mxu0 %v1578
        %v1675 = vpop.f32.mrb[0].mxu0
        %v1676 = vadd.f32 0.0, %v1675
        %v1677 = vpop.f32.mrb[0].mxu0
        %v1678 = vpop.f32.mrb[0].mxu0
        %v1679 = vadd.f32 0.0, %v1678
        %v1680 = vpop.f32.mrb[0].mxu0
        %1681 = vmatprep.mubr.bf16.mxu0 0
        %1682 = vmatmul.mubr.bf16.gmra.mrb[0].mxu0 %v1579
        %v1683 = vpop.f32.mrb[0].mxu0
        %v1684 = vadd.f32 0.0, %v1683
        %v1685 = vpop.f32.mrb[0].mxu0
        %v1686 = vpop.f32.mrb[0].mxu0
        %v1687 = vadd.f32 0.0, %v1686
        %v1688 = vpop.f32.mrb[0].mxu0
        %1689 = vmatprep.mubr.bf16.mxu0 0
        %1690 = vmatmul.mubr.bf16.gmra.mrb[0].mxu0 %v1580
        %v1691 = vpop.f32.mrb[0].mxu0
        %v1692 = vadd.f32 0.0, %v1691
        %v1693 = vpop.f32.mrb[0].mxu0
        %v1694 = vpop.f32.mrb[0].mxu0
        %v1695 = vadd.f32 0.0, %v1694
        %v1696 = vpop.f32.mrb[0].mxu0
        %1697 = vdwg.mxu0
        %v1698 = vadd.f32 %v1547, %v1668
        %v1699 = vadd.f32 %v1548, %v1671
        %v1700 = vadd.f32 %v1549, %v1676
        %v1701 = vadd.f32 %v1550, %v1679
        %v1702 = vadd.f32 %v1551, %v1684
        %v1703 = vadd.f32 %v1552, %v1687
        %v1704 = vadd.f32 %v1553, %v1692
        %v1705 = vadd.f32 %v1554, %v1695
        %s1706 = scalar_lea.vmem [#allocation8], 384
        %v1707 = vld [vmem:[%s1706] sm:$0xf]
        %v1708 = vld [vmem:[%s1706 + $0x4] sm:$0xf]
        %v1709 = vld [vmem:[%s1706 + $0x8] sm:$0xf]
        %v1710 = vld [vmem:[%s1706 + $0xc] sm:$0xf]
        %v1711 = vld [vmem:[%s1706 + $0x10] sm:$0xf]
        %v1712 = vld [vmem:[%s1706 + $0x14] sm:$0xf]
        %v1713 = vld [vmem:[%s1706 + $0x18] sm:$0xf]
        %v1714 = vld [vmem:[%s1706 + $0x1c] sm:$0xf]
        %v1715 = vld [vmem:[%s1706 + $0x20] sm:$0xf]
        %v1716 = vld [vmem:[%s1706 + $0x24] sm:$0xf]
        %v1717 = vld [vmem:[%s1706 + $0x28] sm:$0xf]
        %v1718 = vld [vmem:[%s1706 + $0x2c] sm:$0xf]
        %v1719 = vld [vmem:[%s1706 + $0x30] sm:$0xf]
        %v1720 = vld [vmem:[%s1706 + $0x34] sm:$0xf]
        %v1721 = vld [vmem:[%s1706 + $0x38] sm:$0xf]
        %v1722 = vld [vmem:[%s1706 + $0x3c] sm:$0xf]
        %v1724 = vunpack.c.l.b16 %v615
        %v1725 = vpack.c.b16 %v1724, %v1261
        %v1743 = vunpack.c.l.b16 %v1707
        %v1744 = vunpack.c.l.b16 %v1708
        %v1745 = vunpack.c.l.b16 %v1709
        %v1746 = vunpack.c.l.b16 %v1710
        %v1747 = vunpack.c.l.b16 %v1711
        %v1748 = vunpack.c.l.b16 %v1712
        %v1749 = vunpack.c.l.b16 %v1713
        %v1750 = vunpack.c.l.b16 %v1714
        %v1751 = vunpack.c.l.b16 %v1715
        %v1752 = vunpack.c.l.b16 %v1716
        %v1753 = vunpack.c.l.b16 %v1717
        %v1754 = vunpack.c.l.b16 %v1718
        %v1755 = vunpack.c.l.b16 %v1719
        %v1756 = vunpack.c.l.b16 %v1720
        %v1757 = vunpack.c.l.b16 %v1721
        %v1758 = vunpack.c.l.b16 %v1722
        %v1759 = vpack.c.b16 %v1744, %v1743
        %v1760 = vpack.c.b16 %v1746, %v1745
        %v1761 = vpack.c.b16 %v1748, %v1747
        %v1762 = vpack.c.b16 %v1750, %v1749
        %v1763 = vpack.c.b16 %v1752, %v1751
        %v1764 = vpack.c.b16 %v1754, %v1753
        %v1765 = vpack.c.b16 %v1756, %v1755
        %v1766 = vpack.c.b16 %v1758, %v1757
        %1775 = vmatprep.subr.bf16.mxu0 0
        %1776 = vmatpush1.bf16.msra.mxu0 %v1759
        %1777 = vmatprep.subr.bf16.mxu0 0
        %1778 = vmatpush1.bf16.msra.mxu0 %v1760
        %1779 = vmatprep.subr.bf16.mxu0 0
        %1780 = vmatpush1.bf16.msra.mxu0 %v1761
        %1781 = vmatprep.subr.bf16.mxu0 0
        %1782 = vmatpush1.bf16.msra.mxu0 %v1762
        %1783 = vmatprep.subr.bf16.mxu0 0
        %1784 = vmatpush1.bf16.msra.mxu0 %v1763
        %1785 = vmatprep.subr.bf16.mxu0 0
        %1786 = vmatpush1.bf16.msra.mxu0 %v1764
        %1787 = vmatprep.subr.bf16.mxu0 0
        %1788 = vmatpush1.bf16.msra.mxu0 %v1765
        %1789 = vmatprep.subr.bf16.mxu0 0
        %1790 = vmatpush1.bf16.msra.mxu0 %v1766
        %1791 = vmatprep.subr.bf16.mxu0 0
        %1792 = vmatpush1.bf16.msra.mxu0 0
        %1793 = vmatprep.subr.bf16.mxu0 0
        %1794 = vmatpush1.bf16.msra.mxu0 0
        %1795 = vmatprep.subr.bf16.mxu0 0
        %1796 = vmatpush1.bf16.msra.mxu0 0
        %1797 = vmatprep.subr.bf16.mxu0 0
        %1798 = vmatpush1.bf16.msra.mxu0 0
        %1799 = vmatprep.subr.bf16.mxu0 0
        %1800 = vmatpush1.bf16.msra.mxu0 0
        %1801 = vmatprep.subr.bf16.mxu0 0
        %1802 = vmatpush1.bf16.msra.mxu0 0
        %1803 = vmatprep.subr.bf16.mxu0 0
        %1804 = vmatpush1.bf16.msra.mxu0 0
        %1805 = vmatprep.subr.bf16.mxu0 0
        %1806 = vmatpush1.bf16.msra.mxu0 0
        %1807 = vmatprep.mubr.bf16.mxu0 0
        %1808 = vmatmul.mubr.bf16.gmra.mrb[0].mxu0 %v934
        %v1809 = vpop.f32.mrb[0].mxu0
        %v1810 = vadd.f32 0.0, %v1809
        %v1811 = vpop.f32.mrb[0].mxu0
        %v1812 = vpop.f32.mrb[0].mxu0
        %v1813 = vadd.f32 0.0, %v1812
        %v1814 = vpop.f32.mrb[0].mxu0
        %1815 = vmatprep.mubr.bf16.mxu0 0
        %1816 = vmatmul.mubr.bf16.gmra.mrb[0].mxu0 %v935
        %v1817 = vpop.f32.mrb[0].mxu0
        %v1818 = vadd.f32 0.0, %v1817
        %v1819 = vpop.f32.mrb[0].mxu0
        %v1820 = vpop.f32.mrb[0].mxu0
        %v1821 = vadd.f32 0.0, %v1820
        %v1822 = vpop.f32.mrb[0].mxu0
        %1823 = vmatprep.mubr.bf16.mxu0 0
        %1824 = vmatmul.mubr.bf16.gmra.mrb[0].mxu0 %v936
        %v1825 = vpop.f32.mrb[0].mxu0
        %v1826 = vadd.f32 0.0, %v1825
        %v1827 = vpop.f32.mrb[0].mxu0
        %v1828 = vpop.f32.mrb[0].mxu0
        %v1829 = vadd.f32 0.0, %v1828
        %v1830 = vpop.f32.mrb[0].mxu0
        %1831 = vmatprep.mubr.bf16.mxu0 0
        %1832 = vmatmul.mubr.bf16.gmra.mrb[0].mxu0 %v1725
        %v1833 = vpop.f32.mrb[0].mxu0
        %v1834 = vadd.f32 0.0, %v1833
        %v1835 = vpop.f32.mrb[0].mxu0
        %v1836 = vpop.f32.mrb[0].mxu0
        %v1837 = vadd.f32 0.0, %v1836
        %v1838 = vpop.f32.mrb[0].mxu0
        %1839 = vdwg.mxu0
        %v1840 = vadd.f32 %v1698, %v1810
        %v1841 = vadd.f32 %v1699, %v1813
        %v1842 = vadd.f32 %v1700, %v1818
        %v1843 = vadd.f32 %v1701, %v1821
        %v1844 = vadd.f32 %v1702, %v1826
        %v1845 = vadd.f32 %v1703, %v1829
        %v1846 = vadd.f32 %v1704, %v1834
        %v1847 = vadd.f32 %v1705, %v1837
        %v1848 = vunpack.c.h.b16 %v615
        %v1849 = vpack.c.b16 %v1724, %v1724
        %v1850 = vpack.c.b16 %v1848, %v1848
        %v1852 = vshrl.u32 %v1849, 16
        %v1854 = vrot.slane %v1852, 4
        %v1855 = vshll.u32 %v1849, 16
        %v1857 = vrot.slane %v1855, 5
        %v1858 = vor.u32 %v1854, %v1857
        %v1859 = vrot.slane %v1858, 4
        %v1861 = vshll.u32 %v1850, 16
        %v1863 = vrot.slane %v1861, 5
        %v1864 = vsel %vm674, %v1859, %v1863
        %s1865 = scalar_lea.vmem [#allocation8], 448
        %v1866 = vld [vmem:[%s1865] sm:$0xf]
        %v1867 = vld [vmem:[%s1865 + $0x4] sm:$0xf]
        %v1868 = vld [vmem:[%s1865 + $0x8] sm:$0xf]
        %v1869 = vld [vmem:[%s1865 + $0xc] sm:$0xf]
        %v1870 = vld [vmem:[%s1865 + $0x10] sm:$0xf]
        %v1871 = vld [vmem:[%s1865 + $0x14] sm:$0xf]
        %v1872 = vld [vmem:[%s1865 + $0x18] sm:$0xf]
        %v1873 = vld [vmem:[%s1865 + $0x1c] sm:$0xf]
        %v1874 = vld [vmem:[%s1865 + $0x20] sm:$0xf]
        %v1875 = vld [vmem:[%s1865 + $0x24] sm:$0xf]
        %v1876 = vld [vmem:[%s1865 + $0x28] sm:$0xf]
        %v1877 = vld [vmem:[%s1865 + $0x2c] sm:$0xf]
        %v1878 = vld [vmem:[%s1865 + $0x30] sm:$0xf]
        %v1879 = vld [vmem:[%s1865 + $0x34] sm:$0xf]
        %v1880 = vld [vmem:[%s1865 + $0x38] sm:$0xf]
        %v1881 = vld [vmem:[%s1865 + $0x3c] sm:$0xf]
        %v1882 = vunpack.c.l.b16 %v1864
        %v1883 = vpack.c.b16 %v1882, %v1425
        %v1901 = vunpack.c.l.b16 %v1866
        %v1902 = vunpack.c.l.b16 %v1867
        %v1903 = vunpack.c.l.b16 %v1868
        %v1904 = vunpack.c.l.b16 %v1869
        %v1905 = vunpack.c.l.b16 %v1870
        %v1906 = vunpack.c.l.b16 %v1871
        %v1907 = vunpack.c.l.b16 %v1872
        %v1908 = vunpack.c.l.b16 %v1873
        %v1909 = vunpack.c.l.b16 %v1874
        %v1910 = vunpack.c.l.b16 %v1875
        %v1911 = vunpack.c.l.b16 %v1876
        %v1912 = vunpack.c.l.b16 %v1877
        %v1913 = vunpack.c.l.b16 %v1878
        %v1914 = vunpack.c.l.b16 %v1879
        %v1915 = vunpack.c.l.b16 %v1880
        %v1916 = vunpack.c.l.b16 %v1881
        %v1917 = vpack.c.b16 %v1902, %v1901
        %v1918 = vpack.c.b16 %v1904, %v1903
        %v1919 = vpack.c.b16 %v1906, %v1905
        %v1920 = vpack.c.b16 %v1908, %v1907
        %v1921 = vpack.c.b16 %v1910, %v1909
        %v1922 = vpack.c.b16 %v1912, %v1911
        %v1923 = vpack.c.b16 %v1914, %v1913
        %v1924 = vpack.c.b16 %v1916, %v1915
        %1933 = vmatprep.subr.bf16.mxu0 0
        %1934 = vmatpush1.bf16.msra.mxu0 %v1917
        %1935 = vmatprep.subr.bf16.mxu0 0
        %1936 = vmatpush1.bf16.msra.mxu0 %v1918
        %1937 = vmatprep.subr.bf16.mxu0 0
        %1938 = vmatpush1.bf16.msra.mxu0 %v1919
        %1939 = vmatprep.subr.bf16.mxu0 0
        %1940 = vmatpush1.bf16.msra.mxu0 %v1920
        %1941 = vmatprep.subr.bf16.mxu0 0
        %1942 = vmatpush1.bf16.msra.mxu0 %v1921
        %1943 = vmatprep.subr.bf16.mxu0 0
        %1944 = vmatpush1.bf16.msra.mxu0 %v1922
        %1945 = vmatprep.subr.bf16.mxu0 0
        %1946 = vmatpush1.bf16.msra.mxu0 %v1923
        %1947 = vmatprep.subr.bf16.mxu0 0
        %1948 = vmatpush1.bf16.msra.mxu0 %v1924
        %1949 = vmatprep.subr.bf16.mxu0 0
        %1950 = vmatpush1.bf16.msra.mxu0 0
        %1951 = vmatprep.subr.bf16.mxu0 0
        %1952 = vmatpush1.bf16.msra.mxu0 0
        %1953 = vmatprep.subr.bf16.mxu0 0
        %1954 = vmatpush1.bf16.msra.mxu0 0
        %1955 = vmatprep.subr.bf16.mxu0 0
        %1956 = vmatpush1.bf16.msra.mxu0 0
        %1957 = vmatprep.subr.bf16.mxu0 0
        %1958 = vmatpush1.bf16.msra.mxu0 0
        %1959 = vmatprep.subr.bf16.mxu0 0
        %1960 = vmatpush1.bf16.msra.mxu0 0
        %1961 = vmatprep.subr.bf16.mxu0 0
        %1962 = vmatpush1.bf16.msra.mxu0 0
        %1963 = vmatprep.subr.bf16.mxu0 0
        %1964 = vmatpush1.bf16.msra.mxu0 0
        %1965 = vmatprep.mubr.bf16.mxu0 0
        %1966 = vmatmul.mubr.bf16.gmra.mrb[0].mxu0 %v813
        %v1967 = vpop.f32.mrb[0].mxu0
        %v1968 = vadd.f32 0.0, %v1967
        %v1969 = vpop.f32.mrb[0].mxu0
        %v1970 = vpop.f32.mrb[0].mxu0
        %v1971 = vadd.f32 0.0, %v1970
        %v1972 = vpop.f32.mrb[0].mxu0
        %1973 = vmatprep.mubr.bf16.mxu0 0
        %1974 = vmatmul.mubr.bf16.gmra.mrb[0].mxu0 %v814
        %v1975 = vpop.f32.mrb[0].mxu0
        %v1976 = vadd.f32 0.0, %v1975
        %v1977 = vpop.f32.mrb[0].mxu0
        %v1978 = vpop.f32.mrb[0].mxu0
        %v1979 = vadd.f32 0.0, %v1978
        %v1980 = vpop.f32.mrb[0].mxu0
        %1981 = vmatprep.mubr.bf16.mxu0 0
        %1982 = vmatmul.mubr.bf16.gmra.mrb[0].mxu0 %v815
        %v1983 = vpop.f32.mrb[0].mxu0
        %v1984 = vadd.f32 0.0, %v1983
        %v1985 = vpop.f32.mrb[0].mxu0
        %v1986 = vpop.f32.mrb[0].mxu0
        %v1987 = vadd.f32 0.0, %v1986
        %v1988 = vpop.f32.mrb[0].mxu0
        %1989 = vmatprep.mubr.bf16.mxu0 0
        %1990 = vmatmul.mubr.bf16.gmra.mrb[0].mxu0 %v1883
        %v1991 = vpop.f32.mrb[0].mxu0
        %v1992 = vadd.f32 0.0, %v1991
        %v1993 = vpop.f32.mrb[0].mxu0
        %v1994 = vpop.f32.mrb[0].mxu0
        %v1995 = vadd.f32 0.0, %v1994
        %v1996 = vpop.f32.mrb[0].mxu0
        %1997 = vdwg.mxu0
        %v1998 = vadd.f32 %v1840, %v1968
        %v1999 = vadd.f32 %v1841, %v1971
        %v2000 = vadd.f32 %v1842, %v1976
        %v2001 = vadd.f32 %v1843, %v1979
        %v2002 = vadd.f32 %v1844, %v1984
        %v2003 = vadd.f32 %v1845, %v1987
        %v2004 = vadd.f32 %v1846, %v1992
        %v2005 = vadd.f32 %v1847, %v1995
        %v2006 = vrot.slane %v1849, 5
        %v2007 = vrot.slane %v2006, 4
        %v2008 = vrot.slane %v1850, 5
        %v2009 = vsel %vm1056, %v2007, %v2008
        %s2010 = scalar_lea.vmem [#allocation8], 512
        %v2011 = vld [vmem:[%s2010] sm:$0xf]
        %v2012 = vld [vmem:[%s2010 + $0x4] sm:$0xf]
        %v2013 = vld [vmem:[%s2010 + $0x8] sm:$0xf]
        %v2014 = vld [vmem:[%s2010 + $0xc] sm:$0xf]
        %v2015 = vld [vmem:[%s2010 + $0x10] sm:$0xf]
        %v2016 = vld [vmem:[%s2010 + $0x14] sm:$0xf]
        %v2017 = vld [vmem:[%s2010 + $0x18] sm:$0xf]
        %v2018 = vld [vmem:[%s2010 + $0x1c] sm:$0xf]
        %v2019 = vld [vmem:[%s2010 + $0x20] sm:$0xf]
        %v2020 = vld [vmem:[%s2010 + $0x24] sm:$0xf]
        %v2021 = vld [vmem:[%s2010 + $0x28] sm:$0xf]
        %v2022 = vld [vmem:[%s2010 + $0x2c] sm:$0xf]
        %v2023 = vld [vmem:[%s2010 + $0x30] sm:$0xf]
        %v2024 = vld [vmem:[%s2010 + $0x34] sm:$0xf]
        %v2025 = vld [vmem:[%s2010 + $0x38] sm:$0xf]
        %v2026 = vld [vmem:[%s2010 + $0x3c] sm:$0xf]
        %v2027 = vunpack.c.l.b16 %v2009
        %v2028 = vpack.c.b16 %v2027, %v1576
        %v2046 = vunpack.c.l.b16 %v2011
        %v2047 = vunpack.c.l.b16 %v2012
        %v2048 = vunpack.c.l.b16 %v2013
        %v2049 = vunpack.c.l.b16 %v2014
        %v2050 = vunpack.c.l.b16 %v2015
        %v2051 = vunpack.c.l.b16 %v2016
        %v2052 = vunpack.c.l.b16 %v2017
        %v2053 = vunpack.c.l.b16 %v2018
        %v2054 = vunpack.c.l.b16 %v2019
        %v2055 = vunpack.c.l.b16 %v2020
        %v2056 = vunpack.c.l.b16 %v2021
        %v2057 = vunpack.c.l.b16 %v2022
        %v2058 = vunpack.c.l.b16 %v2023
        %v2059 = vunpack.c.l.b16 %v2024
        %v2060 = vunpack.c.l.b16 %v2025
        %v2061 = vunpack.c.l.b16 %v2026
        %v2062 = vpack.c.b16 %v2047, %v2046
        %v2063 = vpack.c.b16 %v2049, %v2048
        %v2064 = vpack.c.b16 %v2051, %v2050
        %v2065 = vpack.c.b16 %v2053, %v2052
        %v2066 = vpack.c.b16 %v2055, %v2054
        %v2067 = vpack.c.b16 %v2057, %v2056
        %v2068 = vpack.c.b16 %v2059, %v2058
        %v2069 = vpack.c.b16 %v2061, %v2060
        %2078 = vmatprep.subr.bf16.mxu0 0
        %2079 = vmatpush1.bf16.msra.mxu0 %v2062
        %2080 = vmatprep.subr.bf16.mxu0 0
        %2081 = vmatpush1.bf16.msra.mxu0 %v2063
        %2082 = vmatprep.subr.bf16.mxu0 0
        %2083 = vmatpush1.bf16.msra.mxu0 %v2064
        %2084 = vmatprep.subr.bf16.mxu0 0
        %2085 = vmatpush1.bf16.msra.mxu0 %v2065
        %2086 = vmatprep.subr.bf16.mxu0 0
        %2087 = vmatpush1.bf16.msra.mxu0 %v2066
        %2088 = vmatprep.subr.bf16.mxu0 0
        %2089 = vmatpush1.bf16.msra.mxu0 %v2067
        %2090 = vmatprep.subr.bf16.mxu0 0
        %2091 = vmatpush1.bf16.msra.mxu0 %v2068
        %2092 = vmatprep.subr.bf16.mxu0 0
        %2093 = vmatpush1.bf16.msra.mxu0 %v2069
        %2094 = vmatprep.subr.bf16.mxu0 0
        %2095 = vmatpush1.bf16.msra.mxu0 0
        %2096 = vmatprep.subr.bf16.mxu0 0
        %2097 = vmatpush1.bf16.msra.mxu0 0
        %2098 = vmatprep.subr.bf16.mxu0 0
        %2099 = vmatpush1.bf16.msra.mxu0 0
        %2100 = vmatprep.subr.bf16.mxu0 0
        %2101 = vmatpush1.bf16.msra.mxu0 0
        %2102 = vmatprep.subr.bf16.mxu0 0
        %2103 = vmatpush1.bf16.msra.mxu0 0
        %2104 = vmatprep.subr.bf16.mxu0 0
        %2105 = vmatpush1.bf16.msra.mxu0 0
        %2106 = vmatprep.subr.bf16.mxu0 0
        %2107 = vmatpush1.bf16.msra.mxu0 0
        %2108 = vmatprep.subr.bf16.mxu0 0
        %2109 = vmatpush1.bf16.msra.mxu0 0
        %2110 = vmatprep.mubr.bf16.mxu0 0
        %2111 = vmatmul.mubr.bf16.gmra.mrb[0].mxu0 %v1115
        %v2112 = vpop.f32.mrb[0].mxu0
        %v2113 = vadd.f32 0.0, %v2112
        %v2114 = vpop.f32.mrb[0].mxu0
        %v2115 = vpop.f32.mrb[0].mxu0
        %v2116 = vadd.f32 0.0, %v2115
        %v2117 = vpop.f32.mrb[0].mxu0
        %2118 = vmatprep.mubr.bf16.mxu0 0
        %2119 = vmatmul.mubr.bf16.gmra.mrb[0].mxu0 %v1116
        %v2120 = vpop.f32.mrb[0].mxu0
        %v2121 = vadd.f32 0.0, %v2120
        %v2122 = vpop.f32.mrb[0].mxu0
        %v2123 = vpop.f32.mrb[0].mxu0
        %v2124 = vadd.f32 0.0, %v2123
        %v2125 = vpop.f32.mrb[0].mxu0
        %2126 = vmatprep.mubr.bf16.mxu0 0
        %2127 = vmatmul.mubr.bf16.gmra.mrb[0].mxu0 %v1117
        %v2128 = vpop.f32.mrb[0].mxu0
        %v2129 = vadd.f32 0.0, %v2128
        %v2130 = vpop.f32.mrb[0].mxu0
        %v2131 = vpop.f32.mrb[0].mxu0
        %v2132 = vadd.f32 0.0, %v2131
        %v2133 = vpop.f32.mrb[0].mxu0
        %2134 = vmatprep.mubr.bf16.mxu0 0
        %2135 = vmatmul.mubr.bf16.gmra.mrb[0].mxu0 %v2028
        %v2136 = vpop.f32.mrb[0].mxu0
        %v2137 = vadd.f32 0.0, %v2136
        %v2138 = vpop.f32.mrb[0].mxu0
        %v2139 = vpop.f32.mrb[0].mxu0
        %v2140 = vadd.f32 0.0, %v2139
        %v2141 = vpop.f32.mrb[0].mxu0
        %2142 = vdwg.mxu0
        %v2143 = vadd.f32 %v1998, %v2113
        %v2144 = vadd.f32 %v1999, %v2116
        %v2145 = vadd.f32 %v2000, %v2121
        %v2146 = vadd.f32 %v2001, %v2124
        %v2147 = vadd.f32 %v2002, %v2129
        %v2148 = vadd.f32 %v2003, %v2132
        %v2149 = vadd.f32 %v2004, %v2137
        %v2150 = vadd.f32 %v2005, %v2140
        %v2151 = vld [vmem:[#allocation11] sm:$0x1]
        %v2152 = vld [vmem:[#allocation12] sm:$0x1]
        %v2153 = vld [vmem:[%s418] sm:$0xff]
        %v2154 = vld [vmem:[%s418 + $0x8] sm:$0xff]
        %v2155 = vld [vmem:[%s418 + $0x10] sm:$0xff]
        %v2156 = vld [vmem:[%s418 + $0x18] sm:$0xff]
        %v2157 = vld [vmem:[%s418 + $0x20] sm:$0xff]
        %v2158 = vld [vmem:[%s418 + $0x28] sm:$0xff]
        %v2159 = vld [vmem:[%s418 + $0x30] sm:$0xff]
        %v2160 = vld [vmem:[%s418 + $0x38] sm:$0xff]
        %v2162 = vlaneseq
        %v2163 = vshrl.u32 %v2162, 7
        %v2164 = vsub.s32 0, %v2163
        %v2165 = vrot.slane %v2151, %v2164
        %v2167 = vmul.f32 %v2153, %v2165
        %v2168 = vmul.f32 %v2154, %v2165
        %v2169 = vmul.f32 %v2155, %v2165
        %v2170 = vmul.f32 %v2156, %v2165
        %v2171 = vmul.f32 %v2157, %v2165
        %v2172 = vmul.f32 %v2158, %v2165
        %v2173 = vmul.f32 %v2159, %v2165
        %v2174 = vmul.f32 %v2160, %v2165
        %v2176 = vlaneseq
        %v2177 = vshrl.u32 %v2176, 7
        %v2178 = vsub.s32 0, %v2177
        %v2179 = vrot.slane %v2152, %v2178
        %v2181 = vadd.f32 %v2167, %v2179
        %v2182 = vadd.f32 %v2168, %v2179
        %v2183 = vadd.f32 %v2169, %v2179
        %v2184 = vadd.f32 %v2170, %v2179
        %v2185 = vadd.f32 %v2171, %v2179
        %v2186 = vadd.f32 %v2172, %v2179
        %v2187 = vadd.f32 %v2173, %v2179
        %v2188 = vadd.f32 %v2174, %v2179
        %v2189 = vmax.f32 %v2181, 0.0
        %v2190 = vmax.f32 %v2182, 0.0
        %v2191 = vmax.f32 %v2183, 0.0
        %v2192 = vmax.f32 %v2184, 0.0
        %v2193 = vmax.f32 %v2185, 0.0
        %v2194 = vmax.f32 %v2186, 0.0
        %v2195 = vmax.f32 %v2187, 0.0
        %v2196 = vmax.f32 %v2188, 0.0
        %v2197 = vpack.c.bf16 %v2190, %v2189
        %v2198 = vpack.c.bf16 %v2192, %v2191
        %v2199 = vpack.c.bf16 %v2194, %v2193
        %v2200 = vpack.c.bf16 %v2196, %v2195
        %v2201 = vld [vmem:[#allocation13] sm:$0xf]
        %v2202 = vld [vmem:[#allocation13 + $0x4] sm:$0xf]
        %v2203 = vld [vmem:[#allocation13 + $0x8] sm:$0xf]
        %v2204 = vld [vmem:[#allocation13 + $0xc] sm:$0xf]
        %v2205 = vld [vmem:[#allocation13 + $0x10] sm:$0xf]
        %v2206 = vld [vmem:[#allocation13 + $0x14] sm:$0xf]
        %v2207 = vld [vmem:[#allocation13 + $0x18] sm:$0xf]
        %v2208 = vld [vmem:[#allocation13 + $0x1c] sm:$0xf]
        %v2209 = vld [vmem:[#allocation13 + $0x20] sm:$0xf]
        %v2210 = vld [vmem:[#allocation13 + $0x24] sm:$0xf]
        %v2211 = vld [vmem:[#allocation13 + $0x28] sm:$0xf]
        %v2212 = vld [vmem:[#allocation13 + $0x2c] sm:$0xf]
        %v2213 = vld [vmem:[#allocation13 + $0x30] sm:$0xf]
        %v2214 = vld [vmem:[#allocation13 + $0x34] sm:$0xf]
        %v2215 = vld [vmem:[#allocation13 + $0x38] sm:$0xf]
        %v2216 = vld [vmem:[#allocation13 + $0x3c] sm:$0xf]
        %v2233 = vunpack.c.l.b16 %v2201
        %v2234 = vunpack.c.l.b16 %v2202
        %v2235 = vunpack.c.l.b16 %v2203
        %v2236 = vunpack.c.l.b16 %v2204
        %v2237 = vunpack.c.l.b16 %v2205
        %v2238 = vunpack.c.l.b16 %v2206
        %v2239 = vunpack.c.l.b16 %v2207
        %v2240 = vunpack.c.l.b16 %v2208
        %v2241 = vunpack.c.l.b16 %v2209
        %v2242 = vunpack.c.l.b16 %v2210
        %v2243 = vunpack.c.l.b16 %v2211
        %v2244 = vunpack.c.l.b16 %v2212
        %v2245 = vunpack.c.l.b16 %v2213
        %v2246 = vunpack.c.l.b16 %v2214
        %v2247 = vunpack.c.l.b16 %v2215
        %v2248 = vunpack.c.l.b16 %v2216
        %v2249 = vpack.c.b16 %v2234, %v2233
        %v2250 = vpack.c.b16 %v2236, %v2235
        %v2251 = vpack.c.b16 %v2238, %v2237
        %v2252 = vpack.c.b16 %v2240, %v2239
        %v2253 = vpack.c.b16 %v2242, %v2241
        %v2254 = vpack.c.b16 %v2244, %v2243
        %v2255 = vpack.c.b16 %v2246, %v2245
        %v2256 = vpack.c.b16 %v2248, %v2247
        %2265 = vmatprep.subr.bf16.mxu0 0
        %2266 = vmatpush1.bf16.msra.mxu0 %v2249
        %2267 = vmatprep.subr.bf16.mxu0 0
        %2268 = vmatpush1.bf16.msra.mxu0 %v2250
        %2269 = vmatprep.subr.bf16.mxu0 0
        %2270 = vmatpush1.bf16.msra.mxu0 %v2251
        %2271 = vmatprep.subr.bf16.mxu0 0
        %2272 = vmatpush1.bf16.msra.mxu0 %v2252
        %2273 = vmatprep.subr.bf16.mxu0 0
        %2274 = vmatpush1.bf16.msra.mxu0 %v2253
        %2275 = vmatprep.subr.bf16.mxu0 0
        %2276 = vmatpush1.bf16.msra.mxu0 %v2254
        %2277 = vmatprep.subr.bf16.mxu0 0
        %2278 = vmatpush1.bf16.msra.mxu0 %v2255
        %2279 = vmatprep.subr.bf16.mxu0 0
        %2280 = vmatpush1.bf16.msra.mxu0 %v2256
        %2281 = vmatprep.subr.bf16.mxu0 0
        %2282 = vmatpush1.bf16.msra.mxu0 0
        %2283 = vmatprep.subr.bf16.mxu0 0
        %2284 = vmatpush1.bf16.msra.mxu0 0
        %2285 = vmatprep.subr.bf16.mxu0 0
        %2286 = vmatpush1.bf16.msra.mxu0 0
        %2287 = vmatprep.subr.bf16.mxu0 0
        %2288 = vmatpush1.bf16.msra.mxu0 0
        %2289 = vmatprep.subr.bf16.mxu0 0
        %2290 = vmatpush1.bf16.msra.mxu0 0
        %2291 = vmatprep.subr.bf16.mxu0 0
        %2292 = vmatpush1.bf16.msra.mxu0 0
        %2293 = vmatprep.subr.bf16.mxu0 0
        %2294 = vmatpush1.bf16.msra.mxu0 0
        %2295 = vmatprep.subr.bf16.mxu0 0
        %2296 = vmatpush1.bf16.msra.mxu0 0
        %2297 = vmatprep.mubr.bf16.mxu0 0
        %2298 = vmatmul.mubr.bf16.gmra.mrb[0].mxu0 %v2197
        %v2299 = vpop.f32.mrb[0].mxu0
        %v2300 = vadd.f32 0.0, %v2299
        %v2301 = vpop.f32.mrb[0].mxu0
        %v2302 = vpop.f32.mrb[0].mxu0
        %v2303 = vadd.f32 0.0, %v2302
        %v2304 = vpop.f32.mrb[0].mxu0
        %2305 = vmatprep.mubr.bf16.mxu0 0
        %2306 = vmatmul.mubr.bf16.gmra.mrb[0].mxu0 %v2198
        %v2307 = vpop.f32.mrb[0].mxu0
        %v2308 = vadd.f32 0.0, %v2307
        %v2309 = vpop.f32.mrb[0].mxu0
        %v2310 = vpop.f32.mrb[0].mxu0
        %v2311 = vadd.f32 0.0, %v2310
        %v2312 = vpop.f32.mrb[0].mxu0
        %2313 = vmatprep.mubr.bf16.mxu0 0
        %2314 = vmatmul.mubr.bf16.gmra.mrb[0].mxu0 %v2199
        %v2315 = vpop.f32.mrb[0].mxu0
        %v2316 = vadd.f32 0.0, %v2315
        %v2317 = vpop.f32.mrb[0].mxu0
        %v2318 = vpop.f32.mrb[0].mxu0
        %v2319 = vadd.f32 0.0, %v2318
        %v2320 = vpop.f32.mrb[0].mxu0
        %2321 = vmatprep.mubr.bf16.mxu0 0
        %2322 = vmatmul.mubr.bf16.gmra.mrb[0].mxu0 %v2200
        %v2323 = vpop.f32.mrb[0].mxu0
        %v2324 = vadd.f32 0.0, %v2323
        %v2325 = vpop.f32.mrb[0].mxu0
        %v2326 = vpop.f32.mrb[0].mxu0
        %v2327 = vadd.f32 0.0, %v2326
        %v2328 = vpop.f32.mrb[0].mxu0
        %2329 = vdwg.mxu0
        %v2330 = vadd.f32 %v2143, %v2300
        %v2331 = vadd.f32 %v2144, %v2303
        %v2332 = vadd.f32 %v2145, %v2308
        %v2333 = vadd.f32 %v2146, %v2311
        %v2334 = vadd.f32 %v2147, %v2316
        %v2335 = vadd.f32 %v2148, %v2319
        %v2336 = vadd.f32 %v2149, %v2324
        %v2337 = vadd.f32 %v2150, %v2327
        %2338 = vst [vmem:[%s467] sm:$0xff] %v2330
        %2339 = vst [vmem:[%s467 + $0x8] sm:$0xff] %v2331
        %2340 = vst [vmem:[%s467 + $0x10] sm:$0xff] %v2332
        %2341 = vst [vmem:[%s467 + $0x18] sm:$0xff] %v2333
        %2342 = vst [vmem:[%s467 + $0x20] sm:$0xff] %v2334
        %2343 = vst [vmem:[%s467 + $0x28] sm:$0xff] %v2335
        %2344 = vst [vmem:[%s467 + $0x30] sm:$0xff] %v2336
        %2345 = vst [vmem:[%s467 + $0x38] sm:$0xff] %v2337
        %s2346 = sand.u32 %s238, 1
        %s2347 = scalar_lea.sflag [#allocation4], %s2346
        %s2348 = sand.u32 %s238, 1
        %s2349 = smul.addr %s2348, 64
        %s2350 = scalar_lea.vmem [#allocation15], %s2349
        // Predicated region
        $region85: #{_lambda_.5} parent=51 // pred_check
          %p2351 = pneg %p248
        $region86: #{_lambda_.5} parent=51 // pred_check_branch
          %2353 = sbr.rel (%p2351) target = $region88
        $region87: #{_lambda_.5} parent=51 // pred_region
          %s2355 = ssub.s32 1024, 1024
          %2356 = vsyncadd %s2347, %s2355
          %s2357 = smul.addr %s32, 8
          %s2358 = sadd.s32 %s33, %s2357
          %s2359 = smul.addr %s2358, 128
          %s2360 = scalar_lea.hbm %s8, %s2359
          %s2361 = sshll.u32 %s2350, 4
          %s2362 = int_to_ptr.vmem [resolvable:$true] %s2361
          %2367 = dma.vmem_to_hbm [thread:$0]  %s2362, 1024, %s2360, %s2347, 128, 128, 8
        $region88: #{_lambda_.5} parent=51 // pred_fallthru
          _
      $region52: #{_lambda_.5} parent=5 // pred_fallthru
        _
      %p2368 = scmp.le.s32.totalorder 2, %s23
      // Predicated region
      $region89: #{_lambda_.5} parent=5 // pred_check
        %p2369 = pneg %p2368
      $region90: #{_lambda_.5} parent=5 // pred_check_branch
        %2371 = sbr.rel (%p2369) target = $region92
      $region91: #{_lambda_.5} parent=5 // pred_region
        %s2372 = ssub.s32 %s23, 2
        // Predicated region
        $region93: #{_lambda_.5} parent=91 // pred_check
          %p2373 = pneg %p254
        $region94: #{_lambda_.5} parent=91 // pred_check_branch
          %2375 = sbr.rel (%p2373) target = $region96
        $region95: #{_lambda_.5} parent=91 // pred_region
          %s2376 = sand.u32 %s239, 1
          %s2377 = scalar_lea.sflag [#allocation4], %s2376
          %s2378 = sand.u32 %s239, 1
          %s2379 = smul.addr %s2378, 64
          %s2380 = scalar_lea.vmem [#allocation15], %s2379
          %2381 = dma.done %s2377, 1024
        $region96: #{_lambda_.5} parent=91 // pred_fallthru
          _
      $region92: #{_lambda_.5} parent=5 // pred_fallthru
        _
    $region6: #{_lambda_.5} parent=1 // loop_footer
      %s27 = sadd.s32 1, %s23
    $region7: #{_lambda_.5} parent=1 // loop_footer_branch
      %22 = sbr.rel target = $region3
    $region8: #{_lambda_.5} parent=1 // loop_exit
      _
    %2382 = vsyncpa [#allocation3], 1
    %s2383 = scalar_lea.sflag [#allocation3], 1
    %2384 = vsyncpa %s2383, 1
    %2385 = vsyncpa [#allocation6], 1
    %2386 = vsyncpa [#allocation9], 1
    %2387 = vsyncpa [#allocation14], 1
    %2388 = vsyncpa [#allocation4], 1
    %s2389 = scalar_lea.sflag [#allocation4], 1
    %2390 = vsyncpa %s2389, 1

</llo_original>
